<compile_context>
chip_gen: v5e
topology: v5e:2x2
jax: 0.10.0
libtpu: 0.0.40
codegen_flags: <defaults>
</compile_context>

<pallas_src>
import numpy as np
import jax
import jax.numpy as jnp
from jax import lax
from jax.experimental import pallas as pl
from jax.experimental.pallas import tpu as pltpu

CHANNELS = (3, 16, 32, 64)          # fixed by the module: 3 -> 16 -> 32 -> 64


# ------------------------------- fused kernel ------------------------------- #

def make_detector_kernel(B, H0, W0):
    C0, C1, C2, C3 = CHANNELS
    Hf, Wf = H0 // 8, W0 // 8

    def kernel(x_ref, w1_ref, b1_ref, w2_ref, b2_ref, w3_ref, b3_ref,
               wh_ref, bh_ref, out_ref, p1, p2, p3, z_scr):
        # Zero the padded scratches once; the interior is fully overwritten each batch,
        # the 1-pixel zero border never is.
        p1[...] = jnp.zeros_like(p1)
        p2[...] = jnp.zeros_like(p2)
        p3[...] = jnp.zeros_like(p3)

        stages = (
            (p1, w1_ref, b1_ref, H0,      W0,      C0, C1),
            (p2, w2_ref, b2_ref, H0 // 2, W0 // 2, C1, C2),
            (p3, w3_ref, b3_ref, H0 // 4, W0 // 4, C2, C3),
        )

        for b in range(B):                                           # B is tiny -> unrolled
            # batch-b input -> stage-1 padded scratch interior (lanes = (x, ci))
            p1[1:H0 + 1, C0:(W0 + 1) * C0] = x_ref[b]

            for s, (p_ref, w_ref, b_ref, H, W, Cin, Cout) in enumerate(stages):
                # Conv3x3: 9 block-diagonal MXU matmuls over static windows of the padded buffer.
                z = jnp.zeros((H, W * Cout), jnp.float32)
                for t in range(9):
                    dy, dx = divmod(t, 3)
                    slab = p_ref[dy:dy + H, dx * Cin:(dx + W) * Cin]          # (H, W*Cin)
                    z = z + jnp.dot(slab, w_ref[t], preferred_element_type=jnp.float32)
                z_scr[0:H, 0:W * Cout] = z                                     # full-res response

                half = (W // 2) * Cout
                brow = b_ref[...]                                              # (1, half), x'-tiled
                for yp in range(H // 2):
                    # 2x2 max-pool: adjacent rows (y), then the two permuted column halves (x).
                    r = jnp.maximum(z_scr[2 * yp:2 * yp + 1, 0:W * Cout],
                                    z_scr[2 * yp + 1:2 * yp + 2, 0:W * Cout])  # (1, W*Cout)
                    r = jnp.maximum(r[:, :half], r[:, half:])                  # (1, (W/2)*Cout)
                    r = jnp.maximum(r + brow, 0.0)                             # bias+ReLU post-pool
                    if s < 2:
                        p_next, _, _, _, Wn, Cn, _ = stages[s + 1]
                        p_next[1 + yp:2 + yp, Cn:(Wn + 1) * Cn] = r            # feed next stage
                    else:
                        # fused packed heads: (1, Wf*64) @ (Wf*64, Wf*(nc+4)), block-diagonal
                        hrow = jnp.dot(r, wh_ref[...],
                                       preferred_element_type=jnp.float32) + bh_ref[...]
                        out_ref[b * Hf + yp:b * Hf + yp + 1, :] = hrow

    return kernel


def make_forward(B, H0, W0, num_classes):
    assert H0 % 8 == 0 and W0 % 8 == 0
    C0, C1, C2, C3 = CHANNELS
    Hf, Wf = H0 // 8, W0 // 8
    K = num_classes + 4
    zw = max(W0 * C1, (W0 // 2) * C2, (W0 // 4) * C3)

    call = pl.pallas_call(
        make_detector_kernel(B, H0, W0),
        out_shape=jax.ShapeDtypeStruct((B * Hf, Wf * K), jnp.float32),
        scratch_shapes=[
            pltpu.VMEM((H0 + 2, (W0 + 2) * C0), jnp.float32),          # stage-1 padded input
            pltpu.VMEM((H0 // 2 + 2, (W0 // 2 + 2) * C1), jnp.float32),  # stage-2 padded input
            pltpu.VMEM((H0 // 4 + 2, (W0 // 4 + 2) * C2), jnp.float32),  # stage-3 padded input
            pltpu.VMEM((H0, zw), jnp.float32),                         # full-res conv response
        ],
    )

    @jax.jit
    def forward(x_nchw, pp):
        x = jnp.transpose(x_nchw, (0, 2, 3, 1)).reshape(B, H0, W0 * C0)   # lanes = (x, ci)
        packed = call(x, pp["w1"], pp["b1"], pp["w2"], pp["b2"],
                      pp["w3"], pp["b3"], pp["wh"], pp["bh"])
        packed = packed.reshape(B, Hf, Wf, K).reshape(B, Hf * Wf, K)
        return packed[:, :, :num_classes], packed[:, :, num_classes:]

    return forward


# ----------------------- one-time weight re-packing (hoisted) ---------------- #

def prep_params(params, num_classes, W0=16):
    def pool_perm(W):
        # output column-block permutation:  x = 2x'+q  ->  block q*(W/2) + x'
        S = np.zeros((W, W), np.float32)
        for x in range(W):
            S[x, (x % 2) * (W // 2) + x // 2] = 1.0
        return jnp.asarray(S)

    def conv_block_weight(w, W):
        # torch (Cout, Cin, 3, 3) -> (9, W*Cin, W*Cout) block-diagonal, pool-permuted columns
        Cout, Cin = w.shape[0], w.shape[1]
        taps = jnp.transpose(w, (2, 3, 1, 0)).reshape(9, Cin, Cout)      # t = dy*3 + dx
        blk = jnp.einsum("jo,tic->tjioc", pool_perm(W), taps)            # (9, W, Cin, W, Cout)
        return blk.reshape(9, W * Cin, W * Cout)

    def tiled_bias(bias, reps):
        return jnp.tile(bias, reps).reshape(1, -1)

    Wf = W0 // 8
    w_heads = jnp.concatenate([params["wc"][:, :, 0, 0].T,
                               params["wr"][:, :, 0, 0].T], axis=1)       # (64, nc+4)
    b_heads = jnp.concatenate([params["bc"], params["br"]])
    return {
        "w1": conv_block_weight(params["w1"], W0),       "b1": tiled_bias(params["b1"], W0 // 2),
        "w2": conv_block_weight(params["w2"], W0 // 2),  "b2": tiled_bias(params["b2"], W0 // 4),
        "w3": conv_block_weight(params["w3"], W0 // 4),  "b3": tiled_bias(params["b3"], W0 // 8),
        "wh": jnp.kron(jnp.eye(Wf, dtype=jnp.float32), w_heads),          # (Wf*64, Wf*(nc+4))
        "bh": tiled_bias(b_heads, Wf),
    }


# ----------------------------- pure-JAX reference ---------------------------- #

def reference_forward(x_nchw, params):
    x = jnp.transpose(x_nchw, (0, 2, 3, 1))

    def stage(x, w, b):
        w_hwio = jnp.transpose(w, (2, 3, 1, 0))
        y = lax.conv_general_dilated(x, w_hwio, (1, 1), "SAME",
                                     dimension_numbers=("NHWC", "HWIO", "NHWC"))
        y = jax.nn.relu(y + b)
        return lax.reduce_window(y, -jnp.inf, lax.max, (1, 2, 2, 1), (1, 2, 2, 1), "VALID")

    x = stage(x, params["w1"], params["b1"])
    x = stage(x, params["w2"], params["b2"])
    x = stage(x, params["w3"], params["b3"])
    B, Hf, Wf, C = x.shape
    feat = x.reshape(B, Hf * Wf, C)
    cls = feat @ params["wc"][:, :, 0, 0].T + params["bc"]
    box = feat @ params["wr"][:, :, 0, 0].T + params["br"]
    return cls, box


# ---------------------------------- main ------------------------------------- #

if __name__ == "__main__":
    num_classes = 2
    B, H, W = 2, 16, 16
    key = jax.random.PRNGKey(0)
    ks = jax.random.split(key, 11)

    def w(k, shape, scale=0.05):
        return (scale * jax.random.normal(k, shape)).astype(jnp.float32)

    params = {
        "w1": w(ks[0], (16, 3, 3, 3)),  "b1": w(ks[1], (16,)),
        "w2": w(ks[2], (32, 16, 3, 3)), "b2": w(ks[3], (32,)),
        "w3": w(ks[4], (64, 32, 3, 3)), "b3": w(ks[5], (64,)),
        "wc": w(ks[6], (num_classes, 64, 1, 1)), "bc": w(ks[7], (num_classes,)),
        "wr": w(ks[8], (4, 64, 1, 1)),  "br": w(ks[9], (4,)),
    }
    x = jax.random.normal(ks[10], (B, 3, H, W), dtype=jnp.float32)        # NCHW like PyTorch

    prepped = prep_params(params, num_classes, W)                          # hoisted: runs once
    forward = make_forward(B, H, W, num_classes)

    cls_logits, bbox_preds = forward(x, prepped)
    jax.block_until_ready((cls_logits, bbox_preds))

    assert cls_logits.shape == (B, 4, num_classes), cls_logits.shape
    assert bbox_preds.shape == (B, 4, 4), bbox_preds.shape

    ref_cls, ref_box = reference_forward(x, params)
    assert jnp.allclose(cls_logits, ref_cls, rtol=1e-4, atol=1e-4), \
        float(jnp.max(jnp.abs(cls_logits - ref_cls)))
    assert jnp.allclose(bbox_preds, ref_box, rtol=1e-4, atol=1e-4), \
        float(jnp.max(jnp.abs(bbox_preds - ref_box)))

    print("KERNEL_OK")
</pallas_src>

<mosaic_0001>
module attributes {stable_mosaic.version = 11 : i64} {
  func.func @kernel(%arg0: memref<2x16x48xf32, #tpu.memory_space<vmem>>, %arg1: memref<9x48x256xf32, #tpu.memory_space<vmem>>, %arg2: memref<1x128xf32, #tpu.memory_space<vmem>>, %arg3: memref<9x128x256xf32, #tpu.memory_space<vmem>>, %arg4: memref<1x128xf32, #tpu.memory_space<vmem>>, %arg5: memref<9x128x256xf32, #tpu.memory_space<vmem>>, %arg6: memref<1x128xf32, #tpu.memory_space<vmem>>, %arg7: memref<128x12xf32, #tpu.memory_space<vmem>>, %arg8: memref<1x12xf32, #tpu.memory_space<vmem>>, %arg9: memref<4x12xf32, #tpu.memory_space<vmem>>, %arg10: memref<18x54xf32, #tpu.memory_space<vmem>>, %arg11: memref<10x160xf32, #tpu.memory_space<vmem>>, %arg12: memref<6x192xf32, #tpu.memory_space<vmem>>, %arg13: memref<16x256xf32, #tpu.memory_space<vmem>>) attributes {dimension_semantics = [], scalar_prefetch = 0 : i64, scratch_operands = 4 : i64, tpu.core_type = #tpu.core_type<tc>} {
    %cst = arith.constant 0.000000e+00 : f32
    %0 = vector.broadcast %cst : f32 to vector<18x54xf32>
    %c0 = arith.constant 0 : index
    %c0_0 = arith.constant 0 : index
    %1 = vector.load %arg10[%c0, %c0_0] : memref<18x54xf32, #tpu.memory_space<vmem>>, vector<18x54xf32>
    tpu.vector_store %arg10[%c0, %c0_0], %0 {strides = array<i32>} : memref<18x54xf32, #tpu.memory_space<vmem>>, vector<18x54xf32>,
    %cst_1 = arith.constant 0.000000e+00 : f32
    %2 = vector.broadcast %cst_1 : f32 to vector<10x160xf32>
    %c0_2 = arith.constant 0 : index
    %c0_3 = arith.constant 0 : index
    %3 = vector.load %arg11[%c0_2, %c0_3] : memref<10x160xf32, #tpu.memory_space<vmem>>, vector<10x160xf32>
    tpu.vector_store %arg11[%c0_2, %c0_3], %2 {strides = array<i32>} : memref<10x160xf32, #tpu.memory_space<vmem>>, vector<10x160xf32>,
    %cst_4 = arith.constant 0.000000e+00 : f32
    %4 = vector.broadcast %cst_4 : f32 to vector<6x192xf32>
    %c0_5 = arith.constant 0 : index
    %c0_6 = arith.constant 0 : index
    %5 = vector.load %arg12[%c0_5, %c0_6] : memref<6x192xf32, #tpu.memory_space<vmem>>, vector<6x192xf32>
    tpu.vector_store %arg12[%c0_5, %c0_6], %4 {strides = array<i32>} : memref<6x192xf32, #tpu.memory_space<vmem>>, vector<6x192xf32>,
    %c0_7 = arith.constant 0 : index
    %c0_8 = arith.constant 0 : index
    %c0_9 = arith.constant 0 : index
    %6 = vector.load %arg0[%c0_7, %c0_8, %c0_9] : memref<2x16x48xf32, #tpu.memory_space<vmem>>, vector<1x16x48xf32>
    %7 = vector.shape_cast %6 : vector<1x16x48xf32> to vector<16x48xf32>
    %c1 = arith.constant 1 : index
    %c3 = arith.constant 3 : index
    %8 = vector.load %arg10[%c1, %c3] : memref<18x54xf32, #tpu.memory_space<vmem>>, vector<16x48xf32>
    tpu.vector_store %arg10[%c1, %c3], %7 {strides = array<i32>} : memref<18x54xf32, #tpu.memory_space<vmem>>, vector<16x48xf32>,
    %cst_10 = arith.constant 0.000000e+00 : f32
    %9 = vector.broadcast %cst_10 : f32 to vector<16x256xf32>
    %c0_11 = arith.constant 0 : index
    %c0_12 = arith.constant 0 : index
    %10 = vector.load %arg10[%c0_11, %c0_12] : memref<18x54xf32, #tpu.memory_space<vmem>>, vector<16x48xf32>
    %c0_13 = arith.constant 0 : index
    %c0_14 = arith.constant 0 : index
    %c0_15 = arith.constant 0 : index
    %11 = vector.load %arg1[%c0_13, %c0_14, %c0_15] : memref<9x48x256xf32, #tpu.memory_space<vmem>>, vector<1x48x256xf32>
    %12 = vector.shape_cast %11 : vector<1x48x256xf32> to vector<48x256xf32>
    %cst_16 = arith.constant dense<0.000000e+00> : vector<16x256xf32>
    %13 = tpu.matmul %10, %12, %cst_16 {dimension_numbers = #tpu.dot_dimension_numbers<[1], [0], [0], [1], [0, 0, 1, 1], [], []>} : vector<16x48xf32>, vector<48x256xf32>, vector<16x256xf32> -> vector<16x256xf32>
    %14 = arith.addf %9, %13 : vector<16x256xf32>
    %c0_17 = arith.constant 0 : index
    %c3_18 = arith.constant 3 : index
    %15 = vector.load %arg10[%c0_17, %c3_18] : memref<18x54xf32, #tpu.memory_space<vmem>>, vector<16x48xf32>
    %c1_19 = arith.constant 1 : index
    %c0_20 = arith.constant 0 : index
    %c0_21 = arith.constant 0 : index
    %16 = vector.load %arg1[%c1_19, %c0_20, %c0_21] : memref<9x48x256xf32, #tpu.memory_space<vmem>>, vector<1x48x256xf32>
    %17 = vector.shape_cast %16 : vector<1x48x256xf32> to vector<48x256xf32>
    %cst_22 = arith.constant dense<0.000000e+00> : vector<16x256xf32>
    %18 = tpu.matmul %15, %17, %cst_22 {dimension_numbers = #tpu.dot_dimension_numbers<[1], [0], [0], [1], [0, 0, 1, 1], [], []>} : vector<16x48xf32>, vector<48x256xf32>, vector<16x256xf32> -> vector<16x256xf32>
    %19 = arith.addf %14, %18 : vector<16x256xf32>
    %c0_23 = arith.constant 0 : index
    %c6 = arith.constant 6 : index
    %20 = vector.load %arg10[%c0_23, %c6] : memref<18x54xf32, #tpu.memory_space<vmem>>, vector<16x48xf32>
    %c2 = arith.constant 2 : index
    %c0_24 = arith.constant 0 : index
    %c0_25 = arith.constant 0 : index
    %21 = vector.load %arg1[%c2, %c0_24, %c0_25] : memref<9x48x256xf32, #tpu.memory_space<vmem>>, vector<1x48x256xf32>
    %22 = vector.shape_cast %21 : vector<1x48x256xf32> to vector<48x256xf32>
    %cst_26 = arith.constant dense<0.000000e+00> : vector<16x256xf32>
    %23 = tpu.matmul %20, %22, %cst_26 {dimension_numbers = #tpu.dot_dimension_numbers<[1], [0], [0], [1], [0, 0, 1, 1], [], []>} : vector<16x48xf32>, vector<48x256xf32>, vector<16x256xf32> -> vector<16x256xf32>
    %24 = arith.addf %19, %23 : vector<16x256xf32>
    %c1_27 = arith.constant 1 : index
    %c0_28 = arith.constant 0 : index
    %25 = vector.load %arg10[%c1_27, %c0_28] : memref<18x54xf32, #tpu.memory_space<vmem>>, vector<16x48xf32>
    %c3_29 = arith.constant 3 : index
    %c0_30 = arith.constant 0 : index
    %c0_31 = arith.constant 0 : index
    %26 = vector.load %arg1[%c3_29, %c0_30, %c0_31] : memref<9x48x256xf32, #tpu.memory_space<vmem>>, vector<1x48x256xf32>
    %27 = vector.shape_cast %26 : vector<1x48x256xf32> to vector<48x256xf32>
    %cst_32 = arith.constant dense<0.000000e+00> : vector<16x256xf32>
    %28 = tpu.matmul %25, %27, %cst_32 {dimension_numbers = #tpu.dot_dimension_numbers<[1], [0], [0], [1], [0, 0, 1, 1], [], []>} : vector<16x48xf32>, vector<48x256xf32>, vector<16x256xf32> -> vector<16x256xf32>
    %29 = arith.addf %24, %28 : vector<16x256xf32>
    %c1_33 = arith.constant 1 : index
    %c3_34 = arith.constant 3 : index
    %30 = vector.load %arg10[%c1_33, %c3_34] : memref<18x54xf32, #tpu.memory_space<vmem>>, vector<16x48xf32>
    %c4 = arith.constant 4 : index
    %c0_35 = arith.constant 0 : index
    %c0_36 = arith.constant 0 : index
    %31 = vector.load %arg1[%c4, %c0_35, %c0_36] : memref<9x48x256xf32, #tpu.memory_space<vmem>>, vector<1x48x256xf32>
    %32 = vector.shape_cast %31 : vector<1x48x256xf32> to vector<48x256xf32>
    %cst_37 = arith.constant dense<0.000000e+00> : vector<16x256xf32>
    %33 = tpu.matmul %30, %32, %cst_37 {dimension_numbers = #tpu.dot_dimension_numbers<[1], [0], [0], [1], [0, 0, 1, 1], [], []>} : vector<16x48xf32>, vector<48x256xf32>, vector<16x256xf32> -> vector<16x256xf32>
    %34 = arith.addf %29, %33 : vector<16x256xf32>
    %c1_38 = arith.constant 1 : index
    %c6_39 = arith.constant 6 : index
    %35 = vector.load %arg10[%c1_38, %c6_39] : memref<18x54xf32, #tpu.memory_space<vmem>>, vector<16x48xf32>
    %c5 = arith.constant 5 : index
    %c0_40 = arith.constant 0 : index
    %c0_41 = arith.constant 0 : index
    %36 = vector.load %arg1[%c5, %c0_40, %c0_41] : memref<9x48x256xf32, #tpu.memory_space<vmem>>, vector<1x48x256xf32>
    %37 = vector.shape_cast %36 : vector<1x48x256xf32> to vector<48x256xf32>
    %cst_42 = arith.constant dense<0.000000e+00> : vector<16x256xf32>
    %38 = tpu.matmul %35, %37, %cst_42 {dimension_numbers = #tpu.dot_dimension_numbers<[1], [0], [0], [1], [0, 0, 1, 1], [], []>} : vector<16x48xf32>, vector<48x256xf32>, vector<16x256xf32> -> vector<16x256xf32>
    %39 = arith.addf %34, %38 : vector<16x256xf32>
    %c2_43 = arith.constant 2 : index
    %c0_44 = arith.constant 0 : index
    %40 = vector.load %arg10[%c2_43, %c0_44] : memref<18x54xf32, #tpu.memory_space<vmem>>, vector<16x48xf32>
    %c6_45 = arith.constant 6 : index
    %c0_46 = arith.constant 0 : index
    %c0_47 = arith.constant 0 : index
    %41 = vector.load %arg1[%c6_45, %c0_46, %c0_47] : memref<9x48x256xf32, #tpu.memory_space<vmem>>, vector<1x48x256xf32>
    %42 = vector.shape_cast %41 : vector<1x48x256xf32> to vector<48x256xf32>
    %cst_48 = arith.constant dense<0.000000e+00> : vector<16x256xf32>
    %43 = tpu.matmul %40, %42, %cst_48 {dimension_numbers = #tpu.dot_dimension_numbers<[1], [0], [0], [1], [0, 0, 1, 1], [], []>} : vector<16x48xf32>, vector<48x256xf32>, vector<16x256xf32> -> vector<16x256xf32>
    %44 = arith.addf %39, %43 : vector<16x256xf32>
    %c2_49 = arith.constant 2 : index
    %c3_50 = arith.constant 3 : index
    %45 = vector.load %arg10[%c2_49, %c3_50] : memref<18x54xf32, #tpu.memory_space<vmem>>, vector<16x48xf32>
    %c7 = arith.constant 7 : index
    %c0_51 = arith.constant 0 : index
    %c0_52 = arith.constant 0 : index
    %46 = vector.load %arg1[%c7, %c0_51, %c0_52] : memref<9x48x256xf32, #tpu.memory_space<vmem>>, vector<1x48x256xf32>
    %47 = vector.shape_cast %46 : vector<1x48x256xf32> to vector<48x256xf32>
    %cst_53 = arith.constant dense<0.000000e+00> : vector<16x256xf32>
    %48 = tpu.matmul %45, %47, %cst_53 {dimension_numbers = #tpu.dot_dimension_numbers<[1], [0], [0], [1], [0, 0, 1, 1], [], []>} : vector<16x48xf32>, vector<48x256xf32>, vector<16x256xf32> -> vector<16x256xf32>
    %49 = arith.addf %44, %48 : vector<16x256xf32>
    %c2_54 = arith.constant 2 : index
    %c6_55 = arith.constant 6 : index
    %50 = vector.load %arg10[%c2_54, %c6_55] : memref<18x54xf32, #tpu.memory_space<vmem>>, vector<16x48xf32>
    %c8 = arith.constant 8 : index
    %c0_56 = arith.constant 0 : index
    %c0_57 = arith.constant 0 : index
    %51 = vector.load %arg1[%c8, %c0_56, %c0_57] : memref<9x48x256xf32, #tpu.memory_space<vmem>>, vector<1x48x256xf32>
    %52 = vector.shape_cast %51 : vector<1x48x256xf32> to vector<48x256xf32>
    %cst_58 = arith.constant dense<0.000000e+00> : vector<16x256xf32>
    %53 = tpu.matmul %50, %52, %cst_58 {dimension_numbers = #tpu.dot_dimension_numbers<[1], [0], [0], [1], [0, 0, 1, 1], [], []>} : vector<16x48xf32>, vector<48x256xf32>, vector<16x256xf32> -> vector<16x256xf32>
    %54 = arith.addf %49, %53 : vector<16x256xf32>
    %c0_59 = arith.constant 0 : index
    %c0_60 = arith.constant 0 : index
    %55 = vector.load %arg13[%c0_59, %c0_60] : memref<16x256xf32, #tpu.memory_space<vmem>>, vector<16x256xf32>
    tpu.vector_store %arg13[%c0_59, %c0_60], %54 {strides = array<i32>} : memref<16x256xf32, #tpu.memory_space<vmem>>, vector<16x256xf32>,
    %c0_61 = arith.constant 0 : index
    %c0_62 = arith.constant 0 : index
    %56 = vector.load %arg2[%c0_61, %c0_62] : memref<1x128xf32, #tpu.memory_space<vmem>>, vector<1x128xf32>
    %c0_63 = arith.constant 0 : index
    %c0_64 = arith.constant 0 : index
    %57 = vector.load %arg13[%c0_63, %c0_64] : memref<16x256xf32, #tpu.memory_space<vmem>>, vector<1x256xf32>
    %c1_65 = arith.constant 1 : index
    %c0_66 = arith.constant 0 : index
    %58 = vector.load %arg13[%c1_65, %c0_66] : memref<16x256xf32, #tpu.memory_space<vmem>>, vector<1x256xf32>
    %59 = arith.maximumf %57, %58 : vector<1x256xf32>
    %60 = vector.extract_strided_slice %59 {offsets = [0, 0], sizes = [1, 128], strides = [1, 1]} : vector<1x256xf32> to vector<1x128xf32>
    %61 = vector.extract_strided_slice %59 {offsets = [0, 128], sizes = [1, 128], strides = [1, 1]} : vector<1x256xf32> to vector<1x128xf32>
    %62 = arith.maximumf %60, %61 : vector<1x128xf32>
    %63 = arith.addf %62, %56 : vector<1x128xf32>
    %cst_67 = arith.constant 0.000000e+00 : f32
    %64 = vector.broadcast %cst_67 : f32 to vector<1x128xf32>
    %65 = arith.maximumf %63, %64 : vector<1x128xf32>
    %c1_68 = arith.constant 1 : index
    %c16 = arith.constant 16 : index
    %66 = vector.load %arg11[%c1_68, %c16] : memref<10x160xf32, #tpu.memory_space<vmem>>, vector<1x128xf32>
    tpu.vector_store %arg11[%c1_68, %c16], %65 {strides = array<i32>} : memref<10x160xf32, #tpu.memory_space<vmem>>, vector<1x128xf32>,
    %c2_69 = arith.constant 2 : index
    %c0_70 = arith.constant 0 : index
    %67 = vector.load %arg13[%c2_69, %c0_70] : memref<16x256xf32, #tpu.memory_space<vmem>>, vector<1x256xf32>
    %c3_71 = arith.constant 3 : index
    %c0_72 = arith.constant 0 : index
    %68 = vector.load %arg13[%c3_71, %c0_72] : memref<16x256xf32, #tpu.memory_space<vmem>>, vector<1x256xf32>
    %69 = arith.maximumf %67, %68 : vector<1x256xf32>
    %70 = vector.extract_strided_slice %69 {offsets = [0, 0], sizes = [1, 128], strides = [1, 1]} : vector<1x256xf32> to vector<1x128xf32>
    %71 = vector.extract_strided_slice %69 {offsets = [0, 128], sizes = [1, 128], strides = [1, 1]} : vector<1x256xf32> to vector<1x128xf32>
    %72 = arith.maximumf %70, %71 : vector<1x128xf32>
    %73 = arith.addf %72, %56 : vector<1x128xf32>
    %cst_73 = arith.constant 0.000000e+00 : f32
    %74 = vector.broadcast %cst_73 : f32 to vector<1x128xf32>
    %75 = arith.maximumf %73, %74 : vector<1x128xf32>
    %c2_74 = arith.constant 2 : index
    %c16_75 = arith.constant 16 : index
    %76 = vector.load %arg11[%c2_74, %c16_75] : memref<10x160xf32, #tpu.memory_space<vmem>>, vector<1x128xf32>
    tpu.vector_store %arg11[%c2_74, %c16_75], %75 {strides = array<i32>} : memref<10x160xf32, #tpu.memory_space<vmem>>, vector<1x128xf32>,
    %c4_76 = arith.constant 4 : index
    %c0_77 = arith.constant 0 : index
    %77 = vector.load %arg13[%c4_76, %c0_77] : memref<16x256xf32, #tpu.memory_space<vmem>>, vector<1x256xf32>
    %c5_78 = arith.constant 5 : index
    %c0_79 = arith.constant 0 : index
    %78 = vector.load %arg13[%c5_78, %c0_79] : memref<16x256xf32, #tpu.memory_space<vmem>>, vector<1x256xf32>
    %79 = arith.maximumf %77, %78 : vector<1x256xf32>
    %80 = vector.extract_strided_slice %79 {offsets = [0, 0], sizes = [1, 128], strides = [1, 1]} : vector<1x256xf32> to vector<1x128xf32>
    %81 = vector.extract_strided_slice %79 {offsets = [0, 128], sizes = [1, 128], strides = [1, 1]} : vector<1x256xf32> to vector<1x128xf32>
    %82 = arith.maximumf %80, %81 : vector<1x128xf32>
    %83 = arith.addf %82, %56 : vector<1x128xf32>
    %cst_80 = arith.constant 0.000000e+00 : f32
    %84 = vector.broadcast %cst_80 : f32 to vector<1x128xf32>
    %85 = arith.maximumf %83, %84 : vector<1x128xf32>
    %c3_81 = arith.constant 3 : index
    %c16_82 = arith.constant 16 : index
    %86 = vector.load %arg11[%c3_81, %c16_82] : memref<10x160xf32, #tpu.memory_space<vmem>>, vector<1x128xf32>
    tpu.vector_store %arg11[%c3_81, %c16_82], %85 {strides = array<i32>} : memref<10x160xf32, #tpu.memory_space<vmem>>, vector<1x128xf32>,
    %c6_83 = arith.constant 6 : index
    %c0_84 = arith.constant 0 : index
    %87 = vector.load %arg13[%c6_83, %c0_84] : memref<16x256xf32, #tpu.memory_space<vmem>>, vector<1x256xf32>
    %c7_85 = arith.constant 7 : index
    %c0_86 = arith.constant 0 : index
    %88 = vector.load %arg13[%c7_85, %c0_86] : memref<16x256xf32, #tpu.memory_space<vmem>>, vector<1x256xf32>
    %89 = arith.maximumf %87, %88 : vector<1x256xf32>
    %90 = vector.extract_strided_slice %89 {offsets = [0, 0], sizes = [1, 128], strides = [1, 1]} : vector<1x256xf32> to vector<1x128xf32>
    %91 = vector.extract_strided_slice %89 {offsets = [0, 128], sizes = [1, 128], strides = [1, 1]} : vector<1x256xf32> to vector<1x128xf32>
    %92 = arith.maximumf %90, %91 : vector<1x128xf32>
    %93 = arith.addf %92, %56 : vector<1x128xf32>
    %cst_87 = arith.constant 0.000000e+00 : f32
    %94 = vector.broadcast %cst_87 : f32 to vector<1x128xf32>
    %95 = arith.maximumf %93, %94 : vector<1x128xf32>
    %c4_88 = arith.constant 4 : index
    %c16_89 = arith.constant 16 : index
    %96 = vector.load %arg11[%c4_88, %c16_89] : memref<10x160xf32, #tpu.memory_space<vmem>>, vector<1x128xf32>
    tpu.vector_store %arg11[%c4_88, %c16_89], %95 {strides = array<i32>} : memref<10x160xf32, #tpu.memory_space<vmem>>, vector<1x128xf32>,
    %c8_90 = arith.constant 8 : index
    %c0_91 = arith.constant 0 : index
    %97 = vector.load %arg13[%c8_90, %c0_91] : memref<16x256xf32, #tpu.memory_space<vmem>>, vector<1x256xf32>
    %c9 = arith.constant 9 : index
    %c0_92 = arith.constant 0 : index
    %98 = vector.load %arg13[%c9, %c0_92] : memref<16x256xf32, #tpu.memory_space<vmem>>, vector<1x256xf32>
    %99 = arith.maximumf %97, %98 : vector<1x256xf32>
    %100 = vector.extract_strided_slice %99 {offsets = [0, 0], sizes = [1, 128], strides = [1, 1]} : vector<1x256xf32> to vector<1x128xf32>
    %101 = vector.extract_strided_slice %99 {offsets = [0, 128], sizes = [1, 128], strides = [1, 1]} : vector<1x256xf32> to vector<1x128xf32>
    %102 = arith.maximumf %100, %101 : vector<1x128xf32>
    %103 = arith.addf %102, %56 : vector<1x128xf32>
    %cst_93 = arith.constant 0.000000e+00 : f32
    %104 = vector.broadcast %cst_93 : f32 to vector<1x128xf32>
    %105 = arith.maximumf %103, %104 : vector<1x128xf32>
    %c5_94 = arith.constant 5 : index
    %c16_95 = arith.constant 16 : index
    %106 = vector.load %arg11[%c5_94, %c16_95] : memref<10x160xf32, #tpu.memory_space<vmem>>, vector<1x128xf32>
    tpu.vector_store %arg11[%c5_94, %c16_95], %105 {strides = array<i32>} : memref<10x160xf32, #tpu.memory_space<vmem>>, vector<1x128xf32>,
    %c10 = arith.constant 10 : index
    %c0_96 = arith.constant 0 : index
    %107 = vector.load %arg13[%c10, %c0_96] : memref<16x256xf32, #tpu.memory_space<vmem>>, vector<1x256xf32>
    %c11 = arith.constant 11 : index
    %c0_97 = arith.constant 0 : index
    %108 = vector.load %arg13[%c11, %c0_97] : memref<16x256xf32, #tpu.memory_space<vmem>>, vector<1x256xf32>
    %109 = arith.maximumf %107, %108 : vector<1x256xf32>
    %110 = vector.extract_strided_slice %109 {offsets = [0, 0], sizes = [1, 128], strides = [1, 1]} : vector<1x256xf32> to vector<1x128xf32>
    %111 = vector.extract_strided_slice %109 {offsets = [0, 128], sizes = [1, 128], strides = [1, 1]} : vector<1x256xf32> to vector<1x128xf32>
    %112 = arith.maximumf %110, %111 : vector<1x128xf32>
    %113 = arith.addf %112, %56 : vector<1x128xf32>
    %cst_98 = arith.constant 0.000000e+00 : f32
    %114 = vector.broadcast %cst_98 : f32 to vector<1x128xf32>
    %115 = arith.maximumf %113, %114 : vector<1x128xf32>
    %c6_99 = arith.constant 6 : index
    %c16_100 = arith.constant 16 : index
    %116 = vector.load %arg11[%c6_99, %c16_100] : memref<10x160xf32, #tpu.memory_space<vmem>>, vector<1x128xf32>
    tpu.vector_store %arg11[%c6_99, %c16_100], %115 {strides = array<i32>} : memref<10x160xf32, #tpu.memory_space<vmem>>, vector<1x128xf32>,
    %c12 = arith.constant 12 : index
    %c0_101 = arith.constant 0 : index
    %117 = vector.load %arg13[%c12, %c0_101] : memref<16x256xf32, #tpu.memory_space<vmem>>, vector<1x256xf32>
    %c13 = arith.constant 13 : index
    %c0_102 = arith.constant 0 : index
    %118 = vector.load %arg13[%c13, %c0_102] : memref<16x256xf32, #tpu.memory_space<vmem>>, vector<1x256xf32>
    %119 = arith.maximumf %117, %118 : vector<1x256xf32>
    %120 = vector.extract_strided_slice %119 {offsets = [0, 0], sizes = [1, 128], strides = [1, 1]} : vector<1x256xf32> to vector<1x128xf32>
    %121 = vector.extract_strided_slice %119 {offsets = [0, 128], sizes = [1, 128], strides = [1, 1]} : vector<1x256xf32> to vector<1x128xf32>
    %122 = arith.maximumf %120, %121 : vector<1x128xf32>
    %123 = arith.addf %122, %56 : vector<1x128xf32>
    %cst_103 = arith.constant 0.000000e+00 : f32
    %124 = vector.broadcast %cst_103 : f32 to vector<1x128xf32>
    %125 = arith.maximumf %123, %124 : vector<1x128xf32>
    %c7_104 = arith.constant 7 : index
    %c16_105 = arith.constant 16 : index
    %126 = vector.load %arg11[%c7_104, %c16_105] : memref<10x160xf32, #tpu.memory_space<vmem>>, vector<1x128xf32>
    tpu.vector_store %arg11[%c7_104, %c16_105], %125 {strides = array<i32>} : memref<10x160xf32, #tpu.memory_space<vmem>>, vector<1x128xf32>,
    %c14 = arith.constant 14 : index
    %c0_106 = arith.constant 0 : index
    %127 = vector.load %arg13[%c14, %c0_106] : memref<16x256xf32, #tpu.memory_space<vmem>>, vector<1x256xf32>
    %c15 = arith.constant 15 : index
    %c0_107 = arith.constant 0 : index
    %128 = vector.load %arg13[%c15, %c0_107] : memref<16x256xf32, #tpu.memory_space<vmem>>, vector<1x256xf32>
    %129 = arith.maximumf %127, %128 : vector<1x256xf32>
    %130 = vector.extract_strided_slice %129 {offsets = [0, 0], sizes = [1, 128], strides = [1, 1]} : vector<1x256xf32> to vector<1x128xf32>
    %131 = vector.extract_strided_slice %129 {offsets = [0, 128], sizes = [1, 128], strides = [1, 1]} : vector<1x256xf32> to vector<1x128xf32>
    %132 = arith.maximumf %130, %131 : vector<1x128xf32>
    %133 = arith.addf %132, %56 : vector<1x128xf32>
    %cst_108 = arith.constant 0.000000e+00 : f32
    %134 = vector.broadcast %cst_108 : f32 to vector<1x128xf32>
    %135 = arith.maximumf %133, %134 : vector<1x128xf32>
    %c8_109 = arith.constant 8 : index
    %c16_110 = arith.constant 16 : index
    %136 = vector.load %arg11[%c8_109, %c16_110] : memref<10x160xf32, #tpu.memory_space<vmem>>, vector<1x128xf32>
    tpu.vector_store %arg11[%c8_109, %c16_110], %135 {strides = array<i32>} : memref<10x160xf32, #tpu.memory_space<vmem>>, vector<1x128xf32>,
    %cst_111 = arith.constant 0.000000e+00 : f32
    %137 = vector.broadcast %cst_111 : f32 to vector<8x256xf32>
    %c0_112 = arith.constant 0 : index
    %c0_113 = arith.constant 0 : index
    %138 = vector.load %arg11[%c0_112, %c0_113] : memref<10x160xf32, #tpu.memory_space<vmem>>, vector<8x128xf32>
    %c0_114 = arith.constant 0 : index
    %c0_115 = arith.constant 0 : index
    %c0_116 = arith.constant 0 : index
    %139 = vector.load %arg3[%c0_114, %c0_115, %c0_116] : memref<9x128x256xf32, #tpu.memory_space<vmem>>, vector<1x128x256xf32>
    %140 = vector.shape_cast %139 : vector<1x128x256xf32> to vector<128x256xf32>
    %cst_117 = arith.constant dense<0.000000e+00> : vector<8x256xf32>
    %141 = tpu.matmul %138, %140, %cst_117 {dimension_numbers = #tpu.dot_dimension_numbers<[1], [0], [0], [1], [0, 0, 1, 1], [], []>} : vector<8x128xf32>, vector<128x256xf32>, vector<8x256xf32> -> vector<8x256xf32>
    %142 = arith.addf %137, %141 : vector<8x256xf32>
    %c0_118 = arith.constant 0 : index
    %c16_119 = arith.constant 16 : index
    %143 = vector.load %arg11[%c0_118, %c16_119] : memref<10x160xf32, #tpu.memory_space<vmem>>, vector<8x128xf32>
    %c1_120 = arith.constant 1 : index
    %c0_121 = arith.constant 0 : index
    %c0_122 = arith.constant 0 : index
    %144 = vector.load %arg3[%c1_120, %c0_121, %c0_122] : memref<9x128x256xf32, #tpu.memory_space<vmem>>, vector<1x128x256xf32>
    %145 = vector.shape_cast %144 : vector<1x128x256xf32> to vector<128x256xf32>
    %cst_123 = arith.constant dense<0.000000e+00> : vector<8x256xf32>
    %146 = tpu.matmul %143, %145, %cst_123 {dimension_numbers = #tpu.dot_dimension_numbers<[1], [0], [0], [1], [0, 0, 1, 1], [], []>} : vector<8x128xf32>, vector<128x256xf32>, vector<8x256xf32> -> vector<8x256xf32>
    %147 = arith.addf %142, %146 : vector<8x256xf32>
    %c0_124 = arith.constant 0 : index
    %c32 = arith.constant 32 : index
    %148 = vector.load %arg11[%c0_124, %c32] : memref<10x160xf32, #tpu.memory_space<vmem>>, vector<8x128xf32>
    %c2_125 = arith.constant 2 : index
    %c0_126 = arith.constant 0 : index
    %c0_127 = arith.constant 0 : index
    %149 = vector.load %arg3[%c2_125, %c0_126, %c0_127] : memref<9x128x256xf32, #tpu.memory_space<vmem>>, vector<1x128x256xf32>
    %150 = vector.shape_cast %149 : vector<1x128x256xf32> to vector<128x256xf32>
    %cst_128 = arith.constant dense<0.000000e+00> : vector<8x256xf32>
    %151 = tpu.matmul %148, %150, %cst_128 {dimension_numbers = #tpu.dot_dimension_numbers<[1], [0], [0], [1], [0, 0, 1, 1], [], []>} : vector<8x128xf32>, vector<128x256xf32>, vector<8x256xf32> -> vector<8x256xf32>
    %152 = arith.addf %147, %151 : vector<8x256xf32>
    %c1_129 = arith.constant 1 : index
    %c0_130 = arith.constant 0 : index
    %153 = vector.load %arg11[%c1_129, %c0_130] : memref<10x160xf32, #tpu.memory_space<vmem>>, vector<8x128xf32>
    %c3_131 = arith.constant 3 : index
    %c0_132 = arith.constant 0 : index
    %c0_133 = arith.constant 0 : index
    %154 = vector.load %arg3[%c3_131, %c0_132, %c0_133] : memref<9x128x256xf32, #tpu.memory_space<vmem>>, vector<1x128x256xf32>
    %155 = vector.shape_cast %154 : vector<1x128x256xf32> to vector<128x256xf32>
    %cst_134 = arith.constant dense<0.000000e+00> : vector<8x256xf32>
    %156 = tpu.matmul %153, %155, %cst_134 {dimension_numbers = #tpu.dot_dimension_numbers<[1], [0], [0], [1], [0, 0, 1, 1], [], []>} : vector<8x128xf32>, vector<128x256xf32>, vector<8x256xf32> -> vector<8x256xf32>
    %157 = arith.addf %152, %156 : vector<8x256xf32>
    %c1_135 = arith.constant 1 : index
    %c16_136 = arith.constant 16 : index
    %158 = vector.load %arg11[%c1_135, %c16_136] : memref<10x160xf32, #tpu.memory_space<vmem>>, vector<8x128xf32>
    %c4_137 = arith.constant 4 : index
    %c0_138 = arith.constant 0 : index
    %c0_139 = arith.constant 0 : index
    %159 = vector.load %arg3[%c4_137, %c0_138, %c0_139] : memref<9x128x256xf32, #tpu.memory_space<vmem>>, vector<1x128x256xf32>
    %160 = vector.shape_cast %159 : vector<1x128x256xf32> to vector<128x256xf32>
    %cst_140 = arith.constant dense<0.000000e+00> : vector<8x256xf32>
    %161 = tpu.matmul %158, %160, %cst_140 {dimension_numbers = #tpu.dot_dimension_numbers<[1], [0], [0], [1], [0, 0, 1, 1], [], []>} : vector<8x128xf32>, vector<128x256xf32>, vector<8x256xf32> -> vector<8x256xf32>
    %162 = arith.addf %157, %161 : vector<8x256xf32>
    %c1_141 = arith.constant 1 : index
    %c32_142 = arith.constant 32 : index
    %163 = vector.load %arg11[%c1_141, %c32_142] : memref<10x160xf32, #tpu.memory_space<vmem>>, vector<8x128xf32>
    %c5_143 = arith.constant 5 : index
    %c0_144 = arith.constant 0 : index
    %c0_145 = arith.constant 0 : index
    %164 = vector.load %arg3[%c5_143, %c0_144, %c0_145] : memref<9x128x256xf32, #tpu.memory_space<vmem>>, vector<1x128x256xf32>
    %165 = vector.shape_cast %164 : vector<1x128x256xf32> to vector<128x256xf32>
    %cst_146 = arith.constant dense<0.000000e+00> : vector<8x256xf32>
    %166 = tpu.matmul %163, %165, %cst_146 {dimension_numbers = #tpu.dot_dimension_numbers<[1], [0], [0], [1], [0, 0, 1, 1], [], []>} : vector<8x128xf32>, vector<128x256xf32>, vector<8x256xf32> -> vector<8x256xf32>
    %167 = arith.addf %162, %166 : vector<8x256xf32>
    %c2_147 = arith.constant 2 : index
    %c0_148 = arith.constant 0 : index
    %168 = vector.load %arg11[%c2_147, %c0_148] : memref<10x160xf32, #tpu.memory_space<vmem>>, vector<8x128xf32>
    %c6_149 = arith.constant 6 : index
    %c0_150 = arith.constant 0 : index
    %c0_151 = arith.constant 0 : index
    %169 = vector.load %arg3[%c6_149, %c0_150, %c0_151] : memref<9x128x256xf32, #tpu.memory_space<vmem>>, vector<1x128x256xf32>
    %170 = vector.shape_cast %169 : vector<1x128x256xf32> to vector<128x256xf32>
    %cst_152 = arith.constant dense<0.000000e+00> : vector<8x256xf32>
    %171 = tpu.matmul %168, %170, %cst_152 {dimension_numbers = #tpu.dot_dimension_numbers<[1], [0], [0], [1], [0, 0, 1, 1], [], []>} : vector<8x128xf32>, vector<128x256xf32>, vector<8x256xf32> -> vector<8x256xf32>
    %172 = arith.addf %167, %171 : vector<8x256xf32>
    %c2_153 = arith.constant 2 : index
    %c16_154 = arith.constant 16 : index
    %173 = vector.load %arg11[%c2_153, %c16_154] : memref<10x160xf32, #tpu.memory_space<vmem>>, vector<8x128xf32>
    %c7_155 = arith.constant 7 : index
    %c0_156 = arith.constant 0 : index
    %c0_157 = arith.constant 0 : index
    %174 = vector.load %arg3[%c7_155, %c0_156, %c0_157] : memref<9x128x256xf32, #tpu.memory_space<vmem>>, vector<1x128x256xf32>
    %175 = vector.shape_cast %174 : vector<1x128x256xf32> to vector<128x256xf32>
    %cst_158 = arith.constant dense<0.000000e+00> : vector<8x256xf32>
    %176 = tpu.matmul %173, %175, %cst_158 {dimension_numbers = #tpu.dot_dimension_numbers<[1], [0], [0], [1], [0, 0, 1, 1], [], []>} : vector<8x128xf32>, vector<128x256xf32>, vector<8x256xf32> -> vector<8x256xf32>
    %177 = arith.addf %172, %176 : vector<8x256xf32>
    %c2_159 = arith.constant 2 : index
    %c32_160 = arith.constant 32 : index
    %178 = vector.load %arg11[%c2_159, %c32_160] : memref<10x160xf32, #tpu.memory_space<vmem>>, vector<8x128xf32>
    %c8_161 = arith.constant 8 : index
    %c0_162 = arith.constant 0 : index
    %c0_163 = arith.constant 0 : index
    %179 = vector.load %arg3[%c8_161, %c0_162, %c0_163] : memref<9x128x256xf32, #tpu.memory_space<vmem>>, vector<1x128x256xf32>
    %180 = vector.shape_cast %179 : vector<1x128x256xf32> to vector<128x256xf32>
    %cst_164 = arith.constant dense<0.000000e+00> : vector<8x256xf32>
    %181 = tpu.matmul %178, %180, %cst_164 {dimension_numbers = #tpu.dot_dimension_numbers<[1], [0], [0], [1], [0, 0, 1, 1], [], []>} : vector<8x128xf32>, vector<128x256xf32>, vector<8x256xf32> -> vector<8x256xf32>
    %182 = arith.addf %177, %181 : vector<8x256xf32>
    %c0_165 = arith.constant 0 : index
    %c0_166 = arith.constant 0 : index
    %183 = vector.load %arg13[%c0_165, %c0_166] : memref<16x256xf32, #tpu.memory_space<vmem>>, vector<8x256xf32>
    tpu.vector_store %arg13[%c0_165, %c0_166], %182 {strides = array<i32>} : memref<16x256xf32, #tpu.memory_space<vmem>>, vector<8x256xf32>,
    %c0_167 = arith.constant 0 : index
    %c0_168 = arith.constant 0 : index
    %184 = vector.load %arg4[%c0_167, %c0_168] : memref<1x128xf32, #tpu.memory_space<vmem>>, vector<1x128xf32>
    %c0_169 = arith.constant 0 : index
    %c0_170 = arith.constant 0 : index
    %185 = vector.load %arg13[%c0_169, %c0_170] : memref<16x256xf32, #tpu.memory_space<vmem>>, vector<1x256xf32>
    %c1_171 = arith.constant 1 : index
    %c0_172 = arith.constant 0 : index
    %186 = vector.load %arg13[%c1_171, %c0_172] : memref<16x256xf32, #tpu.memory_space<vmem>>, vector<1x256xf32>
    %187 = arith.maximumf %185, %186 : vector<1x256xf32>
    %188 = vector.extract_strided_slice %187 {offsets = [0, 0], sizes = [1, 128], strides = [1, 1]} : vector<1x256xf32> to vector<1x128xf32>
    %189 = vector.extract_strided_slice %187 {offsets = [0, 128], sizes = [1, 128], strides = [1, 1]} : vector<1x256xf32> to vector<1x128xf32>
    %190 = arith.maximumf %188, %189 : vector<1x128xf32>
    %191 = arith.addf %190, %184 : vector<1x128xf32>
    %cst_173 = arith.constant 0.000000e+00 : f32
    %192 = vector.broadcast %cst_173 : f32 to vector<1x128xf32>
    %193 = arith.maximumf %191, %192 : vector<1x128xf32>
    %c1_174 = arith.constant 1 : index
    %c32_175 = arith.constant 32 : index
    %194 = vector.load %arg12[%c1_174, %c32_175] : memref<6x192xf32, #tpu.memory_space<vmem>>, vector<1x128xf32>
    tpu.vector_store %arg12[%c1_174, %c32_175], %193 {strides = array<i32>} : memref<6x192xf32, #tpu.memory_space<vmem>>, vector<1x128xf32>,
    %c2_176 = arith.constant 2 : index
    %c0_177 = arith.constant 0 : index
    %195 = vector.load %arg13[%c2_176, %c0_177] : memref<16x256xf32, #tpu.memory_space<vmem>>, vector<1x256xf32>
    %c3_178 = arith.constant 3 : index
    %c0_179 = arith.constant 0 : index
    %196 = vector.load %arg13[%c3_178, %c0_179] : memref<16x256xf32, #tpu.memory_space<vmem>>, vector<1x256xf32>
    %197 = arith.maximumf %195, %196 : vector<1x256xf32>
    %198 = vector.extract_strided_slice %197 {offsets = [0, 0], sizes = [1, 128], strides = [1, 1]} : vector<1x256xf32> to vector<1x128xf32>
    %199 = vector.extract_strided_slice %197 {offsets = [0, 128], sizes = [1, 128], strides = [1, 1]} : vector<1x256xf32> to vector<1x128xf32>
    %200 = arith.maximumf %198, %199 : vector<1x128xf32>
    %201 = arith.addf %200, %184 : vector<1x128xf32>
    %cst_180 = arith.constant 0.000000e+00 : f32
    %202 = vector.broadcast %cst_180 : f32 to vector<1x128xf32>
    %203 = arith.maximumf %201, %202 : vector<1x128xf32>
    %c2_181 = arith.constant 2 : index
    %c32_182 = arith.constant 32 : index
    %204 = vector.load %arg12[%c2_181, %c32_182] : memref<6x192xf32, #tpu.memory_space<vmem>>, vector<1x128xf32>
    tpu.vector_store %arg12[%c2_181, %c32_182], %203 {strides = array<i32>} : memref<6x192xf32, #tpu.memory_space<vmem>>, vector<1x128xf32>,
    %c4_183 = arith.constant 4 : index
    %c0_184 = arith.constant 0 : index
    %205 = vector.load %arg13[%c4_183, %c0_184] : memref<16x256xf32, #tpu.memory_space<vmem>>, vector<1x256xf32>
    %c5_185 = arith.constant 5 : index
    %c0_186 = arith.constant 0 : index
    %206 = vector.load %arg13[%c5_185, %c0_186] : memref<16x256xf32, #tpu.memory_space<vmem>>, vector<1x256xf32>
    %207 = arith.maximumf %205, %206 : vector<1x256xf32>
    %208 = vector.extract_strided_slice %207 {offsets = [0, 0], sizes = [1, 128], strides = [1, 1]} : vector<1x256xf32> to vector<1x128xf32>
    %209 = vector.extract_strided_slice %207 {offsets = [0, 128], sizes = [1, 128], strides = [1, 1]} : vector<1x256xf32> to vector<1x128xf32>
    %210 = arith.maximumf %208, %209 : vector<1x128xf32>
    %211 = arith.addf %210, %184 : vector<1x128xf32>
    %cst_187 = arith.constant 0.000000e+00 : f32
    %212 = vector.broadcast %cst_187 : f32 to vector<1x128xf32>
    %213 = arith.maximumf %211, %212 : vector<1x128xf32>
    %c3_188 = arith.constant 3 : index
    %c32_189 = arith.constant 32 : index
    %214 = vector.load %arg12[%c3_188, %c32_189] : memref<6x192xf32, #tpu.memory_space<vmem>>, vector<1x128xf32>
    tpu.vector_store %arg12[%c3_188, %c32_189], %213 {strides = array<i32>} : memref<6x192xf32, #tpu.memory_space<vmem>>, vector<1x128xf32>,
    %c6_190 = arith.constant 6 : index
    %c0_191 = arith.constant 0 : index
    %215 = vector.load %arg13[%c6_190, %c0_191] : memref<16x256xf32, #tpu.memory_space<vmem>>, vector<1x256xf32>
    %c7_192 = arith.constant 7 : index
    %c0_193 = arith.constant 0 : index
    %216 = vector.load %arg13[%c7_192, %c0_193] : memref<16x256xf32, #tpu.memory_space<vmem>>, vector<1x256xf32>
    %217 = arith.maximumf %215, %216 : vector<1x256xf32>
    %218 = vector.extract_strided_slice %217 {offsets = [0, 0], sizes = [1, 128], strides = [1, 1]} : vector<1x256xf32> to vector<1x128xf32>
    %219 = vector.extract_strided_slice %217 {offsets = [0, 128], sizes = [1, 128], strides = [1, 1]} : vector<1x256xf32> to vector<1x128xf32>
    %220 = arith.maximumf %218, %219 : vector<1x128xf32>
    %221 = arith.addf %220, %184 : vector<1x128xf32>
    %cst_194 = arith.constant 0.000000e+00 : f32
    %222 = vector.broadcast %cst_194 : f32 to vector<1x128xf32>
    %223 = arith.maximumf %221, %222 : vector<1x128xf32>
    %c4_195 = arith.constant 4 : index
    %c32_196 = arith.constant 32 : index
    %224 = vector.load %arg12[%c4_195, %c32_196] : memref<6x192xf32, #tpu.memory_space<vmem>>, vector<1x128xf32>
    tpu.vector_store %arg12[%c4_195, %c32_196], %223 {strides = array<i32>} : memref<6x192xf32, #tpu.memory_space<vmem>>, vector<1x128xf32>,
    %cst_197 = arith.constant 0.000000e+00 : f32
    %225 = vector.broadcast %cst_197 : f32 to vector<4x256xf32>
    %c0_198 = arith.constant 0 : index
    %c0_199 = arith.constant 0 : index
    %226 = vector.load %arg12[%c0_198, %c0_199] : memref<6x192xf32, #tpu.memory_space<vmem>>, vector<4x128xf32>
    %c0_200 = arith.constant 0 : index
    %c0_201 = arith.constant 0 : index
    %c0_202 = arith.constant 0 : index
    %227 = vector.load %arg5[%c0_200, %c0_201, %c0_202] : memref<9x128x256xf32, #tpu.memory_space<vmem>>, vector<1x128x256xf32>
    %228 = vector.shape_cast %227 : vector<1x128x256xf32> to vector<128x256xf32>
    %cst_203 = arith.constant dense<0.000000e+00> : vector<4x256xf32>
    %229 = tpu.matmul %226, %228, %cst_203 {dimension_numbers = #tpu.dot_dimension_numbers<[1], [0], [0], [1], [0, 0, 1, 1], [], []>} : vector<4x128xf32>, vector<128x256xf32>, vector<4x256xf32> -> vector<4x256xf32>
    %230 = arith.addf %225, %229 : vector<4x256xf32>
    %c0_204 = arith.constant 0 : index
    %c32_205 = arith.constant 32 : index
    %231 = vector.load %arg12[%c0_204, %c32_205] : memref<6x192xf32, #tpu.memory_space<vmem>>, vector<4x128xf32>
    %c1_206 = arith.constant 1 : index
    %c0_207 = arith.constant 0 : index
    %c0_208 = arith.constant 0 : index
    %232 = vector.load %arg5[%c1_206, %c0_207, %c0_208] : memref<9x128x256xf32, #tpu.memory_space<vmem>>, vector<1x128x256xf32>
    %233 = vector.shape_cast %232 : vector<1x128x256xf32> to vector<128x256xf32>
    %cst_209 = arith.constant dense<0.000000e+00> : vector<4x256xf32>
    %234 = tpu.matmul %231, %233, %cst_209 {dimension_numbers = #tpu.dot_dimension_numbers<[1], [0], [0], [1], [0, 0, 1, 1], [], []>} : vector<4x128xf32>, vector<128x256xf32>, vector<4x256xf32> -> vector<4x256xf32>
    %235 = arith.addf %230, %234 : vector<4x256xf32>
    %c0_210 = arith.constant 0 : index
    %c64 = arith.constant 64 : index
    %236 = vector.load %arg12[%c0_210, %c64] : memref<6x192xf32, #tpu.memory_space<vmem>>, vector<4x128xf32>
    %c2_211 = arith.constant 2 : index
    %c0_212 = arith.constant 0 : index
    %c0_213 = arith.constant 0 : index
    %237 = vector.load %arg5[%c2_211, %c0_212, %c0_213] : memref<9x128x256xf32, #tpu.memory_space<vmem>>, vector<1x128x256xf32>
    %238 = vector.shape_cast %237 : vector<1x128x256xf32> to vector<128x256xf32>
    %cst_214 = arith.constant dense<0.000000e+00> : vector<4x256xf32>
    %239 = tpu.matmul %236, %238, %cst_214 {dimension_numbers = #tpu.dot_dimension_numbers<[1], [0], [0], [1], [0, 0, 1, 1], [], []>} : vector<4x128xf32>, vector<128x256xf32>, vector<4x256xf32> -> vector<4x256xf32>
    %240 = arith.addf %235, %239 : vector<4x256xf32>
    %c1_215 = arith.constant 1 : index
    %c0_216 = arith.constant 0 : index
    %241 = vector.load %arg12[%c1_215, %c0_216] : memref<6x192xf32, #tpu.memory_space<vmem>>, vector<4x128xf32>
    %c3_217 = arith.constant 3 : index
    %c0_218 = arith.constant 0 : index
    %c0_219 = arith.constant 0 : index
    %242 = vector.load %arg5[%c3_217, %c0_218, %c0_219] : memref<9x128x256xf32, #tpu.memory_space<vmem>>, vector<1x128x256xf32>
    %243 = vector.shape_cast %242 : vector<1x128x256xf32> to vector<128x256xf32>
    %cst_220 = arith.constant dense<0.000000e+00> : vector<4x256xf32>
    %244 = tpu.matmul %241, %243, %cst_220 {dimension_numbers = #tpu.dot_dimension_numbers<[1], [0], [0], [1], [0, 0, 1, 1], [], []>} : vector<4x128xf32>, vector<128x256xf32>, vector<4x256xf32> -> vector<4x256xf32>
    %245 = arith.addf %240, %244 : vector<4x256xf32>
    %c1_221 = arith.constant 1 : index
    %c32_222 = arith.constant 32 : index
    %246 = vector.load %arg12[%c1_221, %c32_222] : memref<6x192xf32, #tpu.memory_space<vmem>>, vector<4x128xf32>
    %c4_223 = arith.constant 4 : index
    %c0_224 = arith.constant 0 : index
    %c0_225 = arith.constant 0 : index
    %247 = vector.load %arg5[%c4_223, %c0_224, %c0_225] : memref<9x128x256xf32, #tpu.memory_space<vmem>>, vector<1x128x256xf32>
    %248 = vector.shape_cast %247 : vector<1x128x256xf32> to vector<128x256xf32>
    %cst_226 = arith.constant dense<0.000000e+00> : vector<4x256xf32>
    %249 = tpu.matmul %246, %248, %cst_226 {dimension_numbers = #tpu.dot_dimension_numbers<[1], [0], [0], [1], [0, 0, 1, 1], [], []>} : vector<4x128xf32>, vector<128x256xf32>, vector<4x256xf32> -> vector<4x256xf32>
    %250 = arith.addf %245, %249 : vector<4x256xf32>
    %c1_227 = arith.constant 1 : index
    %c64_228 = arith.constant 64 : index
    %251 = vector.load %arg12[%c1_227, %c64_228] : memref<6x192xf32, #tpu.memory_space<vmem>>, vector<4x128xf32>
    %c5_229 = arith.constant 5 : index
    %c0_230 = arith.constant 0 : index
    %c0_231 = arith.constant 0 : index
    %252 = vector.load %arg5[%c5_229, %c0_230, %c0_231] : memref<9x128x256xf32, #tpu.memory_space<vmem>>, vector<1x128x256xf32>
    %253 = vector.shape_cast %252 : vector<1x128x256xf32> to vector<128x256xf32>
    %cst_232 = arith.constant dense<0.000000e+00> : vector<4x256xf32>
    %254 = tpu.matmul %251, %253, %cst_232 {dimension_numbers = #tpu.dot_dimension_numbers<[1], [0], [0], [1], [0, 0, 1, 1], [], []>} : vector<4x128xf32>, vector<128x256xf32>, vector<4x256xf32> -> vector<4x256xf32>
    %255 = arith.addf %250, %254 : vector<4x256xf32>
    %c2_233 = arith.constant 2 : index
    %c0_234 = arith.constant 0 : index
    %256 = vector.load %arg12[%c2_233, %c0_234] : memref<6x192xf32, #tpu.memory_space<vmem>>, vector<4x128xf32>
    %c6_235 = arith.constant 6 : index
    %c0_236 = arith.constant 0 : index
    %c0_237 = arith.constant 0 : index
    %257 = vector.load %arg5[%c6_235, %c0_236, %c0_237] : memref<9x128x256xf32, #tpu.memory_space<vmem>>, vector<1x128x256xf32>
    %258 = vector.shape_cast %257 : vector<1x128x256xf32> to vector<128x256xf32>
    %cst_238 = arith.constant dense<0.000000e+00> : vector<4x256xf32>
    %259 = tpu.matmul %256, %258, %cst_238 {dimension_numbers = #tpu.dot_dimension_numbers<[1], [0], [0], [1], [0, 0, 1, 1], [], []>} : vector<4x128xf32>, vector<128x256xf32>, vector<4x256xf32> -> vector<4x256xf32>
    %260 = arith.addf %255, %259 : vector<4x256xf32>
    %c2_239 = arith.constant 2 : index
    %c32_240 = arith.constant 32 : index
    %261 = vector.load %arg12[%c2_239, %c32_240] : memref<6x192xf32, #tpu.memory_space<vmem>>, vector<4x128xf32>
    %c7_241 = arith.constant 7 : index
    %c0_242 = arith.constant 0 : index
    %c0_243 = arith.constant 0 : index
    %262 = vector.load %arg5[%c7_241, %c0_242, %c0_243] : memref<9x128x256xf32, #tpu.memory_space<vmem>>, vector<1x128x256xf32>
    %263 = vector.shape_cast %262 : vector<1x128x256xf32> to vector<128x256xf32>
    %cst_244 = arith.constant dense<0.000000e+00> : vector<4x256xf32>
    %264 = tpu.matmul %261, %263, %cst_244 {dimension_numbers = #tpu.dot_dimension_numbers<[1], [0], [0], [1], [0, 0, 1, 1], [], []>} : vector<4x128xf32>, vector<128x256xf32>, vector<4x256xf32> -> vector<4x256xf32>
    %265 = arith.addf %260, %264 : vector<4x256xf32>
    %c2_245 = arith.constant 2 : index
    %c64_246 = arith.constant 64 : index
    %266 = vector.load %arg12[%c2_245, %c64_246] : memref<6x192xf32, #tpu.memory_space<vmem>>, vector<4x128xf32>
    %c8_247 = arith.constant 8 : index
    %c0_248 = arith.constant 0 : index
    %c0_249 = arith.constant 0 : index
    %267 = vector.load %arg5[%c8_247, %c0_248, %c0_249] : memref<9x128x256xf32, #tpu.memory_space<vmem>>, vector<1x128x256xf32>
    %268 = vector.shape_cast %267 : vector<1x128x256xf32> to vector<128x256xf32>
    %cst_250 = arith.constant dense<0.000000e+00> : vector<4x256xf32>
    %269 = tpu.matmul %266, %268, %cst_250 {dimension_numbers = #tpu.dot_dimension_numbers<[1], [0], [0], [1], [0, 0, 1, 1], [], []>} : vector<4x128xf32>, vector<128x256xf32>, vector<4x256xf32> -> vector<4x256xf32>
    %270 = arith.addf %265, %269 : vector<4x256xf32>
    %c0_251 = arith.constant 0 : index
    %c0_252 = arith.constant 0 : index
    %271 = vector.load %arg13[%c0_251, %c0_252] : memref<16x256xf32, #tpu.memory_space<vmem>>, vector<4x256xf32>
    tpu.vector_store %arg13[%c0_251, %c0_252], %270 {strides = array<i32>} : memref<16x256xf32, #tpu.memory_space<vmem>>, vector<4x256xf32>,
    %c0_253 = arith.constant 0 : index
    %c0_254 = arith.constant 0 : index
    %272 = vector.load %arg6[%c0_253, %c0_254] : memref<1x128xf32, #tpu.memory_space<vmem>>, vector<1x128xf32>
    %c0_255 = arith.constant 0 : index
    %c0_256 = arith.constant 0 : index
    %273 = vector.load %arg13[%c0_255, %c0_256] : memref<16x256xf32, #tpu.memory_space<vmem>>, vector<1x256xf32>
    %c1_257 = arith.constant 1 : index
    %c0_258 = arith.constant 0 : index
    %274 = vector.load %arg13[%c1_257, %c0_258] : memref<16x256xf32, #tpu.memory_space<vmem>>, vector<1x256xf32>
    %275 = arith.maximumf %273, %274 : vector<1x256xf32>
    %276 = vector.extract_strided_slice %275 {offsets = [0, 0], sizes = [1, 128], strides = [1, 1]} : vector<1x256xf32> to vector<1x128xf32>
    %277 = vector.extract_strided_slice %275 {offsets = [0, 128], sizes = [1, 128], strides = [1, 1]} : vector<1x256xf32> to vector<1x128xf32>
    %278 = arith.maximumf %276, %277 : vector<1x128xf32>
    %279 = arith.addf %278, %272 : vector<1x128xf32>
    %cst_259 = arith.constant 0.000000e+00 : f32
    %280 = vector.broadcast %cst_259 : f32 to vector<1x128xf32>
    %281 = arith.maximumf %279, %280 : vector<1x128xf32>
    %c0_260 = arith.constant 0 : index
    %c0_261 = arith.constant 0 : index
    %282 = vector.load %arg7[%c0_260, %c0_261] : memref<128x12xf32, #tpu.memory_space<vmem>>, vector<128x12xf32>
    %cst_262 = arith.constant dense<0.000000e+00> : vector<1x12xf32>
    %283 = tpu.matmul %281, %282, %cst_262 {dimension_numbers = #tpu.dot_dimension_numbers<[1], [0], [0], [1], [0, 0, 1, 1], [], []>} : vector<1x128xf32>, vector<128x12xf32>, vector<1x12xf32> -> vector<1x12xf32>
    %c0_263 = arith.constant 0 : index
    %c0_264 = arith.constant 0 : index
    %284 = vector.load %arg8[%c0_263, %c0_264] : memref<1x12xf32, #tpu.memory_space<vmem>>, vector<1x12xf32>
    %285 = arith.addf %283, %284 : vector<1x12xf32>
    %c0_265 = arith.constant 0 : index
    %c0_266 = arith.constant 0 : index
    %286 = vector.load %arg9[%c0_265, %c0_266] : memref<4x12xf32, #tpu.memory_space<vmem>>, vector<1x12xf32>
    tpu.vector_store %arg9[%c0_265, %c0_266], %285 {strides = array<i32>} : memref<4x12xf32, #tpu.memory_space<vmem>>, vector<1x12xf32>,
    %c2_267 = arith.constant 2 : index
    %c0_268 = arith.constant 0 : index
    %287 = vector.load %arg13[%c2_267, %c0_268] : memref<16x256xf32, #tpu.memory_space<vmem>>, vector<1x256xf32>
    %c3_269 = arith.constant 3 : index
    %c0_270 = arith.constant 0 : index
    %288 = vector.load %arg13[%c3_269, %c0_270] : memref<16x256xf32, #tpu.memory_space<vmem>>, vector<1x256xf32>
    %289 = arith.maximumf %287, %288 : vector<1x256xf32>
    %290 = vector.extract_strided_slice %289 {offsets = [0, 0], sizes = [1, 128], strides = [1, 1]} : vector<1x256xf32> to vector<1x128xf32>
    %291 = vector.extract_strided_slice %289 {offsets = [0, 128], sizes = [1, 128], strides = [1, 1]} : vector<1x256xf32> to vector<1x128xf32>
    %292 = arith.maximumf %290, %291 : vector<1x128xf32>
    %293 = arith.addf %292, %272 : vector<1x128xf32>
    %cst_271 = arith.constant 0.000000e+00 : f32
    %294 = vector.broadcast %cst_271 : f32 to vector<1x128xf32>
    %295 = arith.maximumf %293, %294 : vector<1x128xf32>
    %c0_272 = arith.constant 0 : index
    %c0_273 = arith.constant 0 : index
    %296 = vector.load %arg7[%c0_272, %c0_273] : memref<128x12xf32, #tpu.memory_space<vmem>>, vector<128x12xf32>
    %cst_274 = arith.constant dense<0.000000e+00> : vector<1x12xf32>
    %297 = tpu.matmul %295, %296, %cst_274 {dimension_numbers = #tpu.dot_dimension_numbers<[1], [0], [0], [1], [0, 0, 1, 1], [], []>} : vector<1x128xf32>, vector<128x12xf32>, vector<1x12xf32> -> vector<1x12xf32>
    %c0_275 = arith.constant 0 : index
    %c0_276 = arith.constant 0 : index
    %298 = vector.load %arg8[%c0_275, %c0_276] : memref<1x12xf32, #tpu.memory_space<vmem>>, vector<1x12xf32>
    %299 = arith.addf %297, %298 : vector<1x12xf32>
    %c1_277 = arith.constant 1 : index
    %c0_278 = arith.constant 0 : index
    %300 = vector.load %arg9[%c1_277, %c0_278] : memref<4x12xf32, #tpu.memory_space<vmem>>, vector<1x12xf32>
    tpu.vector_store %arg9[%c1_277, %c0_278], %299 {strides = array<i32>} : memref<4x12xf32, #tpu.memory_space<vmem>>, vector<1x12xf32>,
    %c1_279 = arith.constant 1 : index
    %c0_280 = arith.constant 0 : index
    %c0_281 = arith.constant 0 : index
    %301 = vector.load %arg0[%c1_279, %c0_280, %c0_281] : memref<2x16x48xf32, #tpu.memory_space<vmem>>, vector<1x16x48xf32>
    %302 = vector.shape_cast %301 : vector<1x16x48xf32> to vector<16x48xf32>
    %c1_282 = arith.constant 1 : index
    %c3_283 = arith.constant 3 : index
    %303 = vector.load %arg10[%c1_282, %c3_283] : memref<18x54xf32, #tpu.memory_space<vmem>>, vector<16x48xf32>
    tpu.vector_store %arg10[%c1_282, %c3_283], %302 {strides = array<i32>} : memref<18x54xf32, #tpu.memory_space<vmem>>, vector<16x48xf32>,
    %cst_284 = arith.constant 0.000000e+00 : f32
    %304 = vector.broadcast %cst_284 : f32 to vector<16x256xf32>
    %c0_285 = arith.constant 0 : index
    %c0_286 = arith.constant 0 : index
    %305 = vector.load %arg10[%c0_285, %c0_286] : memref<18x54xf32, #tpu.memory_space<vmem>>, vector<16x48xf32>
    %c0_287 = arith.constant 0 : index
    %c0_288 = arith.constant 0 : index
    %c0_289 = arith.constant 0 : index
    %306 = vector.load %arg1[%c0_287, %c0_288, %c0_289] : memref<9x48x256xf32, #tpu.memory_space<vmem>>, vector<1x48x256xf32>
    %307 = vector.shape_cast %306 : vector<1x48x256xf32> to vector<48x256xf32>
    %cst_290 = arith.constant dense<0.000000e+00> : vector<16x256xf32>
    %308 = tpu.matmul %305, %307, %cst_290 {dimension_numbers = #tpu.dot_dimension_numbers<[1], [0], [0], [1], [0, 0, 1, 1], [], []>} : vector<16x48xf32>, vector<48x256xf32>, vector<16x256xf32> -> vector<16x256xf32>
    %309 = arith.addf %304, %308 : vector<16x256xf32>
    %c0_291 = arith.constant 0 : index
    %c3_292 = arith.constant 3 : index
    %310 = vector.load %arg10[%c0_291, %c3_292] : memref<18x54xf32, #tpu.memory_space<vmem>>, vector<16x48xf32>
    %c1_293 = arith.constant 1 : index
    %c0_294 = arith.constant 0 : index
    %c0_295 = arith.constant 0 : index
    %311 = vector.load %arg1[%c1_293, %c0_294, %c0_295] : memref<9x48x256xf32, #tpu.memory_space<vmem>>, vector<1x48x256xf32>
    %312 = vector.shape_cast %311 : vector<1x48x256xf32> to vector<48x256xf32>
    %cst_296 = arith.constant dense<0.000000e+00> : vector<16x256xf32>
    %313 = tpu.matmul %310, %312, %cst_296 {dimension_numbers = #tpu.dot_dimension_numbers<[1], [0], [0], [1], [0, 0, 1, 1], [], []>} : vector<16x48xf32>, vector<48x256xf32>, vector<16x256xf32> -> vector<16x256xf32>
    %314 = arith.addf %309, %313 : vector<16x256xf32>
    %c0_297 = arith.constant 0 : index
    %c6_298 = arith.constant 6 : index
    %315 = vector.load %arg10[%c0_297, %c6_298] : memref<18x54xf32, #tpu.memory_space<vmem>>, vector<16x48xf32>
    %c2_299 = arith.constant 2 : index
    %c0_300 = arith.constant 0 : index
    %c0_301 = arith.constant 0 : index
    %316 = vector.load %arg1[%c2_299, %c0_300, %c0_301] : memref<9x48x256xf32, #tpu.memory_space<vmem>>, vector<1x48x256xf32>
    %317 = vector.shape_cast %316 : vector<1x48x256xf32> to vector<48x256xf32>
    %cst_302 = arith.constant dense<0.000000e+00> : vector<16x256xf32>
    %318 = tpu.matmul %315, %317, %cst_302 {dimension_numbers = #tpu.dot_dimension_numbers<[1], [0], [0], [1], [0, 0, 1, 1], [], []>} : vector<16x48xf32>, vector<48x256xf32>, vector<16x256xf32> -> vector<16x256xf32>
    %319 = arith.addf %314, %318 : vector<16x256xf32>
    %c1_303 = arith.constant 1 : index
    %c0_304 = arith.constant 0 : index
    %320 = vector.load %arg10[%c1_303, %c0_304] : memref<18x54xf32, #tpu.memory_space<vmem>>, vector<16x48xf32>
    %c3_305 = arith.constant 3 : index
    %c0_306 = arith.constant 0 : index
    %c0_307 = arith.constant 0 : index
    %321 = vector.load %arg1[%c3_305, %c0_306, %c0_307] : memref<9x48x256xf32, #tpu.memory_space<vmem>>, vector<1x48x256xf32>
    %322 = vector.shape_cast %321 : vector<1x48x256xf32> to vector<48x256xf32>
    %cst_308 = arith.constant dense<0.000000e+00> : vector<16x256xf32>
    %323 = tpu.matmul %320, %322, %cst_308 {dimension_numbers = #tpu.dot_dimension_numbers<[1], [0], [0], [1], [0, 0, 1, 1], [], []>} : vector<16x48xf32>, vector<48x256xf32>, vector<16x256xf32> -> vector<16x256xf32>
    %324 = arith.addf %319, %323 : vector<16x256xf32>
    %c1_309 = arith.constant 1 : index
    %c3_310 = arith.constant 3 : index
    %325 = vector.load %arg10[%c1_309, %c3_310] : memref<18x54xf32, #tpu.memory_space<vmem>>, vector<16x48xf32>
    %c4_311 = arith.constant 4 : index
    %c0_312 = arith.constant 0 : index
    %c0_313 = arith.constant 0 : index
    %326 = vector.load %arg1[%c4_311, %c0_312, %c0_313] : memref<9x48x256xf32, #tpu.memory_space<vmem>>, vector<1x48x256xf32>
    %327 = vector.shape_cast %326 : vector<1x48x256xf32> to vector<48x256xf32>
    %cst_314 = arith.constant dense<0.000000e+00> : vector<16x256xf32>
    %328 = tpu.matmul %325, %327, %cst_314 {dimension_numbers = #tpu.dot_dimension_numbers<[1], [0], [0], [1], [0, 0, 1, 1], [], []>} : vector<16x48xf32>, vector<48x256xf32>, vector<16x256xf32> -> vector<16x256xf32>
    %329 = arith.addf %324, %328 : vector<16x256xf32>
    %c1_315 = arith.constant 1 : index
    %c6_316 = arith.constant 6 : index
    %330 = vector.load %arg10[%c1_315, %c6_316] : memref<18x54xf32, #tpu.memory_space<vmem>>, vector<16x48xf32>
    %c5_317 = arith.constant 5 : index
    %c0_318 = arith.constant 0 : index
    %c0_319 = arith.constant 0 : index
    %331 = vector.load %arg1[%c5_317, %c0_318, %c0_319] : memref<9x48x256xf32, #tpu.memory_space<vmem>>, vector<1x48x256xf32>
    %332 = vector.shape_cast %331 : vector<1x48x256xf32> to vector<48x256xf32>
    %cst_320 = arith.constant dense<0.000000e+00> : vector<16x256xf32>
    %333 = tpu.matmul %330, %332, %cst_320 {dimension_numbers = #tpu.dot_dimension_numbers<[1], [0], [0], [1], [0, 0, 1, 1], [], []>} : vector<16x48xf32>, vector<48x256xf32>, vector<16x256xf32> -> vector<16x256xf32>
    %334 = arith.addf %329, %333 : vector<16x256xf32>
    %c2_321 = arith.constant 2 : index
    %c0_322 = arith.constant 0 : index
    %335 = vector.load %arg10[%c2_321, %c0_322] : memref<18x54xf32, #tpu.memory_space<vmem>>, vector<16x48xf32>
    %c6_323 = arith.constant 6 : index
    %c0_324 = arith.constant 0 : index
    %c0_325 = arith.constant 0 : index
    %336 = vector.load %arg1[%c6_323, %c0_324, %c0_325] : memref<9x48x256xf32, #tpu.memory_space<vmem>>, vector<1x48x256xf32>
    %337 = vector.shape_cast %336 : vector<1x48x256xf32> to vector<48x256xf32>
    %cst_326 = arith.constant dense<0.000000e+00> : vector<16x256xf32>
    %338 = tpu.matmul %335, %337, %cst_326 {dimension_numbers = #tpu.dot_dimension_numbers<[1], [0], [0], [1], [0, 0, 1, 1], [], []>} : vector<16x48xf32>, vector<48x256xf32>, vector<16x256xf32> -> vector<16x256xf32>
    %339 = arith.addf %334, %338 : vector<16x256xf32>
    %c2_327 = arith.constant 2 : index
    %c3_328 = arith.constant 3 : index
    %340 = vector.load %arg10[%c2_327, %c3_328] : memref<18x54xf32, #tpu.memory_space<vmem>>, vector<16x48xf32>
    %c7_329 = arith.constant 7 : index
    %c0_330 = arith.constant 0 : index
    %c0_331 = arith.constant 0 : index
    %341 = vector.load %arg1[%c7_329, %c0_330, %c0_331] : memref<9x48x256xf32, #tpu.memory_space<vmem>>, vector<1x48x256xf32>
    %342 = vector.shape_cast %341 : vector<1x48x256xf32> to vector<48x256xf32>
    %cst_332 = arith.constant dense<0.000000e+00> : vector<16x256xf32>
    %343 = tpu.matmul %340, %342, %cst_332 {dimension_numbers = #tpu.dot_dimension_numbers<[1], [0], [0], [1], [0, 0, 1, 1], [], []>} : vector<16x48xf32>, vector<48x256xf32>, vector<16x256xf32> -> vector<16x256xf32>
    %344 = arith.addf %339, %343 : vector<16x256xf32>
    %c2_333 = arith.constant 2 : index
    %c6_334 = arith.constant 6 : index
    %345 = vector.load %arg10[%c2_333, %c6_334] : memref<18x54xf32, #tpu.memory_space<vmem>>, vector<16x48xf32>
    %c8_335 = arith.constant 8 : index
    %c0_336 = arith.constant 0 : index
    %c0_337 = arith.constant 0 : index
    %346 = vector.load %arg1[%c8_335, %c0_336, %c0_337] : memref<9x48x256xf32, #tpu.memory_space<vmem>>, vector<1x48x256xf32>
    %347 = vector.shape_cast %346 : vector<1x48x256xf32> to vector<48x256xf32>
    %cst_338 = arith.constant dense<0.000000e+00> : vector<16x256xf32>
    %348 = tpu.matmul %345, %347, %cst_338 {dimension_numbers = #tpu.dot_dimension_numbers<[1], [0], [0], [1], [0, 0, 1, 1], [], []>} : vector<16x48xf32>, vector<48x256xf32>, vector<16x256xf32> -> vector<16x256xf32>
    %349 = arith.addf %344, %348 : vector<16x256xf32>
    %c0_339 = arith.constant 0 : index
    %c0_340 = arith.constant 0 : index
    %350 = vector.load %arg13[%c0_339, %c0_340] : memref<16x256xf32, #tpu.memory_space<vmem>>, vector<16x256xf32>
    tpu.vector_store %arg13[%c0_339, %c0_340], %349 {strides = array<i32>} : memref<16x256xf32, #tpu.memory_space<vmem>>, vector<16x256xf32>,
    %c0_341 = arith.constant 0 : index
    %c0_342 = arith.constant 0 : index
    %351 = vector.load %arg2[%c0_341, %c0_342] : memref<1x128xf32, #tpu.memory_space<vmem>>, vector<1x128xf32>
    %c0_343 = arith.constant 0 : index
    %c0_344 = arith.constant 0 : index
    %352 = vector.load %arg13[%c0_343, %c0_344] : memref<16x256xf32, #tpu.memory_space<vmem>>, vector<1x256xf32>
    %c1_345 = arith.constant 1 : index
    %c0_346 = arith.constant 0 : index
    %353 = vector.load %arg13[%c1_345, %c0_346] : memref<16x256xf32, #tpu.memory_space<vmem>>, vector<1x256xf32>
    %354 = arith.maximumf %352, %353 : vector<1x256xf32>
    %355 = vector.extract_strided_slice %354 {offsets = [0, 0], sizes = [1, 128], strides = [1, 1]} : vector<1x256xf32> to vector<1x128xf32>
    %356 = vector.extract_strided_slice %354 {offsets = [0, 128], sizes = [1, 128], strides = [1, 1]} : vector<1x256xf32> to vector<1x128xf32>
    %357 = arith.maximumf %355, %356 : vector<1x128xf32>
    %358 = arith.addf %357, %351 : vector<1x128xf32>
    %cst_347 = arith.constant 0.000000e+00 : f32
    %359 = vector.broadcast %cst_347 : f32 to vector<1x128xf32>
    %360 = arith.maximumf %358, %359 : vector<1x128xf32>
    %c1_348 = arith.constant 1 : index
    %c16_349 = arith.constant 16 : index
    %361 = vector.load %arg11[%c1_348, %c16_349] : memref<10x160xf32, #tpu.memory_space<vmem>>, vector<1x128xf32>
    tpu.vector_store %arg11[%c1_348, %c16_349], %360 {strides = array<i32>} : memref<10x160xf32, #tpu.memory_space<vmem>>, vector<1x128xf32>,
    %c2_350 = arith.constant 2 : index
    %c0_351 = arith.constant 0 : index
    %362 = vector.load %arg13[%c2_350, %c0_351] : memref<16x256xf32, #tpu.memory_space<vmem>>, vector<1x256xf32>
    %c3_352 = arith.constant 3 : index
    %c0_353 = arith.constant 0 : index
    %363 = vector.load %arg13[%c3_352, %c0_353] : memref<16x256xf32, #tpu.memory_space<vmem>>, vector<1x256xf32>
    %364 = arith.maximumf %362, %363 : vector<1x256xf32>
    %365 = vector.extract_strided_slice %364 {offsets = [0, 0], sizes = [1, 128], strides = [1, 1]} : vector<1x256xf32> to vector<1x128xf32>
    %366 = vector.extract_strided_slice %364 {offsets = [0, 128], sizes = [1, 128], strides = [1, 1]} : vector<1x256xf32> to vector<1x128xf32>
    %367 = arith.maximumf %365, %366 : vector<1x128xf32>
    %368 = arith.addf %367, %351 : vector<1x128xf32>
    %cst_354 = arith.constant 0.000000e+00 : f32
    %369 = vector.broadcast %cst_354 : f32 to vector<1x128xf32>
    %370 = arith.maximumf %368, %369 : vector<1x128xf32>
    %c2_355 = arith.constant 2 : index
    %c16_356 = arith.constant 16 : index
    %371 = vector.load %arg11[%c2_355, %c16_356] : memref<10x160xf32, #tpu.memory_space<vmem>>, vector<1x128xf32>
    tpu.vector_store %arg11[%c2_355, %c16_356], %370 {strides = array<i32>} : memref<10x160xf32, #tpu.memory_space<vmem>>, vector<1x128xf32>,
    %c4_357 = arith.constant 4 : index
    %c0_358 = arith.constant 0 : index
    %372 = vector.load %arg13[%c4_357, %c0_358] : memref<16x256xf32, #tpu.memory_space<vmem>>, vector<1x256xf32>
    %c5_359 = arith.constant 5 : index
    %c0_360 = arith.constant 0 : index
    %373 = vector.load %arg13[%c5_359, %c0_360] : memref<16x256xf32, #tpu.memory_space<vmem>>, vector<1x256xf32>
    %374 = arith.maximumf %372, %373 : vector<1x256xf32>
    %375 = vector.extract_strided_slice %374 {offsets = [0, 0], sizes = [1, 128], strides = [1, 1]} : vector<1x256xf32> to vector<1x128xf32>
    %376 = vector.extract_strided_slice %374 {offsets = [0, 128], sizes = [1, 128], strides = [1, 1]} : vector<1x256xf32> to vector<1x128xf32>
    %377 = arith.maximumf %375, %376 : vector<1x128xf32>
    %378 = arith.addf %377, %351 : vector<1x128xf32>
    %cst_361 = arith.constant 0.000000e+00 : f32
    %379 = vector.broadcast %cst_361 : f32 to vector<1x128xf32>
    %380 = arith.maximumf %378, %379 : vector<1x128xf32>
    %c3_362 = arith.constant 3 : index
    %c16_363 = arith.constant 16 : index
    %381 = vector.load %arg11[%c3_362, %c16_363] : memref<10x160xf32, #tpu.memory_space<vmem>>, vector<1x128xf32>
    tpu.vector_store %arg11[%c3_362, %c16_363], %380 {strides = array<i32>} : memref<10x160xf32, #tpu.memory_space<vmem>>, vector<1x128xf32>,
    %c6_364 = arith.constant 6 : index
    %c0_365 = arith.constant 0 : index
    %382 = vector.load %arg13[%c6_364, %c0_365] : memref<16x256xf32, #tpu.memory_space<vmem>>, vector<1x256xf32>
    %c7_366 = arith.constant 7 : index
    %c0_367 = arith.constant 0 : index
    %383 = vector.load %arg13[%c7_366, %c0_367] : memref<16x256xf32, #tpu.memory_space<vmem>>, vector<1x256xf32>
    %384 = arith.maximumf %382, %383 : vector<1x256xf32>
    %385 = vector.extract_strided_slice %384 {offsets = [0, 0], sizes = [1, 128], strides = [1, 1]} : vector<1x256xf32> to vector<1x128xf32>
    %386 = vector.extract_strided_slice %384 {offsets = [0, 128], sizes = [1, 128], strides = [1, 1]} : vector<1x256xf32> to vector<1x128xf32>
    %387 = arith.maximumf %385, %386 : vector<1x128xf32>
    %388 = arith.addf %387, %351 : vector<1x128xf32>
    %cst_368 = arith.constant 0.000000e+00 : f32
    %389 = vector.broadcast %cst_368 : f32 to vector<1x128xf32>
    %390 = arith.maximumf %388, %389 : vector<1x128xf32>
    %c4_369 = arith.constant 4 : index
    %c16_370 = arith.constant 16 : index
    %391 = vector.load %arg11[%c4_369, %c16_370] : memref<10x160xf32, #tpu.memory_space<vmem>>, vector<1x128xf32>
    tpu.vector_store %arg11[%c4_369, %c16_370], %390 {strides = array<i32>} : memref<10x160xf32, #tpu.memory_space<vmem>>, vector<1x128xf32>,
    %c8_371 = arith.constant 8 : index
    %c0_372 = arith.constant 0 : index
    %392 = vector.load %arg13[%c8_371, %c0_372] : memref<16x256xf32, #tpu.memory_space<vmem>>, vector<1x256xf32>
    %c9_373 = arith.constant 9 : index
    %c0_374 = arith.constant 0 : index
    %393 = vector.load %arg13[%c9_373, %c0_374] : memref<16x256xf32, #tpu.memory_space<vmem>>, vector<1x256xf32>
    %394 = arith.maximumf %392, %393 : vector<1x256xf32>
    %395 = vector.extract_strided_slice %394 {offsets = [0, 0], sizes = [1, 128], strides = [1, 1]} : vector<1x256xf32> to vector<1x128xf32>
    %396 = vector.extract_strided_slice %394 {offsets = [0, 128], sizes = [1, 128], strides = [1, 1]} : vector<1x256xf32> to vector<1x128xf32>
    %397 = arith.maximumf %395, %396 : vector<1x128xf32>
    %398 = arith.addf %397, %351 : vector<1x128xf32>
    %cst_375 = arith.constant 0.000000e+00 : f32
    %399 = vector.broadcast %cst_375 : f32 to vector<1x128xf32>
    %400 = arith.maximumf %398, %399 : vector<1x128xf32>
    %c5_376 = arith.constant 5 : index
    %c16_377 = arith.constant 16 : index
    %401 = vector.load %arg11[%c5_376, %c16_377] : memref<10x160xf32, #tpu.memory_space<vmem>>, vector<1x128xf32>
    tpu.vector_store %arg11[%c5_376, %c16_377], %400 {strides = array<i32>} : memref<10x160xf32, #tpu.memory_space<vmem>>, vector<1x128xf32>,
    %c10_378 = arith.constant 10 : index
    %c0_379 = arith.constant 0 : index
    %402 = vector.load %arg13[%c10_378, %c0_379] : memref<16x256xf32, #tpu.memory_space<vmem>>, vector<1x256xf32>
    %c11_380 = arith.constant 11 : index
    %c0_381 = arith.constant 0 : index
    %403 = vector.load %arg13[%c11_380, %c0_381] : memref<16x256xf32, #tpu.memory_space<vmem>>, vector<1x256xf32>
    %404 = arith.maximumf %402, %403 : vector<1x256xf32>
    %405 = vector.extract_strided_slice %404 {offsets = [0, 0], sizes = [1, 128], strides = [1, 1]} : vector<1x256xf32> to vector<1x128xf32>
    %406 = vector.extract_strided_slice %404 {offsets = [0, 128], sizes = [1, 128], strides = [1, 1]} : vector<1x256xf32> to vector<1x128xf32>
    %407 = arith.maximumf %405, %406 : vector<1x128xf32>
    %408 = arith.addf %407, %351 : vector<1x128xf32>
    %cst_382 = arith.constant 0.000000e+00 : f32
    %409 = vector.broadcast %cst_382 : f32 to vector<1x128xf32>
    %410 = arith.maximumf %408, %409 : vector<1x128xf32>
    %c6_383 = arith.constant 6 : index
    %c16_384 = arith.constant 16 : index
    %411 = vector.load %arg11[%c6_383, %c16_384] : memref<10x160xf32, #tpu.memory_space<vmem>>, vector<1x128xf32>
    tpu.vector_store %arg11[%c6_383, %c16_384], %410 {strides = array<i32>} : memref<10x160xf32, #tpu.memory_space<vmem>>, vector<1x128xf32>,
    %c12_385 = arith.constant 12 : index
    %c0_386 = arith.constant 0 : index
    %412 = vector.load %arg13[%c12_385, %c0_386] : memref<16x256xf32, #tpu.memory_space<vmem>>, vector<1x256xf32>
    %c13_387 = arith.constant 13 : index
    %c0_388 = arith.constant 0 : index
    %413 = vector.load %arg13[%c13_387, %c0_388] : memref<16x256xf32, #tpu.memory_space<vmem>>, vector<1x256xf32>
    %414 = arith.maximumf %412, %413 : vector<1x256xf32>
    %415 = vector.extract_strided_slice %414 {offsets = [0, 0], sizes = [1, 128], strides = [1, 1]} : vector<1x256xf32> to vector<1x128xf32>
    %416 = vector.extract_strided_slice %414 {offsets = [0, 128], sizes = [1, 128], strides = [1, 1]} : vector<1x256xf32> to vector<1x128xf32>
    %417 = arith.maximumf %415, %416 : vector<1x128xf32>
    %418 = arith.addf %417, %351 : vector<1x128xf32>
    %cst_389 = arith.constant 0.000000e+00 : f32
    %419 = vector.broadcast %cst_389 : f32 to vector<1x128xf32>
    %420 = arith.maximumf %418, %419 : vector<1x128xf32>
    %c7_390 = arith.constant 7 : index
    %c16_391 = arith.constant 16 : index
    %421 = vector.load %arg11[%c7_390, %c16_391] : memref<10x160xf32, #tpu.memory_space<vmem>>, vector<1x128xf32>
    tpu.vector_store %arg11[%c7_390, %c16_391], %420 {strides = array<i32>} : memref<10x160xf32, #tpu.memory_space<vmem>>, vector<1x128xf32>,
    %c14_392 = arith.constant 14 : index
    %c0_393 = arith.constant 0 : index
    %422 = vector.load %arg13[%c14_392, %c0_393] : memref<16x256xf32, #tpu.memory_space<vmem>>, vector<1x256xf32>
    %c15_394 = arith.constant 15 : index
    %c0_395 = arith.constant 0 : index
    %423 = vector.load %arg13[%c15_394, %c0_395] : memref<16x256xf32, #tpu.memory_space<vmem>>, vector<1x256xf32>
    %424 = arith.maximumf %422, %423 : vector<1x256xf32>
    %425 = vector.extract_strided_slice %424 {offsets = [0, 0], sizes = [1, 128], strides = [1, 1]} : vector<1x256xf32> to vector<1x128xf32>
    %426 = vector.extract_strided_slice %424 {offsets = [0, 128], sizes = [1, 128], strides = [1, 1]} : vector<1x256xf32> to vector<1x128xf32>
    %427 = arith.maximumf %425, %426 : vector<1x128xf32>
    %428 = arith.addf %427, %351 : vector<1x128xf32>
    %cst_396 = arith.constant 0.000000e+00 : f32
    %429 = vector.broadcast %cst_396 : f32 to vector<1x128xf32>
    %430 = arith.maximumf %428, %429 : vector<1x128xf32>
    %c8_397 = arith.constant 8 : index
    %c16_398 = arith.constant 16 : index
    %431 = vector.load %arg11[%c8_397, %c16_398] : memref<10x160xf32, #tpu.memory_space<vmem>>, vector<1x128xf32>
    tpu.vector_store %arg11[%c8_397, %c16_398], %430 {strides = array<i32>} : memref<10x160xf32, #tpu.memory_space<vmem>>, vector<1x128xf32>,
    %cst_399 = arith.constant 0.000000e+00 : f32
    %432 = vector.broadcast %cst_399 : f32 to vector<8x256xf32>
    %c0_400 = arith.constant 0 : index
    %c0_401 = arith.constant 0 : index
    %433 = vector.load %arg11[%c0_400, %c0_401] : memref<10x160xf32, #tpu.memory_space<vmem>>, vector<8x128xf32>
    %c0_402 = arith.constant 0 : index
    %c0_403 = arith.constant 0 : index
    %c0_404 = arith.constant 0 : index
    %434 = vector.load %arg3[%c0_402, %c0_403, %c0_404] : memref<9x128x256xf32, #tpu.memory_space<vmem>>, vector<1x128x256xf32>
    %435 = vector.shape_cast %434 : vector<1x128x256xf32> to vector<128x256xf32>
    %cst_405 = arith.constant dense<0.000000e+00> : vector<8x256xf32>
    %436 = tpu.matmul %433, %435, %cst_405 {dimension_numbers = #tpu.dot_dimension_numbers<[1], [0], [0], [1], [0, 0, 1, 1], [], []>} : vector<8x128xf32>, vector<128x256xf32>, vector<8x256xf32> -> vector<8x256xf32>
    %437 = arith.addf %432, %436 : vector<8x256xf32>
    %c0_406 = arith.constant 0 : index
    %c16_407 = arith.constant 16 : index
    %438 = vector.load %arg11[%c0_406, %c16_407] : memref<10x160xf32, #tpu.memory_space<vmem>>, vector<8x128xf32>
    %c1_408 = arith.constant 1 : index
    %c0_409 = arith.constant 0 : index
    %c0_410 = arith.constant 0 : index
    %439 = vector.load %arg3[%c1_408, %c0_409, %c0_410] : memref<9x128x256xf32, #tpu.memory_space<vmem>>, vector<1x128x256xf32>
    %440 = vector.shape_cast %439 : vector<1x128x256xf32> to vector<128x256xf32>
    %cst_411 = arith.constant dense<0.000000e+00> : vector<8x256xf32>
    %441 = tpu.matmul %438, %440, %cst_411 {dimension_numbers = #tpu.dot_dimension_numbers<[1], [0], [0], [1], [0, 0, 1, 1], [], []>} : vector<8x128xf32>, vector<128x256xf32>, vector<8x256xf32> -> vector<8x256xf32>
    %442 = arith.addf %437, %441 : vector<8x256xf32>
    %c0_412 = arith.constant 0 : index
    %c32_413 = arith.constant 32 : index
    %443 = vector.load %arg11[%c0_412, %c32_413] : memref<10x160xf32, #tpu.memory_space<vmem>>, vector<8x128xf32>
    %c2_414 = arith.constant 2 : index
    %c0_415 = arith.constant 0 : index
    %c0_416 = arith.constant 0 : index
    %444 = vector.load %arg3[%c2_414, %c0_415, %c0_416] : memref<9x128x256xf32, #tpu.memory_space<vmem>>, vector<1x128x256xf32>
    %445 = vector.shape_cast %444 : vector<1x128x256xf32> to vector<128x256xf32>
    %cst_417 = arith.constant dense<0.000000e+00> : vector<8x256xf32>
    %446 = tpu.matmul %443, %445, %cst_417 {dimension_numbers = #tpu.dot_dimension_numbers<[1], [0], [0], [1], [0, 0, 1, 1], [], []>} : vector<8x128xf32>, vector<128x256xf32>, vector<8x256xf32> -> vector<8x256xf32>
    %447 = arith.addf %442, %446 : vector<8x256xf32>
    %c1_418 = arith.constant 1 : index
    %c0_419 = arith.constant 0 : index
    %448 = vector.load %arg11[%c1_418, %c0_419] : memref<10x160xf32, #tpu.memory_space<vmem>>, vector<8x128xf32>
    %c3_420 = arith.constant 3 : index
    %c0_421 = arith.constant 0 : index
    %c0_422 = arith.constant 0 : index
    %449 = vector.load %arg3[%c3_420, %c0_421, %c0_422] : memref<9x128x256xf32, #tpu.memory_space<vmem>>, vector<1x128x256xf32>
    %450 = vector.shape_cast %449 : vector<1x128x256xf32> to vector<128x256xf32>
    %cst_423 = arith.constant dense<0.000000e+00> : vector<8x256xf32>
    %451 = tpu.matmul %448, %450, %cst_423 {dimension_numbers = #tpu.dot_dimension_numbers<[1], [0], [0], [1], [0, 0, 1, 1], [], []>} : vector<8x128xf32>, vector<128x256xf32>, vector<8x256xf32> -> vector<8x256xf32>
    %452 = arith.addf %447, %451 : vector<8x256xf32>
    %c1_424 = arith.constant 1 : index
    %c16_425 = arith.constant 16 : index
    %453 = vector.load %arg11[%c1_424, %c16_425] : memref<10x160xf32, #tpu.memory_space<vmem>>, vector<8x128xf32>
    %c4_426 = arith.constant 4 : index
    %c0_427 = arith.constant 0 : index
    %c0_428 = arith.constant 0 : index
    %454 = vector.load %arg3[%c4_426, %c0_427, %c0_428] : memref<9x128x256xf32, #tpu.memory_space<vmem>>, vector<1x128x256xf32>
    %455 = vector.shape_cast %454 : vector<1x128x256xf32> to vector<128x256xf32>
    %cst_429 = arith.constant dense<0.000000e+00> : vector<8x256xf32>
    %456 = tpu.matmul %453, %455, %cst_429 {dimension_numbers = #tpu.dot_dimension_numbers<[1], [0], [0], [1], [0, 0, 1, 1], [], []>} : vector<8x128xf32>, vector<128x256xf32>, vector<8x256xf32> -> vector<8x256xf32>
    %457 = arith.addf %452, %456 : vector<8x256xf32>
    %c1_430 = arith.constant 1 : index
    %c32_431 = arith.constant 32 : index
    %458 = vector.load %arg11[%c1_430, %c32_431] : memref<10x160xf32, #tpu.memory_space<vmem>>, vector<8x128xf32>
    %c5_432 = arith.constant 5 : index
    %c0_433 = arith.constant 0 : index
    %c0_434 = arith.constant 0 : index
    %459 = vector.load %arg3[%c5_432, %c0_433, %c0_434] : memref<9x128x256xf32, #tpu.memory_space<vmem>>, vector<1x128x256xf32>
    %460 = vector.shape_cast %459 : vector<1x128x256xf32> to vector<128x256xf32>
    %cst_435 = arith.constant dense<0.000000e+00> : vector<8x256xf32>
    %461 = tpu.matmul %458, %460, %cst_435 {dimension_numbers = #tpu.dot_dimension_numbers<[1], [0], [0], [1], [0, 0, 1, 1], [], []>} : vector<8x128xf32>, vector<128x256xf32>, vector<8x256xf32> -> vector<8x256xf32>
    %462 = arith.addf %457, %461 : vector<8x256xf32>
    %c2_436 = arith.constant 2 : index
    %c0_437 = arith.constant 0 : index
    %463 = vector.load %arg11[%c2_436, %c0_437] : memref<10x160xf32, #tpu.memory_space<vmem>>, vector<8x128xf32>
    %c6_438 = arith.constant 6 : index
    %c0_439 = arith.constant 0 : index
    %c0_440 = arith.constant 0 : index
    %464 = vector.load %arg3[%c6_438, %c0_439, %c0_440] : memref<9x128x256xf32, #tpu.memory_space<vmem>>, vector<1x128x256xf32>
    %465 = vector.shape_cast %464 : vector<1x128x256xf32> to vector<128x256xf32>
    %cst_441 = arith.constant dense<0.000000e+00> : vector<8x256xf32>
    %466 = tpu.matmul %463, %465, %cst_441 {dimension_numbers = #tpu.dot_dimension_numbers<[1], [0], [0], [1], [0, 0, 1, 1], [], []>} : vector<8x128xf32>, vector<128x256xf32>, vector<8x256xf32> -> vector<8x256xf32>
    %467 = arith.addf %462, %466 : vector<8x256xf32>
    %c2_442 = arith.constant 2 : index
    %c16_443 = arith.constant 16 : index
    %468 = vector.load %arg11[%c2_442, %c16_443] : memref<10x160xf32, #tpu.memory_space<vmem>>, vector<8x128xf32>
    %c7_444 = arith.constant 7 : index
    %c0_445 = arith.constant 0 : index
    %c0_446 = arith.constant 0 : index
    %469 = vector.load %arg3[%c7_444, %c0_445, %c0_446] : memref<9x128x256xf32, #tpu.memory_space<vmem>>, vector<1x128x256xf32>
    %470 = vector.shape_cast %469 : vector<1x128x256xf32> to vector<128x256xf32>
    %cst_447 = arith.constant dense<0.000000e+00> : vector<8x256xf32>
    %471 = tpu.matmul %468, %470, %cst_447 {dimension_numbers = #tpu.dot_dimension_numbers<[1], [0], [0], [1], [0, 0, 1, 1], [], []>} : vector<8x128xf32>, vector<128x256xf32>, vector<8x256xf32> -> vector<8x256xf32>
    %472 = arith.addf %467, %471 : vector<8x256xf32>
    %c2_448 = arith.constant 2 : index
    %c32_449 = arith.constant 32 : index
    %473 = vector.load %arg11[%c2_448, %c32_449] : memref<10x160xf32, #tpu.memory_space<vmem>>, vector<8x128xf32>
    %c8_450 = arith.constant 8 : index
    %c0_451 = arith.constant 0 : index
    %c0_452 = arith.constant 0 : index
    %474 = vector.load %arg3[%c8_450, %c0_451, %c0_452] : memref<9x128x256xf32, #tpu.memory_space<vmem>>, vector<1x128x256xf32>
    %475 = vector.shape_cast %474 : vector<1x128x256xf32> to vector<128x256xf32>
    %cst_453 = arith.constant dense<0.000000e+00> : vector<8x256xf32>
    %476 = tpu.matmul %473, %475, %cst_453 {dimension_numbers = #tpu.dot_dimension_numbers<[1], [0], [0], [1], [0, 0, 1, 1], [], []>} : vector<8x128xf32>, vector<128x256xf32>, vector<8x256xf32> -> vector<8x256xf32>
    %477 = arith.addf %472, %476 : vector<8x256xf32>
    %c0_454 = arith.constant 0 : index
    %c0_455 = arith.constant 0 : index
    %478 = vector.load %arg13[%c0_454, %c0_455] : memref<16x256xf32, #tpu.memory_space<vmem>>, vector<8x256xf32>
    tpu.vector_store %arg13[%c0_454, %c0_455], %477 {strides = array<i32>} : memref<16x256xf32, #tpu.memory_space<vmem>>, vector<8x256xf32>,
    %c0_456 = arith.constant 0 : index
    %c0_457 = arith.constant 0 : index
    %479 = vector.load %arg4[%c0_456, %c0_457] : memref<1x128xf32, #tpu.memory_space<vmem>>, vector<1x128xf32>
    %c0_458 = arith.constant 0 : index
    %c0_459 = arith.constant 0 : index
    %480 = vector.load %arg13[%c0_458, %c0_459] : memref<16x256xf32, #tpu.memory_space<vmem>>, vector<1x256xf32>
    %c1_460 = arith.constant 1 : index
    %c0_461 = arith.constant 0 : index
    %481 = vector.load %arg13[%c1_460, %c0_461] : memref<16x256xf32, #tpu.memory_space<vmem>>, vector<1x256xf32>
    %482 = arith.maximumf %480, %481 : vector<1x256xf32>
    %483 = vector.extract_strided_slice %482 {offsets = [0, 0], sizes = [1, 128], strides = [1, 1]} : vector<1x256xf32> to vector<1x128xf32>
    %484 = vector.extract_strided_slice %482 {offsets = [0, 128], sizes = [1, 128], strides = [1, 1]} : vector<1x256xf32> to vector<1x128xf32>
    %485 = arith.maximumf %483, %484 : vector<1x128xf32>
    %486 = arith.addf %485, %479 : vector<1x128xf32>
    %cst_462 = arith.constant 0.000000e+00 : f32
    %487 = vector.broadcast %cst_462 : f32 to vector<1x128xf32>
    %488 = arith.maximumf %486, %487 : vector<1x128xf32>
    %c1_463 = arith.constant 1 : index
    %c32_464 = arith.constant 32 : index
    %489 = vector.load %arg12[%c1_463, %c32_464] : memref<6x192xf32, #tpu.memory_space<vmem>>, vector<1x128xf32>
    tpu.vector_store %arg12[%c1_463, %c32_464], %488 {strides = array<i32>} : memref<6x192xf32, #tpu.memory_space<vmem>>, vector<1x128xf32>,
    %c2_465 = arith.constant 2 : index
    %c0_466 = arith.constant 0 : index
    %490 = vector.load %arg13[%c2_465, %c0_466] : memref<16x256xf32, #tpu.memory_space<vmem>>, vector<1x256xf32>
    %c3_467 = arith.constant 3 : index
    %c0_468 = arith.constant 0 : index
    %491 = vector.load %arg13[%c3_467, %c0_468] : memref<16x256xf32, #tpu.memory_space<vmem>>, vector<1x256xf32>
    %492 = arith.maximumf %490, %491 : vector<1x256xf32>
    %493 = vector.extract_strided_slice %492 {offsets = [0, 0], sizes = [1, 128], strides = [1, 1]} : vector<1x256xf32> to vector<1x128xf32>
    %494 = vector.extract_strided_slice %492 {offsets = [0, 128], sizes = [1, 128], strides = [1, 1]} : vector<1x256xf32> to vector<1x128xf32>
    %495 = arith.maximumf %493, %494 : vector<1x128xf32>
    %496 = arith.addf %495, %479 : vector<1x128xf32>
    %cst_469 = arith.constant 0.000000e+00 : f32
    %497 = vector.broadcast %cst_469 : f32 to vector<1x128xf32>
    %498 = arith.maximumf %496, %497 : vector<1x128xf32>
    %c2_470 = arith.constant 2 : index
    %c32_471 = arith.constant 32 : index
    %499 = vector.load %arg12[%c2_470, %c32_471] : memref<6x192xf32, #tpu.memory_space<vmem>>, vector<1x128xf32>
    tpu.vector_store %arg12[%c2_470, %c32_471], %498 {strides = array<i32>} : memref<6x192xf32, #tpu.memory_space<vmem>>, vector<1x128xf32>,
    %c4_472 = arith.constant 4 : index
    %c0_473 = arith.constant 0 : index
    %500 = vector.load %arg13[%c4_472, %c0_473] : memref<16x256xf32, #tpu.memory_space<vmem>>, vector<1x256xf32>
    %c5_474 = arith.constant 5 : index
    %c0_475 = arith.constant 0 : index
    %501 = vector.load %arg13[%c5_474, %c0_475] : memref<16x256xf32, #tpu.memory_space<vmem>>, vector<1x256xf32>
    %502 = arith.maximumf %500, %501 : vector<1x256xf32>
    %503 = vector.extract_strided_slice %502 {offsets = [0, 0], sizes = [1, 128], strides = [1, 1]} : vector<1x256xf32> to vector<1x128xf32>
    %504 = vector.extract_strided_slice %502 {offsets = [0, 128], sizes = [1, 128], strides = [1, 1]} : vector<1x256xf32> to vector<1x128xf32>
    %505 = arith.maximumf %503, %504 : vector<1x128xf32>
    %506 = arith.addf %505, %479 : vector<1x128xf32>
    %cst_476 = arith.constant 0.000000e+00 : f32
    %507 = vector.broadcast %cst_476 : f32 to vector<1x128xf32>
    %508 = arith.maximumf %506, %507 : vector<1x128xf32>
    %c3_477 = arith.constant 3 : index
    %c32_478 = arith.constant 32 : index
    %509 = vector.load %arg12[%c3_477, %c32_478] : memref<6x192xf32, #tpu.memory_space<vmem>>, vector<1x128xf32>
    tpu.vector_store %arg12[%c3_477, %c32_478], %508 {strides = array<i32>} : memref<6x192xf32, #tpu.memory_space<vmem>>, vector<1x128xf32>,
    %c6_479 = arith.constant 6 : index
    %c0_480 = arith.constant 0 : index
    %510 = vector.load %arg13[%c6_479, %c0_480] : memref<16x256xf32, #tpu.memory_space<vmem>>, vector<1x256xf32>
    %c7_481 = arith.constant 7 : index
    %c0_482 = arith.constant 0 : index
    %511 = vector.load %arg13[%c7_481, %c0_482] : memref<16x256xf32, #tpu.memory_space<vmem>>, vector<1x256xf32>
    %512 = arith.maximumf %510, %511 : vector<1x256xf32>
    %513 = vector.extract_strided_slice %512 {offsets = [0, 0], sizes = [1, 128], strides = [1, 1]} : vector<1x256xf32> to vector<1x128xf32>
    %514 = vector.extract_strided_slice %512 {offsets = [0, 128], sizes = [1, 128], strides = [1, 1]} : vector<1x256xf32> to vector<1x128xf32>
    %515 = arith.maximumf %513, %514 : vector<1x128xf32>
    %516 = arith.addf %515, %479 : vector<1x128xf32>
    %cst_483 = arith.constant 0.000000e+00 : f32
    %517 = vector.broadcast %cst_483 : f32 to vector<1x128xf32>
    %518 = arith.maximumf %516, %517 : vector<1x128xf32>
    %c4_484 = arith.constant 4 : index
    %c32_485 = arith.constant 32 : index
    %519 = vector.load %arg12[%c4_484, %c32_485] : memref<6x192xf32, #tpu.memory_space<vmem>>, vector<1x128xf32>
    tpu.vector_store %arg12[%c4_484, %c32_485], %518 {strides = array<i32>} : memref<6x192xf32, #tpu.memory_space<vmem>>, vector<1x128xf32>,
    %cst_486 = arith.constant 0.000000e+00 : f32
    %520 = vector.broadcast %cst_486 : f32 to vector<4x256xf32>
    %c0_487 = arith.constant 0 : index
    %c0_488 = arith.constant 0 : index
    %521 = vector.load %arg12[%c0_487, %c0_488] : memref<6x192xf32, #tpu.memory_space<vmem>>, vector<4x128xf32>
    %c0_489 = arith.constant 0 : index
    %c0_490 = arith.constant 0 : index
    %c0_491 = arith.constant 0 : index
    %522 = vector.load %arg5[%c0_489, %c0_490, %c0_491] : memref<9x128x256xf32, #tpu.memory_space<vmem>>, vector<1x128x256xf32>
    %523 = vector.shape_cast %522 : vector<1x128x256xf32> to vector<128x256xf32>
    %cst_492 = arith.constant dense<0.000000e+00> : vector<4x256xf32>
    %524 = tpu.matmul %521, %523, %cst_492 {dimension_numbers = #tpu.dot_dimension_numbers<[1], [0], [0], [1], [0, 0, 1, 1], [], []>} : vector<4x128xf32>, vector<128x256xf32>, vector<4x256xf32> -> vector<4x256xf32>
    %525 = arith.addf %520, %524 : vector<4x256xf32>
    %c0_493 = arith.constant 0 : index
    %c32_494 = arith.constant 32 : index
    %526 = vector.load %arg12[%c0_493, %c32_494] : memref<6x192xf32, #tpu.memory_space<vmem>>, vector<4x128xf32>
    %c1_495 = arith.constant 1 : index
    %c0_496 = arith.constant 0 : index
    %c0_497 = arith.constant 0 : index
    %527 = vector.load %arg5[%c1_495, %c0_496, %c0_497] : memref<9x128x256xf32, #tpu.memory_space<vmem>>, vector<1x128x256xf32>
    %528 = vector.shape_cast %527 : vector<1x128x256xf32> to vector<128x256xf32>
    %cst_498 = arith.constant dense<0.000000e+00> : vector<4x256xf32>
    %529 = tpu.matmul %526, %528, %cst_498 {dimension_numbers = #tpu.dot_dimension_numbers<[1], [0], [0], [1], [0, 0, 1, 1], [], []>} : vector<4x128xf32>, vector<128x256xf32>, vector<4x256xf32> -> vector<4x256xf32>
    %530 = arith.addf %525, %529 : vector<4x256xf32>
    %c0_499 = arith.constant 0 : index
    %c64_500 = arith.constant 64 : index
    %531 = vector.load %arg12[%c0_499, %c64_500] : memref<6x192xf32, #tpu.memory_space<vmem>>, vector<4x128xf32>
    %c2_501 = arith.constant 2 : index
    %c0_502 = arith.constant 0 : index
    %c0_503 = arith.constant 0 : index
    %532 = vector.load %arg5[%c2_501, %c0_502, %c0_503] : memref<9x128x256xf32, #tpu.memory_space<vmem>>, vector<1x128x256xf32>
    %533 = vector.shape_cast %532 : vector<1x128x256xf32> to vector<128x256xf32>
    %cst_504 = arith.constant dense<0.000000e+00> : vector<4x256xf32>
    %534 = tpu.matmul %531, %533, %cst_504 {dimension_numbers = #tpu.dot_dimension_numbers<[1], [0], [0], [1], [0, 0, 1, 1], [], []>} : vector<4x128xf32>, vector<128x256xf32>, vector<4x256xf32> -> vector<4x256xf32>
    %535 = arith.addf %530, %534 : vector<4x256xf32>
    %c1_505 = arith.constant 1 : index
    %c0_506 = arith.constant 0 : index
    %536 = vector.load %arg12[%c1_505, %c0_506] : memref<6x192xf32, #tpu.memory_space<vmem>>, vector<4x128xf32>
    %c3_507 = arith.constant 3 : index
    %c0_508 = arith.constant 0 : index
    %c0_509 = arith.constant 0 : index
    %537 = vector.load %arg5[%c3_507, %c0_508, %c0_509] : memref<9x128x256xf32, #tpu.memory_space<vmem>>, vector<1x128x256xf32>
    %538 = vector.shape_cast %537 : vector<1x128x256xf32> to vector<128x256xf32>
    %cst_510 = arith.constant dense<0.000000e+00> : vector<4x256xf32>
    %539 = tpu.matmul %536, %538, %cst_510 {dimension_numbers = #tpu.dot_dimension_numbers<[1], [0], [0], [1], [0, 0, 1, 1], [], []>} : vector<4x128xf32>, vector<128x256xf32>, vector<4x256xf32> -> vector<4x256xf32>
    %540 = arith.addf %535, %539 : vector<4x256xf32>
    %c1_511 = arith.constant 1 : index
    %c32_512 = arith.constant 32 : index
    %541 = vector.load %arg12[%c1_511, %c32_512] : memref<6x192xf32, #tpu.memory_space<vmem>>, vector<4x128xf32>
    %c4_513 = arith.constant 4 : index
    %c0_514 = arith.constant 0 : index
    %c0_515 = arith.constant 0 : index
    %542 = vector.load %arg5[%c4_513, %c0_514, %c0_515] : memref<9x128x256xf32, #tpu.memory_space<vmem>>, vector<1x128x256xf32>
    %543 = vector.shape_cast %542 : vector<1x128x256xf32> to vector<128x256xf32>
    %cst_516 = arith.constant dense<0.000000e+00> : vector<4x256xf32>
    %544 = tpu.matmul %541, %543, %cst_516 {dimension_numbers = #tpu.dot_dimension_numbers<[1], [0], [0], [1], [0, 0, 1, 1], [], []>} : vector<4x128xf32>, vector<128x256xf32>, vector<4x256xf32> -> vector<4x256xf32>
    %545 = arith.addf %540, %544 : vector<4x256xf32>
    %c1_517 = arith.constant 1 : index
    %c64_518 = arith.constant 64 : index
    %546 = vector.load %arg12[%c1_517, %c64_518] : memref<6x192xf32, #tpu.memory_space<vmem>>, vector<4x128xf32>
    %c5_519 = arith.constant 5 : index
    %c0_520 = arith.constant 0 : index
    %c0_521 = arith.constant 0 : index
    %547 = vector.load %arg5[%c5_519, %c0_520, %c0_521] : memref<9x128x256xf32, #tpu.memory_space<vmem>>, vector<1x128x256xf32>
    %548 = vector.shape_cast %547 : vector<1x128x256xf32> to vector<128x256xf32>
    %cst_522 = arith.constant dense<0.000000e+00> : vector<4x256xf32>
    %549 = tpu.matmul %546, %548, %cst_522 {dimension_numbers = #tpu.dot_dimension_numbers<[1], [0], [0], [1], [0, 0, 1, 1], [], []>} : vector<4x128xf32>, vector<128x256xf32>, vector<4x256xf32> -> vector<4x256xf32>
    %550 = arith.addf %545, %549 : vector<4x256xf32>
    %c2_523 = arith.constant 2 : index
    %c0_524 = arith.constant 0 : index
    %551 = vector.load %arg12[%c2_523, %c0_524] : memref<6x192xf32, #tpu.memory_space<vmem>>, vector<4x128xf32>
    %c6_525 = arith.constant 6 : index
    %c0_526 = arith.constant 0 : index
    %c0_527 = arith.constant 0 : index
    %552 = vector.load %arg5[%c6_525, %c0_526, %c0_527] : memref<9x128x256xf32, #tpu.memory_space<vmem>>, vector<1x128x256xf32>
    %553 = vector.shape_cast %552 : vector<1x128x256xf32> to vector<128x256xf32>
    %cst_528 = arith.constant dense<0.000000e+00> : vector<4x256xf32>
    %554 = tpu.matmul %551, %553, %cst_528 {dimension_numbers = #tpu.dot_dimension_numbers<[1], [0], [0], [1], [0, 0, 1, 1], [], []>} : vector<4x128xf32>, vector<128x256xf32>, vector<4x256xf32> -> vector<4x256xf32>
    %555 = arith.addf %550, %554 : vector<4x256xf32>
    %c2_529 = arith.constant 2 : index
    %c32_530 = arith.constant 32 : index
    %556 = vector.load %arg12[%c2_529, %c32_530] : memref<6x192xf32, #tpu.memory_space<vmem>>, vector<4x128xf32>
    %c7_531 = arith.constant 7 : index
    %c0_532 = arith.constant 0 : index
    %c0_533 = arith.constant 0 : index
    %557 = vector.load %arg5[%c7_531, %c0_532, %c0_533] : memref<9x128x256xf32, #tpu.memory_space<vmem>>, vector<1x128x256xf32>
    %558 = vector.shape_cast %557 : vector<1x128x256xf32> to vector<128x256xf32>
    %cst_534 = arith.constant dense<0.000000e+00> : vector<4x256xf32>
    %559 = tpu.matmul %556, %558, %cst_534 {dimension_numbers = #tpu.dot_dimension_numbers<[1], [0], [0], [1], [0, 0, 1, 1], [], []>} : vector<4x128xf32>, vector<128x256xf32>, vector<4x256xf32> -> vector<4x256xf32>
    %560 = arith.addf %555, %559 : vector<4x256xf32>
    %c2_535 = arith.constant 2 : index
    %c64_536 = arith.constant 64 : index
    %561 = vector.load %arg12[%c2_535, %c64_536] : memref<6x192xf32, #tpu.memory_space<vmem>>, vector<4x128xf32>
    %c8_537 = arith.constant 8 : index
    %c0_538 = arith.constant 0 : index
    %c0_539 = arith.constant 0 : index
    %562 = vector.load %arg5[%c8_537, %c0_538, %c0_539] : memref<9x128x256xf32, #tpu.memory_space<vmem>>, vector<1x128x256xf32>
    %563 = vector.shape_cast %562 : vector<1x128x256xf32> to vector<128x256xf32>
    %cst_540 = arith.constant dense<0.000000e+00> : vector<4x256xf32>
    %564 = tpu.matmul %561, %563, %cst_540 {dimension_numbers = #tpu.dot_dimension_numbers<[1], [0], [0], [1], [0, 0, 1, 1], [], []>} : vector<4x128xf32>, vector<128x256xf32>, vector<4x256xf32> -> vector<4x256xf32>
    %565 = arith.addf %560, %564 : vector<4x256xf32>
    %c0_541 = arith.constant 0 : index
    %c0_542 = arith.constant 0 : index
    %566 = vector.load %arg13[%c0_541, %c0_542] : memref<16x256xf32, #tpu.memory_space<vmem>>, vector<4x256xf32>
    tpu.vector_store %arg13[%c0_541, %c0_542], %565 {strides = array<i32>} : memref<16x256xf32, #tpu.memory_space<vmem>>, vector<4x256xf32>,
    %c0_543 = arith.constant 0 : index
    %c0_544 = arith.constant 0 : index
    %567 = vector.load %arg6[%c0_543, %c0_544] : memref<1x128xf32, #tpu.memory_space<vmem>>, vector<1x128xf32>
    %c0_545 = arith.constant 0 : index
    %c0_546 = arith.constant 0 : index
    %568 = vector.load %arg13[%c0_545, %c0_546] : memref<16x256xf32, #tpu.memory_space<vmem>>, vector<1x256xf32>
    %c1_547 = arith.constant 1 : index
    %c0_548 = arith.constant 0 : index
    %569 = vector.load %arg13[%c1_547, %c0_548] : memref<16x256xf32, #tpu.memory_space<vmem>>, vector<1x256xf32>
    %570 = arith.maximumf %568, %569 : vector<1x256xf32>
    %571 = vector.extract_strided_slice %570 {offsets = [0, 0], sizes = [1, 128], strides = [1, 1]} : vector<1x256xf32> to vector<1x128xf32>
    %572 = vector.extract_strided_slice %570 {offsets = [0, 128], sizes = [1, 128], strides = [1, 1]} : vector<1x256xf32> to vector<1x128xf32>
    %573 = arith.maximumf %571, %572 : vector<1x128xf32>
    %574 = arith.addf %573, %567 : vector<1x128xf32>
    %cst_549 = arith.constant 0.000000e+00 : f32
    %575 = vector.broadcast %cst_549 : f32 to vector<1x128xf32>
    %576 = arith.maximumf %574, %575 : vector<1x128xf32>
    %c0_550 = arith.constant 0 : index
    %c0_551 = arith.constant 0 : index
    %577 = vector.load %arg7[%c0_550, %c0_551] : memref<128x12xf32, #tpu.memory_space<vmem>>, vector<128x12xf32>
    %cst_552 = arith.constant dense<0.000000e+00> : vector<1x12xf32>
    %578 = tpu.matmul %576, %577, %cst_552 {dimension_numbers = #tpu.dot_dimension_numbers<[1], [0], [0], [1], [0, 0, 1, 1], [], []>} : vector<1x128xf32>, vector<128x12xf32>, vector<1x12xf32> -> vector<1x12xf32>
    %c0_553 = arith.constant 0 : index
    %c0_554 = arith.constant 0 : index
    %579 = vector.load %arg8[%c0_553, %c0_554] : memref<1x12xf32, #tpu.memory_space<vmem>>, vector<1x12xf32>
    %580 = arith.addf %578, %579 : vector<1x12xf32>
    %c2_555 = arith.constant 2 : index
    %c0_556 = arith.constant 0 : index
    %581 = vector.load %arg9[%c2_555, %c0_556] : memref<4x12xf32, #tpu.memory_space<vmem>>, vector<1x12xf32>
    tpu.vector_store %arg9[%c2_555, %c0_556], %580 {strides = array<i32>} : memref<4x12xf32, #tpu.memory_space<vmem>>, vector<1x12xf32>,
    %c2_557 = arith.constant 2 : index
    %c0_558 = arith.constant 0 : index
    %582 = vector.load %arg13[%c2_557, %c0_558] : memref<16x256xf32, #tpu.memory_space<vmem>>, vector<1x256xf32>
    %c3_559 = arith.constant 3 : index
    %c0_560 = arith.constant 0 : index
    %583 = vector.load %arg13[%c3_559, %c0_560] : memref<16x256xf32, #tpu.memory_space<vmem>>, vector<1x256xf32>
    %584 = arith.maximumf %582, %583 : vector<1x256xf32>
    %585 = vector.extract_strided_slice %584 {offsets = [0, 0], sizes = [1, 128], strides = [1, 1]} : vector<1x256xf32> to vector<1x128xf32>
    %586 = vector.extract_strided_slice %584 {offsets = [0, 128], sizes = [1, 128], strides = [1, 1]} : vector<1x256xf32> to vector<1x128xf32>
    %587 = arith.maximumf %585, %586 : vector<1x128xf32>
    %588 = arith.addf %587, %567 : vector<1x128xf32>
    %cst_561 = arith.constant 0.000000e+00 : f32
    %589 = vector.broadcast %cst_561 : f32 to vector<1x128xf32>
    %590 = arith.maximumf %588, %589 : vector<1x128xf32>
    %c0_562 = arith.constant 0 : index
    %c0_563 = arith.constant 0 : index
    %591 = vector.load %arg7[%c0_562, %c0_563] : memref<128x12xf32, #tpu.memory_space<vmem>>, vector<128x12xf32>
    %cst_564 = arith.constant dense<0.000000e+00> : vector<1x12xf32>
    %592 = tpu.matmul %590, %591, %cst_564 {dimension_numbers = #tpu.dot_dimension_numbers<[1], [0], [0], [1], [0, 0, 1, 1], [], []>} : vector<1x128xf32>, vector<128x12xf32>, vector<1x12xf32> -> vector<1x12xf32>
    %c0_565 = arith.constant 0 : index
    %c0_566 = arith.constant 0 : index
    %593 = vector.load %arg8[%c0_565, %c0_566] : memref<1x12xf32, #tpu.memory_space<vmem>>, vector<1x12xf32>
    %594 = arith.addf %592, %593 : vector<1x12xf32>
    %c3_567 = arith.constant 3 : index
    %c0_568 = arith.constant 0 : index
    %595 = vector.load %arg9[%c3_567, %c0_568] : memref<4x12xf32, #tpu.memory_space<vmem>>, vector<1x12xf32>
    tpu.vector_store %arg9[%c3_567, %c0_568], %594 {strides = array<i32>} : memref<4x12xf32, #tpu.memory_space<vmem>>, vector<1x12xf32>,
    return
  }
}

</mosaic_0001>

<llo_original>
// kernel: forward.1
$region0: #{forward.1}
  #allocation0 [shape = 'u32[]', space=smem, size = 0x4, offset = 0x4, fixed_abs, tag = 'smem constant byte address 0x4 - core index']
  #allocation1 [shape = 'u32[72,128]{1,0:T(1,128)}', space=vmem, size = 0x9000, scoped, tag = 'internal scratch']
  #allocation2 [shape = 'f32[18,54]{1,0:T(8,128)}', space=vmem, size = 0x3000, scoped, tag = 'scratch operand']
  #allocation3 [shape = 'f32[10,160]{1,0:T(8,128)}', space=vmem, size = 0x4000, scoped, tag = 'scratch operand']
  #allocation4 [shape = 'f32[6,192]{1,0:T(8,128)}', space=vmem, size = 0x2000, scoped, tag = 'scratch operand']
  #allocation5 [shape = 'f32[16,256]{1,0:T(8,128)}', space=vmem, size = 0x4000, scoped, tag = 'scratch operand']
  %s0 = inlined_call_operand.vmem [shape: f32[2,16,48], index: 0, kind: input, shape index: {}]
  %s1 = inlined_call_operand.hbm [shape: f32[9,48,256], index: 1, kind: input, shape index: {}]
  %s2 = inlined_call_operand.hbm [shape: f32[1,128], index: 2, kind: input, shape index: {}]
  %s3 = inlined_call_operand.hbm [shape: f32[9,128,256], index: 3, kind: input, shape index: {}]
  %s4 = inlined_call_operand.hbm [shape: f32[1,128], index: 4, kind: input, shape index: {}]
  %s5 = inlined_call_operand.hbm [shape: f32[9,128,256], index: 5, kind: input, shape index: {}]
  %s6 = inlined_call_operand.hbm [shape: f32[1,128], index: 6, kind: input, shape index: {}]
  %s7 = inlined_call_operand.vmem [shape: f32[128,12], index: 7, kind: input, shape index: {}]
  %s8 = inlined_call_operand.hbm [shape: f32[1,12], index: 8, kind: input, shape index: {}]
  %s9 = inlined_call_operand.vmem [shape: f32[4,12], index: 9, kind: output, shape index: {}]
  %s10 = sld [smem:[#allocation0]]
  $region74: #{forward.1} parent=0
    _
  %s12 = ssub.s32 1, %s10
  %s13 = scalar_select 0, %s12, %s10
  $region1: #{forward.1} parent=0
    #allocation6 [shape = 'u8[442368]{0}', space=vmem, size = 0x6c000, scoped, tag = 'input window, operand 1, single buffered']
    #allocation7 [shape = 's32[1]{0}', space=sflag, size = 0x4, scoped, tag = 'scoped memory for forward.1']
    #allocation8 [shape = 'u8[512]{0}', space=vmem, size = 0x400, scoped, tag = 'input window, operand 2, single buffered']
    #allocation9 [shape = 's32[1]{0}', space=sflag, size = 0x4, scoped, tag = 'scoped memory for forward.1']
    #allocation10 [shape = 'u8[1179648]{0}', space=vmem, size = 0x120000, scoped, tag = 'input window, operand 3, single buffered']
    #allocation11 [shape = 'u8[512]{0}', space=vmem, size = 0x400, scoped, tag = 'input window, operand 4, single buffered']
    #allocation12 [shape = 's32[1]{0}', space=sflag, size = 0x4, scoped, tag = 'scoped memory for forward.1']
    #allocation13 [shape = 'u8[1179648]{0}', space=vmem, size = 0x120000, scoped, tag = 'input window, operand 5, single buffered']
    #allocation14 [shape = 'u8[512]{0}', space=vmem, size = 0x400, scoped, tag = 'input window, operand 6, single buffered']
    #allocation15 [shape = 's32[1]{0}', space=sflag, size = 0x4, scoped, tag = 'scoped memory for forward.1']
    #allocation16 [shape = 'u8[512]{0}', space=vmem, size = 0x400, scoped, tag = 'input window, operand 8, single buffered']
    %14 = vsyncpa [#allocation7], 0
    %15 = vsyncpa [#allocation9], 0
    %16 = vsyncpa [#allocation12], 0
    %17 = vsyncpa [#allocation15], 0
    // Predicated region
    $region2: #{forward.1} parent=1 // pred_check
      _
    $region3: #{forward.1} parent=1 // pred_check_branch
      %19 = sbr.rel (0) target = $region5
    $region4: #{forward.1} parent=1 // pred_region
      _
    $region5: #{forward.1} parent=1 // pred_fallthru
      _
    // Predicated region
    $region6: #{forward.1} parent=1 // pred_check
      _
    $region7: #{forward.1} parent=1 // pred_check_branch
      %21 = sbr.rel (0) target = $region9
    $region8: #{forward.1} parent=1 // pred_region
      %23 = vsyncadd [#allocation7], 0
      %s24 = sshll.u32 %s1, 4
      %s25 = int_to_ptr.hbm [resolvable:$true] %s24
      %s26 = sshll.u32 [#allocation6], 4
      %s27 = int_to_ptr.vmem [resolvable:$true] %s26
      %32 = dma.hbm_to_vmem [thread:$0]  %s25, 13824, %s27, [#allocation7], 256, 256, 16
    $region9: #{forward.1} parent=1 // pred_fallthru
      _
    // Predicated region
    $region10: #{forward.1} parent=1 // pred_check
      _
    $region11: #{forward.1} parent=1 // pred_check_branch
      %34 = sbr.rel (0) target = $region13
    $region12: #{forward.1} parent=1 // pred_region
      %36 = vsyncadd [#allocation9], 0
      %s38 = sshll.u32 %s2, 4
      %s39 = int_to_ptr.hbm [resolvable:$true] %s38
      %s40 = sshll.u32 [#allocation8], 4
      %s41 = int_to_ptr.vmem [resolvable:$true] %s40
      %43 = dma.hbm_to_vmem [thread:$0]  %s39, 16, %s41, [#allocation9]
    $region13: #{forward.1} parent=1 // pred_fallthru
      _
    // Predicated region
    $region14: #{forward.1} parent=1 // pred_check
      _
    $region15: #{forward.1} parent=1 // pred_check_branch
      %45 = sbr.rel (0) target = $region17
    $region16: #{forward.1} parent=1 // pred_region
      %47 = vsyncadd [#allocation9], 0
      %s48 = sshll.u32 %s3, 4
      %s49 = int_to_ptr.hbm [resolvable:$true] %s48
      %s50 = sshll.u32 [#allocation10], 4
      %s51 = int_to_ptr.vmem [resolvable:$true] %s50
      %56 = dma.hbm_to_vmem [thread:$0]  %s49, 36864, %s51, [#allocation9], 256, 256, 16
    $region17: #{forward.1} parent=1 // pred_fallthru
      _
    // Predicated region
    $region18: #{forward.1} parent=1 // pred_check
      _
    $region19: #{forward.1} parent=1 // pred_check_branch
      %58 = sbr.rel (0) target = $region21
    $region20: #{forward.1} parent=1 // pred_region
      %60 = vsyncadd [#allocation12], 0
      %s62 = sshll.u32 %s4, 4
      %s63 = int_to_ptr.hbm [resolvable:$true] %s62
      %s64 = sshll.u32 [#allocation11], 4
      %s65 = int_to_ptr.vmem [resolvable:$true] %s64
      %67 = dma.hbm_to_vmem [thread:$0]  %s63, 16, %s65, [#allocation12]
    $region21: #{forward.1} parent=1 // pred_fallthru
      _
    // Predicated region
    $region22: #{forward.1} parent=1 // pred_check
      _
    $region23: #{forward.1} parent=1 // pred_check_branch
      %69 = sbr.rel (0) target = $region25
    $region24: #{forward.1} parent=1 // pred_region
      %71 = vsyncadd [#allocation12], 0
      %s72 = sshll.u32 %s5, 4
      %s73 = int_to_ptr.hbm [resolvable:$true] %s72
      %s74 = sshll.u32 [#allocation13], 4
      %s75 = int_to_ptr.vmem [resolvable:$true] %s74
      %80 = dma.hbm_to_vmem [thread:$0]  %s73, 36864, %s75, [#allocation12], 256, 256, 16
    $region25: #{forward.1} parent=1 // pred_fallthru
      _
    // Predicated region
    $region26: #{forward.1} parent=1 // pred_check
      _
    $region27: #{forward.1} parent=1 // pred_check_branch
      %82 = sbr.rel (0) target = $region29
    $region28: #{forward.1} parent=1 // pred_region
      %84 = vsyncadd [#allocation15], 0
      %s86 = sshll.u32 %s6, 4
      %s87 = int_to_ptr.hbm [resolvable:$true] %s86
      %s88 = sshll.u32 [#allocation14], 4
      %s89 = int_to_ptr.vmem [resolvable:$true] %s88
      %91 = dma.hbm_to_vmem [thread:$0]  %s87, 16, %s89, [#allocation15]
    $region29: #{forward.1} parent=1 // pred_fallthru
      _
    // Predicated region
    $region30: #{forward.1} parent=1 // pred_check
      _
    $region31: #{forward.1} parent=1 // pred_check_branch
      %93 = sbr.rel (0) target = $region33
    $region32: #{forward.1} parent=1 // pred_region
      _
    $region33: #{forward.1} parent=1 // pred_fallthru
      _
    // Predicated region
    $region34: #{forward.1} parent=1 // pred_check
      _
    $region35: #{forward.1} parent=1 // pred_check_branch
      %95 = sbr.rel (0) target = $region37
    $region36: #{forward.1} parent=1 // pred_region
      %97 = vsyncadd [#allocation15], 0
      %s99 = sshll.u32 %s8, 4
      %s100 = int_to_ptr.hbm [resolvable:$true] %s99
      %s101 = sshll.u32 [#allocation16], 4
      %s102 = int_to_ptr.vmem [resolvable:$true] %s101
      %104 = dma.hbm_to_vmem [thread:$0]  %s100, 16, %s102, [#allocation15]
    $region37: #{forward.1} parent=1 // pred_fallthru
      _
    // Predicated region
    $region38: #{forward.1} parent=1 // pred_check
      _
    $region39: #{forward.1} parent=1 // pred_check_branch
      %106 = sbr.rel (0) target = $region41
    $region40: #{forward.1} parent=1 // pred_region
      %108 = dma.done [#allocation7], 13824
    $region41: #{forward.1} parent=1 // pred_fallthru
      _
    // Predicated region
    $region42: #{forward.1} parent=1 // pred_check
      _
    $region43: #{forward.1} parent=1 // pred_check_branch
      %110 = sbr.rel (0) target = $region45
    $region44: #{forward.1} parent=1 // pred_region
      %112 = dma.done [#allocation9], 16
    $region45: #{forward.1} parent=1 // pred_fallthru
      _
    // Predicated region
    $region46: #{forward.1} parent=1 // pred_check
      _
    $region47: #{forward.1} parent=1 // pred_check_branch
      %114 = sbr.rel (0) target = $region49
    $region48: #{forward.1} parent=1 // pred_region
      %116 = dma.done [#allocation9], 36864
    $region49: #{forward.1} parent=1 // pred_fallthru
      _
    // Predicated region
    $region50: #{forward.1} parent=1 // pred_check
      _
    $region51: #{forward.1} parent=1 // pred_check_branch
      %118 = sbr.rel (0) target = $region53
    $region52: #{forward.1} parent=1 // pred_region
      %120 = dma.done [#allocation12], 16
    $region53: #{forward.1} parent=1 // pred_fallthru
      _
    // Predicated region
    $region54: #{forward.1} parent=1 // pred_check
      _
    $region55: #{forward.1} parent=1 // pred_check_branch
      %122 = sbr.rel (0) target = $region57
    $region56: #{forward.1} parent=1 // pred_region
      %124 = dma.done [#allocation12], 36864
    $region57: #{forward.1} parent=1 // pred_fallthru
      _
    // Predicated region
    $region58: #{forward.1} parent=1 // pred_check
      _
    $region59: #{forward.1} parent=1 // pred_check_branch
      %126 = sbr.rel (0) target = $region61
    $region60: #{forward.1} parent=1 // pred_region
      %128 = dma.done [#allocation15], 16
    $region61: #{forward.1} parent=1 // pred_fallthru
      _
    // Predicated region
    $region62: #{forward.1} parent=1 // pred_check
      _
    $region63: #{forward.1} parent=1 // pred_check_branch
      %130 = sbr.rel (0) target = $region65
    $region64: #{forward.1} parent=1 // pred_region
      %132 = dma.done [#allocation15], 16
    $region65: #{forward.1} parent=1 // pred_fallthru
      _
    %vm133 = vcmask 441344
    %134 = vst.msk [vmem:[#allocation2] sm:$0xff] %vm133, 0.0
    %135 = vst.msk [vmem:[#allocation2 + $0x8] sm:$0xff] %vm133, 0.0
    %vm136 = vcmask 435200
    %137 = vst.msk [vmem:[#allocation2 + $0x10] sm:$0x3] %vm136, 0.0
    %138 = vst [vmem:[#allocation3] sm:$0xff] 0.0
    %vm139 = vcmask 261120
    %140 = vst.msk [vmem:[#allocation3 + $0x8] sm:$0xff] %vm139, 0.0
    %141 = vst [vmem:[#allocation3 + $0x10] sm:$0x3] 0.0
    %vm142 = vcmask 254976
    %143 = vst.msk [vmem:[#allocation3 + $0x18] sm:$0x3] %vm142, 0.0
    %144 = vst [vmem:[#allocation4] sm:$0x3f] 0.0
    %vm145 = vcmask 521216
    %146 = vst.msk [vmem:[#allocation4 + $0x8] sm:$0x3f] %vm145, 0.0
    %v147 = vld [vmem:[%s0] sm:$0xff]
    %v148 = vld [vmem:[%s0 + $0x8] sm:$0xff]
    %151 = vrot.lane.b32.xlu0 %v147, 3
    %v152 = vpop.permute.xlu0 %151
    %153 = vrot.lane.b32.xlu0 %v148, 3
    %v154 = vpop.permute.xlu0 %153
    %vm157 = vcmask 416792
    %158 = vst.msk [vmem:[#allocation2 + $0x1] sm:$0xff] %vm157, %v152
    %159 = vst.msk [vmem:[#allocation2 + $0x9] sm:$0xff] %vm157, %v154
    %v160 = vld [vmem:[#allocation2] sm:$0xff]
    %v161 = vld [vmem:[#allocation2 + $0x8] sm:$0xff]
    %v162 = vld [vmem:[#allocation6] sm:$0xff]
    %v163 = vld [vmem:[#allocation6 + $0x8] sm:$0xff]
    %v164 = vld [vmem:[#allocation6 + $0x10] sm:$0xff]
    %v165 = vld [vmem:[#allocation6 + $0x18] sm:$0xff]
    %v166 = vld [vmem:[#allocation6 + $0x20] sm:$0xff]
    %v167 = vld [vmem:[#allocation6 + $0x28] sm:$0xff]
    %v168 = vld [vmem:[#allocation6 + $0x30] sm:$0xff]
    %v169 = vld [vmem:[#allocation6 + $0x38] sm:$0xff]
    %v170 = vld [vmem:[#allocation6 + $0x40] sm:$0xff]
    %v171 = vld [vmem:[#allocation6 + $0x48] sm:$0xff]
    %v172 = vld [vmem:[#allocation6 + $0x50] sm:$0xff]
    %v173 = vld [vmem:[#allocation6 + $0x58] sm:$0xff]
    %s174 = scalar_lea.vmem [#allocation6], 96
    %v175 = vld [vmem:[%s174] sm:$0xff]
    %v176 = vld [vmem:[%s174 + $0x8] sm:$0xff]
    %v177 = vld [vmem:[%s174 + $0x10] sm:$0xff]
    %v178 = vld [vmem:[%s174 + $0x18] sm:$0xff]
    %v179 = vld [vmem:[%s174 + $0x20] sm:$0xff]
    %v180 = vld [vmem:[%s174 + $0x28] sm:$0xff]
    %v181 = vld [vmem:[%s174 + $0x30] sm:$0xff]
    %v182 = vld [vmem:[%s174 + $0x38] sm:$0xff]
    %v183 = vld [vmem:[%s174 + $0x40] sm:$0xff]
    %v184 = vld [vmem:[%s174 + $0x48] sm:$0xff]
    %v185 = vld [vmem:[%s174 + $0x50] sm:$0xff]
    %v186 = vld [vmem:[%s174 + $0x58] sm:$0xff]
    %189 = vrot.lane.b32.xlu0 %v160, 125
    %v190 = vpop.permute.xlu0 %189
    %191 = vrot.lane.b32.xlu0 %v161, 125
    %v192 = vpop.permute.xlu0 %191
    %vm193 = vcmask 392192
    %v194 = vsel %vm193, %v190, 0
    %v196 = vsel %vm193, %v192, 0
    %198 = vmatpush.msra.mxu0 0.0
    %199 = vmatpush.msra.mxu0 0.0
    %200 = vmatpush.msra.mxu0 0.0
    %201 = vmatpush.msra.mxu0 0.0
    %202 = vmatpush.msra.mxu0 0.0
    %203 = vmatpush.msra.mxu0 0.0
    %204 = vmatpush.msra.mxu0 0.0
    %205 = vmatpush.msra.mxu0 0.0
    %206 = vmatpush.msra.mxu0 0.0
    %207 = vmatpush.msra.mxu0 0.0
    %208 = vmatpush.msra.mxu0 %v185
    %209 = vmatpush.msra.mxu0 %v183
    %210 = vmatpush.msra.mxu0 %v181
    %211 = vmatpush.msra.mxu0 %v179
    %212 = vmatpush.msra.mxu0 %v177
    %213 = vmatpush.msra.mxu0 %v175
    %214 = vmatmul.f32.gmra.mxu0 %v194
    %v215 = vpop.f32.mrf.mxu0
    %v216 = vadd.f32 0.0, %v215
    %217 = vmatmul.f32.gmra.mxu0 %v196
    %v218 = vpop.f32.mrf.mxu0
    %v219 = vadd.f32 0.0, %v218
    %220 = vdwg.mxu0
    %221 = vmatpush.msra.mxu0 0.0
    %222 = vmatpush.msra.mxu0 0.0
    %223 = vmatpush.msra.mxu0 0.0
    %224 = vmatpush.msra.mxu0 0.0
    %225 = vmatpush.msra.mxu0 0.0
    %226 = vmatpush.msra.mxu0 0.0
    %227 = vmatpush.msra.mxu0 0.0
    %228 = vmatpush.msra.mxu0 0.0
    %229 = vmatpush.msra.mxu0 0.0
    %230 = vmatpush.msra.mxu0 0.0
    %231 = vmatpush.msra.mxu0 %v186
    %232 = vmatpush.msra.mxu0 %v184
    %233 = vmatpush.msra.mxu0 %v182
    %234 = vmatpush.msra.mxu0 %v180
    %235 = vmatpush.msra.mxu0 %v178
    %236 = vmatpush.msra.mxu0 %v176
    %237 = vmatmul.f32.gmra.mxu0 %v194
    %v238 = vpop.f32.mrf.mxu0
    %v239 = vadd.f32 0.0, %v238
    %240 = vmatmul.f32.gmra.mxu0 %v196
    %v241 = vpop.f32.mrf.mxu0
    %v242 = vadd.f32 0.0, %v241
    %243 = vdwg.mxu0
    %v244 = vsel %vm193, %v160, 0
    %v246 = vsel %vm193, %v161, 0
    %248 = vmatpush.msra.mxu0 0.0
    %249 = vmatpush.msra.mxu0 0.0
    %250 = vmatpush.msra.mxu0 0.0
    %251 = vmatpush.msra.mxu0 0.0
    %252 = vmatpush.msra.mxu0 0.0
    %253 = vmatpush.msra.mxu0 0.0
    %254 = vmatpush.msra.mxu0 0.0
    %255 = vmatpush.msra.mxu0 0.0
    %256 = vmatpush.msra.mxu0 0.0
    %257 = vmatpush.msra.mxu0 0.0
    %258 = vmatpush.msra.mxu0 %v172
    %259 = vmatpush.msra.mxu0 %v170
    %260 = vmatpush.msra.mxu0 %v168
    %261 = vmatpush.msra.mxu0 %v166
    %262 = vmatpush.msra.mxu0 %v164
    %263 = vmatpush.msra.mxu0 %v162
    %264 = vmatmul.f32.gmra.mxu0 %v244
    %v265 = vpop.f32.mrf.mxu0
    %v266 = vadd.f32 %v216, %v265
    %267 = vmatmul.f32.gmra.mxu0 %v246
    %v268 = vpop.f32.mrf.mxu0
    %v269 = vadd.f32 %v219, %v268
    %270 = vdwg.mxu0
    %271 = vmatpush.msra.mxu0 0.0
    %272 = vmatpush.msra.mxu0 0.0
    %273 = vmatpush.msra.mxu0 0.0
    %274 = vmatpush.msra.mxu0 0.0
    %275 = vmatpush.msra.mxu0 0.0
    %276 = vmatpush.msra.mxu0 0.0
    %277 = vmatpush.msra.mxu0 0.0
    %278 = vmatpush.msra.mxu0 0.0
    %279 = vmatpush.msra.mxu0 0.0
    %280 = vmatpush.msra.mxu0 0.0
    %281 = vmatpush.msra.mxu0 %v173
    %282 = vmatpush.msra.mxu0 %v171
    %283 = vmatpush.msra.mxu0 %v169
    %284 = vmatpush.msra.mxu0 %v167
    %285 = vmatpush.msra.mxu0 %v165
    %286 = vmatpush.msra.mxu0 %v163
    %287 = vmatmul.f32.gmra.mxu0 %v244
    %v288 = vpop.f32.mrf.mxu0
    %v289 = vadd.f32 %v239, %v288
    %290 = vmatmul.f32.gmra.mxu0 %v246
    %v291 = vpop.f32.mrf.mxu0
    %v292 = vadd.f32 %v242, %v291
    %293 = vdwg.mxu0
    %s294 = scalar_lea.vmem [#allocation6], 192
    %v295 = vld [vmem:[%s294] sm:$0xff]
    %v296 = vld [vmem:[%s294 + $0x8] sm:$0xff]
    %v297 = vld [vmem:[%s294 + $0x10] sm:$0xff]
    %v298 = vld [vmem:[%s294 + $0x18] sm:$0xff]
    %v299 = vld [vmem:[%s294 + $0x20] sm:$0xff]
    %v300 = vld [vmem:[%s294 + $0x28] sm:$0xff]
    %v301 = vld [vmem:[%s294 + $0x30] sm:$0xff]
    %v302 = vld [vmem:[%s294 + $0x38] sm:$0xff]
    %v303 = vld [vmem:[%s294 + $0x40] sm:$0xff]
    %v304 = vld [vmem:[%s294 + $0x48] sm:$0xff]
    %v305 = vld [vmem:[%s294 + $0x50] sm:$0xff]
    %v306 = vld [vmem:[%s294 + $0x58] sm:$0xff]
    %307 = vrot.lane.b32.xlu0 %v160, 122
    %v308 = vpop.permute.xlu0 %307
    %309 = vrot.lane.b32.xlu0 %v161, 122
    %v310 = vpop.permute.xlu0 %309
    %v311 = vsel %vm193, %v308, 0
    %v313 = vsel %vm193, %v310, 0
    %315 = vmatpush.msra.mxu0 0.0
    %316 = vmatpush.msra.mxu0 0.0
    %317 = vmatpush.msra.mxu0 0.0
    %318 = vmatpush.msra.mxu0 0.0
    %319 = vmatpush.msra.mxu0 0.0
    %320 = vmatpush.msra.mxu0 0.0
    %321 = vmatpush.msra.mxu0 0.0
    %322 = vmatpush.msra.mxu0 0.0
    %323 = vmatpush.msra.mxu0 0.0
    %324 = vmatpush.msra.mxu0 0.0
    %325 = vmatpush.msra.mxu0 %v305
    %326 = vmatpush.msra.mxu0 %v303
    %327 = vmatpush.msra.mxu0 %v301
    %328 = vmatpush.msra.mxu0 %v299
    %329 = vmatpush.msra.mxu0 %v297
    %330 = vmatpush.msra.mxu0 %v295
    %331 = vmatmul.f32.gmra.mxu0 %v311
    %v332 = vpop.f32.mrf.mxu0
    %v333 = vadd.f32 0.0, %v332
    %334 = vmatmul.f32.gmra.mxu0 %v313
    %v335 = vpop.f32.mrf.mxu0
    %v336 = vadd.f32 0.0, %v335
    %337 = vdwg.mxu0
    %338 = vmatpush.msra.mxu0 0.0
    %339 = vmatpush.msra.mxu0 0.0
    %340 = vmatpush.msra.mxu0 0.0
    %341 = vmatpush.msra.mxu0 0.0
    %342 = vmatpush.msra.mxu0 0.0
    %343 = vmatpush.msra.mxu0 0.0
    %344 = vmatpush.msra.mxu0 0.0
    %345 = vmatpush.msra.mxu0 0.0
    %346 = vmatpush.msra.mxu0 0.0
    %347 = vmatpush.msra.mxu0 0.0
    %348 = vmatpush.msra.mxu0 %v306
    %349 = vmatpush.msra.mxu0 %v304
    %350 = vmatpush.msra.mxu0 %v302
    %351 = vmatpush.msra.mxu0 %v300
    %352 = vmatpush.msra.mxu0 %v298
    %353 = vmatpush.msra.mxu0 %v296
    %354 = vmatmul.f32.gmra.mxu0 %v311
    %v355 = vpop.f32.mrf.mxu0
    %v356 = vadd.f32 0.0, %v355
    %357 = vmatmul.f32.gmra.mxu0 %v313
    %v358 = vpop.f32.mrf.mxu0
    %v359 = vadd.f32 0.0, %v358
    %360 = vdwg.mxu0
    %v361 = vadd.f32 %v266, %v333
    %v362 = vadd.f32 %v289, %v356
    %v363 = vadd.f32 %v269, %v336
    %v364 = vadd.f32 %v292, %v359
    %v365 = vld [vmem:[#allocation2 + $0x1] sm:$0xff]
    %v366 = vld [vmem:[#allocation2 + $0x9] sm:$0xff]
    %s367 = scalar_lea.vmem [#allocation6], 288
    %v368 = vld [vmem:[%s367] sm:$0xff]
    %v369 = vld [vmem:[%s367 + $0x8] sm:$0xff]
    %v370 = vld [vmem:[%s367 + $0x10] sm:$0xff]
    %v371 = vld [vmem:[%s367 + $0x18] sm:$0xff]
    %v372 = vld [vmem:[%s367 + $0x20] sm:$0xff]
    %v373 = vld [vmem:[%s367 + $0x28] sm:$0xff]
    %v374 = vld [vmem:[%s367 + $0x30] sm:$0xff]
    %v375 = vld [vmem:[%s367 + $0x38] sm:$0xff]
    %v376 = vld [vmem:[%s367 + $0x40] sm:$0xff]
    %v377 = vld [vmem:[%s367 + $0x48] sm:$0xff]
    %v378 = vld [vmem:[%s367 + $0x50] sm:$0xff]
    %v379 = vld [vmem:[%s367 + $0x58] sm:$0xff]
    %v381 = vsel %vm193, %v365, 0
    %v384 = vsel %vm193, %v366, 0
    %386 = vmatpush.msra.mxu0 0.0
    %387 = vmatpush.msra.mxu0 0.0
    %388 = vmatpush.msra.mxu0 0.0
    %389 = vmatpush.msra.mxu0 0.0
    %390 = vmatpush.msra.mxu0 0.0
    %391 = vmatpush.msra.mxu0 0.0
    %392 = vmatpush.msra.mxu0 0.0
    %393 = vmatpush.msra.mxu0 0.0
    %394 = vmatpush.msra.mxu0 0.0
    %395 = vmatpush.msra.mxu0 0.0
    %396 = vmatpush.msra.mxu0 %v378
    %397 = vmatpush.msra.mxu0 %v376
    %398 = vmatpush.msra.mxu0 %v374
    %399 = vmatpush.msra.mxu0 %v372
    %400 = vmatpush.msra.mxu0 %v370
    %401 = vmatpush.msra.mxu0 %v368
    %402 = vmatmul.f32.gmra.mxu0 %v381
    %v403 = vpop.f32.mrf.mxu0
    %v404 = vadd.f32 0.0, %v403
    %405 = vmatmul.f32.gmra.mxu0 %v384
    %v406 = vpop.f32.mrf.mxu0
    %v407 = vadd.f32 0.0, %v406
    %408 = vdwg.mxu0
    %409 = vmatpush.msra.mxu0 0.0
    %410 = vmatpush.msra.mxu0 0.0
    %411 = vmatpush.msra.mxu0 0.0
    %412 = vmatpush.msra.mxu0 0.0
    %413 = vmatpush.msra.mxu0 0.0
    %414 = vmatpush.msra.mxu0 0.0
    %415 = vmatpush.msra.mxu0 0.0
    %416 = vmatpush.msra.mxu0 0.0
    %417 = vmatpush.msra.mxu0 0.0
    %418 = vmatpush.msra.mxu0 0.0
    %419 = vmatpush.msra.mxu0 %v379
    %420 = vmatpush.msra.mxu0 %v377
    %421 = vmatpush.msra.mxu0 %v375
    %422 = vmatpush.msra.mxu0 %v373
    %423 = vmatpush.msra.mxu0 %v371
    %424 = vmatpush.msra.mxu0 %v369
    %425 = vmatmul.f32.gmra.mxu0 %v381
    %v426 = vpop.f32.mrf.mxu0
    %v427 = vadd.f32 0.0, %v426
    %428 = vmatmul.f32.gmra.mxu0 %v384
    %v429 = vpop.f32.mrf.mxu0
    %v430 = vadd.f32 0.0, %v429
    %431 = vdwg.mxu0
    %v432 = vadd.f32 %v361, %v404
    %v433 = vadd.f32 %v362, %v427
    %v434 = vadd.f32 %v363, %v407
    %v435 = vadd.f32 %v364, %v430
    %s436 = scalar_lea.vmem [#allocation6], 384
    %v437 = vld [vmem:[%s436] sm:$0xff]
    %v438 = vld [vmem:[%s436 + $0x8] sm:$0xff]
    %v439 = vld [vmem:[%s436 + $0x10] sm:$0xff]
    %v440 = vld [vmem:[%s436 + $0x18] sm:$0xff]
    %v441 = vld [vmem:[%s436 + $0x20] sm:$0xff]
    %v442 = vld [vmem:[%s436 + $0x28] sm:$0xff]
    %v443 = vld [vmem:[%s436 + $0x30] sm:$0xff]
    %v444 = vld [vmem:[%s436 + $0x38] sm:$0xff]
    %v445 = vld [vmem:[%s436 + $0x40] sm:$0xff]
    %v446 = vld [vmem:[%s436 + $0x48] sm:$0xff]
    %v447 = vld [vmem:[%s436 + $0x50] sm:$0xff]
    %v448 = vld [vmem:[%s436 + $0x58] sm:$0xff]
    %449 = vrot.lane.b32.xlu0 %v365, 125
    %v450 = vpop.permute.xlu0 %449
    %451 = vrot.lane.b32.xlu0 %v366, 125
    %v452 = vpop.permute.xlu0 %451
    %v453 = vsel %vm193, %v450, 0
    %v455 = vsel %vm193, %v452, 0
    %457 = vmatpush.msra.mxu0 0.0
    %458 = vmatpush.msra.mxu0 0.0
    %459 = vmatpush.msra.mxu0 0.0
    %460 = vmatpush.msra.mxu0 0.0
    %461 = vmatpush.msra.mxu0 0.0
    %462 = vmatpush.msra.mxu0 0.0
    %463 = vmatpush.msra.mxu0 0.0
    %464 = vmatpush.msra.mxu0 0.0
    %465 = vmatpush.msra.mxu0 0.0
    %466 = vmatpush.msra.mxu0 0.0
    %467 = vmatpush.msra.mxu0 %v447
    %468 = vmatpush.msra.mxu0 %v445
    %469 = vmatpush.msra.mxu0 %v443
    %470 = vmatpush.msra.mxu0 %v441
    %471 = vmatpush.msra.mxu0 %v439
    %472 = vmatpush.msra.mxu0 %v437
    %473 = vmatmul.f32.gmra.mxu0 %v453
    %v474 = vpop.f32.mrf.mxu0
    %v475 = vadd.f32 0.0, %v474
    %476 = vmatmul.f32.gmra.mxu0 %v455
    %v477 = vpop.f32.mrf.mxu0
    %v478 = vadd.f32 0.0, %v477
    %479 = vdwg.mxu0
    %480 = vmatpush.msra.mxu0 0.0
    %481 = vmatpush.msra.mxu0 0.0
    %482 = vmatpush.msra.mxu0 0.0
    %483 = vmatpush.msra.mxu0 0.0
    %484 = vmatpush.msra.mxu0 0.0
    %485 = vmatpush.msra.mxu0 0.0
    %486 = vmatpush.msra.mxu0 0.0
    %487 = vmatpush.msra.mxu0 0.0
    %488 = vmatpush.msra.mxu0 0.0
    %489 = vmatpush.msra.mxu0 0.0
    %490 = vmatpush.msra.mxu0 %v448
    %491 = vmatpush.msra.mxu0 %v446
    %492 = vmatpush.msra.mxu0 %v444
    %493 = vmatpush.msra.mxu0 %v442
    %494 = vmatpush.msra.mxu0 %v440
    %495 = vmatpush.msra.mxu0 %v438
    %496 = vmatmul.f32.gmra.mxu0 %v453
    %v497 = vpop.f32.mrf.mxu0
    %v498 = vadd.f32 0.0, %v497
    %499 = vmatmul.f32.gmra.mxu0 %v455
    %v500 = vpop.f32.mrf.mxu0
    %v501 = vadd.f32 0.0, %v500
    %502 = vdwg.mxu0
    %v503 = vadd.f32 %v432, %v475
    %v504 = vadd.f32 %v433, %v498
    %v505 = vadd.f32 %v434, %v478
    %v506 = vadd.f32 %v435, %v501
    %s507 = scalar_lea.vmem [#allocation6], 480
    %v508 = vld [vmem:[%s507] sm:$0xff]
    %v509 = vld [vmem:[%s507 + $0x8] sm:$0xff]
    %v510 = vld [vmem:[%s507 + $0x10] sm:$0xff]
    %v511 = vld [vmem:[%s507 + $0x18] sm:$0xff]
    %v512 = vld [vmem:[%s507 + $0x20] sm:$0xff]
    %v513 = vld [vmem:[%s507 + $0x28] sm:$0xff]
    %v514 = vld [vmem:[%s507 + $0x30] sm:$0xff]
    %v515 = vld [vmem:[%s507 + $0x38] sm:$0xff]
    %v516 = vld [vmem:[%s507 + $0x40] sm:$0xff]
    %v517 = vld [vmem:[%s507 + $0x48] sm:$0xff]
    %v518 = vld [vmem:[%s507 + $0x50] sm:$0xff]
    %v519 = vld [vmem:[%s507 + $0x58] sm:$0xff]
    %520 = vrot.lane.b32.xlu0 %v365, 122
    %v521 = vpop.permute.xlu0 %520
    %522 = vrot.lane.b32.xlu0 %v366, 122
    %v523 = vpop.permute.xlu0 %522
    %v524 = vsel %vm193, %v521, 0
    %v526 = vsel %vm193, %v523, 0
    %528 = vmatpush.msra.mxu0 0.0
    %529 = vmatpush.msra.mxu0 0.0
    %530 = vmatpush.msra.mxu0 0.0
    %531 = vmatpush.msra.mxu0 0.0
    %532 = vmatpush.msra.mxu0 0.0
    %533 = vmatpush.msra.mxu0 0.0
    %534 = vmatpush.msra.mxu0 0.0
    %535 = vmatpush.msra.mxu0 0.0
    %536 = vmatpush.msra.mxu0 0.0
    %537 = vmatpush.msra.mxu0 0.0
    %538 = vmatpush.msra.mxu0 %v518
    %539 = vmatpush.msra.mxu0 %v516
    %540 = vmatpush.msra.mxu0 %v514
    %541 = vmatpush.msra.mxu0 %v512
    %542 = vmatpush.msra.mxu0 %v510
    %543 = vmatpush.msra.mxu0 %v508
    %544 = vmatmul.f32.gmra.mxu0 %v524
    %v545 = vpop.f32.mrf.mxu0
    %v546 = vadd.f32 0.0, %v545
    %547 = vmatmul.f32.gmra.mxu0 %v526
    %v548 = vpop.f32.mrf.mxu0
    %v549 = vadd.f32 0.0, %v548
    %550 = vdwg.mxu0
    %551 = vmatpush.msra.mxu0 0.0
    %552 = vmatpush.msra.mxu0 0.0
    %553 = vmatpush.msra.mxu0 0.0
    %554 = vmatpush.msra.mxu0 0.0
    %555 = vmatpush.msra.mxu0 0.0
    %556 = vmatpush.msra.mxu0 0.0
    %557 = vmatpush.msra.mxu0 0.0
    %558 = vmatpush.msra.mxu0 0.0
    %559 = vmatpush.msra.mxu0 0.0
    %560 = vmatpush.msra.mxu0 0.0
    %561 = vmatpush.msra.mxu0 %v519
    %562 = vmatpush.msra.mxu0 %v517
    %563 = vmatpush.msra.mxu0 %v515
    %564 = vmatpush.msra.mxu0 %v513
    %565 = vmatpush.msra.mxu0 %v511
    %566 = vmatpush.msra.mxu0 %v509
    %567 = vmatmul.f32.gmra.mxu0 %v524
    %v568 = vpop.f32.mrf.mxu0
    %v569 = vadd.f32 0.0, %v568
    %570 = vmatmul.f32.gmra.mxu0 %v526
    %v571 = vpop.f32.mrf.mxu0
    %v572 = vadd.f32 0.0, %v571
    %573 = vdwg.mxu0
    %v574 = vadd.f32 %v503, %v546
    %v575 = vadd.f32 %v504, %v569
    %v576 = vadd.f32 %v505, %v549
    %v577 = vadd.f32 %v506, %v572
    %v578 = vld [vmem:[#allocation2 + $0x2] sm:$0xff]
    %v579 = vld [vmem:[#allocation2 + $0xa] sm:$0xff]
    %s580 = scalar_lea.vmem [#allocation6], 576
    %v581 = vld [vmem:[%s580] sm:$0xff]
    %v582 = vld [vmem:[%s580 + $0x8] sm:$0xff]
    %v583 = vld [vmem:[%s580 + $0x10] sm:$0xff]
    %v584 = vld [vmem:[%s580 + $0x18] sm:$0xff]
    %v585 = vld [vmem:[%s580 + $0x20] sm:$0xff]
    %v586 = vld [vmem:[%s580 + $0x28] sm:$0xff]
    %v587 = vld [vmem:[%s580 + $0x30] sm:$0xff]
    %v588 = vld [vmem:[%s580 + $0x38] sm:$0xff]
    %v589 = vld [vmem:[%s580 + $0x40] sm:$0xff]
    %v590 = vld [vmem:[%s580 + $0x48] sm:$0xff]
    %v591 = vld [vmem:[%s580 + $0x50] sm:$0xff]
    %v592 = vld [vmem:[%s580 + $0x58] sm:$0xff]
    %v594 = vsel %vm193, %v578, 0
    %v597 = vsel %vm193, %v579, 0
    %599 = vmatpush.msra.mxu0 0.0
    %600 = vmatpush.msra.mxu0 0.0
    %601 = vmatpush.msra.mxu0 0.0
    %602 = vmatpush.msra.mxu0 0.0
    %603 = vmatpush.msra.mxu0 0.0
    %604 = vmatpush.msra.mxu0 0.0
    %605 = vmatpush.msra.mxu0 0.0
    %606 = vmatpush.msra.mxu0 0.0
    %607 = vmatpush.msra.mxu0 0.0
    %608 = vmatpush.msra.mxu0 0.0
    %609 = vmatpush.msra.mxu0 %v591
    %610 = vmatpush.msra.mxu0 %v589
    %611 = vmatpush.msra.mxu0 %v587
    %612 = vmatpush.msra.mxu0 %v585
    %613 = vmatpush.msra.mxu0 %v583
    %614 = vmatpush.msra.mxu0 %v581
    %615 = vmatmul.f32.gmra.mxu0 %v594
    %v616 = vpop.f32.mrf.mxu0
    %v617 = vadd.f32 0.0, %v616
    %618 = vmatmul.f32.gmra.mxu0 %v597
    %v619 = vpop.f32.mrf.mxu0
    %v620 = vadd.f32 0.0, %v619
    %621 = vdwg.mxu0
    %622 = vmatpush.msra.mxu0 0.0
    %623 = vmatpush.msra.mxu0 0.0
    %624 = vmatpush.msra.mxu0 0.0
    %625 = vmatpush.msra.mxu0 0.0
    %626 = vmatpush.msra.mxu0 0.0
    %627 = vmatpush.msra.mxu0 0.0
    %628 = vmatpush.msra.mxu0 0.0
    %629 = vmatpush.msra.mxu0 0.0
    %630 = vmatpush.msra.mxu0 0.0
    %631 = vmatpush.msra.mxu0 0.0
    %632 = vmatpush.msra.mxu0 %v592
    %633 = vmatpush.msra.mxu0 %v590
    %634 = vmatpush.msra.mxu0 %v588
    %635 = vmatpush.msra.mxu0 %v586
    %636 = vmatpush.msra.mxu0 %v584
    %637 = vmatpush.msra.mxu0 %v582
    %638 = vmatmul.f32.gmra.mxu0 %v594
    %v639 = vpop.f32.mrf.mxu0
    %v640 = vadd.f32 0.0, %v639
    %641 = vmatmul.f32.gmra.mxu0 %v597
    %v642 = vpop.f32.mrf.mxu0
    %v643 = vadd.f32 0.0, %v642
    %644 = vdwg.mxu0
    %v645 = vadd.f32 %v574, %v617
    %v646 = vadd.f32 %v575, %v640
    %v647 = vadd.f32 %v576, %v620
    %v648 = vadd.f32 %v577, %v643
    %s649 = scalar_lea.vmem [#allocation6], 672
    %v650 = vld [vmem:[%s649] sm:$0xff]
    %v651 = vld [vmem:[%s649 + $0x8] sm:$0xff]
    %v652 = vld [vmem:[%s649 + $0x10] sm:$0xff]
    %v653 = vld [vmem:[%s649 + $0x18] sm:$0xff]
    %v654 = vld [vmem:[%s649 + $0x20] sm:$0xff]
    %v655 = vld [vmem:[%s649 + $0x28] sm:$0xff]
    %v656 = vld [vmem:[%s649 + $0x30] sm:$0xff]
    %v657 = vld [vmem:[%s649 + $0x38] sm:$0xff]
    %v658 = vld [vmem:[%s649 + $0x40] sm:$0xff]
    %v659 = vld [vmem:[%s649 + $0x48] sm:$0xff]
    %v660 = vld [vmem:[%s649 + $0x50] sm:$0xff]
    %v661 = vld [vmem:[%s649 + $0x58] sm:$0xff]
    %662 = vrot.lane.b32.xlu0 %v578, 125
    %v663 = vpop.permute.xlu0 %662
    %664 = vrot.lane.b32.xlu0 %v579, 125
    %v665 = vpop.permute.xlu0 %664
    %v666 = vsel %vm193, %v663, 0
    %v668 = vsel %vm193, %v665, 0
    %670 = vmatpush.msra.mxu0 0.0
    %671 = vmatpush.msra.mxu0 0.0
    %672 = vmatpush.msra.mxu0 0.0
    %673 = vmatpush.msra.mxu0 0.0
    %674 = vmatpush.msra.mxu0 0.0
    %675 = vmatpush.msra.mxu0 0.0
    %676 = vmatpush.msra.mxu0 0.0
    %677 = vmatpush.msra.mxu0 0.0
    %678 = vmatpush.msra.mxu0 0.0
    %679 = vmatpush.msra.mxu0 0.0
    %680 = vmatpush.msra.mxu0 %v660
    %681 = vmatpush.msra.mxu0 %v658
    %682 = vmatpush.msra.mxu0 %v656
    %683 = vmatpush.msra.mxu0 %v654
    %684 = vmatpush.msra.mxu0 %v652
    %685 = vmatpush.msra.mxu0 %v650
    %686 = vmatmul.f32.gmra.mxu0 %v666
    %v687 = vpop.f32.mrf.mxu0
    %v688 = vadd.f32 0.0, %v687
    %689 = vmatmul.f32.gmra.mxu0 %v668
    %v690 = vpop.f32.mrf.mxu0
    %v691 = vadd.f32 0.0, %v690
    %692 = vdwg.mxu0
    %693 = vmatpush.msra.mxu0 0.0
    %694 = vmatpush.msra.mxu0 0.0
    %695 = vmatpush.msra.mxu0 0.0
    %696 = vmatpush.msra.mxu0 0.0
    %697 = vmatpush.msra.mxu0 0.0
    %698 = vmatpush.msra.mxu0 0.0
    %699 = vmatpush.msra.mxu0 0.0
    %700 = vmatpush.msra.mxu0 0.0
    %701 = vmatpush.msra.mxu0 0.0
    %702 = vmatpush.msra.mxu0 0.0
    %703 = vmatpush.msra.mxu0 %v661
    %704 = vmatpush.msra.mxu0 %v659
    %705 = vmatpush.msra.mxu0 %v657
    %706 = vmatpush.msra.mxu0 %v655
    %707 = vmatpush.msra.mxu0 %v653
    %708 = vmatpush.msra.mxu0 %v651
    %709 = vmatmul.f32.gmra.mxu0 %v666
    %v710 = vpop.f32.mrf.mxu0
    %v711 = vadd.f32 0.0, %v710
    %712 = vmatmul.f32.gmra.mxu0 %v668
    %v713 = vpop.f32.mrf.mxu0
    %v714 = vadd.f32 0.0, %v713
    %715 = vdwg.mxu0
    %v716 = vadd.f32 %v645, %v688
    %v717 = vadd.f32 %v646, %v711
    %v718 = vadd.f32 %v647, %v691
    %v719 = vadd.f32 %v648, %v714
    %s720 = scalar_lea.vmem [#allocation6], 768
    %v721 = vld [vmem:[%s720] sm:$0xff]
    %v722 = vld [vmem:[%s720 + $0x8] sm:$0xff]
    %v723 = vld [vmem:[%s720 + $0x10] sm:$0xff]
    %v724 = vld [vmem:[%s720 + $0x18] sm:$0xff]
    %v725 = vld [vmem:[%s720 + $0x20] sm:$0xff]
    %v726 = vld [vmem:[%s720 + $0x28] sm:$0xff]
    %v727 = vld [vmem:[%s720 + $0x30] sm:$0xff]
    %v728 = vld [vmem:[%s720 + $0x38] sm:$0xff]
    %v729 = vld [vmem:[%s720 + $0x40] sm:$0xff]
    %v730 = vld [vmem:[%s720 + $0x48] sm:$0xff]
    %v731 = vld [vmem:[%s720 + $0x50] sm:$0xff]
    %v732 = vld [vmem:[%s720 + $0x58] sm:$0xff]
    %733 = vrot.lane.b32.xlu0 %v578, 122
    %v734 = vpop.permute.xlu0 %733
    %735 = vrot.lane.b32.xlu0 %v579, 122
    %v736 = vpop.permute.xlu0 %735
    %v737 = vsel %vm193, %v734, 0
    %v739 = vsel %vm193, %v736, 0
    %741 = vmatpush.msra.mxu0 0.0
    %742 = vmatpush.msra.mxu0 0.0
    %743 = vmatpush.msra.mxu0 0.0
    %744 = vmatpush.msra.mxu0 0.0
    %745 = vmatpush.msra.mxu0 0.0
    %746 = vmatpush.msra.mxu0 0.0
    %747 = vmatpush.msra.mxu0 0.0
    %748 = vmatpush.msra.mxu0 0.0
    %749 = vmatpush.msra.mxu0 0.0
    %750 = vmatpush.msra.mxu0 0.0
    %751 = vmatpush.msra.mxu0 %v731
    %752 = vmatpush.msra.mxu0 %v729
    %753 = vmatpush.msra.mxu0 %v727
    %754 = vmatpush.msra.mxu0 %v725
    %755 = vmatpush.msra.mxu0 %v723
    %756 = vmatpush.msra.mxu0 %v721
    %757 = vmatmul.f32.gmra.mxu0 %v737
    %v758 = vpop.f32.mrf.mxu0
    %v759 = vadd.f32 0.0, %v758
    %760 = vmatmul.f32.gmra.mxu0 %v739
    %v761 = vpop.f32.mrf.mxu0
    %v762 = vadd.f32 0.0, %v761
    %763 = vdwg.mxu0
    %764 = vmatpush.msra.mxu0 0.0
    %765 = vmatpush.msra.mxu0 0.0
    %766 = vmatpush.msra.mxu0 0.0
    %767 = vmatpush.msra.mxu0 0.0
    %768 = vmatpush.msra.mxu0 0.0
    %769 = vmatpush.msra.mxu0 0.0
    %770 = vmatpush.msra.mxu0 0.0
    %771 = vmatpush.msra.mxu0 0.0
    %772 = vmatpush.msra.mxu0 0.0
    %773 = vmatpush.msra.mxu0 0.0
    %774 = vmatpush.msra.mxu0 %v732
    %775 = vmatpush.msra.mxu0 %v730
    %776 = vmatpush.msra.mxu0 %v728
    %777 = vmatpush.msra.mxu0 %v726
    %778 = vmatpush.msra.mxu0 %v724
    %779 = vmatpush.msra.mxu0 %v722
    %780 = vmatmul.f32.gmra.mxu0 %v737
    %v781 = vpop.f32.mrf.mxu0
    %v782 = vadd.f32 0.0, %v781
    %783 = vmatmul.f32.gmra.mxu0 %v739
    %v784 = vpop.f32.mrf.mxu0
    %v785 = vadd.f32 0.0, %v784
    %786 = vdwg.mxu0
    %v787 = vadd.f32 %v716, %v759
    %v788 = vadd.f32 %v717, %v782
    %v789 = vadd.f32 %v718, %v762
    %v790 = vadd.f32 %v719, %v785
    %791 = vst [vmem:[#allocation5] sm:$0xff] %v787
    %792 = vst [vmem:[#allocation5 + $0x8] sm:$0xff] %v788
    %793 = vst [vmem:[#allocation5 + $0x10] sm:$0xff] %v789
    %794 = vst [vmem:[#allocation5 + $0x18] sm:$0xff] %v790
    %v795 = vld [vmem:[#allocation8] sm:$0x1]
    %v796 = vld [vmem:[#allocation5] ss:$8 sm:$0x3]
    %s797 = scalar_lea.vmem [#allocation5], 1
    %v798 = vld [vmem:[%s797] ss:$8 sm:$0x3]
    %v799 = vmax.f32 %v796, %v798
    %v801 = vrot.slane %v799, 1
    %v803 = vmax.f32 %v799, %v801
    %v804 = vadd.f32 %v803, %v795
    %v805 = vmax.f32 %v804, 0.0
    %v807 = vperm.slane %v805, 0
    %808 = vrot.lane.b32.xlu0 %v807, 16
    %v809 = vpop.permute.xlu0 %808
    %vm811 = vcmask 1040512
    %812 = vst.msk [vmem:[#allocation3 + $0x1] sm:$0x1] %vm811, %v809
    %vm813 = vcmask 122880
    %814 = vst.msk [vmem:[#allocation3 + $0x9] sm:$0x1] %vm813, %v809
    %s815 = scalar_lea.vmem [#allocation5], 2
    %v816 = vld [vmem:[%s815] ss:$8 sm:$0x3]
    %s817 = scalar_lea.vmem [#allocation5], 3
    %v818 = vld [vmem:[%s817] ss:$8 sm:$0x3]
    %v819 = vmax.f32 %v816, %v818
    %v821 = vrot.slane %v819, 1
    %v823 = vmax.f32 %v819, %v821
    %v824 = vadd.f32 %v823, %v795
    %v825 = vmax.f32 %v824, 0.0
    %v827 = vperm.slane %v825, 0
    %828 = vrot.lane.b32.xlu0 %v827, 16
    %v829 = vpop.permute.xlu0 %828
    %831 = vst.msk [vmem:[#allocation3 + $0x2] sm:$0x1] %vm811, %v829
    %832 = vst.msk [vmem:[#allocation3 + $0xa] sm:$0x1] %vm813, %v829
    %s833 = scalar_lea.vmem [#allocation5], 4
    %v834 = vld [vmem:[%s833] ss:$8 sm:$0x3]
    %s835 = scalar_lea.vmem [#allocation5], 5
    %v836 = vld [vmem:[%s835] ss:$8 sm:$0x3]
    %v837 = vmax.f32 %v834, %v836
    %v839 = vrot.slane %v837, 1
    %v841 = vmax.f32 %v837, %v839
    %v842 = vadd.f32 %v841, %v795
    %v843 = vmax.f32 %v842, 0.0
    %v845 = vperm.slane %v843, 0
    %846 = vrot.lane.b32.xlu0 %v845, 16
    %v847 = vpop.permute.xlu0 %846
    %849 = vst.msk [vmem:[#allocation3 + $0x3] sm:$0x1] %vm811, %v847
    %850 = vst.msk [vmem:[#allocation3 + $0xb] sm:$0x1] %vm813, %v847
    %s851 = scalar_lea.vmem [#allocation5], 6
    %v852 = vld [vmem:[%s851] ss:$8 sm:$0x3]
    %s853 = scalar_lea.vmem [#allocation5], 7
    %v854 = vld [vmem:[%s853] ss:$8 sm:$0x3]
    %v855 = vmax.f32 %v852, %v854
    %v857 = vrot.slane %v855, 1
    %v859 = vmax.f32 %v855, %v857
    %v860 = vadd.f32 %v859, %v795
    %v861 = vmax.f32 %v860, 0.0
    %v863 = vperm.slane %v861, 0
    %864 = vrot.lane.b32.xlu0 %v863, 16
    %v865 = vpop.permute.xlu0 %864
    %867 = vst.msk [vmem:[#allocation3 + $0x4] sm:$0x1] %vm811, %v865
    %868 = vst.msk [vmem:[#allocation3 + $0xc] sm:$0x1] %vm813, %v865
    %s869 = scalar_lea.vmem [#allocation5], 16
    %v870 = vld [vmem:[%s869] ss:$8 sm:$0x3]
    %s871 = scalar_lea.vmem [#allocation5], 17
    %v872 = vld [vmem:[%s871] ss:$8 sm:$0x3]
    %v873 = vmax.f32 %v870, %v872
    %v875 = vrot.slane %v873, 1
    %v877 = vmax.f32 %v873, %v875
    %v878 = vadd.f32 %v877, %v795
    %v879 = vmax.f32 %v878, 0.0
    %v881 = vperm.slane %v879, 0
    %882 = vrot.lane.b32.xlu0 %v881, 16
    %v883 = vpop.permute.xlu0 %882
    %885 = vst.msk [vmem:[#allocation3 + $0x5] sm:$0x1] %vm811, %v883
    %886 = vst.msk [vmem:[#allocation3 + $0xd] sm:$0x1] %vm813, %v883
    %s887 = scalar_lea.vmem [#allocation5], 18
    %v888 = vld [vmem:[%s887] ss:$8 sm:$0x3]
    %s889 = scalar_lea.vmem [#allocation5], 19
    %v890 = vld [vmem:[%s889] ss:$8 sm:$0x3]
    %v891 = vmax.f32 %v888, %v890
    %v893 = vrot.slane %v891, 1
    %v895 = vmax.f32 %v891, %v893
    %v896 = vadd.f32 %v895, %v795
    %v897 = vmax.f32 %v896, 0.0
    %v899 = vperm.slane %v897, 0
    %900 = vrot.lane.b32.xlu0 %v899, 16
    %v901 = vpop.permute.xlu0 %900
    %903 = vst.msk [vmem:[#allocation3 + $0x6] sm:$0x1] %vm811, %v901
    %904 = vst.msk [vmem:[#allocation3 + $0xe] sm:$0x1] %vm813, %v901
    %s905 = scalar_lea.vmem [#allocation5], 20
    %v906 = vld [vmem:[%s905] ss:$8 sm:$0x3]
    %s907 = scalar_lea.vmem [#allocation5], 21
    %v908 = vld [vmem:[%s907] ss:$8 sm:$0x3]
    %v909 = vmax.f32 %v906, %v908
    %v911 = vrot.slane %v909, 1
    %v913 = vmax.f32 %v909, %v911
    %v914 = vadd.f32 %v913, %v795
    %v915 = vmax.f32 %v914, 0.0
    %v917 = vperm.slane %v915, 0
    %918 = vrot.lane.b32.xlu0 %v917, 16
    %v919 = vpop.permute.xlu0 %918
    %921 = vst.msk [vmem:[#allocation3 + $0x7] sm:$0x1] %vm811, %v919
    %922 = vst.msk [vmem:[#allocation3 + $0xf] sm:$0x1] %vm813, %v919
    %s923 = scalar_lea.vmem [#allocation5], 22
    %v924 = vld [vmem:[%s923] ss:$8 sm:$0x3]
    %s925 = scalar_lea.vmem [#allocation5], 23
    %v926 = vld [vmem:[%s925] ss:$8 sm:$0x3]
    %v927 = vmax.f32 %v924, %v926
    %v929 = vrot.slane %v927, 1
    %v931 = vmax.f32 %v927, %v929
    %v932 = vadd.f32 %v931, %v795
    %v933 = vmax.f32 %v932, 0.0
    %v935 = vperm.slane %v933, 0
    %936 = vrot.lane.b32.xlu0 %v935, 16
    %v937 = vpop.permute.xlu0 %936
    %939 = vst.msk [vmem:[#allocation3 + $0x10] sm:$0x1] %vm811, %v937
    %940 = vst.msk [vmem:[#allocation3 + $0x18] sm:$0x1] %vm813, %v937
    %v941 = vld [vmem:[#allocation3] sm:$0xff]
    %v942 = vld [vmem:[#allocation10] sm:$0xff]
    %v943 = vld [vmem:[#allocation10 + $0x8] sm:$0xff]
    %v944 = vld [vmem:[#allocation10 + $0x10] sm:$0xff]
    %v945 = vld [vmem:[#allocation10 + $0x18] sm:$0xff]
    %v946 = vld [vmem:[#allocation10 + $0x20] sm:$0xff]
    %v947 = vld [vmem:[#allocation10 + $0x28] sm:$0xff]
    %v948 = vld [vmem:[#allocation10 + $0x30] sm:$0xff]
    %v949 = vld [vmem:[#allocation10 + $0x38] sm:$0xff]
    %v950 = vld [vmem:[#allocation10 + $0x40] sm:$0xff]
    %v951 = vld [vmem:[#allocation10 + $0x48] sm:$0xff]
    %v952 = vld [vmem:[#allocation10 + $0x50] sm:$0xff]
    %v953 = vld [vmem:[#allocation10 + $0x58] sm:$0xff]
    %v954 = vld [vmem:[#allocation10 + $0x60] sm:$0xff]
    %v955 = vld [vmem:[#allocation10 + $0x68] sm:$0xff]
    %v956 = vld [vmem:[#allocation10 + $0x70] sm:$0xff]
    %v957 = vld [vmem:[#allocation10 + $0x78] sm:$0xff]
    %v958 = vld [vmem:[#allocation10 + $0x80] sm:$0xff]
    %v959 = vld [vmem:[#allocation10 + $0x88] sm:$0xff]
    %v960 = vld [vmem:[#allocation10 + $0x90] sm:$0xff]
    %v961 = vld [vmem:[#allocation10 + $0x98] sm:$0xff]
    %v962 = vld [vmem:[#allocation10 + $0xa0] sm:$0xff]
    %v963 = vld [vmem:[#allocation10 + $0xa8] sm:$0xff]
    %v964 = vld [vmem:[#allocation10 + $0xb0] sm:$0xff]
    %v965 = vld [vmem:[#allocation10 + $0xb8] sm:$0xff]
    %v966 = vld [vmem:[#allocation10 + $0xc0] sm:$0xff]
    %v967 = vld [vmem:[#allocation10 + $0xc8] sm:$0xff]
    %v968 = vld [vmem:[#allocation10 + $0xd0] sm:$0xff]
    %v969 = vld [vmem:[#allocation10 + $0xd8] sm:$0xff]
    %v970 = vld [vmem:[#allocation10 + $0xe0] sm:$0xff]
    %v971 = vld [vmem:[#allocation10 + $0xe8] sm:$0xff]
    %v972 = vld [vmem:[#allocation10 + $0xf0] sm:$0xff]
    %v973 = vld [vmem:[#allocation10 + $0xf8] sm:$0xff]
    %v974 = vld [vmem:[#allocation3 + $0x8] sm:$0xff]
    %s975 = scalar_lea.vmem [#allocation10], 256
    %v976 = vld [vmem:[%s975] sm:$0xff]
    %v977 = vld [vmem:[%s975 + $0x8] sm:$0xff]
    %v978 = vld [vmem:[%s975 + $0x10] sm:$0xff]
    %v979 = vld [vmem:[%s975 + $0x18] sm:$0xff]
    %v980 = vld [vmem:[%s975 + $0x20] sm:$0xff]
    %v981 = vld [vmem:[%s975 + $0x28] sm:$0xff]
    %v982 = vld [vmem:[%s975 + $0x30] sm:$0xff]
    %v983 = vld [vmem:[%s975 + $0x38] sm:$0xff]
    %v984 = vld [vmem:[%s975 + $0x40] sm:$0xff]
    %v985 = vld [vmem:[%s975 + $0x48] sm:$0xff]
    %v986 = vld [vmem:[%s975 + $0x50] sm:$0xff]
    %v987 = vld [vmem:[%s975 + $0x58] sm:$0xff]
    %v988 = vld [vmem:[%s975 + $0x60] sm:$0xff]
    %v989 = vld [vmem:[%s975 + $0x68] sm:$0xff]
    %v990 = vld [vmem:[%s975 + $0x70] sm:$0xff]
    %v991 = vld [vmem:[%s975 + $0x78] sm:$0xff]
    %v992 = vld [vmem:[%s975 + $0x80] sm:$0xff]
    %v993 = vld [vmem:[%s975 + $0x88] sm:$0xff]
    %v994 = vld [vmem:[%s975 + $0x90] sm:$0xff]
    %v995 = vld [vmem:[%s975 + $0x98] sm:$0xff]
    %v996 = vld [vmem:[%s975 + $0xa0] sm:$0xff]
    %v997 = vld [vmem:[%s975 + $0xa8] sm:$0xff]
    %v998 = vld [vmem:[%s975 + $0xb0] sm:$0xff]
    %v999 = vld [vmem:[%s975 + $0xb8] sm:$0xff]
    %v1000 = vld [vmem:[%s975 + $0xc0] sm:$0xff]
    %v1001 = vld [vmem:[%s975 + $0xc8] sm:$0xff]
    %v1002 = vld [vmem:[%s975 + $0xd0] sm:$0xff]
    %v1003 = vld [vmem:[%s975 + $0xd8] sm:$0xff]
    %v1004 = vld [vmem:[%s975 + $0xe0] sm:$0xff]
    %v1005 = vld [vmem:[%s975 + $0xe8] sm:$0xff]
    %v1006 = vld [vmem:[%s975 + $0xf0] sm:$0xff]
    %v1007 = vld [vmem:[%s975 + $0xf8] sm:$0xff]
    %1010 = vrot.lane.b32.xlu0 %v941, 112
    %v1011 = vpop.permute.xlu0 %1010
    %1012 = vrot.lane.b32.xlu0 %v974, 112
    %v1013 = vpop.permute.xlu0 %1012
    %vm1014 = vcmask 916480
    %v1015 = vsel %vm1014, %v1011, %v1013
    %1017 = vmatpush.msra.mxu0 %v1006
    %1018 = vmatpush.msra.mxu0 %v1004
    %1019 = vmatpush.msra.mxu0 %v1002
    %1020 = vmatpush.msra.mxu0 %v1000
    %1021 = vmatpush.msra.mxu0 %v998
    %1022 = vmatpush.msra.mxu0 %v996
    %1023 = vmatpush.msra.mxu0 %v994
    %1024 = vmatpush.msra.mxu0 %v992
    %1025 = vmatpush.msra.mxu0 %v990
    %1026 = vmatpush.msra.mxu0 %v988
    %1027 = vmatpush.msra.mxu0 %v986
    %1028 = vmatpush.msra.mxu0 %v984
    %1029 = vmatpush.msra.mxu0 %v982
    %1030 = vmatpush.msra.mxu0 %v980
    %1031 = vmatpush.msra.mxu0 %v978
    %1032 = vmatpush.msra.mxu0 %v976
    %1033 = vmatmul.f32.gmra.mxu0 %v1015
    %v1034 = vpop.f32.mrf.mxu0
    %v1035 = vadd.f32 0.0, %v1034
    %1036 = vdwg.mxu0
    %1037 = vmatpush.msra.mxu0 %v1007
    %1038 = vmatpush.msra.mxu0 %v1005
    %1039 = vmatpush.msra.mxu0 %v1003
    %1040 = vmatpush.msra.mxu0 %v1001
    %1041 = vmatpush.msra.mxu0 %v999
    %1042 = vmatpush.msra.mxu0 %v997
    %1043 = vmatpush.msra.mxu0 %v995
    %1044 = vmatpush.msra.mxu0 %v993
    %1045 = vmatpush.msra.mxu0 %v991
    %1046 = vmatpush.msra.mxu0 %v989
    %1047 = vmatpush.msra.mxu0 %v987
    %1048 = vmatpush.msra.mxu0 %v985
    %1049 = vmatpush.msra.mxu0 %v983
    %1050 = vmatpush.msra.mxu0 %v981
    %1051 = vmatpush.msra.mxu0 %v979
    %1052 = vmatpush.msra.mxu0 %v977
    %1053 = vmatmul.f32.gmra.mxu0 %v1015
    %v1054 = vpop.f32.mrf.mxu0
    %v1055 = vadd.f32 0.0, %v1054
    %1056 = vdwg.mxu0
    %1057 = vmatpush.msra.mxu0 %v972
    %1058 = vmatpush.msra.mxu0 %v970
    %1059 = vmatpush.msra.mxu0 %v968
    %1060 = vmatpush.msra.mxu0 %v966
    %1061 = vmatpush.msra.mxu0 %v964
    %1062 = vmatpush.msra.mxu0 %v962
    %1063 = vmatpush.msra.mxu0 %v960
    %1064 = vmatpush.msra.mxu0 %v958
    %1065 = vmatpush.msra.mxu0 %v956
    %1066 = vmatpush.msra.mxu0 %v954
    %1067 = vmatpush.msra.mxu0 %v952
    %1068 = vmatpush.msra.mxu0 %v950
    %1069 = vmatpush.msra.mxu0 %v948
    %1070 = vmatpush.msra.mxu0 %v946
    %1071 = vmatpush.msra.mxu0 %v944
    %1072 = vmatpush.msra.mxu0 %v942
    %1073 = vmatmul.f32.gmra.mxu0 %v941
    %v1074 = vpop.f32.mrf.mxu0
    %v1075 = vadd.f32 %v1035, %v1074
    %1076 = vdwg.mxu0
    %1077 = vmatpush.msra.mxu0 %v973
    %1078 = vmatpush.msra.mxu0 %v971
    %1079 = vmatpush.msra.mxu0 %v969
    %1080 = vmatpush.msra.mxu0 %v967
    %1081 = vmatpush.msra.mxu0 %v965
    %1082 = vmatpush.msra.mxu0 %v963
    %1083 = vmatpush.msra.mxu0 %v961
    %1084 = vmatpush.msra.mxu0 %v959
    %1085 = vmatpush.msra.mxu0 %v957
    %1086 = vmatpush.msra.mxu0 %v955
    %1087 = vmatpush.msra.mxu0 %v953
    %1088 = vmatpush.msra.mxu0 %v951
    %1089 = vmatpush.msra.mxu0 %v949
    %1090 = vmatpush.msra.mxu0 %v947
    %1091 = vmatpush.msra.mxu0 %v945
    %1092 = vmatpush.msra.mxu0 %v943
    %1093 = vmatmul.f32.gmra.mxu0 %v941
    %v1094 = vpop.f32.mrf.mxu0
    %v1095 = vadd.f32 %v1055, %v1094
    %1096 = vdwg.mxu0
    %s1097 = scalar_lea.vmem [#allocation10], 512
    %v1098 = vld [vmem:[%s1097] sm:$0xff]
    %v1099 = vld [vmem:[%s1097 + $0x8] sm:$0xff]
    %v1100 = vld [vmem:[%s1097 + $0x10] sm:$0xff]
    %v1101 = vld [vmem:[%s1097 + $0x18] sm:$0xff]
    %v1102 = vld [vmem:[%s1097 + $0x20] sm:$0xff]
    %v1103 = vld [vmem:[%s1097 + $0x28] sm:$0xff]
    %v1104 = vld [vmem:[%s1097 + $0x30] sm:$0xff]
    %v1105 = vld [vmem:[%s1097 + $0x38] sm:$0xff]
    %v1106 = vld [vmem:[%s1097 + $0x40] sm:$0xff]
    %v1107 = vld [vmem:[%s1097 + $0x48] sm:$0xff]
    %v1108 = vld [vmem:[%s1097 + $0x50] sm:$0xff]
    %v1109 = vld [vmem:[%s1097 + $0x58] sm:$0xff]
    %v1110 = vld [vmem:[%s1097 + $0x60] sm:$0xff]
    %v1111 = vld [vmem:[%s1097 + $0x68] sm:$0xff]
    %v1112 = vld [vmem:[%s1097 + $0x70] sm:$0xff]
    %v1113 = vld [vmem:[%s1097 + $0x78] sm:$0xff]
    %v1114 = vld [vmem:[%s1097 + $0x80] sm:$0xff]
    %v1115 = vld [vmem:[%s1097 + $0x88] sm:$0xff]
    %v1116 = vld [vmem:[%s1097 + $0x90] sm:$0xff]
    %v1117 = vld [vmem:[%s1097 + $0x98] sm:$0xff]
    %v1118 = vld [vmem:[%s1097 + $0xa0] sm:$0xff]
    %v1119 = vld [vmem:[%s1097 + $0xa8] sm:$0xff]
    %v1120 = vld [vmem:[%s1097 + $0xb0] sm:$0xff]
    %v1121 = vld [vmem:[%s1097 + $0xb8] sm:$0xff]
    %v1122 = vld [vmem:[%s1097 + $0xc0] sm:$0xff]
    %v1123 = vld [vmem:[%s1097 + $0xc8] sm:$0xff]
    %v1124 = vld [vmem:[%s1097 + $0xd0] sm:$0xff]
    %v1125 = vld [vmem:[%s1097 + $0xd8] sm:$0xff]
    %v1126 = vld [vmem:[%s1097 + $0xe0] sm:$0xff]
    %v1127 = vld [vmem:[%s1097 + $0xe8] sm:$0xff]
    %v1128 = vld [vmem:[%s1097 + $0xf0] sm:$0xff]
    %v1129 = vld [vmem:[%s1097 + $0xf8] sm:$0xff]
    %1130 = vrot.lane.b32.xlu0 %v941, 96
    %v1131 = vpop.permute.xlu0 %1130
    %1132 = vrot.lane.b32.xlu0 %v974, 96
    %v1133 = vpop.permute.xlu0 %1132
    %vm1134 = vcmask 785408
    %v1135 = vsel %vm1134, %v1131, %v1133
    %1137 = vmatpush.msra.mxu0 %v1128
    %1138 = vmatpush.msra.mxu0 %v1126
    %1139 = vmatpush.msra.mxu0 %v1124
    %1140 = vmatpush.msra.mxu0 %v1122
    %1141 = vmatpush.msra.mxu0 %v1120
    %1142 = vmatpush.msra.mxu0 %v1118
    %1143 = vmatpush.msra.mxu0 %v1116
    %1144 = vmatpush.msra.mxu0 %v1114
    %1145 = vmatpush.msra.mxu0 %v1112
    %1146 = vmatpush.msra.mxu0 %v1110
    %1147 = vmatpush.msra.mxu0 %v1108
    %1148 = vmatpush.msra.mxu0 %v1106
    %1149 = vmatpush.msra.mxu0 %v1104
    %1150 = vmatpush.msra.mxu0 %v1102
    %1151 = vmatpush.msra.mxu0 %v1100
    %1152 = vmatpush.msra.mxu0 %v1098
    %1153 = vmatmul.f32.gmra.mxu0 %v1135
    %v1154 = vpop.f32.mrf.mxu0
    %v1155 = vadd.f32 0.0, %v1154
    %1156 = vdwg.mxu0
    %1157 = vmatpush.msra.mxu0 %v1129
    %1158 = vmatpush.msra.mxu0 %v1127
    %1159 = vmatpush.msra.mxu0 %v1125
    %1160 = vmatpush.msra.mxu0 %v1123
    %1161 = vmatpush.msra.mxu0 %v1121
    %1162 = vmatpush.msra.mxu0 %v1119
    %1163 = vmatpush.msra.mxu0 %v1117
    %1164 = vmatpush.msra.mxu0 %v1115
    %1165 = vmatpush.msra.mxu0 %v1113
    %1166 = vmatpush.msra.mxu0 %v1111
    %1167 = vmatpush.msra.mxu0 %v1109
    %1168 = vmatpush.msra.mxu0 %v1107
    %1169 = vmatpush.msra.mxu0 %v1105
    %1170 = vmatpush.msra.mxu0 %v1103
    %1171 = vmatpush.msra.mxu0 %v1101
    %1172 = vmatpush.msra.mxu0 %v1099
    %1173 = vmatmul.f32.gmra.mxu0 %v1135
    %v1174 = vpop.f32.mrf.mxu0
    %v1175 = vadd.f32 0.0, %v1174
    %1176 = vdwg.mxu0
    %v1177 = vadd.f32 %v1075, %v1155
    %v1178 = vadd.f32 %v1095, %v1175
    %v1179 = vld [vmem:[#allocation3] sm:$0xfe]
    %v1180 = vld [vmem:[#allocation3 + $0x10] sm:$0x1]
    %s1181 = scalar_lea.vmem [#allocation10], 768
    %v1182 = vld [vmem:[%s1181] sm:$0xff]
    %v1183 = vld [vmem:[%s1181 + $0x8] sm:$0xff]
    %v1184 = vld [vmem:[%s1181 + $0x10] sm:$0xff]
    %v1185 = vld [vmem:[%s1181 + $0x18] sm:$0xff]
    %v1186 = vld [vmem:[%s1181 + $0x20] sm:$0xff]
    %v1187 = vld [vmem:[%s1181 + $0x28] sm:$0xff]
    %v1188 = vld [vmem:[%s1181 + $0x30] sm:$0xff]
    %v1189 = vld [vmem:[%s1181 + $0x38] sm:$0xff]
    %v1190 = vld [vmem:[%s1181 + $0x40] sm:$0xff]
    %v1191 = vld [vmem:[%s1181 + $0x48] sm:$0xff]
    %v1192 = vld [vmem:[%s1181 + $0x50] sm:$0xff]
    %v1193 = vld [vmem:[%s1181 + $0x58] sm:$0xff]
    %v1194 = vld [vmem:[%s1181 + $0x60] sm:$0xff]
    %v1195 = vld [vmem:[%s1181 + $0x68] sm:$0xff]
    %v1196 = vld [vmem:[%s1181 + $0x70] sm:$0xff]
    %v1197 = vld [vmem:[%s1181 + $0x78] sm:$0xff]
    %v1198 = vld [vmem:[%s1181 + $0x80] sm:$0xff]
    %v1199 = vld [vmem:[%s1181 + $0x88] sm:$0xff]
    %v1200 = vld [vmem:[%s1181 + $0x90] sm:$0xff]
    %v1201 = vld [vmem:[%s1181 + $0x98] sm:$0xff]
    %v1202 = vld [vmem:[%s1181 + $0xa0] sm:$0xff]
    %v1203 = vld [vmem:[%s1181 + $0xa8] sm:$0xff]
    %v1204 = vld [vmem:[%s1181 + $0xb0] sm:$0xff]
    %v1205 = vld [vmem:[%s1181 + $0xb8] sm:$0xff]
    %v1206 = vld [vmem:[%s1181 + $0xc0] sm:$0xff]
    %v1207 = vld [vmem:[%s1181 + $0xc8] sm:$0xff]
    %v1208 = vld [vmem:[%s1181 + $0xd0] sm:$0xff]
    %v1209 = vld [vmem:[%s1181 + $0xd8] sm:$0xff]
    %v1210 = vld [vmem:[%s1181 + $0xe0] sm:$0xff]
    %v1211 = vld [vmem:[%s1181 + $0xe8] sm:$0xff]
    %v1212 = vld [vmem:[%s1181 + $0xf0] sm:$0xff]
    %v1213 = vld [vmem:[%s1181 + $0xf8] sm:$0xff]
    %vm1216 = vcmask 1046528
    %v1217 = vrot.slane %v1179, 1
    %v1218 = vrot.slane %v1180, 1
    %v1219 = vsel %vm1216, %v1217, %v1218
    %1221 = vmatpush.msra.mxu0 %v1212
    %1222 = vmatpush.msra.mxu0 %v1210
    %1223 = vmatpush.msra.mxu0 %v1208
    %1224 = vmatpush.msra.mxu0 %v1206
    %1225 = vmatpush.msra.mxu0 %v1204
    %1226 = vmatpush.msra.mxu0 %v1202
    %1227 = vmatpush.msra.mxu0 %v1200
    %1228 = vmatpush.msra.mxu0 %v1198
    %1229 = vmatpush.msra.mxu0 %v1196
    %1230 = vmatpush.msra.mxu0 %v1194
    %1231 = vmatpush.msra.mxu0 %v1192
    %1232 = vmatpush.msra.mxu0 %v1190
    %1233 = vmatpush.msra.mxu0 %v1188
    %1234 = vmatpush.msra.mxu0 %v1186
    %1235 = vmatpush.msra.mxu0 %v1184
    %1236 = vmatpush.msra.mxu0 %v1182
    %1237 = vmatmul.f32.gmra.mxu0 %v1219
    %v1238 = vpop.f32.mrf.mxu0
    %v1239 = vadd.f32 0.0, %v1238
    %1240 = vdwg.mxu0
    %1241 = vmatpush.msra.mxu0 %v1213
    %1242 = vmatpush.msra.mxu0 %v1211
    %1243 = vmatpush.msra.mxu0 %v1209
    %1244 = vmatpush.msra.mxu0 %v1207
    %1245 = vmatpush.msra.mxu0 %v1205
    %1246 = vmatpush.msra.mxu0 %v1203
    %1247 = vmatpush.msra.mxu0 %v1201
    %1248 = vmatpush.msra.mxu0 %v1199
    %1249 = vmatpush.msra.mxu0 %v1197
    %1250 = vmatpush.msra.mxu0 %v1195
    %1251 = vmatpush.msra.mxu0 %v1193
    %1252 = vmatpush.msra.mxu0 %v1191
    %1253 = vmatpush.msra.mxu0 %v1189
    %1254 = vmatpush.msra.mxu0 %v1187
    %1255 = vmatpush.msra.mxu0 %v1185
    %1256 = vmatpush.msra.mxu0 %v1183
    %1257 = vmatmul.f32.gmra.mxu0 %v1219
    %v1258 = vpop.f32.mrf.mxu0
    %v1259 = vadd.f32 0.0, %v1258
    %1260 = vdwg.mxu0
    %v1261 = vadd.f32 %v1177, %v1239
    %v1262 = vadd.f32 %v1178, %v1259
    %v1263 = vld [vmem:[#allocation3] sm:$0xfe]
    %v1264 = vld [vmem:[#allocation3 + $0x8] sm:$0xfe]
    %v1265 = vld [vmem:[#allocation3 + $0x10] sm:$0x1]
    %v1266 = vld [vmem:[#allocation3 + $0x18] sm:$0x1]
    %s1267 = scalar_lea.vmem [#allocation10], 1024
    %v1268 = vld [vmem:[%s1267] sm:$0xff]
    %v1269 = vld [vmem:[%s1267 + $0x8] sm:$0xff]
    %v1270 = vld [vmem:[%s1267 + $0x10] sm:$0xff]
    %v1271 = vld [vmem:[%s1267 + $0x18] sm:$0xff]
    %v1272 = vld [vmem:[%s1267 + $0x20] sm:$0xff]
    %v1273 = vld [vmem:[%s1267 + $0x28] sm:$0xff]
    %v1274 = vld [vmem:[%s1267 + $0x30] sm:$0xff]
    %v1275 = vld [vmem:[%s1267 + $0x38] sm:$0xff]
    %v1276 = vld [vmem:[%s1267 + $0x40] sm:$0xff]
    %v1277 = vld [vmem:[%s1267 + $0x48] sm:$0xff]
    %v1278 = vld [vmem:[%s1267 + $0x50] sm:$0xff]
    %v1279 = vld [vmem:[%s1267 + $0x58] sm:$0xff]
    %v1280 = vld [vmem:[%s1267 + $0x60] sm:$0xff]
    %v1281 = vld [vmem:[%s1267 + $0x68] sm:$0xff]
    %v1282 = vld [vmem:[%s1267 + $0x70] sm:$0xff]
    %v1283 = vld [vmem:[%s1267 + $0x78] sm:$0xff]
    %v1284 = vld [vmem:[%s1267 + $0x80] sm:$0xff]
    %v1285 = vld [vmem:[%s1267 + $0x88] sm:$0xff]
    %v1286 = vld [vmem:[%s1267 + $0x90] sm:$0xff]
    %v1287 = vld [vmem:[%s1267 + $0x98] sm:$0xff]
    %v1288 = vld [vmem:[%s1267 + $0xa0] sm:$0xff]
    %v1289 = vld [vmem:[%s1267 + $0xa8] sm:$0xff]
    %v1290 = vld [vmem:[%s1267 + $0xb0] sm:$0xff]
    %v1291 = vld [vmem:[%s1267 + $0xb8] sm:$0xff]
    %v1292 = vld [vmem:[%s1267 + $0xc0] sm:$0xff]
    %v1293 = vld [vmem:[%s1267 + $0xc8] sm:$0xff]
    %v1294 = vld [vmem:[%s1267 + $0xd0] sm:$0xff]
    %v1295 = vld [vmem:[%s1267 + $0xd8] sm:$0xff]
    %v1296 = vld [vmem:[%s1267 + $0xe0] sm:$0xff]
    %v1297 = vld [vmem:[%s1267 + $0xe8] sm:$0xff]
    %v1298 = vld [vmem:[%s1267 + $0xf0] sm:$0xff]
    %v1299 = vld [vmem:[%s1267 + $0xf8] sm:$0xff]
    %v1304 = vrot.slane %v1263, 1
    %v1305 = vrot.slane %v1265, 1
    %v1306 = vsel %vm1216, %v1304, %v1305
    %v1307 = vrot.slane %v1264, 1
    %v1308 = vrot.slane %v1266, 1
    %v1309 = vsel %vm1216, %v1307, %v1308
    %1310 = vrot.lane.b32.xlu0 %v1306, 112
    %v1311 = vpop.permute.xlu0 %1310
    %1312 = vrot.lane.b32.xlu0 %v1309, 112
    %v1313 = vpop.permute.xlu0 %1312
    %v1314 = vsel %vm1014, %v1311, %v1313
    %1316 = vmatpush.msra.mxu0 %v1298
    %1317 = vmatpush.msra.mxu0 %v1296
    %1318 = vmatpush.msra.mxu0 %v1294
    %1319 = vmatpush.msra.mxu0 %v1292
    %1320 = vmatpush.msra.mxu0 %v1290
    %1321 = vmatpush.msra.mxu0 %v1288
    %1322 = vmatpush.msra.mxu0 %v1286
    %1323 = vmatpush.msra.mxu0 %v1284
    %1324 = vmatpush.msra.mxu0 %v1282
    %1325 = vmatpush.msra.mxu0 %v1280
    %1326 = vmatpush.msra.mxu0 %v1278
    %1327 = vmatpush.msra.mxu0 %v1276
    %1328 = vmatpush.msra.mxu0 %v1274
    %1329 = vmatpush.msra.mxu0 %v1272
    %1330 = vmatpush.msra.mxu0 %v1270
    %1331 = vmatpush.msra.mxu0 %v1268
    %1332 = vmatmul.f32.gmra.mxu0 %v1314
    %v1333 = vpop.f32.mrf.mxu0
    %v1334 = vadd.f32 0.0, %v1333
    %1335 = vdwg.mxu0
    %1336 = vmatpush.msra.mxu0 %v1299
    %1337 = vmatpush.msra.mxu0 %v1297
    %1338 = vmatpush.msra.mxu0 %v1295
    %1339 = vmatpush.msra.mxu0 %v1293
    %1340 = vmatpush.msra.mxu0 %v1291
    %1341 = vmatpush.msra.mxu0 %v1289
    %1342 = vmatpush.msra.mxu0 %v1287
    %1343 = vmatpush.msra.mxu0 %v1285
    %1344 = vmatpush.msra.mxu0 %v1283
    %1345 = vmatpush.msra.mxu0 %v1281
    %1346 = vmatpush.msra.mxu0 %v1279
    %1347 = vmatpush.msra.mxu0 %v1277
    %1348 = vmatpush.msra.mxu0 %v1275
    %1349 = vmatpush.msra.mxu0 %v1273
    %1350 = vmatpush.msra.mxu0 %v1271
    %1351 = vmatpush.msra.mxu0 %v1269
    %1352 = vmatmul.f32.gmra.mxu0 %v1314
    %v1353 = vpop.f32.mrf.mxu0
    %v1354 = vadd.f32 0.0, %v1353
    %1355 = vdwg.mxu0
    %v1356 = vadd.f32 %v1261, %v1334
    %v1357 = vadd.f32 %v1262, %v1354
    %s1358 = scalar_lea.vmem [#allocation10], 1280
    %v1359 = vld [vmem:[%s1358] sm:$0xff]
    %v1360 = vld [vmem:[%s1358 + $0x8] sm:$0xff]
    %v1361 = vld [vmem:[%s1358 + $0x10] sm:$0xff]
    %v1362 = vld [vmem:[%s1358 + $0x18] sm:$0xff]
    %v1363 = vld [vmem:[%s1358 + $0x20] sm:$0xff]
    %v1364 = vld [vmem:[%s1358 + $0x28] sm:$0xff]
    %v1365 = vld [vmem:[%s1358 + $0x30] sm:$0xff]
    %v1366 = vld [vmem:[%s1358 + $0x38] sm:$0xff]
    %v1367 = vld [vmem:[%s1358 + $0x40] sm:$0xff]
    %v1368 = vld [vmem:[%s1358 + $0x48] sm:$0xff]
    %v1369 = vld [vmem:[%s1358 + $0x50] sm:$0xff]
    %v1370 = vld [vmem:[%s1358 + $0x58] sm:$0xff]
    %v1371 = vld [vmem:[%s1358 + $0x60] sm:$0xff]
    %v1372 = vld [vmem:[%s1358 + $0x68] sm:$0xff]
    %v1373 = vld [vmem:[%s1358 + $0x70] sm:$0xff]
    %v1374 = vld [vmem:[%s1358 + $0x78] sm:$0xff]
    %v1375 = vld [vmem:[%s1358 + $0x80] sm:$0xff]
    %v1376 = vld [vmem:[%s1358 + $0x88] sm:$0xff]
    %v1377 = vld [vmem:[%s1358 + $0x90] sm:$0xff]
    %v1378 = vld [vmem:[%s1358 + $0x98] sm:$0xff]
    %v1379 = vld [vmem:[%s1358 + $0xa0] sm:$0xff]
    %v1380 = vld [vmem:[%s1358 + $0xa8] sm:$0xff]
    %v1381 = vld [vmem:[%s1358 + $0xb0] sm:$0xff]
    %v1382 = vld [vmem:[%s1358 + $0xb8] sm:$0xff]
    %v1383 = vld [vmem:[%s1358 + $0xc0] sm:$0xff]
    %v1384 = vld [vmem:[%s1358 + $0xc8] sm:$0xff]
    %v1385 = vld [vmem:[%s1358 + $0xd0] sm:$0xff]
    %v1386 = vld [vmem:[%s1358 + $0xd8] sm:$0xff]
    %v1387 = vld [vmem:[%s1358 + $0xe0] sm:$0xff]
    %v1388 = vld [vmem:[%s1358 + $0xe8] sm:$0xff]
    %v1389 = vld [vmem:[%s1358 + $0xf0] sm:$0xff]
    %v1390 = vld [vmem:[%s1358 + $0xf8] sm:$0xff]
    %1391 = vrot.lane.b32.xlu0 %v1306, 96
    %v1392 = vpop.permute.xlu0 %1391
    %1393 = vrot.lane.b32.xlu0 %v1309, 96
    %v1394 = vpop.permute.xlu0 %1393
    %v1395 = vsel %vm1134, %v1392, %v1394
    %1397 = vmatpush.msra.mxu0 %v1389
    %1398 = vmatpush.msra.mxu0 %v1387
    %1399 = vmatpush.msra.mxu0 %v1385
    %1400 = vmatpush.msra.mxu0 %v1383
    %1401 = vmatpush.msra.mxu0 %v1381
    %1402 = vmatpush.msra.mxu0 %v1379
    %1403 = vmatpush.msra.mxu0 %v1377
    %1404 = vmatpush.msra.mxu0 %v1375
    %1405 = vmatpush.msra.mxu0 %v1373
    %1406 = vmatpush.msra.mxu0 %v1371
    %1407 = vmatpush.msra.mxu0 %v1369
    %1408 = vmatpush.msra.mxu0 %v1367
    %1409 = vmatpush.msra.mxu0 %v1365
    %1410 = vmatpush.msra.mxu0 %v1363
    %1411 = vmatpush.msra.mxu0 %v1361
    %1412 = vmatpush.msra.mxu0 %v1359
    %1413 = vmatmul.f32.gmra.mxu0 %v1395
    %v1414 = vpop.f32.mrf.mxu0
    %v1415 = vadd.f32 0.0, %v1414
    %1416 = vdwg.mxu0
    %1417 = vmatpush.msra.mxu0 %v1390
    %1418 = vmatpush.msra.mxu0 %v1388
    %1419 = vmatpush.msra.mxu0 %v1386
    %1420 = vmatpush.msra.mxu0 %v1384
    %1421 = vmatpush.msra.mxu0 %v1382
    %1422 = vmatpush.msra.mxu0 %v1380
    %1423 = vmatpush.msra.mxu0 %v1378
    %1424 = vmatpush.msra.mxu0 %v1376
    %1425 = vmatpush.msra.mxu0 %v1374
    %1426 = vmatpush.msra.mxu0 %v1372
    %1427 = vmatpush.msra.mxu0 %v1370
    %1428 = vmatpush.msra.mxu0 %v1368
    %1429 = vmatpush.msra.mxu0 %v1366
    %1430 = vmatpush.msra.mxu0 %v1364
    %1431 = vmatpush.msra.mxu0 %v1362
    %1432 = vmatpush.msra.mxu0 %v1360
    %1433 = vmatmul.f32.gmra.mxu0 %v1395
    %v1434 = vpop.f32.mrf.mxu0
    %v1435 = vadd.f32 0.0, %v1434
    %1436 = vdwg.mxu0
    %v1437 = vadd.f32 %v1356, %v1415
    %v1438 = vadd.f32 %v1357, %v1435
    %v1439 = vld [vmem:[#allocation3] sm:$0xfc]
    %v1440 = vld [vmem:[#allocation3 + $0x10] sm:$0x3]
    %s1441 = scalar_lea.vmem [#allocation10], 1536
    %v1442 = vld [vmem:[%s1441] sm:$0xff]
    %v1443 = vld [vmem:[%s1441 + $0x8] sm:$0xff]
    %v1444 = vld [vmem:[%s1441 + $0x10] sm:$0xff]
    %v1445 = vld [vmem:[%s1441 + $0x18] sm:$0xff]
    %v1446 = vld [vmem:[%s1441 + $0x20] sm:$0xff]
    %v1447 = vld [vmem:[%s1441 + $0x28] sm:$0xff]
    %v1448 = vld [vmem:[%s1441 + $0x30] sm:$0xff]
    %v1449 = vld [vmem:[%s1441 + $0x38] sm:$0xff]
    %v1450 = vld [vmem:[%s1441 + $0x40] sm:$0xff]
    %v1451 = vld [vmem:[%s1441 + $0x48] sm:$0xff]
    %v1452 = vld [vmem:[%s1441 + $0x50] sm:$0xff]
    %v1453 = vld [vmem:[%s1441 + $0x58] sm:$0xff]
    %v1454 = vld [vmem:[%s1441 + $0x60] sm:$0xff]
    %v1455 = vld [vmem:[%s1441 + $0x68] sm:$0xff]
    %v1456 = vld [vmem:[%s1441 + $0x70] sm:$0xff]
    %v1457 = vld [vmem:[%s1441 + $0x78] sm:$0xff]
    %v1458 = vld [vmem:[%s1441 + $0x80] sm:$0xff]
    %v1459 = vld [vmem:[%s1441 + $0x88] sm:$0xff]
    %v1460 = vld [vmem:[%s1441 + $0x90] sm:$0xff]
    %v1461 = vld [vmem:[%s1441 + $0x98] sm:$0xff]
    %v1462 = vld [vmem:[%s1441 + $0xa0] sm:$0xff]
    %v1463 = vld [vmem:[%s1441 + $0xa8] sm:$0xff]
    %v1464 = vld [vmem:[%s1441 + $0xb0] sm:$0xff]
    %v1465 = vld [vmem:[%s1441 + $0xb8] sm:$0xff]
    %v1466 = vld [vmem:[%s1441 + $0xc0] sm:$0xff]
    %v1467 = vld [vmem:[%s1441 + $0xc8] sm:$0xff]
    %v1468 = vld [vmem:[%s1441 + $0xd0] sm:$0xff]
    %v1469 = vld [vmem:[%s1441 + $0xd8] sm:$0xff]
    %v1470 = vld [vmem:[%s1441 + $0xe0] sm:$0xff]
    %v1471 = vld [vmem:[%s1441 + $0xe8] sm:$0xff]
    %v1472 = vld [vmem:[%s1441 + $0xf0] sm:$0xff]
    %v1473 = vld [vmem:[%s1441 + $0xf8] sm:$0xff]
    %vm1476 = vcmask 1045504
    %v1477 = vrot.slane %v1439, 2
    %v1478 = vrot.slane %v1440, 2
    %v1479 = vsel %vm1476, %v1477, %v1478
    %1481 = vmatpush.msra.mxu0 %v1472
    %1482 = vmatpush.msra.mxu0 %v1470
    %1483 = vmatpush.msra.mxu0 %v1468
    %1484 = vmatpush.msra.mxu0 %v1466
    %1485 = vmatpush.msra.mxu0 %v1464
    %1486 = vmatpush.msra.mxu0 %v1462
    %1487 = vmatpush.msra.mxu0 %v1460
    %1488 = vmatpush.msra.mxu0 %v1458
    %1489 = vmatpush.msra.mxu0 %v1456
    %1490 = vmatpush.msra.mxu0 %v1454
    %1491 = vmatpush.msra.mxu0 %v1452
    %1492 = vmatpush.msra.mxu0 %v1450
    %1493 = vmatpush.msra.mxu0 %v1448
    %1494 = vmatpush.msra.mxu0 %v1446
    %1495 = vmatpush.msra.mxu0 %v1444
    %1496 = vmatpush.msra.mxu0 %v1442
    %1497 = vmatmul.f32.gmra.mxu0 %v1479
    %v1498 = vpop.f32.mrf.mxu0
    %v1499 = vadd.f32 0.0, %v1498
    %1500 = vdwg.mxu0
    %1501 = vmatpush.msra.mxu0 %v1473
    %1502 = vmatpush.msra.mxu0 %v1471
    %1503 = vmatpush.msra.mxu0 %v1469
    %1504 = vmatpush.msra.mxu0 %v1467
    %1505 = vmatpush.msra.mxu0 %v1465
    %1506 = vmatpush.msra.mxu0 %v1463
    %1507 = vmatpush.msra.mxu0 %v1461
    %1508 = vmatpush.msra.mxu0 %v1459
    %1509 = vmatpush.msra.mxu0 %v1457
    %1510 = vmatpush.msra.mxu0 %v1455
    %1511 = vmatpush.msra.mxu0 %v1453
    %1512 = vmatpush.msra.mxu0 %v1451
    %1513 = vmatpush.msra.mxu0 %v1449
    %1514 = vmatpush.msra.mxu0 %v1447
    %1515 = vmatpush.msra.mxu0 %v1445
    %1516 = vmatpush.msra.mxu0 %v1443
    %1517 = vmatmul.f32.gmra.mxu0 %v1479
    %v1518 = vpop.f32.mrf.mxu0
    %v1519 = vadd.f32 0.0, %v1518
    %1520 = vdwg.mxu0
    %v1521 = vadd.f32 %v1437, %v1499
    %v1522 = vadd.f32 %v1438, %v1519
    %v1523 = vld [vmem:[#allocation3] sm:$0xfc]
    %v1524 = vld [vmem:[#allocation3 + $0x8] sm:$0xfc]
    %v1525 = vld [vmem:[#allocation3 + $0x10] sm:$0x3]
    %v1526 = vld [vmem:[#allocation3 + $0x18] sm:$0x3]
    %s1527 = scalar_lea.vmem [#allocation10], 1792
    %v1528 = vld [vmem:[%s1527] sm:$0xff]
    %v1529 = vld [vmem:[%s1527 + $0x8] sm:$0xff]
    %v1530 = vld [vmem:[%s1527 + $0x10] sm:$0xff]
    %v1531 = vld [vmem:[%s1527 + $0x18] sm:$0xff]
    %v1532 = vld [vmem:[%s1527 + $0x20] sm:$0xff]
    %v1533 = vld [vmem:[%s1527 + $0x28] sm:$0xff]
    %v1534 = vld [vmem:[%s1527 + $0x30] sm:$0xff]
    %v1535 = vld [vmem:[%s1527 + $0x38] sm:$0xff]
    %v1536 = vld [vmem:[%s1527 + $0x40] sm:$0xff]
    %v1537 = vld [vmem:[%s1527 + $0x48] sm:$0xff]
    %v1538 = vld [vmem:[%s1527 + $0x50] sm:$0xff]
    %v1539 = vld [vmem:[%s1527 + $0x58] sm:$0xff]
    %v1540 = vld [vmem:[%s1527 + $0x60] sm:$0xff]
    %v1541 = vld [vmem:[%s1527 + $0x68] sm:$0xff]
    %v1542 = vld [vmem:[%s1527 + $0x70] sm:$0xff]
    %v1543 = vld [vmem:[%s1527 + $0x78] sm:$0xff]
    %v1544 = vld [vmem:[%s1527 + $0x80] sm:$0xff]
    %v1545 = vld [vmem:[%s1527 + $0x88] sm:$0xff]
    %v1546 = vld [vmem:[%s1527 + $0x90] sm:$0xff]
    %v1547 = vld [vmem:[%s1527 + $0x98] sm:$0xff]
    %v1548 = vld [vmem:[%s1527 + $0xa0] sm:$0xff]
    %v1549 = vld [vmem:[%s1527 + $0xa8] sm:$0xff]
    %v1550 = vld [vmem:[%s1527 + $0xb0] sm:$0xff]
    %v1551 = vld [vmem:[%s1527 + $0xb8] sm:$0xff]
    %v1552 = vld [vmem:[%s1527 + $0xc0] sm:$0xff]
    %v1553 = vld [vmem:[%s1527 + $0xc8] sm:$0xff]
    %v1554 = vld [vmem:[%s1527 + $0xd0] sm:$0xff]
    %v1555 = vld [vmem:[%s1527 + $0xd8] sm:$0xff]
    %v1556 = vld [vmem:[%s1527 + $0xe0] sm:$0xff]
    %v1557 = vld [vmem:[%s1527 + $0xe8] sm:$0xff]
    %v1558 = vld [vmem:[%s1527 + $0xf0] sm:$0xff]
    %v1559 = vld [vmem:[%s1527 + $0xf8] sm:$0xff]
    %v1564 = vrot.slane %v1523, 2
    %v1565 = vrot.slane %v1525, 2
    %v1566 = vsel %vm1476, %v1564, %v1565
    %v1567 = vrot.slane %v1524, 2
    %v1568 = vrot.slane %v1526, 2
    %v1569 = vsel %vm1476, %v1567, %v1568
    %1570 = vrot.lane.b32.xlu0 %v1566, 112
    %v1571 = vpop.permute.xlu0 %1570
    %1572 = vrot.lane.b32.xlu0 %v1569, 112
    %v1573 = vpop.permute.xlu0 %1572
    %v1574 = vsel %vm1014, %v1571, %v1573
    %1576 = vmatpush.msra.mxu0 %v1558
    %1577 = vmatpush.msra.mxu0 %v1556
    %1578 = vmatpush.msra.mxu0 %v1554
    %1579 = vmatpush.msra.mxu0 %v1552
    %1580 = vmatpush.msra.mxu0 %v1550
    %1581 = vmatpush.msra.mxu0 %v1548
    %1582 = vmatpush.msra.mxu0 %v1546
    %1583 = vmatpush.msra.mxu0 %v1544
    %1584 = vmatpush.msra.mxu0 %v1542
    %1585 = vmatpush.msra.mxu0 %v1540
    %1586 = vmatpush.msra.mxu0 %v1538
    %1587 = vmatpush.msra.mxu0 %v1536
    %1588 = vmatpush.msra.mxu0 %v1534
    %1589 = vmatpush.msra.mxu0 %v1532
    %1590 = vmatpush.msra.mxu0 %v1530
    %1591 = vmatpush.msra.mxu0 %v1528
    %1592 = vmatmul.f32.gmra.mxu0 %v1574
    %v1593 = vpop.f32.mrf.mxu0
    %v1594 = vadd.f32 0.0, %v1593
    %1595 = vdwg.mxu0
    %1596 = vmatpush.msra.mxu0 %v1559
    %1597 = vmatpush.msra.mxu0 %v1557
    %1598 = vmatpush.msra.mxu0 %v1555
    %1599 = vmatpush.msra.mxu0 %v1553
    %1600 = vmatpush.msra.mxu0 %v1551
    %1601 = vmatpush.msra.mxu0 %v1549
    %1602 = vmatpush.msra.mxu0 %v1547
    %1603 = vmatpush.msra.mxu0 %v1545
    %1604 = vmatpush.msra.mxu0 %v1543
    %1605 = vmatpush.msra.mxu0 %v1541
    %1606 = vmatpush.msra.mxu0 %v1539
    %1607 = vmatpush.msra.mxu0 %v1537
    %1608 = vmatpush.msra.mxu0 %v1535
    %1609 = vmatpush.msra.mxu0 %v1533
    %1610 = vmatpush.msra.mxu0 %v1531
    %1611 = vmatpush.msra.mxu0 %v1529
    %1612 = vmatmul.f32.gmra.mxu0 %v1574
    %v1613 = vpop.f32.mrf.mxu0
    %v1614 = vadd.f32 0.0, %v1613
    %1615 = vdwg.mxu0
    %v1616 = vadd.f32 %v1521, %v1594
    %v1617 = vadd.f32 %v1522, %v1614
    %s1618 = scalar_lea.vmem [#allocation10], 2048
    %v1619 = vld [vmem:[%s1618] sm:$0xff]
    %v1620 = vld [vmem:[%s1618 + $0x8] sm:$0xff]
    %v1621 = vld [vmem:[%s1618 + $0x10] sm:$0xff]
    %v1622 = vld [vmem:[%s1618 + $0x18] sm:$0xff]
    %v1623 = vld [vmem:[%s1618 + $0x20] sm:$0xff]
    %v1624 = vld [vmem:[%s1618 + $0x28] sm:$0xff]
    %v1625 = vld [vmem:[%s1618 + $0x30] sm:$0xff]
    %v1626 = vld [vmem:[%s1618 + $0x38] sm:$0xff]
    %v1627 = vld [vmem:[%s1618 + $0x40] sm:$0xff]
    %v1628 = vld [vmem:[%s1618 + $0x48] sm:$0xff]
    %v1629 = vld [vmem:[%s1618 + $0x50] sm:$0xff]
    %v1630 = vld [vmem:[%s1618 + $0x58] sm:$0xff]
    %v1631 = vld [vmem:[%s1618 + $0x60] sm:$0xff]
    %v1632 = vld [vmem:[%s1618 + $0x68] sm:$0xff]
    %v1633 = vld [vmem:[%s1618 + $0x70] sm:$0xff]
    %v1634 = vld [vmem:[%s1618 + $0x78] sm:$0xff]
    %v1635 = vld [vmem:[%s1618 + $0x80] sm:$0xff]
    %v1636 = vld [vmem:[%s1618 + $0x88] sm:$0xff]
    %v1637 = vld [vmem:[%s1618 + $0x90] sm:$0xff]
    %v1638 = vld [vmem:[%s1618 + $0x98] sm:$0xff]
    %v1639 = vld [vmem:[%s1618 + $0xa0] sm:$0xff]
    %v1640 = vld [vmem:[%s1618 + $0xa8] sm:$0xff]
    %v1641 = vld [vmem:[%s1618 + $0xb0] sm:$0xff]
    %v1642 = vld [vmem:[%s1618 + $0xb8] sm:$0xff]
    %v1643 = vld [vmem:[%s1618 + $0xc0] sm:$0xff]
    %v1644 = vld [vmem:[%s1618 + $0xc8] sm:$0xff]
    %v1645 = vld [vmem:[%s1618 + $0xd0] sm:$0xff]
    %v1646 = vld [vmem:[%s1618 + $0xd8] sm:$0xff]
    %v1647 = vld [vmem:[%s1618 + $0xe0] sm:$0xff]
    %v1648 = vld [vmem:[%s1618 + $0xe8] sm:$0xff]
    %v1649 = vld [vmem:[%s1618 + $0xf0] sm:$0xff]
    %v1650 = vld [vmem:[%s1618 + $0xf8] sm:$0xff]
    %1651 = vrot.lane.b32.xlu0 %v1566, 96
    %v1652 = vpop.permute.xlu0 %1651
    %1653 = vrot.lane.b32.xlu0 %v1569, 96
    %v1654 = vpop.permute.xlu0 %1653
    %v1655 = vsel %vm1134, %v1652, %v1654
    %1657 = vmatpush.msra.mxu0 %v1649
    %1658 = vmatpush.msra.mxu0 %v1647
    %1659 = vmatpush.msra.mxu0 %v1645
    %1660 = vmatpush.msra.mxu0 %v1643
    %1661 = vmatpush.msra.mxu0 %v1641
    %1662 = vmatpush.msra.mxu0 %v1639
    %1663 = vmatpush.msra.mxu0 %v1637
    %1664 = vmatpush.msra.mxu0 %v1635
    %1665 = vmatpush.msra.mxu0 %v1633
    %1666 = vmatpush.msra.mxu0 %v1631
    %1667 = vmatpush.msra.mxu0 %v1629
    %1668 = vmatpush.msra.mxu0 %v1627
    %1669 = vmatpush.msra.mxu0 %v1625
    %1670 = vmatpush.msra.mxu0 %v1623
    %1671 = vmatpush.msra.mxu0 %v1621
    %1672 = vmatpush.msra.mxu0 %v1619
    %1673 = vmatmul.f32.gmra.mxu0 %v1655
    %v1674 = vpop.f32.mrf.mxu0
    %v1675 = vadd.f32 0.0, %v1674
    %1676 = vdwg.mxu0
    %1677 = vmatpush.msra.mxu0 %v1650
    %1678 = vmatpush.msra.mxu0 %v1648
    %1679 = vmatpush.msra.mxu0 %v1646
    %1680 = vmatpush.msra.mxu0 %v1644
    %1681 = vmatpush.msra.mxu0 %v1642
    %1682 = vmatpush.msra.mxu0 %v1640
    %1683 = vmatpush.msra.mxu0 %v1638
    %1684 = vmatpush.msra.mxu0 %v1636
    %1685 = vmatpush.msra.mxu0 %v1634
    %1686 = vmatpush.msra.mxu0 %v1632
    %1687 = vmatpush.msra.mxu0 %v1630
    %1688 = vmatpush.msra.mxu0 %v1628
    %1689 = vmatpush.msra.mxu0 %v1626
    %1690 = vmatpush.msra.mxu0 %v1624
    %1691 = vmatpush.msra.mxu0 %v1622
    %1692 = vmatpush.msra.mxu0 %v1620
    %1693 = vmatmul.f32.gmra.mxu0 %v1655
    %v1694 = vpop.f32.mrf.mxu0
    %v1695 = vadd.f32 0.0, %v1694
    %1696 = vdwg.mxu0
    %v1697 = vadd.f32 %v1616, %v1675
    %v1698 = vadd.f32 %v1617, %v1695
    %1699 = vst [vmem:[#allocation5] sm:$0xff] %v1697
    %1700 = vst [vmem:[#allocation5 + $0x8] sm:$0xff] %v1698
    %v1701 = vld [vmem:[#allocation11] sm:$0x1]
    %v1702 = vld [vmem:[#allocation5] ss:$8 sm:$0x3]
    %v1703 = vld [vmem:[%s797] ss:$8 sm:$0x3]
    %v1704 = vmax.f32 %v1702, %v1703
    %v1706 = vrot.slane %v1704, 1
    %v1708 = vmax.f32 %v1704, %v1706
    %v1709 = vadd.f32 %v1708, %v1701
    %v1710 = vmax.f32 %v1709, 0.0
    %v1712 = vperm.slane %v1710, 0
    %1713 = vrot.lane.b32.xlu0 %v1712, 32
    %v1714 = vpop.permute.xlu0 %1713
    %vm1716 = vcmask 1040640
    %1717 = vst.msk [vmem:[#allocation4 + $0x1] sm:$0x1] %vm1716, %v1714
    %vm1718 = vcmask 253952
    %1719 = vst.msk [vmem:[#allocation4 + $0x9] sm:$0x1] %vm1718, %v1714
    %v1720 = vld [vmem:[%s815] ss:$8 sm:$0x3]
    %v1721 = vld [vmem:[%s817] ss:$8 sm:$0x3]
    %v1722 = vmax.f32 %v1720, %v1721
    %v1724 = vrot.slane %v1722, 1
    %v1726 = vmax.f32 %v1722, %v1724
    %v1727 = vadd.f32 %v1726, %v1701
    %v1728 = vmax.f32 %v1727, 0.0
    %v1730 = vperm.slane %v1728, 0
    %1731 = vrot.lane.b32.xlu0 %v1730, 32
    %v1732 = vpop.permute.xlu0 %1731
    %1734 = vst.msk [vmem:[#allocation4 + $0x2] sm:$0x1] %vm1716, %v1732
    %1735 = vst.msk [vmem:[#allocation4 + $0xa] sm:$0x1] %vm1718, %v1732
    %v1736 = vld [vmem:[%s833] ss:$8 sm:$0x3]
    %v1737 = vld [vmem:[%s835] ss:$8 sm:$0x3]
    %v1738 = vmax.f32 %v1736, %v1737
    %v1740 = vrot.slane %v1738, 1
    %v1742 = vmax.f32 %v1738, %v1740
    %v1743 = vadd.f32 %v1742, %v1701
    %v1744 = vmax.f32 %v1743, 0.0
    %v1746 = vperm.slane %v1744, 0
    %1747 = vrot.lane.b32.xlu0 %v1746, 32
    %v1748 = vpop.permute.xlu0 %1747
    %1750 = vst.msk [vmem:[#allocation4 + $0x3] sm:$0x1] %vm1716, %v1748
    %1751 = vst.msk [vmem:[#allocation4 + $0xb] sm:$0x1] %vm1718, %v1748
    %v1752 = vld [vmem:[%s851] ss:$8 sm:$0x3]
    %v1753 = vld [vmem:[%s853] ss:$8 sm:$0x3]
    %v1754 = vmax.f32 %v1752, %v1753
    %v1756 = vrot.slane %v1754, 1
    %v1758 = vmax.f32 %v1754, %v1756
    %v1759 = vadd.f32 %v1758, %v1701
    %v1760 = vmax.f32 %v1759, 0.0
    %v1762 = vperm.slane %v1760, 0
    %1763 = vrot.lane.b32.xlu0 %v1762, 32
    %v1764 = vpop.permute.xlu0 %1763
    %1766 = vst.msk [vmem:[#allocation4 + $0x4] sm:$0x1] %vm1716, %v1764
    %1767 = vst.msk [vmem:[#allocation4 + $0xc] sm:$0x1] %vm1718, %v1764
    %v1768 = vld [vmem:[#allocation4] sm:$0xf]
    %v1769 = vld [vmem:[#allocation13] sm:$0xff]
    %v1770 = vld [vmem:[#allocation13 + $0x8] sm:$0xff]
    %v1771 = vld [vmem:[#allocation13 + $0x10] sm:$0xff]
    %v1772 = vld [vmem:[#allocation13 + $0x18] sm:$0xff]
    %v1773 = vld [vmem:[#allocation13 + $0x20] sm:$0xff]
    %v1774 = vld [vmem:[#allocation13 + $0x28] sm:$0xff]
    %v1775 = vld [vmem:[#allocation13 + $0x30] sm:$0xff]
    %v1776 = vld [vmem:[#allocation13 + $0x38] sm:$0xff]
    %v1777 = vld [vmem:[#allocation13 + $0x40] sm:$0xff]
    %v1778 = vld [vmem:[#allocation13 + $0x48] sm:$0xff]
    %v1779 = vld [vmem:[#allocation13 + $0x50] sm:$0xff]
    %v1780 = vld [vmem:[#allocation13 + $0x58] sm:$0xff]
    %v1781 = vld [vmem:[#allocation13 + $0x60] sm:$0xff]
    %v1782 = vld [vmem:[#allocation13 + $0x68] sm:$0xff]
    %v1783 = vld [vmem:[#allocation13 + $0x70] sm:$0xff]
    %v1784 = vld [vmem:[#allocation13 + $0x78] sm:$0xff]
    %v1785 = vld [vmem:[#allocation13 + $0x80] sm:$0xff]
    %v1786 = vld [vmem:[#allocation13 + $0x88] sm:$0xff]
    %v1787 = vld [vmem:[#allocation13 + $0x90] sm:$0xff]
    %v1788 = vld [vmem:[#allocation13 + $0x98] sm:$0xff]
    %v1789 = vld [vmem:[#allocation13 + $0xa0] sm:$0xff]
    %v1790 = vld [vmem:[#allocation13 + $0xa8] sm:$0xff]
    %v1791 = vld [vmem:[#allocation13 + $0xb0] sm:$0xff]
    %v1792 = vld [vmem:[#allocation13 + $0xb8] sm:$0xff]
    %v1793 = vld [vmem:[#allocation13 + $0xc0] sm:$0xff]
    %v1794 = vld [vmem:[#allocation13 + $0xc8] sm:$0xff]
    %v1795 = vld [vmem:[#allocation13 + $0xd0] sm:$0xff]
    %v1796 = vld [vmem:[#allocation13 + $0xd8] sm:$0xff]
    %v1797 = vld [vmem:[#allocation13 + $0xe0] sm:$0xff]
    %v1798 = vld [vmem:[#allocation13 + $0xe8] sm:$0xff]
    %v1799 = vld [vmem:[#allocation13 + $0xf0] sm:$0xff]
    %v1800 = vld [vmem:[#allocation13 + $0xf8] sm:$0xff]
    %v1801 = vld [vmem:[#allocation4 + $0x8] sm:$0xf]
    %s1802 = scalar_lea.vmem [#allocation13], 256
    %v1803 = vld [vmem:[%s1802] sm:$0xff]
    %v1804 = vld [vmem:[%s1802 + $0x8] sm:$0xff]
    %v1805 = vld [vmem:[%s1802 + $0x10] sm:$0xff]
    %v1806 = vld [vmem:[%s1802 + $0x18] sm:$0xff]
    %v1807 = vld [vmem:[%s1802 + $0x20] sm:$0xff]
    %v1808 = vld [vmem:[%s1802 + $0x28] sm:$0xff]
    %v1809 = vld [vmem:[%s1802 + $0x30] sm:$0xff]
    %v1810 = vld [vmem:[%s1802 + $0x38] sm:$0xff]
    %v1811 = vld [vmem:[%s1802 + $0x40] sm:$0xff]
    %v1812 = vld [vmem:[%s1802 + $0x48] sm:$0xff]
    %v1813 = vld [vmem:[%s1802 + $0x50] sm:$0xff]
    %v1814 = vld [vmem:[%s1802 + $0x58] sm:$0xff]
    %v1815 = vld [vmem:[%s1802 + $0x60] sm:$0xff]
    %v1816 = vld [vmem:[%s1802 + $0x68] sm:$0xff]
    %v1817 = vld [vmem:[%s1802 + $0x70] sm:$0xff]
    %v1818 = vld [vmem:[%s1802 + $0x78] sm:$0xff]
    %v1819 = vld [vmem:[%s1802 + $0x80] sm:$0xff]
    %v1820 = vld [vmem:[%s1802 + $0x88] sm:$0xff]
    %v1821 = vld [vmem:[%s1802 + $0x90] sm:$0xff]
    %v1822 = vld [vmem:[%s1802 + $0x98] sm:$0xff]
    %v1823 = vld [vmem:[%s1802 + $0xa0] sm:$0xff]
    %v1824 = vld [vmem:[%s1802 + $0xa8] sm:$0xff]
    %v1825 = vld [vmem:[%s1802 + $0xb0] sm:$0xff]
    %v1826 = vld [vmem:[%s1802 + $0xb8] sm:$0xff]
    %v1827 = vld [vmem:[%s1802 + $0xc0] sm:$0xff]
    %v1828 = vld [vmem:[%s1802 + $0xc8] sm:$0xff]
    %v1829 = vld [vmem:[%s1802 + $0xd0] sm:$0xff]
    %v1830 = vld [vmem:[%s1802 + $0xd8] sm:$0xff]
    %v1831 = vld [vmem:[%s1802 + $0xe0] sm:$0xff]
    %v1832 = vld [vmem:[%s1802 + $0xe8] sm:$0xff]
    %v1833 = vld [vmem:[%s1802 + $0xf0] sm:$0xff]
    %v1834 = vld [vmem:[%s1802 + $0xf8] sm:$0xff]
    %1837 = vrot.lane.b32.xlu0 %v1768, 96
    %v1838 = vpop.permute.xlu0 %1837
    %1839 = vrot.lane.b32.xlu0 %v1801, 96
    %v1840 = vpop.permute.xlu0 %1839
    %v1841 = vsel %vm1134, %v1838, %v1840
    %1843 = vmatpush.msra.mxu0 %v1833
    %1844 = vmatpush.msra.mxu0 %v1831
    %1845 = vmatpush.msra.mxu0 %v1829
    %1846 = vmatpush.msra.mxu0 %v1827
    %1847 = vmatpush.msra.mxu0 %v1825
    %1848 = vmatpush.msra.mxu0 %v1823
    %1849 = vmatpush.msra.mxu0 %v1821
    %1850 = vmatpush.msra.mxu0 %v1819
    %1851 = vmatpush.msra.mxu0 %v1817
    %1852 = vmatpush.msra.mxu0 %v1815
    %1853 = vmatpush.msra.mxu0 %v1813
    %1854 = vmatpush.msra.mxu0 %v1811
    %1855 = vmatpush.msra.mxu0 %v1809
    %1856 = vmatpush.msra.mxu0 %v1807
    %1857 = vmatpush.msra.mxu0 %v1805
    %1858 = vmatpush.msra.mxu0 %v1803
    %1859 = vmatmul.f32.gmra.mxu0 %v1841
    %v1860 = vpop.f32.mrf.mxu0
    %v1861 = vadd.f32 0.0, %v1860
    %1862 = vdwg.mxu0
    %1863 = vmatpush.msra.mxu0 %v1834
    %1864 = vmatpush.msra.mxu0 %v1832
    %1865 = vmatpush.msra.mxu0 %v1830
    %1866 = vmatpush.msra.mxu0 %v1828
    %1867 = vmatpush.msra.mxu0 %v1826
    %1868 = vmatpush.msra.mxu0 %v1824
    %1869 = vmatpush.msra.mxu0 %v1822
    %1870 = vmatpush.msra.mxu0 %v1820
    %1871 = vmatpush.msra.mxu0 %v1818
    %1872 = vmatpush.msra.mxu0 %v1816
    %1873 = vmatpush.msra.mxu0 %v1814
    %1874 = vmatpush.msra.mxu0 %v1812
    %1875 = vmatpush.msra.mxu0 %v1810
    %1876 = vmatpush.msra.mxu0 %v1808
    %1877 = vmatpush.msra.mxu0 %v1806
    %1878 = vmatpush.msra.mxu0 %v1804
    %1879 = vmatmul.f32.gmra.mxu0 %v1841
    %v1880 = vpop.f32.mrf.mxu0
    %v1881 = vadd.f32 0.0, %v1880
    %1882 = vdwg.mxu0
    %1883 = vmatpush.msra.mxu0 %v1799
    %1884 = vmatpush.msra.mxu0 %v1797
    %1885 = vmatpush.msra.mxu0 %v1795
    %1886 = vmatpush.msra.mxu0 %v1793
    %1887 = vmatpush.msra.mxu0 %v1791
    %1888 = vmatpush.msra.mxu0 %v1789
    %1889 = vmatpush.msra.mxu0 %v1787
    %1890 = vmatpush.msra.mxu0 %v1785
    %1891 = vmatpush.msra.mxu0 %v1783
    %1892 = vmatpush.msra.mxu0 %v1781
    %1893 = vmatpush.msra.mxu0 %v1779
    %1894 = vmatpush.msra.mxu0 %v1777
    %1895 = vmatpush.msra.mxu0 %v1775
    %1896 = vmatpush.msra.mxu0 %v1773
    %1897 = vmatpush.msra.mxu0 %v1771
    %1898 = vmatpush.msra.mxu0 %v1769
    %1899 = vmatmul.f32.gmra.mxu0 %v1768
    %v1900 = vpop.f32.mrf.mxu0
    %v1901 = vadd.f32 %v1861, %v1900
    %1902 = vdwg.mxu0
    %1903 = vmatpush.msra.mxu0 %v1800
    %1904 = vmatpush.msra.mxu0 %v1798
    %1905 = vmatpush.msra.mxu0 %v1796
    %1906 = vmatpush.msra.mxu0 %v1794
    %1907 = vmatpush.msra.mxu0 %v1792
    %1908 = vmatpush.msra.mxu0 %v1790
    %1909 = vmatpush.msra.mxu0 %v1788
    %1910 = vmatpush.msra.mxu0 %v1786
    %1911 = vmatpush.msra.mxu0 %v1784
    %1912 = vmatpush.msra.mxu0 %v1782
    %1913 = vmatpush.msra.mxu0 %v1780
    %1914 = vmatpush.msra.mxu0 %v1778
    %1915 = vmatpush.msra.mxu0 %v1776
    %1916 = vmatpush.msra.mxu0 %v1774
    %1917 = vmatpush.msra.mxu0 %v1772
    %1918 = vmatpush.msra.mxu0 %v1770
    %1919 = vmatmul.f32.gmra.mxu0 %v1768
    %v1920 = vpop.f32.mrf.mxu0
    %v1921 = vadd.f32 %v1881, %v1920
    %1922 = vdwg.mxu0
    %s1923 = scalar_lea.vmem [#allocation13], 512
    %v1924 = vld [vmem:[%s1923] sm:$0xff]
    %v1925 = vld [vmem:[%s1923 + $0x8] sm:$0xff]
    %v1926 = vld [vmem:[%s1923 + $0x10] sm:$0xff]
    %v1927 = vld [vmem:[%s1923 + $0x18] sm:$0xff]
    %v1928 = vld [vmem:[%s1923 + $0x20] sm:$0xff]
    %v1929 = vld [vmem:[%s1923 + $0x28] sm:$0xff]
    %v1930 = vld [vmem:[%s1923 + $0x30] sm:$0xff]
    %v1931 = vld [vmem:[%s1923 + $0x38] sm:$0xff]
    %v1932 = vld [vmem:[%s1923 + $0x40] sm:$0xff]
    %v1933 = vld [vmem:[%s1923 + $0x48] sm:$0xff]
    %v1934 = vld [vmem:[%s1923 + $0x50] sm:$0xff]
    %v1935 = vld [vmem:[%s1923 + $0x58] sm:$0xff]
    %v1936 = vld [vmem:[%s1923 + $0x60] sm:$0xff]
    %v1937 = vld [vmem:[%s1923 + $0x68] sm:$0xff]
    %v1938 = vld [vmem:[%s1923 + $0x70] sm:$0xff]
    %v1939 = vld [vmem:[%s1923 + $0x78] sm:$0xff]
    %v1940 = vld [vmem:[%s1923 + $0x80] sm:$0xff]
    %v1941 = vld [vmem:[%s1923 + $0x88] sm:$0xff]
    %v1942 = vld [vmem:[%s1923 + $0x90] sm:$0xff]
    %v1943 = vld [vmem:[%s1923 + $0x98] sm:$0xff]
    %v1944 = vld [vmem:[%s1923 + $0xa0] sm:$0xff]
    %v1945 = vld [vmem:[%s1923 + $0xa8] sm:$0xff]
    %v1946 = vld [vmem:[%s1923 + $0xb0] sm:$0xff]
    %v1947 = vld [vmem:[%s1923 + $0xb8] sm:$0xff]
    %v1948 = vld [vmem:[%s1923 + $0xc0] sm:$0xff]
    %v1949 = vld [vmem:[%s1923 + $0xc8] sm:$0xff]
    %v1950 = vld [vmem:[%s1923 + $0xd0] sm:$0xff]
    %v1951 = vld [vmem:[%s1923 + $0xd8] sm:$0xff]
    %v1952 = vld [vmem:[%s1923 + $0xe0] sm:$0xff]
    %v1953 = vld [vmem:[%s1923 + $0xe8] sm:$0xff]
    %v1954 = vld [vmem:[%s1923 + $0xf0] sm:$0xff]
    %v1955 = vld [vmem:[%s1923 + $0xf8] sm:$0xff]
    %1956 = vrot.lane.b32.xlu0 %v1768, 64
    %v1957 = vpop.permute.xlu0 %1956
    %1958 = vrot.lane.b32.xlu0 %v1801, 64
    %v1959 = vpop.permute.xlu0 %1958
    %vm1960 = vcmask 523264
    %v1961 = vsel %vm1960, %v1957, %v1959
    %1963 = vmatpush.msra.mxu0 %v1954
    %1964 = vmatpush.msra.mxu0 %v1952
    %1965 = vmatpush.msra.mxu0 %v1950
    %1966 = vmatpush.msra.mxu0 %v1948
    %1967 = vmatpush.msra.mxu0 %v1946
    %1968 = vmatpush.msra.mxu0 %v1944
    %1969 = vmatpush.msra.mxu0 %v1942
    %1970 = vmatpush.msra.mxu0 %v1940
    %1971 = vmatpush.msra.mxu0 %v1938
    %1972 = vmatpush.msra.mxu0 %v1936
    %1973 = vmatpush.msra.mxu0 %v1934
    %1974 = vmatpush.msra.mxu0 %v1932
    %1975 = vmatpush.msra.mxu0 %v1930
    %1976 = vmatpush.msra.mxu0 %v1928
    %1977 = vmatpush.msra.mxu0 %v1926
    %1978 = vmatpush.msra.mxu0 %v1924
    %1979 = vmatmul.f32.gmra.mxu0 %v1961
    %v1980 = vpop.f32.mrf.mxu0
    %v1981 = vadd.f32 0.0, %v1980
    %1982 = vdwg.mxu0
    %1983 = vmatpush.msra.mxu0 %v1955
    %1984 = vmatpush.msra.mxu0 %v1953
    %1985 = vmatpush.msra.mxu0 %v1951
    %1986 = vmatpush.msra.mxu0 %v1949
    %1987 = vmatpush.msra.mxu0 %v1947
    %1988 = vmatpush.msra.mxu0 %v1945
    %1989 = vmatpush.msra.mxu0 %v1943
    %1990 = vmatpush.msra.mxu0 %v1941
    %1991 = vmatpush.msra.mxu0 %v1939
    %1992 = vmatpush.msra.mxu0 %v1937
    %1993 = vmatpush.msra.mxu0 %v1935
    %1994 = vmatpush.msra.mxu0 %v1933
    %1995 = vmatpush.msra.mxu0 %v1931
    %1996 = vmatpush.msra.mxu0 %v1929
    %1997 = vmatpush.msra.mxu0 %v1927
    %1998 = vmatpush.msra.mxu0 %v1925
    %1999 = vmatmul.f32.gmra.mxu0 %v1961
    %v2000 = vpop.f32.mrf.mxu0
    %v2001 = vadd.f32 0.0, %v2000
    %2002 = vdwg.mxu0
    %v2003 = vadd.f32 %v1901, %v1981
    %v2004 = vadd.f32 %v1921, %v2001
    %v2005 = vld [vmem:[#allocation4] sm:$0x1e]
    %s2006 = scalar_lea.vmem [#allocation13], 768
    %v2007 = vld [vmem:[%s2006] sm:$0xff]
    %v2008 = vld [vmem:[%s2006 + $0x8] sm:$0xff]
    %v2009 = vld [vmem:[%s2006 + $0x10] sm:$0xff]
    %v2010 = vld [vmem:[%s2006 + $0x18] sm:$0xff]
    %v2011 = vld [vmem:[%s2006 + $0x20] sm:$0xff]
    %v2012 = vld [vmem:[%s2006 + $0x28] sm:$0xff]
    %v2013 = vld [vmem:[%s2006 + $0x30] sm:$0xff]
    %v2014 = vld [vmem:[%s2006 + $0x38] sm:$0xff]
    %v2015 = vld [vmem:[%s2006 + $0x40] sm:$0xff]
    %v2016 = vld [vmem:[%s2006 + $0x48] sm:$0xff]
    %v2017 = vld [vmem:[%s2006 + $0x50] sm:$0xff]
    %v2018 = vld [vmem:[%s2006 + $0x58] sm:$0xff]
    %v2019 = vld [vmem:[%s2006 + $0x60] sm:$0xff]
    %v2020 = vld [vmem:[%s2006 + $0x68] sm:$0xff]
    %v2021 = vld [vmem:[%s2006 + $0x70] sm:$0xff]
    %v2022 = vld [vmem:[%s2006 + $0x78] sm:$0xff]
    %v2023 = vld [vmem:[%s2006 + $0x80] sm:$0xff]
    %v2024 = vld [vmem:[%s2006 + $0x88] sm:$0xff]
    %v2025 = vld [vmem:[%s2006 + $0x90] sm:$0xff]
    %v2026 = vld [vmem:[%s2006 + $0x98] sm:$0xff]
    %v2027 = vld [vmem:[%s2006 + $0xa0] sm:$0xff]
    %v2028 = vld [vmem:[%s2006 + $0xa8] sm:$0xff]
    %v2029 = vld [vmem:[%s2006 + $0xb0] sm:$0xff]
    %v2030 = vld [vmem:[%s2006 + $0xb8] sm:$0xff]
    %v2031 = vld [vmem:[%s2006 + $0xc0] sm:$0xff]
    %v2032 = vld [vmem:[%s2006 + $0xc8] sm:$0xff]
    %v2033 = vld [vmem:[%s2006 + $0xd0] sm:$0xff]
    %v2034 = vld [vmem:[%s2006 + $0xd8] sm:$0xff]
    %v2035 = vld [vmem:[%s2006 + $0xe0] sm:$0xff]
    %v2036 = vld [vmem:[%s2006 + $0xe8] sm:$0xff]
    %v2037 = vld [vmem:[%s2006 + $0xf0] sm:$0xff]
    %v2038 = vld [vmem:[%s2006 + $0xf8] sm:$0xff]
    %v2040 = vrot.slane %v2005, 1
    %2042 = vmatpush.msra.mxu0 %v2037
    %2043 = vmatpush.msra.mxu0 %v2035
    %2044 = vmatpush.msra.mxu0 %v2033
    %2045 = vmatpush.msra.mxu0 %v2031
    %2046 = vmatpush.msra.mxu0 %v2029
    %2047 = vmatpush.msra.mxu0 %v2027
    %2048 = vmatpush.msra.mxu0 %v2025
    %2049 = vmatpush.msra.mxu0 %v2023
    %2050 = vmatpush.msra.mxu0 %v2021
    %2051 = vmatpush.msra.mxu0 %v2019
    %2052 = vmatpush.msra.mxu0 %v2017
    %2053 = vmatpush.msra.mxu0 %v2015
    %2054 = vmatpush.msra.mxu0 %v2013
    %2055 = vmatpush.msra.mxu0 %v2011
    %2056 = vmatpush.msra.mxu0 %v2009
    %2057 = vmatpush.msra.mxu0 %v2007
    %2058 = vmatmul.f32.gmra.mxu0 %v2040
    %v2059 = vpop.f32.mrf.mxu0
    %v2060 = vadd.f32 0.0, %v2059
    %2061 = vdwg.mxu0
    %2062 = vmatpush.msra.mxu0 %v2038
    %2063 = vmatpush.msra.mxu0 %v2036
    %2064 = vmatpush.msra.mxu0 %v2034
    %2065 = vmatpush.msra.mxu0 %v2032
    %2066 = vmatpush.msra.mxu0 %v2030
    %2067 = vmatpush.msra.mxu0 %v2028
    %2068 = vmatpush.msra.mxu0 %v2026
    %2069 = vmatpush.msra.mxu0 %v2024
    %2070 = vmatpush.msra.mxu0 %v2022
    %2071 = vmatpush.msra.mxu0 %v2020
    %2072 = vmatpush.msra.mxu0 %v2018
    %2073 = vmatpush.msra.mxu0 %v2016
    %2074 = vmatpush.msra.mxu0 %v2014
    %2075 = vmatpush.msra.mxu0 %v2012
    %2076 = vmatpush.msra.mxu0 %v2010
    %2077 = vmatpush.msra.mxu0 %v2008
    %2078 = vmatmul.f32.gmra.mxu0 %v2040
    %v2079 = vpop.f32.mrf.mxu0
    %v2080 = vadd.f32 0.0, %v2079
    %2081 = vdwg.mxu0
    %v2082 = vadd.f32 %v2003, %v2060
    %v2083 = vadd.f32 %v2004, %v2080
    %v2084 = vld [vmem:[#allocation4] sm:$0x1e]
    %v2085 = vld [vmem:[#allocation4 + $0x8] sm:$0x1e]
    %s2086 = scalar_lea.vmem [#allocation13], 1024
    %v2087 = vld [vmem:[%s2086] sm:$0xff]
    %v2088 = vld [vmem:[%s2086 + $0x8] sm:$0xff]
    %v2089 = vld [vmem:[%s2086 + $0x10] sm:$0xff]
    %v2090 = vld [vmem:[%s2086 + $0x18] sm:$0xff]
    %v2091 = vld [vmem:[%s2086 + $0x20] sm:$0xff]
    %v2092 = vld [vmem:[%s2086 + $0x28] sm:$0xff]
    %v2093 = vld [vmem:[%s2086 + $0x30] sm:$0xff]
    %v2094 = vld [vmem:[%s2086 + $0x38] sm:$0xff]
    %v2095 = vld [vmem:[%s2086 + $0x40] sm:$0xff]
    %v2096 = vld [vmem:[%s2086 + $0x48] sm:$0xff]
    %v2097 = vld [vmem:[%s2086 + $0x50] sm:$0xff]
    %v2098 = vld [vmem:[%s2086 + $0x58] sm:$0xff]
    %v2099 = vld [vmem:[%s2086 + $0x60] sm:$0xff]
    %v2100 = vld [vmem:[%s2086 + $0x68] sm:$0xff]
    %v2101 = vld [vmem:[%s2086 + $0x70] sm:$0xff]
    %v2102 = vld [vmem:[%s2086 + $0x78] sm:$0xff]
    %v2103 = vld [vmem:[%s2086 + $0x80] sm:$0xff]
    %v2104 = vld [vmem:[%s2086 + $0x88] sm:$0xff]
    %v2105 = vld [vmem:[%s2086 + $0x90] sm:$0xff]
    %v2106 = vld [vmem:[%s2086 + $0x98] sm:$0xff]
    %v2107 = vld [vmem:[%s2086 + $0xa0] sm:$0xff]
    %v2108 = vld [vmem:[%s2086 + $0xa8] sm:$0xff]
    %v2109 = vld [vmem:[%s2086 + $0xb0] sm:$0xff]
    %v2110 = vld [vmem:[%s2086 + $0xb8] sm:$0xff]
    %v2111 = vld [vmem:[%s2086 + $0xc0] sm:$0xff]
    %v2112 = vld [vmem:[%s2086 + $0xc8] sm:$0xff]
    %v2113 = vld [vmem:[%s2086 + $0xd0] sm:$0xff]
    %v2114 = vld [vmem:[%s2086 + $0xd8] sm:$0xff]
    %v2115 = vld [vmem:[%s2086 + $0xe0] sm:$0xff]
    %v2116 = vld [vmem:[%s2086 + $0xe8] sm:$0xff]
    %v2117 = vld [vmem:[%s2086 + $0xf0] sm:$0xff]
    %v2118 = vld [vmem:[%s2086 + $0xf8] sm:$0xff]
    %v2121 = vrot.slane %v2084, 1
    %v2122 = vrot.slane %v2085, 1
    %2123 = vrot.lane.b32.xlu0 %v2121, 96
    %v2124 = vpop.permute.xlu0 %2123
    %2125 = vrot.lane.b32.xlu0 %v2122, 96
    %v2126 = vpop.permute.xlu0 %2125
    %v2127 = vsel %vm1134, %v2124, %v2126
    %2129 = vmatpush.msra.mxu0 %v2117
    %2130 = vmatpush.msra.mxu0 %v2115
    %2131 = vmatpush.msra.mxu0 %v2113
    %2132 = vmatpush.msra.mxu0 %v2111
    %2133 = vmatpush.msra.mxu0 %v2109
    %2134 = vmatpush.msra.mxu0 %v2107
    %2135 = vmatpush.msra.mxu0 %v2105
    %2136 = vmatpush.msra.mxu0 %v2103
    %2137 = vmatpush.msra.mxu0 %v2101
    %2138 = vmatpush.msra.mxu0 %v2099
    %2139 = vmatpush.msra.mxu0 %v2097
    %2140 = vmatpush.msra.mxu0 %v2095
    %2141 = vmatpush.msra.mxu0 %v2093
    %2142 = vmatpush.msra.mxu0 %v2091
    %2143 = vmatpush.msra.mxu0 %v2089
    %2144 = vmatpush.msra.mxu0 %v2087
    %2145 = vmatmul.f32.gmra.mxu0 %v2127
    %v2146 = vpop.f32.mrf.mxu0
    %v2147 = vadd.f32 0.0, %v2146
    %2148 = vdwg.mxu0
    %2149 = vmatpush.msra.mxu0 %v2118
    %2150 = vmatpush.msra.mxu0 %v2116
    %2151 = vmatpush.msra.mxu0 %v2114
    %2152 = vmatpush.msra.mxu0 %v2112
    %2153 = vmatpush.msra.mxu0 %v2110
    %2154 = vmatpush.msra.mxu0 %v2108
    %2155 = vmatpush.msra.mxu0 %v2106
    %2156 = vmatpush.msra.mxu0 %v2104
    %2157 = vmatpush.msra.mxu0 %v2102
    %2158 = vmatpush.msra.mxu0 %v2100
    %2159 = vmatpush.msra.mxu0 %v2098
    %2160 = vmatpush.msra.mxu0 %v2096
    %2161 = vmatpush.msra.mxu0 %v2094
    %2162 = vmatpush.msra.mxu0 %v2092
    %2163 = vmatpush.msra.mxu0 %v2090
    %2164 = vmatpush.msra.mxu0 %v2088
    %2165 = vmatmul.f32.gmra.mxu0 %v2127
    %v2166 = vpop.f32.mrf.mxu0
    %v2167 = vadd.f32 0.0, %v2166
    %2168 = vdwg.mxu0
    %v2169 = vadd.f32 %v2082, %v2147
    %v2170 = vadd.f32 %v2083, %v2167
    %s2171 = scalar_lea.vmem [#allocation13], 1280
    %v2172 = vld [vmem:[%s2171] sm:$0xff]
    %v2173 = vld [vmem:[%s2171 + $0x8] sm:$0xff]
    %v2174 = vld [vmem:[%s2171 + $0x10] sm:$0xff]
    %v2175 = vld [vmem:[%s2171 + $0x18] sm:$0xff]
    %v2176 = vld [vmem:[%s2171 + $0x20] sm:$0xff]
    %v2177 = vld [vmem:[%s2171 + $0x28] sm:$0xff]
    %v2178 = vld [vmem:[%s2171 + $0x30] sm:$0xff]
    %v2179 = vld [vmem:[%s2171 + $0x38] sm:$0xff]
    %v2180 = vld [vmem:[%s2171 + $0x40] sm:$0xff]
    %v2181 = vld [vmem:[%s2171 + $0x48] sm:$0xff]
    %v2182 = vld [vmem:[%s2171 + $0x50] sm:$0xff]
    %v2183 = vld [vmem:[%s2171 + $0x58] sm:$0xff]
    %v2184 = vld [vmem:[%s2171 + $0x60] sm:$0xff]
    %v2185 = vld [vmem:[%s2171 + $0x68] sm:$0xff]
    %v2186 = vld [vmem:[%s2171 + $0x70] sm:$0xff]
    %v2187 = vld [vmem:[%s2171 + $0x78] sm:$0xff]
    %v2188 = vld [vmem:[%s2171 + $0x80] sm:$0xff]
    %v2189 = vld [vmem:[%s2171 + $0x88] sm:$0xff]
    %v2190 = vld [vmem:[%s2171 + $0x90] sm:$0xff]
    %v2191 = vld [vmem:[%s2171 + $0x98] sm:$0xff]
    %v2192 = vld [vmem:[%s2171 + $0xa0] sm:$0xff]
    %v2193 = vld [vmem:[%s2171 + $0xa8] sm:$0xff]
    %v2194 = vld [vmem:[%s2171 + $0xb0] sm:$0xff]
    %v2195 = vld [vmem:[%s2171 + $0xb8] sm:$0xff]
    %v2196 = vld [vmem:[%s2171 + $0xc0] sm:$0xff]
    %v2197 = vld [vmem:[%s2171 + $0xc8] sm:$0xff]
    %v2198 = vld [vmem:[%s2171 + $0xd0] sm:$0xff]
    %v2199 = vld [vmem:[%s2171 + $0xd8] sm:$0xff]
    %v2200 = vld [vmem:[%s2171 + $0xe0] sm:$0xff]
    %v2201 = vld [vmem:[%s2171 + $0xe8] sm:$0xff]
    %v2202 = vld [vmem:[%s2171 + $0xf0] sm:$0xff]
    %v2203 = vld [vmem:[%s2171 + $0xf8] sm:$0xff]
    %2204 = vrot.lane.b32.xlu0 %v2121, 64
    %v2205 = vpop.permute.xlu0 %2204
    %2206 = vrot.lane.b32.xlu0 %v2122, 64
    %v2207 = vpop.permute.xlu0 %2206
    %v2208 = vsel %vm1960, %v2205, %v2207
    %2210 = vmatpush.msra.mxu0 %v2202
    %2211 = vmatpush.msra.mxu0 %v2200
    %2212 = vmatpush.msra.mxu0 %v2198
    %2213 = vmatpush.msra.mxu0 %v2196
    %2214 = vmatpush.msra.mxu0 %v2194
    %2215 = vmatpush.msra.mxu0 %v2192
    %2216 = vmatpush.msra.mxu0 %v2190
    %2217 = vmatpush.msra.mxu0 %v2188
    %2218 = vmatpush.msra.mxu0 %v2186
    %2219 = vmatpush.msra.mxu0 %v2184
    %2220 = vmatpush.msra.mxu0 %v2182
    %2221 = vmatpush.msra.mxu0 %v2180
    %2222 = vmatpush.msra.mxu0 %v2178
    %2223 = vmatpush.msra.mxu0 %v2176
    %2224 = vmatpush.msra.mxu0 %v2174
    %2225 = vmatpush.msra.mxu0 %v2172
    %2226 = vmatmul.f32.gmra.mxu0 %v2208
    %v2227 = vpop.f32.mrf.mxu0
    %v2228 = vadd.f32 0.0, %v2227
    %2229 = vdwg.mxu0
    %2230 = vmatpush.msra.mxu0 %v2203
    %2231 = vmatpush.msra.mxu0 %v2201
    %2232 = vmatpush.msra.mxu0 %v2199
    %2233 = vmatpush.msra.mxu0 %v2197
    %2234 = vmatpush.msra.mxu0 %v2195
    %2235 = vmatpush.msra.mxu0 %v2193
    %2236 = vmatpush.msra.mxu0 %v2191
    %2237 = vmatpush.msra.mxu0 %v2189
    %2238 = vmatpush.msra.mxu0 %v2187
    %2239 = vmatpush.msra.mxu0 %v2185
    %2240 = vmatpush.msra.mxu0 %v2183
    %2241 = vmatpush.msra.mxu0 %v2181
    %2242 = vmatpush.msra.mxu0 %v2179
    %2243 = vmatpush.msra.mxu0 %v2177
    %2244 = vmatpush.msra.mxu0 %v2175
    %2245 = vmatpush.msra.mxu0 %v2173
    %2246 = vmatmul.f32.gmra.mxu0 %v2208
    %v2247 = vpop.f32.mrf.mxu0
    %v2248 = vadd.f32 0.0, %v2247
    %2249 = vdwg.mxu0
    %v2250 = vadd.f32 %v2169, %v2228
    %v2251 = vadd.f32 %v2170, %v2248
    %v2252 = vld [vmem:[#allocation4] sm:$0x3c]
    %s2253 = scalar_lea.vmem [#allocation13], 1536
    %v2254 = vld [vmem:[%s2253] sm:$0xff]
    %v2255 = vld [vmem:[%s2253 + $0x8] sm:$0xff]
    %v2256 = vld [vmem:[%s2253 + $0x10] sm:$0xff]
    %v2257 = vld [vmem:[%s2253 + $0x18] sm:$0xff]
    %v2258 = vld [vmem:[%s2253 + $0x20] sm:$0xff]
    %v2259 = vld [vmem:[%s2253 + $0x28] sm:$0xff]
    %v2260 = vld [vmem:[%s2253 + $0x30] sm:$0xff]
    %v2261 = vld [vmem:[%s2253 + $0x38] sm:$0xff]
    %v2262 = vld [vmem:[%s2253 + $0x40] sm:$0xff]
    %v2263 = vld [vmem:[%s2253 + $0x48] sm:$0xff]
    %v2264 = vld [vmem:[%s2253 + $0x50] sm:$0xff]
    %v2265 = vld [vmem:[%s2253 + $0x58] sm:$0xff]
    %v2266 = vld [vmem:[%s2253 + $0x60] sm:$0xff]
    %v2267 = vld [vmem:[%s2253 + $0x68] sm:$0xff]
    %v2268 = vld [vmem:[%s2253 + $0x70] sm:$0xff]
    %v2269 = vld [vmem:[%s2253 + $0x78] sm:$0xff]
    %v2270 = vld [vmem:[%s2253 + $0x80] sm:$0xff]
    %v2271 = vld [vmem:[%s2253 + $0x88] sm:$0xff]
    %v2272 = vld [vmem:[%s2253 + $0x90] sm:$0xff]
    %v2273 = vld [vmem:[%s2253 + $0x98] sm:$0xff]
    %v2274 = vld [vmem:[%s2253 + $0xa0] sm:$0xff]
    %v2275 = vld [vmem:[%s2253 + $0xa8] sm:$0xff]
    %v2276 = vld [vmem:[%s2253 + $0xb0] sm:$0xff]
    %v2277 = vld [vmem:[%s2253 + $0xb8] sm:$0xff]
    %v2278 = vld [vmem:[%s2253 + $0xc0] sm:$0xff]
    %v2279 = vld [vmem:[%s2253 + $0xc8] sm:$0xff]
    %v2280 = vld [vmem:[%s2253 + $0xd0] sm:$0xff]
    %v2281 = vld [vmem:[%s2253 + $0xd8] sm:$0xff]
    %v2282 = vld [vmem:[%s2253 + $0xe0] sm:$0xff]
    %v2283 = vld [vmem:[%s2253 + $0xe8] sm:$0xff]
    %v2284 = vld [vmem:[%s2253 + $0xf0] sm:$0xff]
    %v2285 = vld [vmem:[%s2253 + $0xf8] sm:$0xff]
    %v2287 = vrot.slane %v2252, 2
    %2289 = vmatpush.msra.mxu0 %v2284
    %2290 = vmatpush.msra.mxu0 %v2282
    %2291 = vmatpush.msra.mxu0 %v2280
    %2292 = vmatpush.msra.mxu0 %v2278
    %2293 = vmatpush.msra.mxu0 %v2276
    %2294 = vmatpush.msra.mxu0 %v2274
    %2295 = vmatpush.msra.mxu0 %v2272
    %2296 = vmatpush.msra.mxu0 %v2270
    %2297 = vmatpush.msra.mxu0 %v2268
    %2298 = vmatpush.msra.mxu0 %v2266
    %2299 = vmatpush.msra.mxu0 %v2264
    %2300 = vmatpush.msra.mxu0 %v2262
    %2301 = vmatpush.msra.mxu0 %v2260
    %2302 = vmatpush.msra.mxu0 %v2258
    %2303 = vmatpush.msra.mxu0 %v2256
    %2304 = vmatpush.msra.mxu0 %v2254
    %2305 = vmatmul.f32.gmra.mxu0 %v2287
    %v2306 = vpop.f32.mrf.mxu0
    %v2307 = vadd.f32 0.0, %v2306
    %2308 = vdwg.mxu0
    %2309 = vmatpush.msra.mxu0 %v2285
    %2310 = vmatpush.msra.mxu0 %v2283
    %2311 = vmatpush.msra.mxu0 %v2281
    %2312 = vmatpush.msra.mxu0 %v2279
    %2313 = vmatpush.msra.mxu0 %v2277
    %2314 = vmatpush.msra.mxu0 %v2275
    %2315 = vmatpush.msra.mxu0 %v2273
    %2316 = vmatpush.msra.mxu0 %v2271
    %2317 = vmatpush.msra.mxu0 %v2269
    %2318 = vmatpush.msra.mxu0 %v2267
    %2319 = vmatpush.msra.mxu0 %v2265
    %2320 = vmatpush.msra.mxu0 %v2263
    %2321 = vmatpush.msra.mxu0 %v2261
    %2322 = vmatpush.msra.mxu0 %v2259
    %2323 = vmatpush.msra.mxu0 %v2257
    %2324 = vmatpush.msra.mxu0 %v2255
    %2325 = vmatmul.f32.gmra.mxu0 %v2287
    %v2326 = vpop.f32.mrf.mxu0
    %v2327 = vadd.f32 0.0, %v2326
    %2328 = vdwg.mxu0
    %v2329 = vadd.f32 %v2250, %v2307
    %v2330 = vadd.f32 %v2251, %v2327
    %v2331 = vld [vmem:[#allocation4] sm:$0x3c]
    %v2332 = vld [vmem:[#allocation4 + $0x8] sm:$0x3c]
    %s2333 = scalar_lea.vmem [#allocation13], 1792
    %v2334 = vld [vmem:[%s2333] sm:$0xff]
    %v2335 = vld [vmem:[%s2333 + $0x8] sm:$0xff]
    %v2336 = vld [vmem:[%s2333 + $0x10] sm:$0xff]
    %v2337 = vld [vmem:[%s2333 + $0x18] sm:$0xff]
    %v2338 = vld [vmem:[%s2333 + $0x20] sm:$0xff]
    %v2339 = vld [vmem:[%s2333 + $0x28] sm:$0xff]
    %v2340 = vld [vmem:[%s2333 + $0x30] sm:$0xff]
    %v2341 = vld [vmem:[%s2333 + $0x38] sm:$0xff]
    %v2342 = vld [vmem:[%s2333 + $0x40] sm:$0xff]
    %v2343 = vld [vmem:[%s2333 + $0x48] sm:$0xff]
    %v2344 = vld [vmem:[%s2333 + $0x50] sm:$0xff]
    %v2345 = vld [vmem:[%s2333 + $0x58] sm:$0xff]
    %v2346 = vld [vmem:[%s2333 + $0x60] sm:$0xff]
    %v2347 = vld [vmem:[%s2333 + $0x68] sm:$0xff]
    %v2348 = vld [vmem:[%s2333 + $0x70] sm:$0xff]
    %v2349 = vld [vmem:[%s2333 + $0x78] sm:$0xff]
    %v2350 = vld [vmem:[%s2333 + $0x80] sm:$0xff]
    %v2351 = vld [vmem:[%s2333 + $0x88] sm:$0xff]
    %v2352 = vld [vmem:[%s2333 + $0x90] sm:$0xff]
    %v2353 = vld [vmem:[%s2333 + $0x98] sm:$0xff]
    %v2354 = vld [vmem:[%s2333 + $0xa0] sm:$0xff]
    %v2355 = vld [vmem:[%s2333 + $0xa8] sm:$0xff]
    %v2356 = vld [vmem:[%s2333 + $0xb0] sm:$0xff]
    %v2357 = vld [vmem:[%s2333 + $0xb8] sm:$0xff]
    %v2358 = vld [vmem:[%s2333 + $0xc0] sm:$0xff]
    %v2359 = vld [vmem:[%s2333 + $0xc8] sm:$0xff]
    %v2360 = vld [vmem:[%s2333 + $0xd0] sm:$0xff]
    %v2361 = vld [vmem:[%s2333 + $0xd8] sm:$0xff]
    %v2362 = vld [vmem:[%s2333 + $0xe0] sm:$0xff]
    %v2363 = vld [vmem:[%s2333 + $0xe8] sm:$0xff]
    %v2364 = vld [vmem:[%s2333 + $0xf0] sm:$0xff]
    %v2365 = vld [vmem:[%s2333 + $0xf8] sm:$0xff]
    %v2368 = vrot.slane %v2331, 2
    %v2369 = vrot.slane %v2332, 2
    %2370 = vrot.lane.b32.xlu0 %v2368, 96
    %v2371 = vpop.permute.xlu0 %2370
    %2372 = vrot.lane.b32.xlu0 %v2369, 96
    %v2373 = vpop.permute.xlu0 %2372
    %v2374 = vsel %vm1134, %v2371, %v2373
    %2376 = vmatpush.msra.mxu0 %v2364
    %2377 = vmatpush.msra.mxu0 %v2362
    %2378 = vmatpush.msra.mxu0 %v2360
    %2379 = vmatpush.msra.mxu0 %v2358
    %2380 = vmatpush.msra.mxu0 %v2356
    %2381 = vmatpush.msra.mxu0 %v2354
    %2382 = vmatpush.msra.mxu0 %v2352
    %2383 = vmatpush.msra.mxu0 %v2350
    %2384 = vmatpush.msra.mxu0 %v2348
    %2385 = vmatpush.msra.mxu0 %v2346
    %2386 = vmatpush.msra.mxu0 %v2344
    %2387 = vmatpush.msra.mxu0 %v2342
    %2388 = vmatpush.msra.mxu0 %v2340
    %2389 = vmatpush.msra.mxu0 %v2338
    %2390 = vmatpush.msra.mxu0 %v2336
    %2391 = vmatpush.msra.mxu0 %v2334
    %2392 = vmatmul.f32.gmra.mxu0 %v2374
    %v2393 = vpop.f32.mrf.mxu0
    %v2394 = vadd.f32 0.0, %v2393
    %2395 = vdwg.mxu0
    %2396 = vmatpush.msra.mxu0 %v2365
    %2397 = vmatpush.msra.mxu0 %v2363
    %2398 = vmatpush.msra.mxu0 %v2361
    %2399 = vmatpush.msra.mxu0 %v2359
    %2400 = vmatpush.msra.mxu0 %v2357
    %2401 = vmatpush.msra.mxu0 %v2355
    %2402 = vmatpush.msra.mxu0 %v2353
    %2403 = vmatpush.msra.mxu0 %v2351
    %2404 = vmatpush.msra.mxu0 %v2349
    %2405 = vmatpush.msra.mxu0 %v2347
    %2406 = vmatpush.msra.mxu0 %v2345
    %2407 = vmatpush.msra.mxu0 %v2343
    %2408 = vmatpush.msra.mxu0 %v2341
    %2409 = vmatpush.msra.mxu0 %v2339
    %2410 = vmatpush.msra.mxu0 %v2337
    %2411 = vmatpush.msra.mxu0 %v2335
    %2412 = vmatmul.f32.gmra.mxu0 %v2374
    %v2413 = vpop.f32.mrf.mxu0
    %v2414 = vadd.f32 0.0, %v2413
    %2415 = vdwg.mxu0
    %v2416 = vadd.f32 %v2329, %v2394
    %v2417 = vadd.f32 %v2330, %v2414
    %s2418 = scalar_lea.vmem [#allocation13], 2048
    %v2419 = vld [vmem:[%s2418] sm:$0xff]
    %v2420 = vld [vmem:[%s2418 + $0x8] sm:$0xff]
    %v2421 = vld [vmem:[%s2418 + $0x10] sm:$0xff]
    %v2422 = vld [vmem:[%s2418 + $0x18] sm:$0xff]
    %v2423 = vld [vmem:[%s2418 + $0x20] sm:$0xff]
    %v2424 = vld [vmem:[%s2418 + $0x28] sm:$0xff]
    %v2425 = vld [vmem:[%s2418 + $0x30] sm:$0xff]
    %v2426 = vld [vmem:[%s2418 + $0x38] sm:$0xff]
    %v2427 = vld [vmem:[%s2418 + $0x40] sm:$0xff]
    %v2428 = vld [vmem:[%s2418 + $0x48] sm:$0xff]
    %v2429 = vld [vmem:[%s2418 + $0x50] sm:$0xff]
    %v2430 = vld [vmem:[%s2418 + $0x58] sm:$0xff]
    %v2431 = vld [vmem:[%s2418 + $0x60] sm:$0xff]
    %v2432 = vld [vmem:[%s2418 + $0x68] sm:$0xff]
    %v2433 = vld [vmem:[%s2418 + $0x70] sm:$0xff]
    %v2434 = vld [vmem:[%s2418 + $0x78] sm:$0xff]
    %v2435 = vld [vmem:[%s2418 + $0x80] sm:$0xff]
    %v2436 = vld [vmem:[%s2418 + $0x88] sm:$0xff]
    %v2437 = vld [vmem:[%s2418 + $0x90] sm:$0xff]
    %v2438 = vld [vmem:[%s2418 + $0x98] sm:$0xff]
    %v2439 = vld [vmem:[%s2418 + $0xa0] sm:$0xff]
    %v2440 = vld [vmem:[%s2418 + $0xa8] sm:$0xff]
    %v2441 = vld [vmem:[%s2418 + $0xb0] sm:$0xff]
    %v2442 = vld [vmem:[%s2418 + $0xb8] sm:$0xff]
    %v2443 = vld [vmem:[%s2418 + $0xc0] sm:$0xff]
    %v2444 = vld [vmem:[%s2418 + $0xc8] sm:$0xff]
    %v2445 = vld [vmem:[%s2418 + $0xd0] sm:$0xff]
    %v2446 = vld [vmem:[%s2418 + $0xd8] sm:$0xff]
    %v2447 = vld [vmem:[%s2418 + $0xe0] sm:$0xff]
    %v2448 = vld [vmem:[%s2418 + $0xe8] sm:$0xff]
    %v2449 = vld [vmem:[%s2418 + $0xf0] sm:$0xff]
    %v2450 = vld [vmem:[%s2418 + $0xf8] sm:$0xff]
    %2451 = vrot.lane.b32.xlu0 %v2368, 64
    %v2452 = vpop.permute.xlu0 %2451
    %2453 = vrot.lane.b32.xlu0 %v2369, 64
    %v2454 = vpop.permute.xlu0 %2453
    %v2455 = vsel %vm1960, %v2452, %v2454
    %2457 = vmatpush.msra.mxu0 %v2449
    %2458 = vmatpush.msra.mxu0 %v2447
    %2459 = vmatpush.msra.mxu0 %v2445
    %2460 = vmatpush.msra.mxu0 %v2443
    %2461 = vmatpush.msra.mxu0 %v2441
    %2462 = vmatpush.msra.mxu0 %v2439
    %2463 = vmatpush.msra.mxu0 %v2437
    %2464 = vmatpush.msra.mxu0 %v2435
    %2465 = vmatpush.msra.mxu0 %v2433
    %2466 = vmatpush.msra.mxu0 %v2431
    %2467 = vmatpush.msra.mxu0 %v2429
    %2468 = vmatpush.msra.mxu0 %v2427
    %2469 = vmatpush.msra.mxu0 %v2425
    %2470 = vmatpush.msra.mxu0 %v2423
    %2471 = vmatpush.msra.mxu0 %v2421
    %2472 = vmatpush.msra.mxu0 %v2419
    %2473 = vmatmul.f32.gmra.mxu0 %v2455
    %v2474 = vpop.f32.mrf.mxu0
    %v2475 = vadd.f32 0.0, %v2474
    %2476 = vdwg.mxu0
    %2477 = vmatpush.msra.mxu0 %v2450
    %2478 = vmatpush.msra.mxu0 %v2448
    %2479 = vmatpush.msra.mxu0 %v2446
    %2480 = vmatpush.msra.mxu0 %v2444
    %2481 = vmatpush.msra.mxu0 %v2442
    %2482 = vmatpush.msra.mxu0 %v2440
    %2483 = vmatpush.msra.mxu0 %v2438
    %2484 = vmatpush.msra.mxu0 %v2436
    %2485 = vmatpush.msra.mxu0 %v2434
    %2486 = vmatpush.msra.mxu0 %v2432
    %2487 = vmatpush.msra.mxu0 %v2430
    %2488 = vmatpush.msra.mxu0 %v2428
    %2489 = vmatpush.msra.mxu0 %v2426
    %2490 = vmatpush.msra.mxu0 %v2424
    %2491 = vmatpush.msra.mxu0 %v2422
    %2492 = vmatpush.msra.mxu0 %v2420
    %2493 = vmatmul.f32.gmra.mxu0 %v2455
    %v2494 = vpop.f32.mrf.mxu0
    %v2495 = vadd.f32 0.0, %v2494
    %2496 = vdwg.mxu0
    %v2497 = vadd.f32 %v2416, %v2475
    %v2498 = vadd.f32 %v2417, %v2495
    %2499 = vst [vmem:[#allocation5] sm:$0xf] %v2497
    %2500 = vst [vmem:[#allocation5 + $0x8] sm:$0xf] %v2498
    %v2501 = vld [vmem:[#allocation14] sm:$0x1]
    %v2502 = vld [vmem:[#allocation5] ss:$8 sm:$0x3]
    %v2503 = vld [vmem:[%s797] ss:$8 sm:$0x3]
    %v2504 = vmax.f32 %v2502, %v2503
    %v2506 = vrot.slane %v2504, 1
    %v2508 = vmax.f32 %v2504, %v2506
    %v2509 = vadd.f32 %v2508, %v2501
    %v2510 = vmax.f32 %v2509, 0.0
    %v2511 = vld [vmem:[%s7] sm:$0xff]
    %v2512 = vld [vmem:[%s7 + $0x8] sm:$0xff]
    %v2513 = vld [vmem:[%s7 + $0x10] sm:$0xff]
    %v2514 = vld [vmem:[%s7 + $0x18] sm:$0xff]
    %v2515 = vld [vmem:[%s7 + $0x20] sm:$0xff]
    %v2516 = vld [vmem:[%s7 + $0x28] sm:$0xff]
    %v2517 = vld [vmem:[%s7 + $0x30] sm:$0xff]
    %v2518 = vld [vmem:[%s7 + $0x38] sm:$0xff]
    %v2519 = vld [vmem:[%s7 + $0x40] sm:$0xff]
    %v2520 = vld [vmem:[%s7 + $0x48] sm:$0xff]
    %v2521 = vld [vmem:[%s7 + $0x50] sm:$0xff]
    %v2522 = vld [vmem:[%s7 + $0x58] sm:$0xff]
    %v2523 = vld [vmem:[%s7 + $0x60] sm:$0xff]
    %v2524 = vld [vmem:[%s7 + $0x68] sm:$0xff]
    %v2525 = vld [vmem:[%s7 + $0x70] sm:$0xff]
    %v2526 = vld [vmem:[%s7 + $0x78] sm:$0xff]
    %v2527 = vld [vmem:[#allocation16] sm:$0x1]
    %2528 = vmatpush.msra.mxu0 %v2526
    %2529 = vmatpush.msra.mxu0 %v2525
    %2530 = vmatpush.msra.mxu0 %v2524
    %2531 = vmatpush.msra.mxu0 %v2523
    %2532 = vmatpush.msra.mxu0 %v2522
    %2533 = vmatpush.msra.mxu0 %v2521
    %2534 = vmatpush.msra.mxu0 %v2520
    %2535 = vmatpush.msra.mxu0 %v2519
    %2536 = vmatpush.msra.mxu0 %v2518
    %2537 = vmatpush.msra.mxu0 %v2517
    %2538 = vmatpush.msra.mxu0 %v2516
    %2539 = vmatpush.msra.mxu0 %v2515
    %2540 = vmatpush.msra.mxu0 %v2514
    %2541 = vmatpush.msra.mxu0 %v2513
    %2542 = vmatpush.msra.mxu0 %v2512
    %2543 = vmatpush.msra.mxu0 %v2511
    %2544 = vmatmul.f32.gmra.mxu0 %v2510
    %v2545 = vpop.f32.mrf.mxu0
    %v2546 = vadd.f32 %v2527, %v2545
    %2547 = vdwg.mxu0
    %vm2548 = vcmask 90112
    %2549 = vst.msk [vmem:[%s9] sm:$0x1] %vm2548, %v2546
    %v2550 = vld [vmem:[%s815] ss:$8 sm:$0x3]
    %v2551 = vld [vmem:[%s817] ss:$8 sm:$0x3]
    %v2552 = vmax.f32 %v2550, %v2551
    %v2554 = vrot.slane %v2552, 1
    %v2556 = vmax.f32 %v2552, %v2554
    %v2557 = vadd.f32 %v2556, %v2501
    %v2558 = vmax.f32 %v2557, 0.0
    %v2559 = vld [vmem:[%s7] sm:$0xff]
    %v2560 = vld [vmem:[%s7 + $0x8] sm:$0xff]
    %v2561 = vld [vmem:[%s7 + $0x10] sm:$0xff]
    %v2562 = vld [vmem:[%s7 + $0x18] sm:$0xff]
    %v2563 = vld [vmem:[%s7 + $0x20] sm:$0xff]
    %v2564 = vld [vmem:[%s7 + $0x28] sm:$0xff]
    %v2565 = vld [vmem:[%s7 + $0x30] sm:$0xff]
    %v2566 = vld [vmem:[%s7 + $0x38] sm:$0xff]
    %v2567 = vld [vmem:[%s7 + $0x40] sm:$0xff]
    %v2568 = vld [vmem:[%s7 + $0x48] sm:$0xff]
    %v2569 = vld [vmem:[%s7 + $0x50] sm:$0xff]
    %v2570 = vld [vmem:[%s7 + $0x58] sm:$0xff]
    %v2571 = vld [vmem:[%s7 + $0x60] sm:$0xff]
    %v2572 = vld [vmem:[%s7 + $0x68] sm:$0xff]
    %v2573 = vld [vmem:[%s7 + $0x70] sm:$0xff]
    %v2574 = vld [vmem:[%s7 + $0x78] sm:$0xff]
    %v2575 = vld [vmem:[#allocation16] sm:$0x1]
    %2576 = vmatpush.msra.mxu0 %v2574
    %2577 = vmatpush.msra.mxu0 %v2573
    %2578 = vmatpush.msra.mxu0 %v2572
    %2579 = vmatpush.msra.mxu0 %v2571
    %2580 = vmatpush.msra.mxu0 %v2570
    %2581 = vmatpush.msra.mxu0 %v2569
    %2582 = vmatpush.msra.mxu0 %v2568
    %2583 = vmatpush.msra.mxu0 %v2567
    %2584 = vmatpush.msra.mxu0 %v2566
    %2585 = vmatpush.msra.mxu0 %v2565
    %2586 = vmatpush.msra.mxu0 %v2564
    %2587 = vmatpush.msra.mxu0 %v2563
    %2588 = vmatpush.msra.mxu0 %v2562
    %2589 = vmatpush.msra.mxu0 %v2561
    %2590 = vmatpush.msra.mxu0 %v2560
    %2591 = vmatpush.msra.mxu0 %v2559
    %2592 = vmatmul.f32.gmra.mxu0 %v2558
    %v2593 = vpop.f32.mrf.mxu0
    %v2594 = vadd.f32 %v2575, %v2593
    %2595 = vdwg.mxu0
    %2596 = vst.msk [vmem:[%s9 + $0x1] sm:$0x1] %vm2548, %v2594
    %s2597 = scalar_lea.vmem %s0, 16
    %v2598 = vld [vmem:[%s2597] sm:$0xff]
    %v2599 = vld [vmem:[%s2597 + $0x8] sm:$0xff]
    %2602 = vrot.lane.b32.xlu0 %v2598, 3
    %v2603 = vpop.permute.xlu0 %2602
    %2604 = vrot.lane.b32.xlu0 %v2599, 3
    %v2605 = vpop.permute.xlu0 %2604
    %2608 = vst.msk [vmem:[#allocation2 + $0x1] sm:$0xff] %vm157, %v2603
    %2609 = vst.msk [vmem:[#allocation2 + $0x9] sm:$0xff] %vm157, %v2605
    %v2610 = vld [vmem:[#allocation2] sm:$0xff]
    %v2611 = vld [vmem:[#allocation2 + $0x8] sm:$0xff]
    %v2612 = vld [vmem:[#allocation6] sm:$0xff]
    %v2613 = vld [vmem:[#allocation6 + $0x8] sm:$0xff]
    %v2614 = vld [vmem:[#allocation6 + $0x10] sm:$0xff]
    %v2615 = vld [vmem:[#allocation6 + $0x18] sm:$0xff]
    %v2616 = vld [vmem:[#allocation6 + $0x20] sm:$0xff]
    %v2617 = vld [vmem:[#allocation6 + $0x28] sm:$0xff]
    %v2618 = vld [vmem:[#allocation6 + $0x30] sm:$0xff]
    %v2619 = vld [vmem:[#allocation6 + $0x38] sm:$0xff]
    %v2620 = vld [vmem:[#allocation6 + $0x40] sm:$0xff]
    %v2621 = vld [vmem:[#allocation6 + $0x48] sm:$0xff]
    %v2622 = vld [vmem:[#allocation6 + $0x50] sm:$0xff]
    %v2623 = vld [vmem:[#allocation6 + $0x58] sm:$0xff]
    %v2624 = vld [vmem:[%s174] sm:$0xff]
    %v2625 = vld [vmem:[%s174 + $0x8] sm:$0xff]
    %v2626 = vld [vmem:[%s174 + $0x10] sm:$0xff]
    %v2627 = vld [vmem:[%s174 + $0x18] sm:$0xff]
    %v2628 = vld [vmem:[%s174 + $0x20] sm:$0xff]
    %v2629 = vld [vmem:[%s174 + $0x28] sm:$0xff]
    %v2630 = vld [vmem:[%s174 + $0x30] sm:$0xff]
    %v2631 = vld [vmem:[%s174 + $0x38] sm:$0xff]
    %v2632 = vld [vmem:[%s174 + $0x40] sm:$0xff]
    %v2633 = vld [vmem:[%s174 + $0x48] sm:$0xff]
    %v2634 = vld [vmem:[%s174 + $0x50] sm:$0xff]
    %v2635 = vld [vmem:[%s174 + $0x58] sm:$0xff]
    %2638 = vrot.lane.b32.xlu0 %v2610, 125
    %v2639 = vpop.permute.xlu0 %2638
    %2640 = vrot.lane.b32.xlu0 %v2611, 125
    %v2641 = vpop.permute.xlu0 %2640
    %v2642 = vsel %vm193, %v2639, 0
    %v2644 = vsel %vm193, %v2641, 0
    %2646 = vmatpush.msra.mxu0 0.0
    %2647 = vmatpush.msra.mxu0 0.0
    %2648 = vmatpush.msra.mxu0 0.0
    %2649 = vmatpush.msra.mxu0 0.0
    %2650 = vmatpush.msra.mxu0 0.0
    %2651 = vmatpush.msra.mxu0 0.0
    %2652 = vmatpush.msra.mxu0 0.0
    %2653 = vmatpush.msra.mxu0 0.0
    %2654 = vmatpush.msra.mxu0 0.0
    %2655 = vmatpush.msra.mxu0 0.0
    %2656 = vmatpush.msra.mxu0 %v2634
    %2657 = vmatpush.msra.mxu0 %v2632
    %2658 = vmatpush.msra.mxu0 %v2630
    %2659 = vmatpush.msra.mxu0 %v2628
    %2660 = vmatpush.msra.mxu0 %v2626
    %2661 = vmatpush.msra.mxu0 %v2624
    %2662 = vmatmul.f32.gmra.mxu0 %v2642
    %v2663 = vpop.f32.mrf.mxu0
    %v2664 = vadd.f32 0.0, %v2663
    %2665 = vmatmul.f32.gmra.mxu0 %v2644
    %v2666 = vpop.f32.mrf.mxu0
    %v2667 = vadd.f32 0.0, %v2666
    %2668 = vdwg.mxu0
    %2669 = vmatpush.msra.mxu0 0.0
    %2670 = vmatpush.msra.mxu0 0.0
    %2671 = vmatpush.msra.mxu0 0.0
    %2672 = vmatpush.msra.mxu0 0.0
    %2673 = vmatpush.msra.mxu0 0.0
    %2674 = vmatpush.msra.mxu0 0.0
    %2675 = vmatpush.msra.mxu0 0.0
    %2676 = vmatpush.msra.mxu0 0.0
    %2677 = vmatpush.msra.mxu0 0.0
    %2678 = vmatpush.msra.mxu0 0.0
    %2679 = vmatpush.msra.mxu0 %v2635
    %2680 = vmatpush.msra.mxu0 %v2633
    %2681 = vmatpush.msra.mxu0 %v2631
    %2682 = vmatpush.msra.mxu0 %v2629
    %2683 = vmatpush.msra.mxu0 %v2627
    %2684 = vmatpush.msra.mxu0 %v2625
    %2685 = vmatmul.f32.gmra.mxu0 %v2642
    %v2686 = vpop.f32.mrf.mxu0
    %v2687 = vadd.f32 0.0, %v2686
    %2688 = vmatmul.f32.gmra.mxu0 %v2644
    %v2689 = vpop.f32.mrf.mxu0
    %v2690 = vadd.f32 0.0, %v2689
    %2691 = vdwg.mxu0
    %v2692 = vsel %vm193, %v2610, 0
    %v2694 = vsel %vm193, %v2611, 0
    %2696 = vmatpush.msra.mxu0 0.0
    %2697 = vmatpush.msra.mxu0 0.0
    %2698 = vmatpush.msra.mxu0 0.0
    %2699 = vmatpush.msra.mxu0 0.0
    %2700 = vmatpush.msra.mxu0 0.0
    %2701 = vmatpush.msra.mxu0 0.0
    %2702 = vmatpush.msra.mxu0 0.0
    %2703 = vmatpush.msra.mxu0 0.0
    %2704 = vmatpush.msra.mxu0 0.0
    %2705 = vmatpush.msra.mxu0 0.0
    %2706 = vmatpush.msra.mxu0 %v2622
    %2707 = vmatpush.msra.mxu0 %v2620
    %2708 = vmatpush.msra.mxu0 %v2618
    %2709 = vmatpush.msra.mxu0 %v2616
    %2710 = vmatpush.msra.mxu0 %v2614
    %2711 = vmatpush.msra.mxu0 %v2612
    %2712 = vmatmul.f32.gmra.mxu0 %v2692
    %v2713 = vpop.f32.mrf.mxu0
    %v2714 = vadd.f32 %v2664, %v2713
    %2715 = vmatmul.f32.gmra.mxu0 %v2694
    %v2716 = vpop.f32.mrf.mxu0
    %v2717 = vadd.f32 %v2667, %v2716
    %2718 = vdwg.mxu0
    %2719 = vmatpush.msra.mxu0 0.0
    %2720 = vmatpush.msra.mxu0 0.0
    %2721 = vmatpush.msra.mxu0 0.0
    %2722 = vmatpush.msra.mxu0 0.0
    %2723 = vmatpush.msra.mxu0 0.0
    %2724 = vmatpush.msra.mxu0 0.0
    %2725 = vmatpush.msra.mxu0 0.0
    %2726 = vmatpush.msra.mxu0 0.0
    %2727 = vmatpush.msra.mxu0 0.0
    %2728 = vmatpush.msra.mxu0 0.0
    %2729 = vmatpush.msra.mxu0 %v2623
    %2730 = vmatpush.msra.mxu0 %v2621
    %2731 = vmatpush.msra.mxu0 %v2619
    %2732 = vmatpush.msra.mxu0 %v2617
    %2733 = vmatpush.msra.mxu0 %v2615
    %2734 = vmatpush.msra.mxu0 %v2613
    %2735 = vmatmul.f32.gmra.mxu0 %v2692
    %v2736 = vpop.f32.mrf.mxu0
    %v2737 = vadd.f32 %v2687, %v2736
    %2738 = vmatmul.f32.gmra.mxu0 %v2694
    %v2739 = vpop.f32.mrf.mxu0
    %v2740 = vadd.f32 %v2690, %v2739
    %2741 = vdwg.mxu0
    %v2742 = vld [vmem:[%s294] sm:$0xff]
    %v2743 = vld [vmem:[%s294 + $0x8] sm:$0xff]
    %v2744 = vld [vmem:[%s294 + $0x10] sm:$0xff]
    %v2745 = vld [vmem:[%s294 + $0x18] sm:$0xff]
    %v2746 = vld [vmem:[%s294 + $0x20] sm:$0xff]
    %v2747 = vld [vmem:[%s294 + $0x28] sm:$0xff]
    %v2748 = vld [vmem:[%s294 + $0x30] sm:$0xff]
    %v2749 = vld [vmem:[%s294 + $0x38] sm:$0xff]
    %v2750 = vld [vmem:[%s294 + $0x40] sm:$0xff]
    %v2751 = vld [vmem:[%s294 + $0x48] sm:$0xff]
    %v2752 = vld [vmem:[%s294 + $0x50] sm:$0xff]
    %v2753 = vld [vmem:[%s294 + $0x58] sm:$0xff]
    %2754 = vrot.lane.b32.xlu0 %v2610, 122
    %v2755 = vpop.permute.xlu0 %2754
    %2756 = vrot.lane.b32.xlu0 %v2611, 122
    %v2757 = vpop.permute.xlu0 %2756
    %v2758 = vsel %vm193, %v2755, 0
    %v2760 = vsel %vm193, %v2757, 0
    %2762 = vmatpush.msra.mxu0 0.0
    %2763 = vmatpush.msra.mxu0 0.0
    %2764 = vmatpush.msra.mxu0 0.0
    %2765 = vmatpush.msra.mxu0 0.0
    %2766 = vmatpush.msra.mxu0 0.0
    %2767 = vmatpush.msra.mxu0 0.0
    %2768 = vmatpush.msra.mxu0 0.0
    %2769 = vmatpush.msra.mxu0 0.0
    %2770 = vmatpush.msra.mxu0 0.0
    %2771 = vmatpush.msra.mxu0 0.0
    %2772 = vmatpush.msra.mxu0 %v2752
    %2773 = vmatpush.msra.mxu0 %v2750
    %2774 = vmatpush.msra.mxu0 %v2748
    %2775 = vmatpush.msra.mxu0 %v2746
    %2776 = vmatpush.msra.mxu0 %v2744
    %2777 = vmatpush.msra.mxu0 %v2742
    %2778 = vmatmul.f32.gmra.mxu0 %v2758
    %v2779 = vpop.f32.mrf.mxu0
    %v2780 = vadd.f32 0.0, %v2779
    %2781 = vmatmul.f32.gmra.mxu0 %v2760
    %v2782 = vpop.f32.mrf.mxu0
    %v2783 = vadd.f32 0.0, %v2782
    %2784 = vdwg.mxu0
    %2785 = vmatpush.msra.mxu0 0.0
    %2786 = vmatpush.msra.mxu0 0.0
    %2787 = vmatpush.msra.mxu0 0.0
    %2788 = vmatpush.msra.mxu0 0.0
    %2789 = vmatpush.msra.mxu0 0.0
    %2790 = vmatpush.msra.mxu0 0.0
    %2791 = vmatpush.msra.mxu0 0.0
    %2792 = vmatpush.msra.mxu0 0.0
    %2793 = vmatpush.msra.mxu0 0.0
    %2794 = vmatpush.msra.mxu0 0.0
    %2795 = vmatpush.msra.mxu0 %v2753
    %2796 = vmatpush.msra.mxu0 %v2751
    %2797 = vmatpush.msra.mxu0 %v2749
    %2798 = vmatpush.msra.mxu0 %v2747
    %2799 = vmatpush.msra.mxu0 %v2745
    %2800 = vmatpush.msra.mxu0 %v2743
    %2801 = vmatmul.f32.gmra.mxu0 %v2758
    %v2802 = vpop.f32.mrf.mxu0
    %v2803 = vadd.f32 0.0, %v2802
    %2804 = vmatmul.f32.gmra.mxu0 %v2760
    %v2805 = vpop.f32.mrf.mxu0
    %v2806 = vadd.f32 0.0, %v2805
    %2807 = vdwg.mxu0
    %v2808 = vadd.f32 %v2714, %v2780
    %v2809 = vadd.f32 %v2737, %v2803
    %v2810 = vadd.f32 %v2717, %v2783
    %v2811 = vadd.f32 %v2740, %v2806
    %v2812 = vld [vmem:[#allocation2 + $0x1] sm:$0xff]
    %v2813 = vld [vmem:[#allocation2 + $0x9] sm:$0xff]
    %v2814 = vld [vmem:[%s367] sm:$0xff]
    %v2815 = vld [vmem:[%s367 + $0x8] sm:$0xff]
    %v2816 = vld [vmem:[%s367 + $0x10] sm:$0xff]
    %v2817 = vld [vmem:[%s367 + $0x18] sm:$0xff]
    %v2818 = vld [vmem:[%s367 + $0x20] sm:$0xff]
    %v2819 = vld [vmem:[%s367 + $0x28] sm:$0xff]
    %v2820 = vld [vmem:[%s367 + $0x30] sm:$0xff]
    %v2821 = vld [vmem:[%s367 + $0x38] sm:$0xff]
    %v2822 = vld [vmem:[%s367 + $0x40] sm:$0xff]
    %v2823 = vld [vmem:[%s367 + $0x48] sm:$0xff]
    %v2824 = vld [vmem:[%s367 + $0x50] sm:$0xff]
    %v2825 = vld [vmem:[%s367 + $0x58] sm:$0xff]
    %v2827 = vsel %vm193, %v2812, 0
    %v2830 = vsel %vm193, %v2813, 0
    %2832 = vmatpush.msra.mxu0 0.0
    %2833 = vmatpush.msra.mxu0 0.0
    %2834 = vmatpush.msra.mxu0 0.0
    %2835 = vmatpush.msra.mxu0 0.0
    %2836 = vmatpush.msra.mxu0 0.0
    %2837 = vmatpush.msra.mxu0 0.0
    %2838 = vmatpush.msra.mxu0 0.0
    %2839 = vmatpush.msra.mxu0 0.0
    %2840 = vmatpush.msra.mxu0 0.0
    %2841 = vmatpush.msra.mxu0 0.0
    %2842 = vmatpush.msra.mxu0 %v2824
    %2843 = vmatpush.msra.mxu0 %v2822
    %2844 = vmatpush.msra.mxu0 %v2820
    %2845 = vmatpush.msra.mxu0 %v2818
    %2846 = vmatpush.msra.mxu0 %v2816
    %2847 = vmatpush.msra.mxu0 %v2814
    %2848 = vmatmul.f32.gmra.mxu0 %v2827
    %v2849 = vpop.f32.mrf.mxu0
    %v2850 = vadd.f32 0.0, %v2849
    %2851 = vmatmul.f32.gmra.mxu0 %v2830
    %v2852 = vpop.f32.mrf.mxu0
    %v2853 = vadd.f32 0.0, %v2852
    %2854 = vdwg.mxu0
    %2855 = vmatpush.msra.mxu0 0.0
    %2856 = vmatpush.msra.mxu0 0.0
    %2857 = vmatpush.msra.mxu0 0.0
    %2858 = vmatpush.msra.mxu0 0.0
    %2859 = vmatpush.msra.mxu0 0.0
    %2860 = vmatpush.msra.mxu0 0.0
    %2861 = vmatpush.msra.mxu0 0.0
    %2862 = vmatpush.msra.mxu0 0.0
    %2863 = vmatpush.msra.mxu0 0.0
    %2864 = vmatpush.msra.mxu0 0.0
    %2865 = vmatpush.msra.mxu0 %v2825
    %2866 = vmatpush.msra.mxu0 %v2823
    %2867 = vmatpush.msra.mxu0 %v2821
    %2868 = vmatpush.msra.mxu0 %v2819
    %2869 = vmatpush.msra.mxu0 %v2817
    %2870 = vmatpush.msra.mxu0 %v2815
    %2871 = vmatmul.f32.gmra.mxu0 %v2827
    %v2872 = vpop.f32.mrf.mxu0
    %v2873 = vadd.f32 0.0, %v2872
    %2874 = vmatmul.f32.gmra.mxu0 %v2830
    %v2875 = vpop.f32.mrf.mxu0
    %v2876 = vadd.f32 0.0, %v2875
    %2877 = vdwg.mxu0
    %v2878 = vadd.f32 %v2808, %v2850
    %v2879 = vadd.f32 %v2809, %v2873
    %v2880 = vadd.f32 %v2810, %v2853
    %v2881 = vadd.f32 %v2811, %v2876
    %v2882 = vld [vmem:[%s436] sm:$0xff]
    %v2883 = vld [vmem:[%s436 + $0x8] sm:$0xff]
    %v2884 = vld [vmem:[%s436 + $0x10] sm:$0xff]
    %v2885 = vld [vmem:[%s436 + $0x18] sm:$0xff]
    %v2886 = vld [vmem:[%s436 + $0x20] sm:$0xff]
    %v2887 = vld [vmem:[%s436 + $0x28] sm:$0xff]
    %v2888 = vld [vmem:[%s436 + $0x30] sm:$0xff]
    %v2889 = vld [vmem:[%s436 + $0x38] sm:$0xff]
    %v2890 = vld [vmem:[%s436 + $0x40] sm:$0xff]
    %v2891 = vld [vmem:[%s436 + $0x48] sm:$0xff]
    %v2892 = vld [vmem:[%s436 + $0x50] sm:$0xff]
    %v2893 = vld [vmem:[%s436 + $0x58] sm:$0xff]
    %2894 = vrot.lane.b32.xlu0 %v2812, 125
    %v2895 = vpop.permute.xlu0 %2894
    %2896 = vrot.lane.b32.xlu0 %v2813, 125
    %v2897 = vpop.permute.xlu0 %2896
    %v2898 = vsel %vm193, %v2895, 0
    %v2900 = vsel %vm193, %v2897, 0
    %2902 = vmatpush.msra.mxu0 0.0
    %2903 = vmatpush.msra.mxu0 0.0
    %2904 = vmatpush.msra.mxu0 0.0
    %2905 = vmatpush.msra.mxu0 0.0
    %2906 = vmatpush.msra.mxu0 0.0
    %2907 = vmatpush.msra.mxu0 0.0
    %2908 = vmatpush.msra.mxu0 0.0
    %2909 = vmatpush.msra.mxu0 0.0
    %2910 = vmatpush.msra.mxu0 0.0
    %2911 = vmatpush.msra.mxu0 0.0
    %2912 = vmatpush.msra.mxu0 %v2892
    %2913 = vmatpush.msra.mxu0 %v2890
    %2914 = vmatpush.msra.mxu0 %v2888
    %2915 = vmatpush.msra.mxu0 %v2886
    %2916 = vmatpush.msra.mxu0 %v2884
    %2917 = vmatpush.msra.mxu0 %v2882
    %2918 = vmatmul.f32.gmra.mxu0 %v2898
    %v2919 = vpop.f32.mrf.mxu0
    %v2920 = vadd.f32 0.0, %v2919
    %2921 = vmatmul.f32.gmra.mxu0 %v2900
    %v2922 = vpop.f32.mrf.mxu0
    %v2923 = vadd.f32 0.0, %v2922
    %2924 = vdwg.mxu0
    %2925 = vmatpush.msra.mxu0 0.0
    %2926 = vmatpush.msra.mxu0 0.0
    %2927 = vmatpush.msra.mxu0 0.0
    %2928 = vmatpush.msra.mxu0 0.0
    %2929 = vmatpush.msra.mxu0 0.0
    %2930 = vmatpush.msra.mxu0 0.0
    %2931 = vmatpush.msra.mxu0 0.0
    %2932 = vmatpush.msra.mxu0 0.0
    %2933 = vmatpush.msra.mxu0 0.0
    %2934 = vmatpush.msra.mxu0 0.0
    %2935 = vmatpush.msra.mxu0 %v2893
    %2936 = vmatpush.msra.mxu0 %v2891
    %2937 = vmatpush.msra.mxu0 %v2889
    %2938 = vmatpush.msra.mxu0 %v2887
    %2939 = vmatpush.msra.mxu0 %v2885
    %2940 = vmatpush.msra.mxu0 %v2883
    %2941 = vmatmul.f32.gmra.mxu0 %v2898
    %v2942 = vpop.f32.mrf.mxu0
    %v2943 = vadd.f32 0.0, %v2942
    %2944 = vmatmul.f32.gmra.mxu0 %v2900
    %v2945 = vpop.f32.mrf.mxu0
    %v2946 = vadd.f32 0.0, %v2945
    %2947 = vdwg.mxu0
    %v2948 = vadd.f32 %v2878, %v2920
    %v2949 = vadd.f32 %v2879, %v2943
    %v2950 = vadd.f32 %v2880, %v2923
    %v2951 = vadd.f32 %v2881, %v2946
    %v2952 = vld [vmem:[%s507] sm:$0xff]
    %v2953 = vld [vmem:[%s507 + $0x8] sm:$0xff]
    %v2954 = vld [vmem:[%s507 + $0x10] sm:$0xff]
    %v2955 = vld [vmem:[%s507 + $0x18] sm:$0xff]
    %v2956 = vld [vmem:[%s507 + $0x20] sm:$0xff]
    %v2957 = vld [vmem:[%s507 + $0x28] sm:$0xff]
    %v2958 = vld [vmem:[%s507 + $0x30] sm:$0xff]
    %v2959 = vld [vmem:[%s507 + $0x38] sm:$0xff]
    %v2960 = vld [vmem:[%s507 + $0x40] sm:$0xff]
    %v2961 = vld [vmem:[%s507 + $0x48] sm:$0xff]
    %v2962 = vld [vmem:[%s507 + $0x50] sm:$0xff]
    %v2963 = vld [vmem:[%s507 + $0x58] sm:$0xff]
    %2964 = vrot.lane.b32.xlu0 %v2812, 122
    %v2965 = vpop.permute.xlu0 %2964
    %2966 = vrot.lane.b32.xlu0 %v2813, 122
    %v2967 = vpop.permute.xlu0 %2966
    %v2968 = vsel %vm193, %v2965, 0
    %v2970 = vsel %vm193, %v2967, 0
    %2972 = vmatpush.msra.mxu0 0.0
    %2973 = vmatpush.msra.mxu0 0.0
    %2974 = vmatpush.msra.mxu0 0.0
    %2975 = vmatpush.msra.mxu0 0.0
    %2976 = vmatpush.msra.mxu0 0.0
    %2977 = vmatpush.msra.mxu0 0.0
    %2978 = vmatpush.msra.mxu0 0.0
    %2979 = vmatpush.msra.mxu0 0.0
    %2980 = vmatpush.msra.mxu0 0.0
    %2981 = vmatpush.msra.mxu0 0.0
    %2982 = vmatpush.msra.mxu0 %v2962
    %2983 = vmatpush.msra.mxu0 %v2960
    %2984 = vmatpush.msra.mxu0 %v2958
    %2985 = vmatpush.msra.mxu0 %v2956
    %2986 = vmatpush.msra.mxu0 %v2954
    %2987 = vmatpush.msra.mxu0 %v2952
    %2988 = vmatmul.f32.gmra.mxu0 %v2968
    %v2989 = vpop.f32.mrf.mxu0
    %v2990 = vadd.f32 0.0, %v2989
    %2991 = vmatmul.f32.gmra.mxu0 %v2970
    %v2992 = vpop.f32.mrf.mxu0
    %v2993 = vadd.f32 0.0, %v2992
    %2994 = vdwg.mxu0
    %2995 = vmatpush.msra.mxu0 0.0
    %2996 = vmatpush.msra.mxu0 0.0
    %2997 = vmatpush.msra.mxu0 0.0
    %2998 = vmatpush.msra.mxu0 0.0
    %2999 = vmatpush.msra.mxu0 0.0
    %3000 = vmatpush.msra.mxu0 0.0
    %3001 = vmatpush.msra.mxu0 0.0
    %3002 = vmatpush.msra.mxu0 0.0
    %3003 = vmatpush.msra.mxu0 0.0
    %3004 = vmatpush.msra.mxu0 0.0
    %3005 = vmatpush.msra.mxu0 %v2963
    %3006 = vmatpush.msra.mxu0 %v2961
    %3007 = vmatpush.msra.mxu0 %v2959
    %3008 = vmatpush.msra.mxu0 %v2957
    %3009 = vmatpush.msra.mxu0 %v2955
    %3010 = vmatpush.msra.mxu0 %v2953
    %3011 = vmatmul.f32.gmra.mxu0 %v2968
    %v3012 = vpop.f32.mrf.mxu0
    %v3013 = vadd.f32 0.0, %v3012
    %3014 = vmatmul.f32.gmra.mxu0 %v2970
    %v3015 = vpop.f32.mrf.mxu0
    %v3016 = vadd.f32 0.0, %v3015
    %3017 = vdwg.mxu0
    %v3018 = vadd.f32 %v2948, %v2990
    %v3019 = vadd.f32 %v2949, %v3013
    %v3020 = vadd.f32 %v2950, %v2993
    %v3021 = vadd.f32 %v2951, %v3016
    %v3022 = vld [vmem:[#allocation2 + $0x2] sm:$0xff]
    %v3023 = vld [vmem:[#allocation2 + $0xa] sm:$0xff]
    %v3024 = vld [vmem:[%s580] sm:$0xff]
    %v3025 = vld [vmem:[%s580 + $0x8] sm:$0xff]
    %v3026 = vld [vmem:[%s580 + $0x10] sm:$0xff]
    %v3027 = vld [vmem:[%s580 + $0x18] sm:$0xff]
    %v3028 = vld [vmem:[%s580 + $0x20] sm:$0xff]
    %v3029 = vld [vmem:[%s580 + $0x28] sm:$0xff]
    %v3030 = vld [vmem:[%s580 + $0x30] sm:$0xff]
    %v3031 = vld [vmem:[%s580 + $0x38] sm:$0xff]
    %v3032 = vld [vmem:[%s580 + $0x40] sm:$0xff]
    %v3033 = vld [vmem:[%s580 + $0x48] sm:$0xff]
    %v3034 = vld [vmem:[%s580 + $0x50] sm:$0xff]
    %v3035 = vld [vmem:[%s580 + $0x58] sm:$0xff]
    %v3037 = vsel %vm193, %v3022, 0
    %v3040 = vsel %vm193, %v3023, 0
    %3042 = vmatpush.msra.mxu0 0.0
    %3043 = vmatpush.msra.mxu0 0.0
    %3044 = vmatpush.msra.mxu0 0.0
    %3045 = vmatpush.msra.mxu0 0.0
    %3046 = vmatpush.msra.mxu0 0.0
    %3047 = vmatpush.msra.mxu0 0.0
    %3048 = vmatpush.msra.mxu0 0.0
    %3049 = vmatpush.msra.mxu0 0.0
    %3050 = vmatpush.msra.mxu0 0.0
    %3051 = vmatpush.msra.mxu0 0.0
    %3052 = vmatpush.msra.mxu0 %v3034
    %3053 = vmatpush.msra.mxu0 %v3032
    %3054 = vmatpush.msra.mxu0 %v3030
    %3055 = vmatpush.msra.mxu0 %v3028
    %3056 = vmatpush.msra.mxu0 %v3026
    %3057 = vmatpush.msra.mxu0 %v3024
    %3058 = vmatmul.f32.gmra.mxu0 %v3037
    %v3059 = vpop.f32.mrf.mxu0
    %v3060 = vadd.f32 0.0, %v3059
    %3061 = vmatmul.f32.gmra.mxu0 %v3040
    %v3062 = vpop.f32.mrf.mxu0
    %v3063 = vadd.f32 0.0, %v3062
    %3064 = vdwg.mxu0
    %3065 = vmatpush.msra.mxu0 0.0
    %3066 = vmatpush.msra.mxu0 0.0
    %3067 = vmatpush.msra.mxu0 0.0
    %3068 = vmatpush.msra.mxu0 0.0
    %3069 = vmatpush.msra.mxu0 0.0
    %3070 = vmatpush.msra.mxu0 0.0
    %3071 = vmatpush.msra.mxu0 0.0
    %3072 = vmatpush.msra.mxu0 0.0
    %3073 = vmatpush.msra.mxu0 0.0
    %3074 = vmatpush.msra.mxu0 0.0
    %3075 = vmatpush.msra.mxu0 %v3035
    %3076 = vmatpush.msra.mxu0 %v3033
    %3077 = vmatpush.msra.mxu0 %v3031
    %3078 = vmatpush.msra.mxu0 %v3029
    %3079 = vmatpush.msra.mxu0 %v3027
    %3080 = vmatpush.msra.mxu0 %v3025
    %3081 = vmatmul.f32.gmra.mxu0 %v3037
    %v3082 = vpop.f32.mrf.mxu0
    %v3083 = vadd.f32 0.0, %v3082
    %3084 = vmatmul.f32.gmra.mxu0 %v3040
    %v3085 = vpop.f32.mrf.mxu0
    %v3086 = vadd.f32 0.0, %v3085
    %3087 = vdwg.mxu0
    %v3088 = vadd.f32 %v3018, %v3060
    %v3089 = vadd.f32 %v3019, %v3083
    %v3090 = vadd.f32 %v3020, %v3063
    %v3091 = vadd.f32 %v3021, %v3086
    %v3092 = vld [vmem:[%s649] sm:$0xff]
    %v3093 = vld [vmem:[%s649 + $0x8] sm:$0xff]
    %v3094 = vld [vmem:[%s649 + $0x10] sm:$0xff]
    %v3095 = vld [vmem:[%s649 + $0x18] sm:$0xff]
    %v3096 = vld [vmem:[%s649 + $0x20] sm:$0xff]
    %v3097 = vld [vmem:[%s649 + $0x28] sm:$0xff]
    %v3098 = vld [vmem:[%s649 + $0x30] sm:$0xff]
    %v3099 = vld [vmem:[%s649 + $0x38] sm:$0xff]
    %v3100 = vld [vmem:[%s649 + $0x40] sm:$0xff]
    %v3101 = vld [vmem:[%s649 + $0x48] sm:$0xff]
    %v3102 = vld [vmem:[%s649 + $0x50] sm:$0xff]
    %v3103 = vld [vmem:[%s649 + $0x58] sm:$0xff]
    %3104 = vrot.lane.b32.xlu0 %v3022, 125
    %v3105 = vpop.permute.xlu0 %3104
    %3106 = vrot.lane.b32.xlu0 %v3023, 125
    %v3107 = vpop.permute.xlu0 %3106
    %v3108 = vsel %vm193, %v3105, 0
    %v3110 = vsel %vm193, %v3107, 0
    %3112 = vmatpush.msra.mxu0 0.0
    %3113 = vmatpush.msra.mxu0 0.0
    %3114 = vmatpush.msra.mxu0 0.0
    %3115 = vmatpush.msra.mxu0 0.0
    %3116 = vmatpush.msra.mxu0 0.0
    %3117 = vmatpush.msra.mxu0 0.0
    %3118 = vmatpush.msra.mxu0 0.0
    %3119 = vmatpush.msra.mxu0 0.0
    %3120 = vmatpush.msra.mxu0 0.0
    %3121 = vmatpush.msra.mxu0 0.0
    %3122 = vmatpush.msra.mxu0 %v3102
    %3123 = vmatpush.msra.mxu0 %v3100
    %3124 = vmatpush.msra.mxu0 %v3098
    %3125 = vmatpush.msra.mxu0 %v3096
    %3126 = vmatpush.msra.mxu0 %v3094
    %3127 = vmatpush.msra.mxu0 %v3092
    %3128 = vmatmul.f32.gmra.mxu0 %v3108
    %v3129 = vpop.f32.mrf.mxu0
    %v3130 = vadd.f32 0.0, %v3129
    %3131 = vmatmul.f32.gmra.mxu0 %v3110
    %v3132 = vpop.f32.mrf.mxu0
    %v3133 = vadd.f32 0.0, %v3132
    %3134 = vdwg.mxu0
    %3135 = vmatpush.msra.mxu0 0.0
    %3136 = vmatpush.msra.mxu0 0.0
    %3137 = vmatpush.msra.mxu0 0.0
    %3138 = vmatpush.msra.mxu0 0.0
    %3139 = vmatpush.msra.mxu0 0.0
    %3140 = vmatpush.msra.mxu0 0.0
    %3141 = vmatpush.msra.mxu0 0.0
    %3142 = vmatpush.msra.mxu0 0.0
    %3143 = vmatpush.msra.mxu0 0.0
    %3144 = vmatpush.msra.mxu0 0.0
    %3145 = vmatpush.msra.mxu0 %v3103
    %3146 = vmatpush.msra.mxu0 %v3101
    %3147 = vmatpush.msra.mxu0 %v3099
    %3148 = vmatpush.msra.mxu0 %v3097
    %3149 = vmatpush.msra.mxu0 %v3095
    %3150 = vmatpush.msra.mxu0 %v3093
    %3151 = vmatmul.f32.gmra.mxu0 %v3108
    %v3152 = vpop.f32.mrf.mxu0
    %v3153 = vadd.f32 0.0, %v3152
    %3154 = vmatmul.f32.gmra.mxu0 %v3110
    %v3155 = vpop.f32.mrf.mxu0
    %v3156 = vadd.f32 0.0, %v3155
    %3157 = vdwg.mxu0
    %v3158 = vadd.f32 %v3088, %v3130
    %v3159 = vadd.f32 %v3089, %v3153
    %v3160 = vadd.f32 %v3090, %v3133
    %v3161 = vadd.f32 %v3091, %v3156
    %v3162 = vld [vmem:[%s720] sm:$0xff]
    %v3163 = vld [vmem:[%s720 + $0x8] sm:$0xff]
    %v3164 = vld [vmem:[%s720 + $0x10] sm:$0xff]
    %v3165 = vld [vmem:[%s720 + $0x18] sm:$0xff]
    %v3166 = vld [vmem:[%s720 + $0x20] sm:$0xff]
    %v3167 = vld [vmem:[%s720 + $0x28] sm:$0xff]
    %v3168 = vld [vmem:[%s720 + $0x30] sm:$0xff]
    %v3169 = vld [vmem:[%s720 + $0x38] sm:$0xff]
    %v3170 = vld [vmem:[%s720 + $0x40] sm:$0xff]
    %v3171 = vld [vmem:[%s720 + $0x48] sm:$0xff]
    %v3172 = vld [vmem:[%s720 + $0x50] sm:$0xff]
    %v3173 = vld [vmem:[%s720 + $0x58] sm:$0xff]
    %3174 = vrot.lane.b32.xlu0 %v3022, 122
    %v3175 = vpop.permute.xlu0 %3174
    %3176 = vrot.lane.b32.xlu0 %v3023, 122
    %v3177 = vpop.permute.xlu0 %3176
    %v3178 = vsel %vm193, %v3175, 0
    %v3180 = vsel %vm193, %v3177, 0
    %3182 = vmatpush.msra.mxu0 0.0
    %3183 = vmatpush.msra.mxu0 0.0
    %3184 = vmatpush.msra.mxu0 0.0
    %3185 = vmatpush.msra.mxu0 0.0
    %3186 = vmatpush.msra.mxu0 0.0
    %3187 = vmatpush.msra.mxu0 0.0
    %3188 = vmatpush.msra.mxu0 0.0
    %3189 = vmatpush.msra.mxu0 0.0
    %3190 = vmatpush.msra.mxu0 0.0
    %3191 = vmatpush.msra.mxu0 0.0
    %3192 = vmatpush.msra.mxu0 %v3172
    %3193 = vmatpush.msra.mxu0 %v3170
    %3194 = vmatpush.msra.mxu0 %v3168
    %3195 = vmatpush.msra.mxu0 %v3166
    %3196 = vmatpush.msra.mxu0 %v3164
    %3197 = vmatpush.msra.mxu0 %v3162
    %3198 = vmatmul.f32.gmra.mxu0 %v3178
    %v3199 = vpop.f32.mrf.mxu0
    %v3200 = vadd.f32 0.0, %v3199
    %3201 = vmatmul.f32.gmra.mxu0 %v3180
    %v3202 = vpop.f32.mrf.mxu0
    %v3203 = vadd.f32 0.0, %v3202
    %3204 = vdwg.mxu0
    %3205 = vmatpush.msra.mxu0 0.0
    %3206 = vmatpush.msra.mxu0 0.0
    %3207 = vmatpush.msra.mxu0 0.0
    %3208 = vmatpush.msra.mxu0 0.0
    %3209 = vmatpush.msra.mxu0 0.0
    %3210 = vmatpush.msra.mxu0 0.0
    %3211 = vmatpush.msra.mxu0 0.0
    %3212 = vmatpush.msra.mxu0 0.0
    %3213 = vmatpush.msra.mxu0 0.0
    %3214 = vmatpush.msra.mxu0 0.0
    %3215 = vmatpush.msra.mxu0 %v3173
    %3216 = vmatpush.msra.mxu0 %v3171
    %3217 = vmatpush.msra.mxu0 %v3169
    %3218 = vmatpush.msra.mxu0 %v3167
    %3219 = vmatpush.msra.mxu0 %v3165
    %3220 = vmatpush.msra.mxu0 %v3163
    %3221 = vmatmul.f32.gmra.mxu0 %v3178
    %v3222 = vpop.f32.mrf.mxu0
    %v3223 = vadd.f32 0.0, %v3222
    %3224 = vmatmul.f32.gmra.mxu0 %v3180
    %v3225 = vpop.f32.mrf.mxu0
    %v3226 = vadd.f32 0.0, %v3225
    %3227 = vdwg.mxu0
    %v3228 = vadd.f32 %v3158, %v3200
    %v3229 = vadd.f32 %v3159, %v3223
    %v3230 = vadd.f32 %v3160, %v3203
    %v3231 = vadd.f32 %v3161, %v3226
    %3232 = vst [vmem:[#allocation5] sm:$0xff] %v3228
    %3233 = vst [vmem:[#allocation5 + $0x8] sm:$0xff] %v3229
    %3234 = vst [vmem:[#allocation5 + $0x10] sm:$0xff] %v3230
    %3235 = vst [vmem:[#allocation5 + $0x18] sm:$0xff] %v3231
    %v3236 = vld [vmem:[#allocation8] sm:$0x1]
    %v3237 = vld [vmem:[#allocation5] ss:$8 sm:$0x3]
    %v3238 = vld [vmem:[%s797] ss:$8 sm:$0x3]
    %v3239 = vmax.f32 %v3237, %v3238
    %v3241 = vrot.slane %v3239, 1
    %v3243 = vmax.f32 %v3239, %v3241
    %v3244 = vadd.f32 %v3243, %v3236
    %v3245 = vmax.f32 %v3244, 0.0
    %v3247 = vperm.slane %v3245, 0
    %3248 = vrot.lane.b32.xlu0 %v3247, 16
    %v3249 = vpop.permute.xlu0 %3248
    %3251 = vst.msk [vmem:[#allocation3 + $0x1] sm:$0x1] %vm811, %v3249
    %3252 = vst.msk [vmem:[#allocation3 + $0x9] sm:$0x1] %vm813, %v3249
    %v3253 = vld [vmem:[%s815] ss:$8 sm:$0x3]
    %v3254 = vld [vmem:[%s817] ss:$8 sm:$0x3]
    %v3255 = vmax.f32 %v3253, %v3254
    %v3257 = vrot.slane %v3255, 1
    %v3259 = vmax.f32 %v3255, %v3257
    %v3260 = vadd.f32 %v3259, %v3236
    %v3261 = vmax.f32 %v3260, 0.0
    %v3263 = vperm.slane %v3261, 0
    %3264 = vrot.lane.b32.xlu0 %v3263, 16
    %v3265 = vpop.permute.xlu0 %3264
    %3267 = vst.msk [vmem:[#allocation3 + $0x2] sm:$0x1] %vm811, %v3265
    %3268 = vst.msk [vmem:[#allocation3 + $0xa] sm:$0x1] %vm813, %v3265
    %v3269 = vld [vmem:[%s833] ss:$8 sm:$0x3]
    %v3270 = vld [vmem:[%s835] ss:$8 sm:$0x3]
    %v3271 = vmax.f32 %v3269, %v3270
    %v3273 = vrot.slane %v3271, 1
    %v3275 = vmax.f32 %v3271, %v3273
    %v3276 = vadd.f32 %v3275, %v3236
    %v3277 = vmax.f32 %v3276, 0.0
    %v3279 = vperm.slane %v3277, 0
    %3280 = vrot.lane.b32.xlu0 %v3279, 16
    %v3281 = vpop.permute.xlu0 %3280
    %3283 = vst.msk [vmem:[#allocation3 + $0x3] sm:$0x1] %vm811, %v3281
    %3284 = vst.msk [vmem:[#allocation3 + $0xb] sm:$0x1] %vm813, %v3281
    %v3285 = vld [vmem:[%s851] ss:$8 sm:$0x3]
    %v3286 = vld [vmem:[%s853] ss:$8 sm:$0x3]
    %v3287 = vmax.f32 %v3285, %v3286
    %v3289 = vrot.slane %v3287, 1
    %v3291 = vmax.f32 %v3287, %v3289
    %v3292 = vadd.f32 %v3291, %v3236
    %v3293 = vmax.f32 %v3292, 0.0
    %v3295 = vperm.slane %v3293, 0
    %3296 = vrot.lane.b32.xlu0 %v3295, 16
    %v3297 = vpop.permute.xlu0 %3296
    %3299 = vst.msk [vmem:[#allocation3 + $0x4] sm:$0x1] %vm811, %v3297
    %3300 = vst.msk [vmem:[#allocation3 + $0xc] sm:$0x1] %vm813, %v3297
    %v3301 = vld [vmem:[%s869] ss:$8 sm:$0x3]
    %v3302 = vld [vmem:[%s871] ss:$8 sm:$0x3]
    %v3303 = vmax.f32 %v3301, %v3302
    %v3305 = vrot.slane %v3303, 1
    %v3307 = vmax.f32 %v3303, %v3305
    %v3308 = vadd.f32 %v3307, %v3236
    %v3309 = vmax.f32 %v3308, 0.0
    %v3311 = vperm.slane %v3309, 0
    %3312 = vrot.lane.b32.xlu0 %v3311, 16
    %v3313 = vpop.permute.xlu0 %3312
    %3315 = vst.msk [vmem:[#allocation3 + $0x5] sm:$0x1] %vm811, %v3313
    %3316 = vst.msk [vmem:[#allocation3 + $0xd] sm:$0x1] %vm813, %v3313
    %v3317 = vld [vmem:[%s887] ss:$8 sm:$0x3]
    %v3318 = vld [vmem:[%s889] ss:$8 sm:$0x3]
    %v3319 = vmax.f32 %v3317, %v3318
    %v3321 = vrot.slane %v3319, 1
    %v3323 = vmax.f32 %v3319, %v3321
    %v3324 = vadd.f32 %v3323, %v3236
    %v3325 = vmax.f32 %v3324, 0.0
    %v3327 = vperm.slane %v3325, 0
    %3328 = vrot.lane.b32.xlu0 %v3327, 16
    %v3329 = vpop.permute.xlu0 %3328
    %3331 = vst.msk [vmem:[#allocation3 + $0x6] sm:$0x1] %vm811, %v3329
    %3332 = vst.msk [vmem:[#allocation3 + $0xe] sm:$0x1] %vm813, %v3329
    %v3333 = vld [vmem:[%s905] ss:$8 sm:$0x3]
    %v3334 = vld [vmem:[%s907] ss:$8 sm:$0x3]
    %v3335 = vmax.f32 %v3333, %v3334
    %v3337 = vrot.slane %v3335, 1
    %v3339 = vmax.f32 %v3335, %v3337
    %v3340 = vadd.f32 %v3339, %v3236
    %v3341 = vmax.f32 %v3340, 0.0
    %v3343 = vperm.slane %v3341, 0
    %3344 = vrot.lane.b32.xlu0 %v3343, 16
    %v3345 = vpop.permute.xlu0 %3344
    %3347 = vst.msk [vmem:[#allocation3 + $0x7] sm:$0x1] %vm811, %v3345
    %3348 = vst.msk [vmem:[#allocation3 + $0xf] sm:$0x1] %vm813, %v3345
    %v3349 = vld [vmem:[%s923] ss:$8 sm:$0x3]
    %v3350 = vld [vmem:[%s925] ss:$8 sm:$0x3]
    %v3351 = vmax.f32 %v3349, %v3350
    %v3353 = vrot.slane %v3351, 1
    %v3355 = vmax.f32 %v3351, %v3353
    %v3356 = vadd.f32 %v3355, %v3236
    %v3357 = vmax.f32 %v3356, 0.0
    %v3359 = vperm.slane %v3357, 0
    %3360 = vrot.lane.b32.xlu0 %v3359, 16
    %v3361 = vpop.permute.xlu0 %3360
    %3363 = vst.msk [vmem:[#allocation3 + $0x10] sm:$0x1] %vm811, %v3361
    %3364 = vst.msk [vmem:[#allocation3 + $0x18] sm:$0x1] %vm813, %v3361
    %v3365 = vld [vmem:[#allocation3] sm:$0xff]
    %v3366 = vld [vmem:[#allocation10] sm:$0xff]
    %v3367 = vld [vmem:[#allocation10 + $0x8] sm:$0xff]
    %v3368 = vld [vmem:[#allocation10 + $0x10] sm:$0xff]
    %v3369 = vld [vmem:[#allocation10 + $0x18] sm:$0xff]
    %v3370 = vld [vmem:[#allocation10 + $0x20] sm:$0xff]
    %v3371 = vld [vmem:[#allocation10 + $0x28] sm:$0xff]
    %v3372 = vld [vmem:[#allocation10 + $0x30] sm:$0xff]
    %v3373 = vld [vmem:[#allocation10 + $0x38] sm:$0xff]
    %v3374 = vld [vmem:[#allocation10 + $0x40] sm:$0xff]
    %v3375 = vld [vmem:[#allocation10 + $0x48] sm:$0xff]
    %v3376 = vld [vmem:[#allocation10 + $0x50] sm:$0xff]
    %v3377 = vld [vmem:[#allocation10 + $0x58] sm:$0xff]
    %v3378 = vld [vmem:[#allocation10 + $0x60] sm:$0xff]
    %v3379 = vld [vmem:[#allocation10 + $0x68] sm:$0xff]
    %v3380 = vld [vmem:[#allocation10 + $0x70] sm:$0xff]
    %v3381 = vld [vmem:[#allocation10 + $0x78] sm:$0xff]
    %v3382 = vld [vmem:[#allocation10 + $0x80] sm:$0xff]
    %v3383 = vld [vmem:[#allocation10 + $0x88] sm:$0xff]
    %v3384 = vld [vmem:[#allocation10 + $0x90] sm:$0xff]
    %v3385 = vld [vmem:[#allocation10 + $0x98] sm:$0xff]
    %v3386 = vld [vmem:[#allocation10 + $0xa0] sm:$0xff]
    %v3387 = vld [vmem:[#allocation10 + $0xa8] sm:$0xff]
    %v3388 = vld [vmem:[#allocation10 + $0xb0] sm:$0xff]
    %v3389 = vld [vmem:[#allocation10 + $0xb8] sm:$0xff]
    %v3390 = vld [vmem:[#allocation10 + $0xc0] sm:$0xff]
    %v3391 = vld [vmem:[#allocation10 + $0xc8] sm:$0xff]
    %v3392 = vld [vmem:[#allocation10 + $0xd0] sm:$0xff]
    %v3393 = vld [vmem:[#allocation10 + $0xd8] sm:$0xff]
    %v3394 = vld [vmem:[#allocation10 + $0xe0] sm:$0xff]
    %v3395 = vld [vmem:[#allocation10 + $0xe8] sm:$0xff]
    %v3396 = vld [vmem:[#allocation10 + $0xf0] sm:$0xff]
    %v3397 = vld [vmem:[#allocation10 + $0xf8] sm:$0xff]
    %v3398 = vld [vmem:[#allocation3 + $0x8] sm:$0xff]
    %v3399 = vld [vmem:[%s975] sm:$0xff]
    %v3400 = vld [vmem:[%s975 + $0x8] sm:$0xff]
    %v3401 = vld [vmem:[%s975 + $0x10] sm:$0xff]
    %v3402 = vld [vmem:[%s975 + $0x18] sm:$0xff]
    %v3403 = vld [vmem:[%s975 + $0x20] sm:$0xff]
    %v3404 = vld [vmem:[%s975 + $0x28] sm:$0xff]
    %v3405 = vld [vmem:[%s975 + $0x30] sm:$0xff]
    %v3406 = vld [vmem:[%s975 + $0x38] sm:$0xff]
    %v3407 = vld [vmem:[%s975 + $0x40] sm:$0xff]
    %v3408 = vld [vmem:[%s975 + $0x48] sm:$0xff]
    %v3409 = vld [vmem:[%s975 + $0x50] sm:$0xff]
    %v3410 = vld [vmem:[%s975 + $0x58] sm:$0xff]
    %v3411 = vld [vmem:[%s975 + $0x60] sm:$0xff]
    %v3412 = vld [vmem:[%s975 + $0x68] sm:$0xff]
    %v3413 = vld [vmem:[%s975 + $0x70] sm:$0xff]
    %v3414 = vld [vmem:[%s975 + $0x78] sm:$0xff]
    %v3415 = vld [vmem:[%s975 + $0x80] sm:$0xff]
    %v3416 = vld [vmem:[%s975 + $0x88] sm:$0xff]
    %v3417 = vld [vmem:[%s975 + $0x90] sm:$0xff]
    %v3418 = vld [vmem:[%s975 + $0x98] sm:$0xff]
    %v3419 = vld [vmem:[%s975 + $0xa0] sm:$0xff]
    %v3420 = vld [vmem:[%s975 + $0xa8] sm:$0xff]
    %v3421 = vld [vmem:[%s975 + $0xb0] sm:$0xff]
    %v3422 = vld [vmem:[%s975 + $0xb8] sm:$0xff]
    %v3423 = vld [vmem:[%s975 + $0xc0] sm:$0xff]
    %v3424 = vld [vmem:[%s975 + $0xc8] sm:$0xff]
    %v3425 = vld [vmem:[%s975 + $0xd0] sm:$0xff]
    %v3426 = vld [vmem:[%s975 + $0xd8] sm:$0xff]
    %v3427 = vld [vmem:[%s975 + $0xe0] sm:$0xff]
    %v3428 = vld [vmem:[%s975 + $0xe8] sm:$0xff]
    %v3429 = vld [vmem:[%s975 + $0xf0] sm:$0xff]
    %v3430 = vld [vmem:[%s975 + $0xf8] sm:$0xff]
    %3433 = vrot.lane.b32.xlu0 %v3365, 112
    %v3434 = vpop.permute.xlu0 %3433
    %3435 = vrot.lane.b32.xlu0 %v3398, 112
    %v3436 = vpop.permute.xlu0 %3435
    %v3437 = vsel %vm1014, %v3434, %v3436
    %3439 = vmatpush.msra.mxu0 %v3429
    %3440 = vmatpush.msra.mxu0 %v3427
    %3441 = vmatpush.msra.mxu0 %v3425
    %3442 = vmatpush.msra.mxu0 %v3423
    %3443 = vmatpush.msra.mxu0 %v3421
    %3444 = vmatpush.msra.mxu0 %v3419
    %3445 = vmatpush.msra.mxu0 %v3417
    %3446 = vmatpush.msra.mxu0 %v3415
    %3447 = vmatpush.msra.mxu0 %v3413
    %3448 = vmatpush.msra.mxu0 %v3411
    %3449 = vmatpush.msra.mxu0 %v3409
    %3450 = vmatpush.msra.mxu0 %v3407
    %3451 = vmatpush.msra.mxu0 %v3405
    %3452 = vmatpush.msra.mxu0 %v3403
    %3453 = vmatpush.msra.mxu0 %v3401
    %3454 = vmatpush.msra.mxu0 %v3399
    %3455 = vmatmul.f32.gmra.mxu0 %v3437
    %v3456 = vpop.f32.mrf.mxu0
    %v3457 = vadd.f32 0.0, %v3456
    %3458 = vdwg.mxu0
    %3459 = vmatpush.msra.mxu0 %v3430
    %3460 = vmatpush.msra.mxu0 %v3428
    %3461 = vmatpush.msra.mxu0 %v3426
    %3462 = vmatpush.msra.mxu0 %v3424
    %3463 = vmatpush.msra.mxu0 %v3422
    %3464 = vmatpush.msra.mxu0 %v3420
    %3465 = vmatpush.msra.mxu0 %v3418
    %3466 = vmatpush.msra.mxu0 %v3416
    %3467 = vmatpush.msra.mxu0 %v3414
    %3468 = vmatpush.msra.mxu0 %v3412
    %3469 = vmatpush.msra.mxu0 %v3410
    %3470 = vmatpush.msra.mxu0 %v3408
    %3471 = vmatpush.msra.mxu0 %v3406
    %3472 = vmatpush.msra.mxu0 %v3404
    %3473 = vmatpush.msra.mxu0 %v3402
    %3474 = vmatpush.msra.mxu0 %v3400
    %3475 = vmatmul.f32.gmra.mxu0 %v3437
    %v3476 = vpop.f32.mrf.mxu0
    %v3477 = vadd.f32 0.0, %v3476
    %3478 = vdwg.mxu0
    %3479 = vmatpush.msra.mxu0 %v3396
    %3480 = vmatpush.msra.mxu0 %v3394
    %3481 = vmatpush.msra.mxu0 %v3392
    %3482 = vmatpush.msra.mxu0 %v3390
    %3483 = vmatpush.msra.mxu0 %v3388
    %3484 = vmatpush.msra.mxu0 %v3386
    %3485 = vmatpush.msra.mxu0 %v3384
    %3486 = vmatpush.msra.mxu0 %v3382
    %3487 = vmatpush.msra.mxu0 %v3380
    %3488 = vmatpush.msra.mxu0 %v3378
    %3489 = vmatpush.msra.mxu0 %v3376
    %3490 = vmatpush.msra.mxu0 %v3374
    %3491 = vmatpush.msra.mxu0 %v3372
    %3492 = vmatpush.msra.mxu0 %v3370
    %3493 = vmatpush.msra.mxu0 %v3368
    %3494 = vmatpush.msra.mxu0 %v3366
    %3495 = vmatmul.f32.gmra.mxu0 %v3365
    %v3496 = vpop.f32.mrf.mxu0
    %v3497 = vadd.f32 %v3457, %v3496
    %3498 = vdwg.mxu0
    %3499 = vmatpush.msra.mxu0 %v3397
    %3500 = vmatpush.msra.mxu0 %v3395
    %3501 = vmatpush.msra.mxu0 %v3393
    %3502 = vmatpush.msra.mxu0 %v3391
    %3503 = vmatpush.msra.mxu0 %v3389
    %3504 = vmatpush.msra.mxu0 %v3387
    %3505 = vmatpush.msra.mxu0 %v3385
    %3506 = vmatpush.msra.mxu0 %v3383
    %3507 = vmatpush.msra.mxu0 %v3381
    %3508 = vmatpush.msra.mxu0 %v3379
    %3509 = vmatpush.msra.mxu0 %v3377
    %3510 = vmatpush.msra.mxu0 %v3375
    %3511 = vmatpush.msra.mxu0 %v3373
    %3512 = vmatpush.msra.mxu0 %v3371
    %3513 = vmatpush.msra.mxu0 %v3369
    %3514 = vmatpush.msra.mxu0 %v3367
    %3515 = vmatmul.f32.gmra.mxu0 %v3365
    %v3516 = vpop.f32.mrf.mxu0
    %v3517 = vadd.f32 %v3477, %v3516
    %3518 = vdwg.mxu0
    %v3519 = vld [vmem:[%s1097] sm:$0xff]
    %v3520 = vld [vmem:[%s1097 + $0x8] sm:$0xff]
    %v3521 = vld [vmem:[%s1097 + $0x10] sm:$0xff]
    %v3522 = vld [vmem:[%s1097 + $0x18] sm:$0xff]
    %v3523 = vld [vmem:[%s1097 + $0x20] sm:$0xff]
    %v3524 = vld [vmem:[%s1097 + $0x28] sm:$0xff]
    %v3525 = vld [vmem:[%s1097 + $0x30] sm:$0xff]
    %v3526 = vld [vmem:[%s1097 + $0x38] sm:$0xff]
    %v3527 = vld [vmem:[%s1097 + $0x40] sm:$0xff]
    %v3528 = vld [vmem:[%s1097 + $0x48] sm:$0xff]
    %v3529 = vld [vmem:[%s1097 + $0x50] sm:$0xff]
    %v3530 = vld [vmem:[%s1097 + $0x58] sm:$0xff]
    %v3531 = vld [vmem:[%s1097 + $0x60] sm:$0xff]
    %v3532 = vld [vmem:[%s1097 + $0x68] sm:$0xff]
    %v3533 = vld [vmem:[%s1097 + $0x70] sm:$0xff]
    %v3534 = vld [vmem:[%s1097 + $0x78] sm:$0xff]
    %v3535 = vld [vmem:[%s1097 + $0x80] sm:$0xff]
    %v3536 = vld [vmem:[%s1097 + $0x88] sm:$0xff]
    %v3537 = vld [vmem:[%s1097 + $0x90] sm:$0xff]
    %v3538 = vld [vmem:[%s1097 + $0x98] sm:$0xff]
    %v3539 = vld [vmem:[%s1097 + $0xa0] sm:$0xff]
    %v3540 = vld [vmem:[%s1097 + $0xa8] sm:$0xff]
    %v3541 = vld [vmem:[%s1097 + $0xb0] sm:$0xff]
    %v3542 = vld [vmem:[%s1097 + $0xb8] sm:$0xff]
    %v3543 = vld [vmem:[%s1097 + $0xc0] sm:$0xff]
    %v3544 = vld [vmem:[%s1097 + $0xc8] sm:$0xff]
    %v3545 = vld [vmem:[%s1097 + $0xd0] sm:$0xff]
    %v3546 = vld [vmem:[%s1097 + $0xd8] sm:$0xff]
    %v3547 = vld [vmem:[%s1097 + $0xe0] sm:$0xff]
    %v3548 = vld [vmem:[%s1097 + $0xe8] sm:$0xff]
    %v3549 = vld [vmem:[%s1097 + $0xf0] sm:$0xff]
    %v3550 = vld [vmem:[%s1097 + $0xf8] sm:$0xff]
    %3551 = vrot.lane.b32.xlu0 %v3365, 96
    %v3552 = vpop.permute.xlu0 %3551
    %3553 = vrot.lane.b32.xlu0 %v3398, 96
    %v3554 = vpop.permute.xlu0 %3553
    %v3555 = vsel %vm1134, %v3552, %v3554
    %3557 = vmatpush.msra.mxu0 %v3549
    %3558 = vmatpush.msra.mxu0 %v3547
    %3559 = vmatpush.msra.mxu0 %v3545
    %3560 = vmatpush.msra.mxu0 %v3543
    %3561 = vmatpush.msra.mxu0 %v3541
    %3562 = vmatpush.msra.mxu0 %v3539
    %3563 = vmatpush.msra.mxu0 %v3537
    %3564 = vmatpush.msra.mxu0 %v3535
    %3565 = vmatpush.msra.mxu0 %v3533
    %3566 = vmatpush.msra.mxu0 %v3531
    %3567 = vmatpush.msra.mxu0 %v3529
    %3568 = vmatpush.msra.mxu0 %v3527
    %3569 = vmatpush.msra.mxu0 %v3525
    %3570 = vmatpush.msra.mxu0 %v3523
    %3571 = vmatpush.msra.mxu0 %v3521
    %3572 = vmatpush.msra.mxu0 %v3519
    %3573 = vmatmul.f32.gmra.mxu0 %v3555
    %v3574 = vpop.f32.mrf.mxu0
    %v3575 = vadd.f32 0.0, %v3574
    %3576 = vdwg.mxu0
    %3577 = vmatpush.msra.mxu0 %v3550
    %3578 = vmatpush.msra.mxu0 %v3548
    %3579 = vmatpush.msra.mxu0 %v3546
    %3580 = vmatpush.msra.mxu0 %v3544
    %3581 = vmatpush.msra.mxu0 %v3542
    %3582 = vmatpush.msra.mxu0 %v3540
    %3583 = vmatpush.msra.mxu0 %v3538
    %3584 = vmatpush.msra.mxu0 %v3536
    %3585 = vmatpush.msra.mxu0 %v3534
    %3586 = vmatpush.msra.mxu0 %v3532
    %3587 = vmatpush.msra.mxu0 %v3530
    %3588 = vmatpush.msra.mxu0 %v3528
    %3589 = vmatpush.msra.mxu0 %v3526
    %3590 = vmatpush.msra.mxu0 %v3524
    %3591 = vmatpush.msra.mxu0 %v3522
    %3592 = vmatpush.msra.mxu0 %v3520
    %3593 = vmatmul.f32.gmra.mxu0 %v3555
    %v3594 = vpop.f32.mrf.mxu0
    %v3595 = vadd.f32 0.0, %v3594
    %3596 = vdwg.mxu0
    %v3597 = vadd.f32 %v3497, %v3575
    %v3598 = vadd.f32 %v3517, %v3595
    %v3599 = vld [vmem:[#allocation3] sm:$0xfe]
    %v3600 = vld [vmem:[#allocation3 + $0x10] sm:$0x1]
    %v3601 = vld [vmem:[%s1181] sm:$0xff]
    %v3602 = vld [vmem:[%s1181 + $0x8] sm:$0xff]
    %v3603 = vld [vmem:[%s1181 + $0x10] sm:$0xff]
    %v3604 = vld [vmem:[%s1181 + $0x18] sm:$0xff]
    %v3605 = vld [vmem:[%s1181 + $0x20] sm:$0xff]
    %v3606 = vld [vmem:[%s1181 + $0x28] sm:$0xff]
    %v3607 = vld [vmem:[%s1181 + $0x30] sm:$0xff]
    %v3608 = vld [vmem:[%s1181 + $0x38] sm:$0xff]
    %v3609 = vld [vmem:[%s1181 + $0x40] sm:$0xff]
    %v3610 = vld [vmem:[%s1181 + $0x48] sm:$0xff]
    %v3611 = vld [vmem:[%s1181 + $0x50] sm:$0xff]
    %v3612 = vld [vmem:[%s1181 + $0x58] sm:$0xff]
    %v3613 = vld [vmem:[%s1181 + $0x60] sm:$0xff]
    %v3614 = vld [vmem:[%s1181 + $0x68] sm:$0xff]
    %v3615 = vld [vmem:[%s1181 + $0x70] sm:$0xff]
    %v3616 = vld [vmem:[%s1181 + $0x78] sm:$0xff]
    %v3617 = vld [vmem:[%s1181 + $0x80] sm:$0xff]
    %v3618 = vld [vmem:[%s1181 + $0x88] sm:$0xff]
    %v3619 = vld [vmem:[%s1181 + $0x90] sm:$0xff]
    %v3620 = vld [vmem:[%s1181 + $0x98] sm:$0xff]
    %v3621 = vld [vmem:[%s1181 + $0xa0] sm:$0xff]
    %v3622 = vld [vmem:[%s1181 + $0xa8] sm:$0xff]
    %v3623 = vld [vmem:[%s1181 + $0xb0] sm:$0xff]
    %v3624 = vld [vmem:[%s1181 + $0xb8] sm:$0xff]
    %v3625 = vld [vmem:[%s1181 + $0xc0] sm:$0xff]
    %v3626 = vld [vmem:[%s1181 + $0xc8] sm:$0xff]
    %v3627 = vld [vmem:[%s1181 + $0xd0] sm:$0xff]
    %v3628 = vld [vmem:[%s1181 + $0xd8] sm:$0xff]
    %v3629 = vld [vmem:[%s1181 + $0xe0] sm:$0xff]
    %v3630 = vld [vmem:[%s1181 + $0xe8] sm:$0xff]
    %v3631 = vld [vmem:[%s1181 + $0xf0] sm:$0xff]
    %v3632 = vld [vmem:[%s1181 + $0xf8] sm:$0xff]
    %v3635 = vrot.slane %v3599, 1
    %v3636 = vrot.slane %v3600, 1
    %v3637 = vsel %vm1216, %v3635, %v3636
    %3639 = vmatpush.msra.mxu0 %v3631
    %3640 = vmatpush.msra.mxu0 %v3629
    %3641 = vmatpush.msra.mxu0 %v3627
    %3642 = vmatpush.msra.mxu0 %v3625
    %3643 = vmatpush.msra.mxu0 %v3623
    %3644 = vmatpush.msra.mxu0 %v3621
    %3645 = vmatpush.msra.mxu0 %v3619
    %3646 = vmatpush.msra.mxu0 %v3617
    %3647 = vmatpush.msra.mxu0 %v3615
    %3648 = vmatpush.msra.mxu0 %v3613
    %3649 = vmatpush.msra.mxu0 %v3611
    %3650 = vmatpush.msra.mxu0 %v3609
    %3651 = vmatpush.msra.mxu0 %v3607
    %3652 = vmatpush.msra.mxu0 %v3605
    %3653 = vmatpush.msra.mxu0 %v3603
    %3654 = vmatpush.msra.mxu0 %v3601
    %3655 = vmatmul.f32.gmra.mxu0 %v3637
    %v3656 = vpop.f32.mrf.mxu0
    %v3657 = vadd.f32 0.0, %v3656
    %3658 = vdwg.mxu0
    %3659 = vmatpush.msra.mxu0 %v3632
    %3660 = vmatpush.msra.mxu0 %v3630
    %3661 = vmatpush.msra.mxu0 %v3628
    %3662 = vmatpush.msra.mxu0 %v3626
    %3663 = vmatpush.msra.mxu0 %v3624
    %3664 = vmatpush.msra.mxu0 %v3622
    %3665 = vmatpush.msra.mxu0 %v3620
    %3666 = vmatpush.msra.mxu0 %v3618
    %3667 = vmatpush.msra.mxu0 %v3616
    %3668 = vmatpush.msra.mxu0 %v3614
    %3669 = vmatpush.msra.mxu0 %v3612
    %3670 = vmatpush.msra.mxu0 %v3610
    %3671 = vmatpush.msra.mxu0 %v3608
    %3672 = vmatpush.msra.mxu0 %v3606
    %3673 = vmatpush.msra.mxu0 %v3604
    %3674 = vmatpush.msra.mxu0 %v3602
    %3675 = vmatmul.f32.gmra.mxu0 %v3637
    %v3676 = vpop.f32.mrf.mxu0
    %v3677 = vadd.f32 0.0, %v3676
    %3678 = vdwg.mxu0
    %v3679 = vadd.f32 %v3597, %v3657
    %v3680 = vadd.f32 %v3598, %v3677
    %v3681 = vld [vmem:[#allocation3] sm:$0xfe]
    %v3682 = vld [vmem:[#allocation3 + $0x8] sm:$0xfe]
    %v3683 = vld [vmem:[#allocation3 + $0x10] sm:$0x1]
    %v3684 = vld [vmem:[#allocation3 + $0x18] sm:$0x1]
    %v3685 = vld [vmem:[%s1267] sm:$0xff]
    %v3686 = vld [vmem:[%s1267 + $0x8] sm:$0xff]
    %v3687 = vld [vmem:[%s1267 + $0x10] sm:$0xff]
    %v3688 = vld [vmem:[%s1267 + $0x18] sm:$0xff]
    %v3689 = vld [vmem:[%s1267 + $0x20] sm:$0xff]
    %v3690 = vld [vmem:[%s1267 + $0x28] sm:$0xff]
    %v3691 = vld [vmem:[%s1267 + $0x30] sm:$0xff]
    %v3692 = vld [vmem:[%s1267 + $0x38] sm:$0xff]
    %v3693 = vld [vmem:[%s1267 + $0x40] sm:$0xff]
    %v3694 = vld [vmem:[%s1267 + $0x48] sm:$0xff]
    %v3695 = vld [vmem:[%s1267 + $0x50] sm:$0xff]
    %v3696 = vld [vmem:[%s1267 + $0x58] sm:$0xff]
    %v3697 = vld [vmem:[%s1267 + $0x60] sm:$0xff]
    %v3698 = vld [vmem:[%s1267 + $0x68] sm:$0xff]
    %v3699 = vld [vmem:[%s1267 + $0x70] sm:$0xff]
    %v3700 = vld [vmem:[%s1267 + $0x78] sm:$0xff]
    %v3701 = vld [vmem:[%s1267 + $0x80] sm:$0xff]
    %v3702 = vld [vmem:[%s1267 + $0x88] sm:$0xff]
    %v3703 = vld [vmem:[%s1267 + $0x90] sm:$0xff]
    %v3704 = vld [vmem:[%s1267 + $0x98] sm:$0xff]
    %v3705 = vld [vmem:[%s1267 + $0xa0] sm:$0xff]
    %v3706 = vld [vmem:[%s1267 + $0xa8] sm:$0xff]
    %v3707 = vld [vmem:[%s1267 + $0xb0] sm:$0xff]
    %v3708 = vld [vmem:[%s1267 + $0xb8] sm:$0xff]
    %v3709 = vld [vmem:[%s1267 + $0xc0] sm:$0xff]
    %v3710 = vld [vmem:[%s1267 + $0xc8] sm:$0xff]
    %v3711 = vld [vmem:[%s1267 + $0xd0] sm:$0xff]
    %v3712 = vld [vmem:[%s1267 + $0xd8] sm:$0xff]
    %v3713 = vld [vmem:[%s1267 + $0xe0] sm:$0xff]
    %v3714 = vld [vmem:[%s1267 + $0xe8] sm:$0xff]
    %v3715 = vld [vmem:[%s1267 + $0xf0] sm:$0xff]
    %v3716 = vld [vmem:[%s1267 + $0xf8] sm:$0xff]
    %v3721 = vrot.slane %v3681, 1
    %v3722 = vrot.slane %v3683, 1
    %v3723 = vsel %vm1216, %v3721, %v3722
    %v3724 = vrot.slane %v3682, 1
    %v3725 = vrot.slane %v3684, 1
    %v3726 = vsel %vm1216, %v3724, %v3725
    %3727 = vrot.lane.b32.xlu0 %v3723, 112
    %v3728 = vpop.permute.xlu0 %3727
    %3729 = vrot.lane.b32.xlu0 %v3726, 112
    %v3730 = vpop.permute.xlu0 %3729
    %v3731 = vsel %vm1014, %v3728, %v3730
    %3733 = vmatpush.msra.mxu0 %v3715
    %3734 = vmatpush.msra.mxu0 %v3713
    %3735 = vmatpush.msra.mxu0 %v3711
    %3736 = vmatpush.msra.mxu0 %v3709
    %3737 = vmatpush.msra.mxu0 %v3707
    %3738 = vmatpush.msra.mxu0 %v3705
    %3739 = vmatpush.msra.mxu0 %v3703
    %3740 = vmatpush.msra.mxu0 %v3701
    %3741 = vmatpush.msra.mxu0 %v3699
    %3742 = vmatpush.msra.mxu0 %v3697
    %3743 = vmatpush.msra.mxu0 %v3695
    %3744 = vmatpush.msra.mxu0 %v3693
    %3745 = vmatpush.msra.mxu0 %v3691
    %3746 = vmatpush.msra.mxu0 %v3689
    %3747 = vmatpush.msra.mxu0 %v3687
    %3748 = vmatpush.msra.mxu0 %v3685
    %3749 = vmatmul.f32.gmra.mxu0 %v3731
    %v3750 = vpop.f32.mrf.mxu0
    %v3751 = vadd.f32 0.0, %v3750
    %3752 = vdwg.mxu0
    %3753 = vmatpush.msra.mxu0 %v3716
    %3754 = vmatpush.msra.mxu0 %v3714
    %3755 = vmatpush.msra.mxu0 %v3712
    %3756 = vmatpush.msra.mxu0 %v3710
    %3757 = vmatpush.msra.mxu0 %v3708
    %3758 = vmatpush.msra.mxu0 %v3706
    %3759 = vmatpush.msra.mxu0 %v3704
    %3760 = vmatpush.msra.mxu0 %v3702
    %3761 = vmatpush.msra.mxu0 %v3700
    %3762 = vmatpush.msra.mxu0 %v3698
    %3763 = vmatpush.msra.mxu0 %v3696
    %3764 = vmatpush.msra.mxu0 %v3694
    %3765 = vmatpush.msra.mxu0 %v3692
    %3766 = vmatpush.msra.mxu0 %v3690
    %3767 = vmatpush.msra.mxu0 %v3688
    %3768 = vmatpush.msra.mxu0 %v3686
    %3769 = vmatmul.f32.gmra.mxu0 %v3731
    %v3770 = vpop.f32.mrf.mxu0
    %v3771 = vadd.f32 0.0, %v3770
    %3772 = vdwg.mxu0
    %v3773 = vadd.f32 %v3679, %v3751
    %v3774 = vadd.f32 %v3680, %v3771
    %v3775 = vld [vmem:[%s1358] sm:$0xff]
    %v3776 = vld [vmem:[%s1358 + $0x8] sm:$0xff]
    %v3777 = vld [vmem:[%s1358 + $0x10] sm:$0xff]
    %v3778 = vld [vmem:[%s1358 + $0x18] sm:$0xff]
    %v3779 = vld [vmem:[%s1358 + $0x20] sm:$0xff]
    %v3780 = vld [vmem:[%s1358 + $0x28] sm:$0xff]
    %v3781 = vld [vmem:[%s1358 + $0x30] sm:$0xff]
    %v3782 = vld [vmem:[%s1358 + $0x38] sm:$0xff]
    %v3783 = vld [vmem:[%s1358 + $0x40] sm:$0xff]
    %v3784 = vld [vmem:[%s1358 + $0x48] sm:$0xff]
    %v3785 = vld [vmem:[%s1358 + $0x50] sm:$0xff]
    %v3786 = vld [vmem:[%s1358 + $0x58] sm:$0xff]
    %v3787 = vld [vmem:[%s1358 + $0x60] sm:$0xff]
    %v3788 = vld [vmem:[%s1358 + $0x68] sm:$0xff]
    %v3789 = vld [vmem:[%s1358 + $0x70] sm:$0xff]
    %v3790 = vld [vmem:[%s1358 + $0x78] sm:$0xff]
    %v3791 = vld [vmem:[%s1358 + $0x80] sm:$0xff]
    %v3792 = vld [vmem:[%s1358 + $0x88] sm:$0xff]
    %v3793 = vld [vmem:[%s1358 + $0x90] sm:$0xff]
    %v3794 = vld [vmem:[%s1358 + $0x98] sm:$0xff]
    %v3795 = vld [vmem:[%s1358 + $0xa0] sm:$0xff]
    %v3796 = vld [vmem:[%s1358 + $0xa8] sm:$0xff]
    %v3797 = vld [vmem:[%s1358 + $0xb0] sm:$0xff]
    %v3798 = vld [vmem:[%s1358 + $0xb8] sm:$0xff]
    %v3799 = vld [vmem:[%s1358 + $0xc0] sm:$0xff]
    %v3800 = vld [vmem:[%s1358 + $0xc8] sm:$0xff]
    %v3801 = vld [vmem:[%s1358 + $0xd0] sm:$0xff]
    %v3802 = vld [vmem:[%s1358 + $0xd8] sm:$0xff]
    %v3803 = vld [vmem:[%s1358 + $0xe0] sm:$0xff]
    %v3804 = vld [vmem:[%s1358 + $0xe8] sm:$0xff]
    %v3805 = vld [vmem:[%s1358 + $0xf0] sm:$0xff]
    %v3806 = vld [vmem:[%s1358 + $0xf8] sm:$0xff]
    %3807 = vrot.lane.b32.xlu0 %v3723, 96
    %v3808 = vpop.permute.xlu0 %3807
    %3809 = vrot.lane.b32.xlu0 %v3726, 96
    %v3810 = vpop.permute.xlu0 %3809
    %v3811 = vsel %vm1134, %v3808, %v3810
    %3813 = vmatpush.msra.mxu0 %v3805
    %3814 = vmatpush.msra.mxu0 %v3803
    %3815 = vmatpush.msra.mxu0 %v3801
    %3816 = vmatpush.msra.mxu0 %v3799
    %3817 = vmatpush.msra.mxu0 %v3797
    %3818 = vmatpush.msra.mxu0 %v3795
    %3819 = vmatpush.msra.mxu0 %v3793
    %3820 = vmatpush.msra.mxu0 %v3791
    %3821 = vmatpush.msra.mxu0 %v3789
    %3822 = vmatpush.msra.mxu0 %v3787
    %3823 = vmatpush.msra.mxu0 %v3785
    %3824 = vmatpush.msra.mxu0 %v3783
    %3825 = vmatpush.msra.mxu0 %v3781
    %3826 = vmatpush.msra.mxu0 %v3779
    %3827 = vmatpush.msra.mxu0 %v3777
    %3828 = vmatpush.msra.mxu0 %v3775
    %3829 = vmatmul.f32.gmra.mxu0 %v3811
    %v3830 = vpop.f32.mrf.mxu0
    %v3831 = vadd.f32 0.0, %v3830
    %3832 = vdwg.mxu0
    %3833 = vmatpush.msra.mxu0 %v3806
    %3834 = vmatpush.msra.mxu0 %v3804
    %3835 = vmatpush.msra.mxu0 %v3802
    %3836 = vmatpush.msra.mxu0 %v3800
    %3837 = vmatpush.msra.mxu0 %v3798
    %3838 = vmatpush.msra.mxu0 %v3796
    %3839 = vmatpush.msra.mxu0 %v3794
    %3840 = vmatpush.msra.mxu0 %v3792
    %3841 = vmatpush.msra.mxu0 %v3790
    %3842 = vmatpush.msra.mxu0 %v3788
    %3843 = vmatpush.msra.mxu0 %v3786
    %3844 = vmatpush.msra.mxu0 %v3784
    %3845 = vmatpush.msra.mxu0 %v3782
    %3846 = vmatpush.msra.mxu0 %v3780
    %3847 = vmatpush.msra.mxu0 %v3778
    %3848 = vmatpush.msra.mxu0 %v3776
    %3849 = vmatmul.f32.gmra.mxu0 %v3811
    %v3850 = vpop.f32.mrf.mxu0
    %v3851 = vadd.f32 0.0, %v3850
    %3852 = vdwg.mxu0
    %v3853 = vadd.f32 %v3773, %v3831
    %v3854 = vadd.f32 %v3774, %v3851
    %v3855 = vld [vmem:[#allocation3] sm:$0xfc]
    %v3856 = vld [vmem:[#allocation3 + $0x10] sm:$0x3]
    %v3857 = vld [vmem:[%s1441] sm:$0xff]
    %v3858 = vld [vmem:[%s1441 + $0x8] sm:$0xff]
    %v3859 = vld [vmem:[%s1441 + $0x10] sm:$0xff]
    %v3860 = vld [vmem:[%s1441 + $0x18] sm:$0xff]
    %v3861 = vld [vmem:[%s1441 + $0x20] sm:$0xff]
    %v3862 = vld [vmem:[%s1441 + $0x28] sm:$0xff]
    %v3863 = vld [vmem:[%s1441 + $0x30] sm:$0xff]
    %v3864 = vld [vmem:[%s1441 + $0x38] sm:$0xff]
    %v3865 = vld [vmem:[%s1441 + $0x40] sm:$0xff]
    %v3866 = vld [vmem:[%s1441 + $0x48] sm:$0xff]
    %v3867 = vld [vmem:[%s1441 + $0x50] sm:$0xff]
    %v3868 = vld [vmem:[%s1441 + $0x58] sm:$0xff]
    %v3869 = vld [vmem:[%s1441 + $0x60] sm:$0xff]
    %v3870 = vld [vmem:[%s1441 + $0x68] sm:$0xff]
    %v3871 = vld [vmem:[%s1441 + $0x70] sm:$0xff]
    %v3872 = vld [vmem:[%s1441 + $0x78] sm:$0xff]
    %v3873 = vld [vmem:[%s1441 + $0x80] sm:$0xff]
    %v3874 = vld [vmem:[%s1441 + $0x88] sm:$0xff]
    %v3875 = vld [vmem:[%s1441 + $0x90] sm:$0xff]
    %v3876 = vld [vmem:[%s1441 + $0x98] sm:$0xff]
    %v3877 = vld [vmem:[%s1441 + $0xa0] sm:$0xff]
    %v3878 = vld [vmem:[%s1441 + $0xa8] sm:$0xff]
    %v3879 = vld [vmem:[%s1441 + $0xb0] sm:$0xff]
    %v3880 = vld [vmem:[%s1441 + $0xb8] sm:$0xff]
    %v3881 = vld [vmem:[%s1441 + $0xc0] sm:$0xff]
    %v3882 = vld [vmem:[%s1441 + $0xc8] sm:$0xff]
    %v3883 = vld [vmem:[%s1441 + $0xd0] sm:$0xff]
    %v3884 = vld [vmem:[%s1441 + $0xd8] sm:$0xff]
    %v3885 = vld [vmem:[%s1441 + $0xe0] sm:$0xff]
    %v3886 = vld [vmem:[%s1441 + $0xe8] sm:$0xff]
    %v3887 = vld [vmem:[%s1441 + $0xf0] sm:$0xff]
    %v3888 = vld [vmem:[%s1441 + $0xf8] sm:$0xff]
    %v3891 = vrot.slane %v3855, 2
    %v3892 = vrot.slane %v3856, 2
    %v3893 = vsel %vm1476, %v3891, %v3892
    %3895 = vmatpush.msra.mxu0 %v3887
    %3896 = vmatpush.msra.mxu0 %v3885
    %3897 = vmatpush.msra.mxu0 %v3883
    %3898 = vmatpush.msra.mxu0 %v3881
    %3899 = vmatpush.msra.mxu0 %v3879
    %3900 = vmatpush.msra.mxu0 %v3877
    %3901 = vmatpush.msra.mxu0 %v3875
    %3902 = vmatpush.msra.mxu0 %v3873
    %3903 = vmatpush.msra.mxu0 %v3871
    %3904 = vmatpush.msra.mxu0 %v3869
    %3905 = vmatpush.msra.mxu0 %v3867
    %3906 = vmatpush.msra.mxu0 %v3865
    %3907 = vmatpush.msra.mxu0 %v3863
    %3908 = vmatpush.msra.mxu0 %v3861
    %3909 = vmatpush.msra.mxu0 %v3859
    %3910 = vmatpush.msra.mxu0 %v3857
    %3911 = vmatmul.f32.gmra.mxu0 %v3893
    %v3912 = vpop.f32.mrf.mxu0
    %v3913 = vadd.f32 0.0, %v3912
    %3914 = vdwg.mxu0
    %3915 = vmatpush.msra.mxu0 %v3888
    %3916 = vmatpush.msra.mxu0 %v3886
    %3917 = vmatpush.msra.mxu0 %v3884
    %3918 = vmatpush.msra.mxu0 %v3882
    %3919 = vmatpush.msra.mxu0 %v3880
    %3920 = vmatpush.msra.mxu0 %v3878
    %3921 = vmatpush.msra.mxu0 %v3876
    %3922 = vmatpush.msra.mxu0 %v3874
    %3923 = vmatpush.msra.mxu0 %v3872
    %3924 = vmatpush.msra.mxu0 %v3870
    %3925 = vmatpush.msra.mxu0 %v3868
    %3926 = vmatpush.msra.mxu0 %v3866
    %3927 = vmatpush.msra.mxu0 %v3864
    %3928 = vmatpush.msra.mxu0 %v3862
    %3929 = vmatpush.msra.mxu0 %v3860
    %3930 = vmatpush.msra.mxu0 %v3858
    %3931 = vmatmul.f32.gmra.mxu0 %v3893
    %v3932 = vpop.f32.mrf.mxu0
    %v3933 = vadd.f32 0.0, %v3932
    %3934 = vdwg.mxu0
    %v3935 = vadd.f32 %v3853, %v3913
    %v3936 = vadd.f32 %v3854, %v3933
    %v3937 = vld [vmem:[#allocation3] sm:$0xfc]
    %v3938 = vld [vmem:[#allocation3 + $0x8] sm:$0xfc]
    %v3939 = vld [vmem:[#allocation3 + $0x10] sm:$0x3]
    %v3940 = vld [vmem:[#allocation3 + $0x18] sm:$0x3]
    %v3941 = vld [vmem:[%s1527] sm:$0xff]
    %v3942 = vld [vmem:[%s1527 + $0x8] sm:$0xff]
    %v3943 = vld [vmem:[%s1527 + $0x10] sm:$0xff]
    %v3944 = vld [vmem:[%s1527 + $0x18] sm:$0xff]
    %v3945 = vld [vmem:[%s1527 + $0x20] sm:$0xff]
    %v3946 = vld [vmem:[%s1527 + $0x28] sm:$0xff]
    %v3947 = vld [vmem:[%s1527 + $0x30] sm:$0xff]
    %v3948 = vld [vmem:[%s1527 + $0x38] sm:$0xff]
    %v3949 = vld [vmem:[%s1527 + $0x40] sm:$0xff]
    %v3950 = vld [vmem:[%s1527 + $0x48] sm:$0xff]
    %v3951 = vld [vmem:[%s1527 + $0x50] sm:$0xff]
    %v3952 = vld [vmem:[%s1527 + $0x58] sm:$0xff]
    %v3953 = vld [vmem:[%s1527 + $0x60] sm:$0xff]
    %v3954 = vld [vmem:[%s1527 + $0x68] sm:$0xff]
    %v3955 = vld [vmem:[%s1527 + $0x70] sm:$0xff]
    %v3956 = vld [vmem:[%s1527 + $0x78] sm:$0xff]
    %v3957 = vld [vmem:[%s1527 + $0x80] sm:$0xff]
    %v3958 = vld [vmem:[%s1527 + $0x88] sm:$0xff]
    %v3959 = vld [vmem:[%s1527 + $0x90] sm:$0xff]
    %v3960 = vld [vmem:[%s1527 + $0x98] sm:$0xff]
    %v3961 = vld [vmem:[%s1527 + $0xa0] sm:$0xff]
    %v3962 = vld [vmem:[%s1527 + $0xa8] sm:$0xff]
    %v3963 = vld [vmem:[%s1527 + $0xb0] sm:$0xff]
    %v3964 = vld [vmem:[%s1527 + $0xb8] sm:$0xff]
    %v3965 = vld [vmem:[%s1527 + $0xc0] sm:$0xff]
    %v3966 = vld [vmem:[%s1527 + $0xc8] sm:$0xff]
    %v3967 = vld [vmem:[%s1527 + $0xd0] sm:$0xff]
    %v3968 = vld [vmem:[%s1527 + $0xd8] sm:$0xff]
    %v3969 = vld [vmem:[%s1527 + $0xe0] sm:$0xff]
    %v3970 = vld [vmem:[%s1527 + $0xe8] sm:$0xff]
    %v3971 = vld [vmem:[%s1527 + $0xf0] sm:$0xff]
    %v3972 = vld [vmem:[%s1527 + $0xf8] sm:$0xff]
    %v3977 = vrot.slane %v3937, 2
    %v3978 = vrot.slane %v3939, 2
    %v3979 = vsel %vm1476, %v3977, %v3978
    %v3980 = vrot.slane %v3938, 2
    %v3981 = vrot.slane %v3940, 2
    %v3982 = vsel %vm1476, %v3980, %v3981
    %3983 = vrot.lane.b32.xlu0 %v3979, 112
    %v3984 = vpop.permute.xlu0 %3983
    %3985 = vrot.lane.b32.xlu0 %v3982, 112
    %v3986 = vpop.permute.xlu0 %3985
    %v3987 = vsel %vm1014, %v3984, %v3986
    %3989 = vmatpush.msra.mxu0 %v3971
    %3990 = vmatpush.msra.mxu0 %v3969
    %3991 = vmatpush.msra.mxu0 %v3967
    %3992 = vmatpush.msra.mxu0 %v3965
    %3993 = vmatpush.msra.mxu0 %v3963
    %3994 = vmatpush.msra.mxu0 %v3961
    %3995 = vmatpush.msra.mxu0 %v3959
    %3996 = vmatpush.msra.mxu0 %v3957
    %3997 = vmatpush.msra.mxu0 %v3955
    %3998 = vmatpush.msra.mxu0 %v3953
    %3999 = vmatpush.msra.mxu0 %v3951
    %4000 = vmatpush.msra.mxu0 %v3949
    %4001 = vmatpush.msra.mxu0 %v3947
    %4002 = vmatpush.msra.mxu0 %v3945
    %4003 = vmatpush.msra.mxu0 %v3943
    %4004 = vmatpush.msra.mxu0 %v3941
    %4005 = vmatmul.f32.gmra.mxu0 %v3987
    %v4006 = vpop.f32.mrf.mxu0
    %v4007 = vadd.f32 0.0, %v4006
    %4008 = vdwg.mxu0
    %4009 = vmatpush.msra.mxu0 %v3972
    %4010 = vmatpush.msra.mxu0 %v3970
    %4011 = vmatpush.msra.mxu0 %v3968
    %4012 = vmatpush.msra.mxu0 %v3966
    %4013 = vmatpush.msra.mxu0 %v3964
    %4014 = vmatpush.msra.mxu0 %v3962
    %4015 = vmatpush.msra.mxu0 %v3960
    %4016 = vmatpush.msra.mxu0 %v3958
    %4017 = vmatpush.msra.mxu0 %v3956
    %4018 = vmatpush.msra.mxu0 %v3954
    %4019 = vmatpush.msra.mxu0 %v3952
    %4020 = vmatpush.msra.mxu0 %v3950
    %4021 = vmatpush.msra.mxu0 %v3948
    %4022 = vmatpush.msra.mxu0 %v3946
    %4023 = vmatpush.msra.mxu0 %v3944
    %4024 = vmatpush.msra.mxu0 %v3942
    %4025 = vmatmul.f32.gmra.mxu0 %v3987
    %v4026 = vpop.f32.mrf.mxu0
    %v4027 = vadd.f32 0.0, %v4026
    %4028 = vdwg.mxu0
    %v4029 = vadd.f32 %v3935, %v4007
    %v4030 = vadd.f32 %v3936, %v4027
    %v4031 = vld [vmem:[%s1618] sm:$0xff]
    %v4032 = vld [vmem:[%s1618 + $0x8] sm:$0xff]
    %v4033 = vld [vmem:[%s1618 + $0x10] sm:$0xff]
    %v4034 = vld [vmem:[%s1618 + $0x18] sm:$0xff]
    %v4035 = vld [vmem:[%s1618 + $0x20] sm:$0xff]
    %v4036 = vld [vmem:[%s1618 + $0x28] sm:$0xff]
    %v4037 = vld [vmem:[%s1618 + $0x30] sm:$0xff]
    %v4038 = vld [vmem:[%s1618 + $0x38] sm:$0xff]
    %v4039 = vld [vmem:[%s1618 + $0x40] sm:$0xff]
    %v4040 = vld [vmem:[%s1618 + $0x48] sm:$0xff]
    %v4041 = vld [vmem:[%s1618 + $0x50] sm:$0xff]
    %v4042 = vld [vmem:[%s1618 + $0x58] sm:$0xff]
    %v4043 = vld [vmem:[%s1618 + $0x60] sm:$0xff]
    %v4044 = vld [vmem:[%s1618 + $0x68] sm:$0xff]
    %v4045 = vld [vmem:[%s1618 + $0x70] sm:$0xff]
    %v4046 = vld [vmem:[%s1618 + $0x78] sm:$0xff]
    %v4047 = vld [vmem:[%s1618 + $0x80] sm:$0xff]
    %v4048 = vld [vmem:[%s1618 + $0x88] sm:$0xff]
    %v4049 = vld [vmem:[%s1618 + $0x90] sm:$0xff]
    %v4050 = vld [vmem:[%s1618 + $0x98] sm:$0xff]
    %v4051 = vld [vmem:[%s1618 + $0xa0] sm:$0xff]
    %v4052 = vld [vmem:[%s1618 + $0xa8] sm:$0xff]
    %v4053 = vld [vmem:[%s1618 + $0xb0] sm:$0xff]
    %v4054 = vld [vmem:[%s1618 + $0xb8] sm:$0xff]
    %v4055 = vld [vmem:[%s1618 + $0xc0] sm:$0xff]
    %v4056 = vld [vmem:[%s1618 + $0xc8] sm:$0xff]
    %v4057 = vld [vmem:[%s1618 + $0xd0] sm:$0xff]
    %v4058 = vld [vmem:[%s1618 + $0xd8] sm:$0xff]
    %v4059 = vld [vmem:[%s1618 + $0xe0] sm:$0xff]
    %v4060 = vld [vmem:[%s1618 + $0xe8] sm:$0xff]
    %v4061 = vld [vmem:[%s1618 + $0xf0] sm:$0xff]
    %v4062 = vld [vmem:[%s1618 + $0xf8] sm:$0xff]
    %4063 = vrot.lane.b32.xlu0 %v3979, 96
    %v4064 = vpop.permute.xlu0 %4063
    %4065 = vrot.lane.b32.xlu0 %v3982, 96
    %v4066 = vpop.permute.xlu0 %4065
    %v4067 = vsel %vm1134, %v4064, %v4066
    %4069 = vmatpush.msra.mxu0 %v4061
    %4070 = vmatpush.msra.mxu0 %v4059
    %4071 = vmatpush.msra.mxu0 %v4057
    %4072 = vmatpush.msra.mxu0 %v4055
    %4073 = vmatpush.msra.mxu0 %v4053
    %4074 = vmatpush.msra.mxu0 %v4051
    %4075 = vmatpush.msra.mxu0 %v4049
    %4076 = vmatpush.msra.mxu0 %v4047
    %4077 = vmatpush.msra.mxu0 %v4045
    %4078 = vmatpush.msra.mxu0 %v4043
    %4079 = vmatpush.msra.mxu0 %v4041
    %4080 = vmatpush.msra.mxu0 %v4039
    %4081 = vmatpush.msra.mxu0 %v4037
    %4082 = vmatpush.msra.mxu0 %v4035
    %4083 = vmatpush.msra.mxu0 %v4033
    %4084 = vmatpush.msra.mxu0 %v4031
    %4085 = vmatmul.f32.gmra.mxu0 %v4067
    %v4086 = vpop.f32.mrf.mxu0
    %v4087 = vadd.f32 0.0, %v4086
    %4088 = vdwg.mxu0
    %4089 = vmatpush.msra.mxu0 %v4062
    %4090 = vmatpush.msra.mxu0 %v4060
    %4091 = vmatpush.msra.mxu0 %v4058
    %4092 = vmatpush.msra.mxu0 %v4056
    %4093 = vmatpush.msra.mxu0 %v4054
    %4094 = vmatpush.msra.mxu0 %v4052
    %4095 = vmatpush.msra.mxu0 %v4050
    %4096 = vmatpush.msra.mxu0 %v4048
    %4097 = vmatpush.msra.mxu0 %v4046
    %4098 = vmatpush.msra.mxu0 %v4044
    %4099 = vmatpush.msra.mxu0 %v4042
    %4100 = vmatpush.msra.mxu0 %v4040
    %4101 = vmatpush.msra.mxu0 %v4038
    %4102 = vmatpush.msra.mxu0 %v4036
    %4103 = vmatpush.msra.mxu0 %v4034
    %4104 = vmatpush.msra.mxu0 %v4032
    %4105 = vmatmul.f32.gmra.mxu0 %v4067
    %v4106 = vpop.f32.mrf.mxu0
    %v4107 = vadd.f32 0.0, %v4106
    %4108 = vdwg.mxu0
    %v4109 = vadd.f32 %v4029, %v4087
    %v4110 = vadd.f32 %v4030, %v4107
    %4111 = vst [vmem:[#allocation5] sm:$0xff] %v4109
    %4112 = vst [vmem:[#allocation5 + $0x8] sm:$0xff] %v4110
    %v4113 = vld [vmem:[#allocation11] sm:$0x1]
    %v4114 = vld [vmem:[#allocation5] ss:$8 sm:$0x3]
    %v4115 = vld [vmem:[%s797] ss:$8 sm:$0x3]
    %v4116 = vmax.f32 %v4114, %v4115
    %v4118 = vrot.slane %v4116, 1
    %v4120 = vmax.f32 %v4116, %v4118
    %v4121 = vadd.f32 %v4120, %v4113
    %v4122 = vmax.f32 %v4121, 0.0
    %v4124 = vperm.slane %v4122, 0
    %4125 = vrot.lane.b32.xlu0 %v4124, 32
    %v4126 = vpop.permute.xlu0 %4125
    %4128 = vst.msk [vmem:[#allocation4 + $0x1] sm:$0x1] %vm1716, %v4126
    %4129 = vst.msk [vmem:[#allocation4 + $0x9] sm:$0x1] %vm1718, %v4126
    %v4130 = vld [vmem:[%s815] ss:$8 sm:$0x3]
    %v4131 = vld [vmem:[%s817] ss:$8 sm:$0x3]
    %v4132 = vmax.f32 %v4130, %v4131
    %v4134 = vrot.slane %v4132, 1
    %v4136 = vmax.f32 %v4132, %v4134
    %v4137 = vadd.f32 %v4136, %v4113
    %v4138 = vmax.f32 %v4137, 0.0
    %v4140 = vperm.slane %v4138, 0
    %4141 = vrot.lane.b32.xlu0 %v4140, 32
    %v4142 = vpop.permute.xlu0 %4141
    %4144 = vst.msk [vmem:[#allocation4 + $0x2] sm:$0x1] %vm1716, %v4142
    %4145 = vst.msk [vmem:[#allocation4 + $0xa] sm:$0x1] %vm1718, %v4142
    %v4146 = vld [vmem:[%s833] ss:$8 sm:$0x3]
    %v4147 = vld [vmem:[%s835] ss:$8 sm:$0x3]
    %v4148 = vmax.f32 %v4146, %v4147
    %v4150 = vrot.slane %v4148, 1
    %v4152 = vmax.f32 %v4148, %v4150
    %v4153 = vadd.f32 %v4152, %v4113
    %v4154 = vmax.f32 %v4153, 0.0
    %v4156 = vperm.slane %v4154, 0
    %4157 = vrot.lane.b32.xlu0 %v4156, 32
    %v4158 = vpop.permute.xlu0 %4157
    %4160 = vst.msk [vmem:[#allocation4 + $0x3] sm:$0x1] %vm1716, %v4158
    %4161 = vst.msk [vmem:[#allocation4 + $0xb] sm:$0x1] %vm1718, %v4158
    %v4162 = vld [vmem:[%s851] ss:$8 sm:$0x3]
    %v4163 = vld [vmem:[%s853] ss:$8 sm:$0x3]
    %v4164 = vmax.f32 %v4162, %v4163
    %v4166 = vrot.slane %v4164, 1
    %v4168 = vmax.f32 %v4164, %v4166
    %v4169 = vadd.f32 %v4168, %v4113
    %v4170 = vmax.f32 %v4169, 0.0
    %v4172 = vperm.slane %v4170, 0
    %4173 = vrot.lane.b32.xlu0 %v4172, 32
    %v4174 = vpop.permute.xlu0 %4173
    %4176 = vst.msk [vmem:[#allocation4 + $0x4] sm:$0x1] %vm1716, %v4174
    %4177 = vst.msk [vmem:[#allocation4 + $0xc] sm:$0x1] %vm1718, %v4174
    %v4178 = vld [vmem:[#allocation4] sm:$0xf]
    %v4179 = vld [vmem:[#allocation13] sm:$0xff]
    %v4180 = vld [vmem:[#allocation13 + $0x8] sm:$0xff]
    %v4181 = vld [vmem:[#allocation13 + $0x10] sm:$0xff]
    %v4182 = vld [vmem:[#allocation13 + $0x18] sm:$0xff]
    %v4183 = vld [vmem:[#allocation13 + $0x20] sm:$0xff]
    %v4184 = vld [vmem:[#allocation13 + $0x28] sm:$0xff]
    %v4185 = vld [vmem:[#allocation13 + $0x30] sm:$0xff]
    %v4186 = vld [vmem:[#allocation13 + $0x38] sm:$0xff]
    %v4187 = vld [vmem:[#allocation13 + $0x40] sm:$0xff]
    %v4188 = vld [vmem:[#allocation13 + $0x48] sm:$0xff]
    %v4189 = vld [vmem:[#allocation13 + $0x50] sm:$0xff]
    %v4190 = vld [vmem:[#allocation13 + $0x58] sm:$0xff]
    %v4191 = vld [vmem:[#allocation13 + $0x60] sm:$0xff]
    %v4192 = vld [vmem:[#allocation13 + $0x68] sm:$0xff]
    %v4193 = vld [vmem:[#allocation13 + $0x70] sm:$0xff]
    %v4194 = vld [vmem:[#allocation13 + $0x78] sm:$0xff]
    %v4195 = vld [vmem:[#allocation13 + $0x80] sm:$0xff]
    %v4196 = vld [vmem:[#allocation13 + $0x88] sm:$0xff]
    %v4197 = vld [vmem:[#allocation13 + $0x90] sm:$0xff]
    %v4198 = vld [vmem:[#allocation13 + $0x98] sm:$0xff]
    %v4199 = vld [vmem:[#allocation13 + $0xa0] sm:$0xff]
    %v4200 = vld [vmem:[#allocation13 + $0xa8] sm:$0xff]
    %v4201 = vld [vmem:[#allocation13 + $0xb0] sm:$0xff]
    %v4202 = vld [vmem:[#allocation13 + $0xb8] sm:$0xff]
    %v4203 = vld [vmem:[#allocation13 + $0xc0] sm:$0xff]
    %v4204 = vld [vmem:[#allocation13 + $0xc8] sm:$0xff]
    %v4205 = vld [vmem:[#allocation13 + $0xd0] sm:$0xff]
    %v4206 = vld [vmem:[#allocation13 + $0xd8] sm:$0xff]
    %v4207 = vld [vmem:[#allocation13 + $0xe0] sm:$0xff]
    %v4208 = vld [vmem:[#allocation13 + $0xe8] sm:$0xff]
    %v4209 = vld [vmem:[#allocation13 + $0xf0] sm:$0xff]
    %v4210 = vld [vmem:[#allocation13 + $0xf8] sm:$0xff]
    %v4211 = vld [vmem:[#allocation4 + $0x8] sm:$0xf]
    %v4212 = vld [vmem:[%s1802] sm:$0xff]
    %v4213 = vld [vmem:[%s1802 + $0x8] sm:$0xff]
    %v4214 = vld [vmem:[%s1802 + $0x10] sm:$0xff]
    %v4215 = vld [vmem:[%s1802 + $0x18] sm:$0xff]
    %v4216 = vld [vmem:[%s1802 + $0x20] sm:$0xff]
    %v4217 = vld [vmem:[%s1802 + $0x28] sm:$0xff]
    %v4218 = vld [vmem:[%s1802 + $0x30] sm:$0xff]
    %v4219 = vld [vmem:[%s1802 + $0x38] sm:$0xff]
    %v4220 = vld [vmem:[%s1802 + $0x40] sm:$0xff]
    %v4221 = vld [vmem:[%s1802 + $0x48] sm:$0xff]
    %v4222 = vld [vmem:[%s1802 + $0x50] sm:$0xff]
    %v4223 = vld [vmem:[%s1802 + $0x58] sm:$0xff]
    %v4224 = vld [vmem:[%s1802 + $0x60] sm:$0xff]
    %v4225 = vld [vmem:[%s1802 + $0x68] sm:$0xff]
    %v4226 = vld [vmem:[%s1802 + $0x70] sm:$0xff]
    %v4227 = vld [vmem:[%s1802 + $0x78] sm:$0xff]
    %v4228 = vld [vmem:[%s1802 + $0x80] sm:$0xff]
    %v4229 = vld [vmem:[%s1802 + $0x88] sm:$0xff]
    %v4230 = vld [vmem:[%s1802 + $0x90] sm:$0xff]
    %v4231 = vld [vmem:[%s1802 + $0x98] sm:$0xff]
    %v4232 = vld [vmem:[%s1802 + $0xa0] sm:$0xff]
    %v4233 = vld [vmem:[%s1802 + $0xa8] sm:$0xff]
    %v4234 = vld [vmem:[%s1802 + $0xb0] sm:$0xff]
    %v4235 = vld [vmem:[%s1802 + $0xb8] sm:$0xff]
    %v4236 = vld [vmem:[%s1802 + $0xc0] sm:$0xff]
    %v4237 = vld [vmem:[%s1802 + $0xc8] sm:$0xff]
    %v4238 = vld [vmem:[%s1802 + $0xd0] sm:$0xff]
    %v4239 = vld [vmem:[%s1802 + $0xd8] sm:$0xff]
    %v4240 = vld [vmem:[%s1802 + $0xe0] sm:$0xff]
    %v4241 = vld [vmem:[%s1802 + $0xe8] sm:$0xff]
    %v4242 = vld [vmem:[%s1802 + $0xf0] sm:$0xff]
    %v4243 = vld [vmem:[%s1802 + $0xf8] sm:$0xff]
    %4246 = vrot.lane.b32.xlu0 %v4178, 96
    %v4247 = vpop.permute.xlu0 %4246
    %4248 = vrot.lane.b32.xlu0 %v4211, 96
    %v4249 = vpop.permute.xlu0 %4248
    %v4250 = vsel %vm1134, %v4247, %v4249
    %4252 = vmatpush.msra.mxu0 %v4242
    %4253 = vmatpush.msra.mxu0 %v4240
    %4254 = vmatpush.msra.mxu0 %v4238
    %4255 = vmatpush.msra.mxu0 %v4236
    %4256 = vmatpush.msra.mxu0 %v4234
    %4257 = vmatpush.msra.mxu0 %v4232
    %4258 = vmatpush.msra.mxu0 %v4230
    %4259 = vmatpush.msra.mxu0 %v4228
    %4260 = vmatpush.msra.mxu0 %v4226
    %4261 = vmatpush.msra.mxu0 %v4224
    %4262 = vmatpush.msra.mxu0 %v4222
    %4263 = vmatpush.msra.mxu0 %v4220
    %4264 = vmatpush.msra.mxu0 %v4218
    %4265 = vmatpush.msra.mxu0 %v4216
    %4266 = vmatpush.msra.mxu0 %v4214
    %4267 = vmatpush.msra.mxu0 %v4212
    %4268 = vmatmul.f32.gmra.mxu0 %v4250
    %v4269 = vpop.f32.mrf.mxu0
    %v4270 = vadd.f32 0.0, %v4269
    %4271 = vdwg.mxu0
    %4272 = vmatpush.msra.mxu0 %v4243
    %4273 = vmatpush.msra.mxu0 %v4241
    %4274 = vmatpush.msra.mxu0 %v4239
    %4275 = vmatpush.msra.mxu0 %v4237
    %4276 = vmatpush.msra.mxu0 %v4235
    %4277 = vmatpush.msra.mxu0 %v4233
    %4278 = vmatpush.msra.mxu0 %v4231
    %4279 = vmatpush.msra.mxu0 %v4229
    %4280 = vmatpush.msra.mxu0 %v4227
    %4281 = vmatpush.msra.mxu0 %v4225
    %4282 = vmatpush.msra.mxu0 %v4223
    %4283 = vmatpush.msra.mxu0 %v4221
    %4284 = vmatpush.msra.mxu0 %v4219
    %4285 = vmatpush.msra.mxu0 %v4217
    %4286 = vmatpush.msra.mxu0 %v4215
    %4287 = vmatpush.msra.mxu0 %v4213
    %4288 = vmatmul.f32.gmra.mxu0 %v4250
    %v4289 = vpop.f32.mrf.mxu0
    %v4290 = vadd.f32 0.0, %v4289
    %4291 = vdwg.mxu0
    %4292 = vmatpush.msra.mxu0 %v4209
    %4293 = vmatpush.msra.mxu0 %v4207
    %4294 = vmatpush.msra.mxu0 %v4205
    %4295 = vmatpush.msra.mxu0 %v4203
    %4296 = vmatpush.msra.mxu0 %v4201
    %4297 = vmatpush.msra.mxu0 %v4199
    %4298 = vmatpush.msra.mxu0 %v4197
    %4299 = vmatpush.msra.mxu0 %v4195
    %4300 = vmatpush.msra.mxu0 %v4193
    %4301 = vmatpush.msra.mxu0 %v4191
    %4302 = vmatpush.msra.mxu0 %v4189
    %4303 = vmatpush.msra.mxu0 %v4187
    %4304 = vmatpush.msra.mxu0 %v4185
    %4305 = vmatpush.msra.mxu0 %v4183
    %4306 = vmatpush.msra.mxu0 %v4181
    %4307 = vmatpush.msra.mxu0 %v4179
    %4308 = vmatmul.f32.gmra.mxu0 %v4178
    %v4309 = vpop.f32.mrf.mxu0
    %v4310 = vadd.f32 %v4270, %v4309
    %4311 = vdwg.mxu0
    %4312 = vmatpush.msra.mxu0 %v4210
    %4313 = vmatpush.msra.mxu0 %v4208
    %4314 = vmatpush.msra.mxu0 %v4206
    %4315 = vmatpush.msra.mxu0 %v4204
    %4316 = vmatpush.msra.mxu0 %v4202
    %4317 = vmatpush.msra.mxu0 %v4200
    %4318 = vmatpush.msra.mxu0 %v4198
    %4319 = vmatpush.msra.mxu0 %v4196
    %4320 = vmatpush.msra.mxu0 %v4194
    %4321 = vmatpush.msra.mxu0 %v4192
    %4322 = vmatpush.msra.mxu0 %v4190
    %4323 = vmatpush.msra.mxu0 %v4188
    %4324 = vmatpush.msra.mxu0 %v4186
    %4325 = vmatpush.msra.mxu0 %v4184
    %4326 = vmatpush.msra.mxu0 %v4182
    %4327 = vmatpush.msra.mxu0 %v4180
    %4328 = vmatmul.f32.gmra.mxu0 %v4178
    %v4329 = vpop.f32.mrf.mxu0
    %v4330 = vadd.f32 %v4290, %v4329
    %4331 = vdwg.mxu0
    %v4332 = vld [vmem:[%s1923] sm:$0xff]
    %v4333 = vld [vmem:[%s1923 + $0x8] sm:$0xff]
    %v4334 = vld [vmem:[%s1923 + $0x10] sm:$0xff]
    %v4335 = vld [vmem:[%s1923 + $0x18] sm:$0xff]
    %v4336 = vld [vmem:[%s1923 + $0x20] sm:$0xff]
    %v4337 = vld [vmem:[%s1923 + $0x28] sm:$0xff]
    %v4338 = vld [vmem:[%s1923 + $0x30] sm:$0xff]
    %v4339 = vld [vmem:[%s1923 + $0x38] sm:$0xff]
    %v4340 = vld [vmem:[%s1923 + $0x40] sm:$0xff]
    %v4341 = vld [vmem:[%s1923 + $0x48] sm:$0xff]
    %v4342 = vld [vmem:[%s1923 + $0x50] sm:$0xff]
    %v4343 = vld [vmem:[%s1923 + $0x58] sm:$0xff]
    %v4344 = vld [vmem:[%s1923 + $0x60] sm:$0xff]
    %v4345 = vld [vmem:[%s1923 + $0x68] sm:$0xff]
    %v4346 = vld [vmem:[%s1923 + $0x70] sm:$0xff]
    %v4347 = vld [vmem:[%s1923 + $0x78] sm:$0xff]
    %v4348 = vld [vmem:[%s1923 + $0x80] sm:$0xff]
    %v4349 = vld [vmem:[%s1923 + $0x88] sm:$0xff]
    %v4350 = vld [vmem:[%s1923 + $0x90] sm:$0xff]
    %v4351 = vld [vmem:[%s1923 + $0x98] sm:$0xff]
    %v4352 = vld [vmem:[%s1923 + $0xa0] sm:$0xff]
    %v4353 = vld [vmem:[%s1923 + $0xa8] sm:$0xff]
    %v4354 = vld [vmem:[%s1923 + $0xb0] sm:$0xff]
    %v4355 = vld [vmem:[%s1923 + $0xb8] sm:$0xff]
    %v4356 = vld [vmem:[%s1923 + $0xc0] sm:$0xff]
    %v4357 = vld [vmem:[%s1923 + $0xc8] sm:$0xff]
    %v4358 = vld [vmem:[%s1923 + $0xd0] sm:$0xff]
    %v4359 = vld [vmem:[%s1923 + $0xd8] sm:$0xff]
    %v4360 = vld [vmem:[%s1923 + $0xe0] sm:$0xff]
    %v4361 = vld [vmem:[%s1923 + $0xe8] sm:$0xff]
    %v4362 = vld [vmem:[%s1923 + $0xf0] sm:$0xff]
    %v4363 = vld [vmem:[%s1923 + $0xf8] sm:$0xff]
    %4364 = vrot.lane.b32.xlu0 %v4178, 64
    %v4365 = vpop.permute.xlu0 %4364
    %4366 = vrot.lane.b32.xlu0 %v4211, 64
    %v4367 = vpop.permute.xlu0 %4366
    %v4368 = vsel %vm1960, %v4365, %v4367
    %4370 = vmatpush.msra.mxu0 %v4362
    %4371 = vmatpush.msra.mxu0 %v4360
    %4372 = vmatpush.msra.mxu0 %v4358
    %4373 = vmatpush.msra.mxu0 %v4356
    %4374 = vmatpush.msra.mxu0 %v4354
    %4375 = vmatpush.msra.mxu0 %v4352
    %4376 = vmatpush.msra.mxu0 %v4350
    %4377 = vmatpush.msra.mxu0 %v4348
    %4378 = vmatpush.msra.mxu0 %v4346
    %4379 = vmatpush.msra.mxu0 %v4344
    %4380 = vmatpush.msra.mxu0 %v4342
    %4381 = vmatpush.msra.mxu0 %v4340
    %4382 = vmatpush.msra.mxu0 %v4338
    %4383 = vmatpush.msra.mxu0 %v4336
    %4384 = vmatpush.msra.mxu0 %v4334
    %4385 = vmatpush.msra.mxu0 %v4332
    %4386 = vmatmul.f32.gmra.mxu0 %v4368
    %v4387 = vpop.f32.mrf.mxu0
    %v4388 = vadd.f32 0.0, %v4387
    %4389 = vdwg.mxu0
    %4390 = vmatpush.msra.mxu0 %v4363
    %4391 = vmatpush.msra.mxu0 %v4361
    %4392 = vmatpush.msra.mxu0 %v4359
    %4393 = vmatpush.msra.mxu0 %v4357
    %4394 = vmatpush.msra.mxu0 %v4355
    %4395 = vmatpush.msra.mxu0 %v4353
    %4396 = vmatpush.msra.mxu0 %v4351
    %4397 = vmatpush.msra.mxu0 %v4349
    %4398 = vmatpush.msra.mxu0 %v4347
    %4399 = vmatpush.msra.mxu0 %v4345
    %4400 = vmatpush.msra.mxu0 %v4343
    %4401 = vmatpush.msra.mxu0 %v4341
    %4402 = vmatpush.msra.mxu0 %v4339
    %4403 = vmatpush.msra.mxu0 %v4337
    %4404 = vmatpush.msra.mxu0 %v4335
    %4405 = vmatpush.msra.mxu0 %v4333
    %4406 = vmatmul.f32.gmra.mxu0 %v4368
    %v4407 = vpop.f32.mrf.mxu0
    %v4408 = vadd.f32 0.0, %v4407
    %4409 = vdwg.mxu0
    %v4410 = vadd.f32 %v4310, %v4388
    %v4411 = vadd.f32 %v4330, %v4408
    %v4412 = vld [vmem:[#allocation4] sm:$0x1e]
    %v4413 = vld [vmem:[%s2006] sm:$0xff]
    %v4414 = vld [vmem:[%s2006 + $0x8] sm:$0xff]
    %v4415 = vld [vmem:[%s2006 + $0x10] sm:$0xff]
    %v4416 = vld [vmem:[%s2006 + $0x18] sm:$0xff]
    %v4417 = vld [vmem:[%s2006 + $0x20] sm:$0xff]
    %v4418 = vld [vmem:[%s2006 + $0x28] sm:$0xff]
    %v4419 = vld [vmem:[%s2006 + $0x30] sm:$0xff]
    %v4420 = vld [vmem:[%s2006 + $0x38] sm:$0xff]
    %v4421 = vld [vmem:[%s2006 + $0x40] sm:$0xff]
    %v4422 = vld [vmem:[%s2006 + $0x48] sm:$0xff]
    %v4423 = vld [vmem:[%s2006 + $0x50] sm:$0xff]
    %v4424 = vld [vmem:[%s2006 + $0x58] sm:$0xff]
    %v4425 = vld [vmem:[%s2006 + $0x60] sm:$0xff]
    %v4426 = vld [vmem:[%s2006 + $0x68] sm:$0xff]
    %v4427 = vld [vmem:[%s2006 + $0x70] sm:$0xff]
    %v4428 = vld [vmem:[%s2006 + $0x78] sm:$0xff]
    %v4429 = vld [vmem:[%s2006 + $0x80] sm:$0xff]
    %v4430 = vld [vmem:[%s2006 + $0x88] sm:$0xff]
    %v4431 = vld [vmem:[%s2006 + $0x90] sm:$0xff]
    %v4432 = vld [vmem:[%s2006 + $0x98] sm:$0xff]
    %v4433 = vld [vmem:[%s2006 + $0xa0] sm:$0xff]
    %v4434 = vld [vmem:[%s2006 + $0xa8] sm:$0xff]
    %v4435 = vld [vmem:[%s2006 + $0xb0] sm:$0xff]
    %v4436 = vld [vmem:[%s2006 + $0xb8] sm:$0xff]
    %v4437 = vld [vmem:[%s2006 + $0xc0] sm:$0xff]
    %v4438 = vld [vmem:[%s2006 + $0xc8] sm:$0xff]
    %v4439 = vld [vmem:[%s2006 + $0xd0] sm:$0xff]
    %v4440 = vld [vmem:[%s2006 + $0xd8] sm:$0xff]
    %v4441 = vld [vmem:[%s2006 + $0xe0] sm:$0xff]
    %v4442 = vld [vmem:[%s2006 + $0xe8] sm:$0xff]
    %v4443 = vld [vmem:[%s2006 + $0xf0] sm:$0xff]
    %v4444 = vld [vmem:[%s2006 + $0xf8] sm:$0xff]
    %v4446 = vrot.slane %v4412, 1
    %4448 = vmatpush.msra.mxu0 %v4443
    %4449 = vmatpush.msra.mxu0 %v4441
    %4450 = vmatpush.msra.mxu0 %v4439
    %4451 = vmatpush.msra.mxu0 %v4437
    %4452 = vmatpush.msra.mxu0 %v4435
    %4453 = vmatpush.msra.mxu0 %v4433
    %4454 = vmatpush.msra.mxu0 %v4431
    %4455 = vmatpush.msra.mxu0 %v4429
    %4456 = vmatpush.msra.mxu0 %v4427
    %4457 = vmatpush.msra.mxu0 %v4425
    %4458 = vmatpush.msra.mxu0 %v4423
    %4459 = vmatpush.msra.mxu0 %v4421
    %4460 = vmatpush.msra.mxu0 %v4419
    %4461 = vmatpush.msra.mxu0 %v4417
    %4462 = vmatpush.msra.mxu0 %v4415
    %4463 = vmatpush.msra.mxu0 %v4413
    %4464 = vmatmul.f32.gmra.mxu0 %v4446
    %v4465 = vpop.f32.mrf.mxu0
    %v4466 = vadd.f32 0.0, %v4465
    %4467 = vdwg.mxu0
    %4468 = vmatpush.msra.mxu0 %v4444
    %4469 = vmatpush.msra.mxu0 %v4442
    %4470 = vmatpush.msra.mxu0 %v4440
    %4471 = vmatpush.msra.mxu0 %v4438
    %4472 = vmatpush.msra.mxu0 %v4436
    %4473 = vmatpush.msra.mxu0 %v4434
    %4474 = vmatpush.msra.mxu0 %v4432
    %4475 = vmatpush.msra.mxu0 %v4430
    %4476 = vmatpush.msra.mxu0 %v4428
    %4477 = vmatpush.msra.mxu0 %v4426
    %4478 = vmatpush.msra.mxu0 %v4424
    %4479 = vmatpush.msra.mxu0 %v4422
    %4480 = vmatpush.msra.mxu0 %v4420
    %4481 = vmatpush.msra.mxu0 %v4418
    %4482 = vmatpush.msra.mxu0 %v4416
    %4483 = vmatpush.msra.mxu0 %v4414
    %4484 = vmatmul.f32.gmra.mxu0 %v4446
    %v4485 = vpop.f32.mrf.mxu0
    %v4486 = vadd.f32 0.0, %v4485
    %4487 = vdwg.mxu0
    %v4488 = vadd.f32 %v4410, %v4466
    %v4489 = vadd.f32 %v4411, %v4486
    %v4490 = vld [vmem:[#allocation4] sm:$0x1e]
    %v4491 = vld [vmem:[#allocation4 + $0x8] sm:$0x1e]
    %v4492 = vld [vmem:[%s2086] sm:$0xff]
    %v4493 = vld [vmem:[%s2086 + $0x8] sm:$0xff]
    %v4494 = vld [vmem:[%s2086 + $0x10] sm:$0xff]
    %v4495 = vld [vmem:[%s2086 + $0x18] sm:$0xff]
    %v4496 = vld [vmem:[%s2086 + $0x20] sm:$0xff]
    %v4497 = vld [vmem:[%s2086 + $0x28] sm:$0xff]
    %v4498 = vld [vmem:[%s2086 + $0x30] sm:$0xff]
    %v4499 = vld [vmem:[%s2086 + $0x38] sm:$0xff]
    %v4500 = vld [vmem:[%s2086 + $0x40] sm:$0xff]
    %v4501 = vld [vmem:[%s2086 + $0x48] sm:$0xff]
    %v4502 = vld [vmem:[%s2086 + $0x50] sm:$0xff]
    %v4503 = vld [vmem:[%s2086 + $0x58] sm:$0xff]
    %v4504 = vld [vmem:[%s2086 + $0x60] sm:$0xff]
    %v4505 = vld [vmem:[%s2086 + $0x68] sm:$0xff]
    %v4506 = vld [vmem:[%s2086 + $0x70] sm:$0xff]
    %v4507 = vld [vmem:[%s2086 + $0x78] sm:$0xff]
    %v4508 = vld [vmem:[%s2086 + $0x80] sm:$0xff]
    %v4509 = vld [vmem:[%s2086 + $0x88] sm:$0xff]
    %v4510 = vld [vmem:[%s2086 + $0x90] sm:$0xff]
    %v4511 = vld [vmem:[%s2086 + $0x98] sm:$0xff]
    %v4512 = vld [vmem:[%s2086 + $0xa0] sm:$0xff]
    %v4513 = vld [vmem:[%s2086 + $0xa8] sm:$0xff]
    %v4514 = vld [vmem:[%s2086 + $0xb0] sm:$0xff]
    %v4515 = vld [vmem:[%s2086 + $0xb8] sm:$0xff]
    %v4516 = vld [vmem:[%s2086 + $0xc0] sm:$0xff]
    %v4517 = vld [vmem:[%s2086 + $0xc8] sm:$0xff]
    %v4518 = vld [vmem:[%s2086 + $0xd0] sm:$0xff]
    %v4519 = vld [vmem:[%s2086 + $0xd8] sm:$0xff]
    %v4520 = vld [vmem:[%s2086 + $0xe0] sm:$0xff]
    %v4521 = vld [vmem:[%s2086 + $0xe8] sm:$0xff]
    %v4522 = vld [vmem:[%s2086 + $0xf0] sm:$0xff]
    %v4523 = vld [vmem:[%s2086 + $0xf8] sm:$0xff]
    %v4526 = vrot.slane %v4490, 1
    %v4527 = vrot.slane %v4491, 1
    %4528 = vrot.lane.b32.xlu0 %v4526, 96
    %v4529 = vpop.permute.xlu0 %4528
    %4530 = vrot.lane.b32.xlu0 %v4527, 96
    %v4531 = vpop.permute.xlu0 %4530
    %v4532 = vsel %vm1134, %v4529, %v4531
    %4534 = vmatpush.msra.mxu0 %v4522
    %4535 = vmatpush.msra.mxu0 %v4520
    %4536 = vmatpush.msra.mxu0 %v4518
    %4537 = vmatpush.msra.mxu0 %v4516
    %4538 = vmatpush.msra.mxu0 %v4514
    %4539 = vmatpush.msra.mxu0 %v4512
    %4540 = vmatpush.msra.mxu0 %v4510
    %4541 = vmatpush.msra.mxu0 %v4508
    %4542 = vmatpush.msra.mxu0 %v4506
    %4543 = vmatpush.msra.mxu0 %v4504
    %4544 = vmatpush.msra.mxu0 %v4502
    %4545 = vmatpush.msra.mxu0 %v4500
    %4546 = vmatpush.msra.mxu0 %v4498
    %4547 = vmatpush.msra.mxu0 %v4496
    %4548 = vmatpush.msra.mxu0 %v4494
    %4549 = vmatpush.msra.mxu0 %v4492
    %4550 = vmatmul.f32.gmra.mxu0 %v4532
    %v4551 = vpop.f32.mrf.mxu0
    %v4552 = vadd.f32 0.0, %v4551
    %4553 = vdwg.mxu0
    %4554 = vmatpush.msra.mxu0 %v4523
    %4555 = vmatpush.msra.mxu0 %v4521
    %4556 = vmatpush.msra.mxu0 %v4519
    %4557 = vmatpush.msra.mxu0 %v4517
    %4558 = vmatpush.msra.mxu0 %v4515
    %4559 = vmatpush.msra.mxu0 %v4513
    %4560 = vmatpush.msra.mxu0 %v4511
    %4561 = vmatpush.msra.mxu0 %v4509
    %4562 = vmatpush.msra.mxu0 %v4507
    %4563 = vmatpush.msra.mxu0 %v4505
    %4564 = vmatpush.msra.mxu0 %v4503
    %4565 = vmatpush.msra.mxu0 %v4501
    %4566 = vmatpush.msra.mxu0 %v4499
    %4567 = vmatpush.msra.mxu0 %v4497
    %4568 = vmatpush.msra.mxu0 %v4495
    %4569 = vmatpush.msra.mxu0 %v4493
    %4570 = vmatmul.f32.gmra.mxu0 %v4532
    %v4571 = vpop.f32.mrf.mxu0
    %v4572 = vadd.f32 0.0, %v4571
    %4573 = vdwg.mxu0
    %v4574 = vadd.f32 %v4488, %v4552
    %v4575 = vadd.f32 %v4489, %v4572
    %v4576 = vld [vmem:[%s2171] sm:$0xff]
    %v4577 = vld [vmem:[%s2171 + $0x8] sm:$0xff]
    %v4578 = vld [vmem:[%s2171 + $0x10] sm:$0xff]
    %v4579 = vld [vmem:[%s2171 + $0x18] sm:$0xff]
    %v4580 = vld [vmem:[%s2171 + $0x20] sm:$0xff]
    %v4581 = vld [vmem:[%s2171 + $0x28] sm:$0xff]
    %v4582 = vld [vmem:[%s2171 + $0x30] sm:$0xff]
    %v4583 = vld [vmem:[%s2171 + $0x38] sm:$0xff]
    %v4584 = vld [vmem:[%s2171 + $0x40] sm:$0xff]
    %v4585 = vld [vmem:[%s2171 + $0x48] sm:$0xff]
    %v4586 = vld [vmem:[%s2171 + $0x50] sm:$0xff]
    %v4587 = vld [vmem:[%s2171 + $0x58] sm:$0xff]
    %v4588 = vld [vmem:[%s2171 + $0x60] sm:$0xff]
    %v4589 = vld [vmem:[%s2171 + $0x68] sm:$0xff]
    %v4590 = vld [vmem:[%s2171 + $0x70] sm:$0xff]
    %v4591 = vld [vmem:[%s2171 + $0x78] sm:$0xff]
    %v4592 = vld [vmem:[%s2171 + $0x80] sm:$0xff]
    %v4593 = vld [vmem:[%s2171 + $0x88] sm:$0xff]
    %v4594 = vld [vmem:[%s2171 + $0x90] sm:$0xff]
    %v4595 = vld [vmem:[%s2171 + $0x98] sm:$0xff]
    %v4596 = vld [vmem:[%s2171 + $0xa0] sm:$0xff]
    %v4597 = vld [vmem:[%s2171 + $0xa8] sm:$0xff]
    %v4598 = vld [vmem:[%s2171 + $0xb0] sm:$0xff]
    %v4599 = vld [vmem:[%s2171 + $0xb8] sm:$0xff]
    %v4600 = vld [vmem:[%s2171 + $0xc0] sm:$0xff]
    %v4601 = vld [vmem:[%s2171 + $0xc8] sm:$0xff]
    %v4602 = vld [vmem:[%s2171 + $0xd0] sm:$0xff]
    %v4603 = vld [vmem:[%s2171 + $0xd8] sm:$0xff]
    %v4604 = vld [vmem:[%s2171 + $0xe0] sm:$0xff]
    %v4605 = vld [vmem:[%s2171 + $0xe8] sm:$0xff]
    %v4606 = vld [vmem:[%s2171 + $0xf0] sm:$0xff]
    %v4607 = vld [vmem:[%s2171 + $0xf8] sm:$0xff]
    %4608 = vrot.lane.b32.xlu0 %v4526, 64
    %v4609 = vpop.permute.xlu0 %4608
    %4610 = vrot.lane.b32.xlu0 %v4527, 64
    %v4611 = vpop.permute.xlu0 %4610
    %v4612 = vsel %vm1960, %v4609, %v4611
    %4614 = vmatpush.msra.mxu0 %v4606
    %4615 = vmatpush.msra.mxu0 %v4604
    %4616 = vmatpush.msra.mxu0 %v4602
    %4617 = vmatpush.msra.mxu0 %v4600
    %4618 = vmatpush.msra.mxu0 %v4598
    %4619 = vmatpush.msra.mxu0 %v4596
    %4620 = vmatpush.msra.mxu0 %v4594
    %4621 = vmatpush.msra.mxu0 %v4592
    %4622 = vmatpush.msra.mxu0 %v4590
    %4623 = vmatpush.msra.mxu0 %v4588
    %4624 = vmatpush.msra.mxu0 %v4586
    %4625 = vmatpush.msra.mxu0 %v4584
    %4626 = vmatpush.msra.mxu0 %v4582
    %4627 = vmatpush.msra.mxu0 %v4580
    %4628 = vmatpush.msra.mxu0 %v4578
    %4629 = vmatpush.msra.mxu0 %v4576
    %4630 = vmatmul.f32.gmra.mxu0 %v4612
    %v4631 = vpop.f32.mrf.mxu0
    %v4632 = vadd.f32 0.0, %v4631
    %4633 = vdwg.mxu0
    %4634 = vmatpush.msra.mxu0 %v4607
    %4635 = vmatpush.msra.mxu0 %v4605
    %4636 = vmatpush.msra.mxu0 %v4603
    %4637 = vmatpush.msra.mxu0 %v4601
    %4638 = vmatpush.msra.mxu0 %v4599
    %4639 = vmatpush.msra.mxu0 %v4597
    %4640 = vmatpush.msra.mxu0 %v4595
    %4641 = vmatpush.msra.mxu0 %v4593
    %4642 = vmatpush.msra.mxu0 %v4591
    %4643 = vmatpush.msra.mxu0 %v4589
    %4644 = vmatpush.msra.mxu0 %v4587
    %4645 = vmatpush.msra.mxu0 %v4585
    %4646 = vmatpush.msra.mxu0 %v4583
    %4647 = vmatpush.msra.mxu0 %v4581
    %4648 = vmatpush.msra.mxu0 %v4579
    %4649 = vmatpush.msra.mxu0 %v4577
    %4650 = vmatmul.f32.gmra.mxu0 %v4612
    %v4651 = vpop.f32.mrf.mxu0
    %v4652 = vadd.f32 0.0, %v4651
    %4653 = vdwg.mxu0
    %v4654 = vadd.f32 %v4574, %v4632
    %v4655 = vadd.f32 %v4575, %v4652
    %v4656 = vld [vmem:[#allocation4] sm:$0x3c]
    %v4657 = vld [vmem:[%s2253] sm:$0xff]
    %v4658 = vld [vmem:[%s2253 + $0x8] sm:$0xff]
    %v4659 = vld [vmem:[%s2253 + $0x10] sm:$0xff]
    %v4660 = vld [vmem:[%s2253 + $0x18] sm:$0xff]
    %v4661 = vld [vmem:[%s2253 + $0x20] sm:$0xff]
    %v4662 = vld [vmem:[%s2253 + $0x28] sm:$0xff]
    %v4663 = vld [vmem:[%s2253 + $0x30] sm:$0xff]
    %v4664 = vld [vmem:[%s2253 + $0x38] sm:$0xff]
    %v4665 = vld [vmem:[%s2253 + $0x40] sm:$0xff]
    %v4666 = vld [vmem:[%s2253 + $0x48] sm:$0xff]
    %v4667 = vld [vmem:[%s2253 + $0x50] sm:$0xff]
    %v4668 = vld [vmem:[%s2253 + $0x58] sm:$0xff]
    %v4669 = vld [vmem:[%s2253 + $0x60] sm:$0xff]
    %v4670 = vld [vmem:[%s2253 + $0x68] sm:$0xff]
    %v4671 = vld [vmem:[%s2253 + $0x70] sm:$0xff]
    %v4672 = vld [vmem:[%s2253 + $0x78] sm:$0xff]
    %v4673 = vld [vmem:[%s2253 + $0x80] sm:$0xff]
    %v4674 = vld [vmem:[%s2253 + $0x88] sm:$0xff]
    %v4675 = vld [vmem:[%s2253 + $0x90] sm:$0xff]
    %v4676 = vld [vmem:[%s2253 + $0x98] sm:$0xff]
    %v4677 = vld [vmem:[%s2253 + $0xa0] sm:$0xff]
    %v4678 = vld [vmem:[%s2253 + $0xa8] sm:$0xff]
    %v4679 = vld [vmem:[%s2253 + $0xb0] sm:$0xff]
    %v4680 = vld [vmem:[%s2253 + $0xb8] sm:$0xff]
    %v4681 = vld [vmem:[%s2253 + $0xc0] sm:$0xff]
    %v4682 = vld [vmem:[%s2253 + $0xc8] sm:$0xff]
    %v4683 = vld [vmem:[%s2253 + $0xd0] sm:$0xff]
    %v4684 = vld [vmem:[%s2253 + $0xd8] sm:$0xff]
    %v4685 = vld [vmem:[%s2253 + $0xe0] sm:$0xff]
    %v4686 = vld [vmem:[%s2253 + $0xe8] sm:$0xff]
    %v4687 = vld [vmem:[%s2253 + $0xf0] sm:$0xff]
    %v4688 = vld [vmem:[%s2253 + $0xf8] sm:$0xff]
    %v4690 = vrot.slane %v4656, 2
    %4692 = vmatpush.msra.mxu0 %v4687
    %4693 = vmatpush.msra.mxu0 %v4685
    %4694 = vmatpush.msra.mxu0 %v4683
    %4695 = vmatpush.msra.mxu0 %v4681
    %4696 = vmatpush.msra.mxu0 %v4679
    %4697 = vmatpush.msra.mxu0 %v4677
    %4698 = vmatpush.msra.mxu0 %v4675
    %4699 = vmatpush.msra.mxu0 %v4673
    %4700 = vmatpush.msra.mxu0 %v4671
    %4701 = vmatpush.msra.mxu0 %v4669
    %4702 = vmatpush.msra.mxu0 %v4667
    %4703 = vmatpush.msra.mxu0 %v4665
    %4704 = vmatpush.msra.mxu0 %v4663
    %4705 = vmatpush.msra.mxu0 %v4661
    %4706 = vmatpush.msra.mxu0 %v4659
    %4707 = vmatpush.msra.mxu0 %v4657
    %4708 = vmatmul.f32.gmra.mxu0 %v4690
    %v4709 = vpop.f32.mrf.mxu0
    %v4710 = vadd.f32 0.0, %v4709
    %4711 = vdwg.mxu0
    %4712 = vmatpush.msra.mxu0 %v4688
    %4713 = vmatpush.msra.mxu0 %v4686
    %4714 = vmatpush.msra.mxu0 %v4684
    %4715 = vmatpush.msra.mxu0 %v4682
    %4716 = vmatpush.msra.mxu0 %v4680
    %4717 = vmatpush.msra.mxu0 %v4678
    %4718 = vmatpush.msra.mxu0 %v4676
    %4719 = vmatpush.msra.mxu0 %v4674
    %4720 = vmatpush.msra.mxu0 %v4672
    %4721 = vmatpush.msra.mxu0 %v4670
    %4722 = vmatpush.msra.mxu0 %v4668
    %4723 = vmatpush.msra.mxu0 %v4666
    %4724 = vmatpush.msra.mxu0 %v4664
    %4725 = vmatpush.msra.mxu0 %v4662
    %4726 = vmatpush.msra.mxu0 %v4660
    %4727 = vmatpush.msra.mxu0 %v4658
    %4728 = vmatmul.f32.gmra.mxu0 %v4690
    %v4729 = vpop.f32.mrf.mxu0
    %v4730 = vadd.f32 0.0, %v4729
    %4731 = vdwg.mxu0
    %v4732 = vadd.f32 %v4654, %v4710
    %v4733 = vadd.f32 %v4655, %v4730
    %v4734 = vld [vmem:[#allocation4] sm:$0x3c]
    %v4735 = vld [vmem:[#allocation4 + $0x8] sm:$0x3c]
    %v4736 = vld [vmem:[%s2333] sm:$0xff]
    %v4737 = vld [vmem:[%s2333 + $0x8] sm:$0xff]
    %v4738 = vld [vmem:[%s2333 + $0x10] sm:$0xff]
    %v4739 = vld [vmem:[%s2333 + $0x18] sm:$0xff]
    %v4740 = vld [vmem:[%s2333 + $0x20] sm:$0xff]
    %v4741 = vld [vmem:[%s2333 + $0x28] sm:$0xff]
    %v4742 = vld [vmem:[%s2333 + $0x30] sm:$0xff]
    %v4743 = vld [vmem:[%s2333 + $0x38] sm:$0xff]
    %v4744 = vld [vmem:[%s2333 + $0x40] sm:$0xff]
    %v4745 = vld [vmem:[%s2333 + $0x48] sm:$0xff]
    %v4746 = vld [vmem:[%s2333 + $0x50] sm:$0xff]
    %v4747 = vld [vmem:[%s2333 + $0x58] sm:$0xff]
    %v4748 = vld [vmem:[%s2333 + $0x60] sm:$0xff]
    %v4749 = vld [vmem:[%s2333 + $0x68] sm:$0xff]
    %v4750 = vld [vmem:[%s2333 + $0x70] sm:$0xff]
    %v4751 = vld [vmem:[%s2333 + $0x78] sm:$0xff]
    %v4752 = vld [vmem:[%s2333 + $0x80] sm:$0xff]
    %v4753 = vld [vmem:[%s2333 + $0x88] sm:$0xff]
    %v4754 = vld [vmem:[%s2333 + $0x90] sm:$0xff]
    %v4755 = vld [vmem:[%s2333 + $0x98] sm:$0xff]
    %v4756 = vld [vmem:[%s2333 + $0xa0] sm:$0xff]
    %v4757 = vld [vmem:[%s2333 + $0xa8] sm:$0xff]
    %v4758 = vld [vmem:[%s2333 + $0xb0] sm:$0xff]
    %v4759 = vld [vmem:[%s2333 + $0xb8] sm:$0xff]
    %v4760 = vld [vmem:[%s2333 + $0xc0] sm:$0xff]
    %v4761 = vld [vmem:[%s2333 + $0xc8] sm:$0xff]
    %v4762 = vld [vmem:[%s2333 + $0xd0] sm:$0xff]
    %v4763 = vld [vmem:[%s2333 + $0xd8] sm:$0xff]
    %v4764 = vld [vmem:[%s2333 + $0xe0] sm:$0xff]
    %v4765 = vld [vmem:[%s2333 + $0xe8] sm:$0xff]
    %v4766 = vld [vmem:[%s2333 + $0xf0] sm:$0xff]
    %v4767 = vld [vmem:[%s2333 + $0xf8] sm:$0xff]
    %v4770 = vrot.slane %v4734, 2
    %v4771 = vrot.slane %v4735, 2
    %4772 = vrot.lane.b32.xlu0 %v4770, 96
    %v4773 = vpop.permute.xlu0 %4772
    %4774 = vrot.lane.b32.xlu0 %v4771, 96
    %v4775 = vpop.permute.xlu0 %4774
    %v4776 = vsel %vm1134, %v4773, %v4775
    %4778 = vmatpush.msra.mxu0 %v4766
    %4779 = vmatpush.msra.mxu0 %v4764
    %4780 = vmatpush.msra.mxu0 %v4762
    %4781 = vmatpush.msra.mxu0 %v4760
    %4782 = vmatpush.msra.mxu0 %v4758
    %4783 = vmatpush.msra.mxu0 %v4756
    %4784 = vmatpush.msra.mxu0 %v4754
    %4785 = vmatpush.msra.mxu0 %v4752
    %4786 = vmatpush.msra.mxu0 %v4750
    %4787 = vmatpush.msra.mxu0 %v4748
    %4788 = vmatpush.msra.mxu0 %v4746
    %4789 = vmatpush.msra.mxu0 %v4744
    %4790 = vmatpush.msra.mxu0 %v4742
    %4791 = vmatpush.msra.mxu0 %v4740
    %4792 = vmatpush.msra.mxu0 %v4738
    %4793 = vmatpush.msra.mxu0 %v4736
    %4794 = vmatmul.f32.gmra.mxu0 %v4776
    %v4795 = vpop.f32.mrf.mxu0
    %v4796 = vadd.f32 0.0, %v4795
    %4797 = vdwg.mxu0
    %4798 = vmatpush.msra.mxu0 %v4767
    %4799 = vmatpush.msra.mxu0 %v4765
    %4800 = vmatpush.msra.mxu0 %v4763
    %4801 = vmatpush.msra.mxu0 %v4761
    %4802 = vmatpush.msra.mxu0 %v4759
    %4803 = vmatpush.msra.mxu0 %v4757
    %4804 = vmatpush.msra.mxu0 %v4755
    %4805 = vmatpush.msra.mxu0 %v4753
    %4806 = vmatpush.msra.mxu0 %v4751
    %4807 = vmatpush.msra.mxu0 %v4749
    %4808 = vmatpush.msra.mxu0 %v4747
    %4809 = vmatpush.msra.mxu0 %v4745
    %4810 = vmatpush.msra.mxu0 %v4743
    %4811 = vmatpush.msra.mxu0 %v4741
    %4812 = vmatpush.msra.mxu0 %v4739
    %4813 = vmatpush.msra.mxu0 %v4737
    %4814 = vmatmul.f32.gmra.mxu0 %v4776
    %v4815 = vpop.f32.mrf.mxu0
    %v4816 = vadd.f32 0.0, %v4815
    %4817 = vdwg.mxu0
    %v4818 = vadd.f32 %v4732, %v4796
    %v4819 = vadd.f32 %v4733, %v4816
    %v4820 = vld [vmem:[%s2418] sm:$0xff]
    %v4821 = vld [vmem:[%s2418 + $0x8] sm:$0xff]
    %v4822 = vld [vmem:[%s2418 + $0x10] sm:$0xff]
    %v4823 = vld [vmem:[%s2418 + $0x18] sm:$0xff]
    %v4824 = vld [vmem:[%s2418 + $0x20] sm:$0xff]
    %v4825 = vld [vmem:[%s2418 + $0x28] sm:$0xff]
    %v4826 = vld [vmem:[%s2418 + $0x30] sm:$0xff]
    %v4827 = vld [vmem:[%s2418 + $0x38] sm:$0xff]
    %v4828 = vld [vmem:[%s2418 + $0x40] sm:$0xff]
    %v4829 = vld [vmem:[%s2418 + $0x48] sm:$0xff]
    %v4830 = vld [vmem:[%s2418 + $0x50] sm:$0xff]
    %v4831 = vld [vmem:[%s2418 + $0x58] sm:$0xff]
    %v4832 = vld [vmem:[%s2418 + $0x60] sm:$0xff]
    %v4833 = vld [vmem:[%s2418 + $0x68] sm:$0xff]
    %v4834 = vld [vmem:[%s2418 + $0x70] sm:$0xff]
    %v4835 = vld [vmem:[%s2418 + $0x78] sm:$0xff]
    %v4836 = vld [vmem:[%s2418 + $0x80] sm:$0xff]
    %v4837 = vld [vmem:[%s2418 + $0x88] sm:$0xff]
    %v4838 = vld [vmem:[%s2418 + $0x90] sm:$0xff]
    %v4839 = vld [vmem:[%s2418 + $0x98] sm:$0xff]
    %v4840 = vld [vmem:[%s2418 + $0xa0] sm:$0xff]
    %v4841 = vld [vmem:[%s2418 + $0xa8] sm:$0xff]
    %v4842 = vld [vmem:[%s2418 + $0xb0] sm:$0xff]
    %v4843 = vld [vmem:[%s2418 + $0xb8] sm:$0xff]
    %v4844 = vld [vmem:[%s2418 + $0xc0] sm:$0xff]
    %v4845 = vld [vmem:[%s2418 + $0xc8] sm:$0xff]
    %v4846 = vld [vmem:[%s2418 + $0xd0] sm:$0xff]
    %v4847 = vld [vmem:[%s2418 + $0xd8] sm:$0xff]
    %v4848 = vld [vmem:[%s2418 + $0xe0] sm:$0xff]
    %v4849 = vld [vmem:[%s2418 + $0xe8] sm:$0xff]
    %v4850 = vld [vmem:[%s2418 + $0xf0] sm:$0xff]
    %v4851 = vld [vmem:[%s2418 + $0xf8] sm:$0xff]
    %4852 = vrot.lane.b32.xlu0 %v4770, 64
    %v4853 = vpop.permute.xlu0 %4852
    %4854 = vrot.lane.b32.xlu0 %v4771, 64
    %v4855 = vpop.permute.xlu0 %4854
    %v4856 = vsel %vm1960, %v4853, %v4855
    %4858 = vmatpush.msra.mxu0 %v4850
    %4859 = vmatpush.msra.mxu0 %v4848
    %4860 = vmatpush.msra.mxu0 %v4846
    %4861 = vmatpush.msra.mxu0 %v4844
    %4862 = vmatpush.msra.mxu0 %v4842
    %4863 = vmatpush.msra.mxu0 %v4840
    %4864 = vmatpush.msra.mxu0 %v4838
    %4865 = vmatpush.msra.mxu0 %v4836
    %4866 = vmatpush.msra.mxu0 %v4834
    %4867 = vmatpush.msra.mxu0 %v4832
    %4868 = vmatpush.msra.mxu0 %v4830
    %4869 = vmatpush.msra.mxu0 %v4828
    %4870 = vmatpush.msra.mxu0 %v4826
    %4871 = vmatpush.msra.mxu0 %v4824
    %4872 = vmatpush.msra.mxu0 %v4822
    %4873 = vmatpush.msra.mxu0 %v4820
    %4874 = vmatmul.f32.gmra.mxu0 %v4856
    %v4875 = vpop.f32.mrf.mxu0
    %v4876 = vadd.f32 0.0, %v4875
    %4877 = vdwg.mxu0
    %4878 = vmatpush.msra.mxu0 %v4851
    %4879 = vmatpush.msra.mxu0 %v4849
    %4880 = vmatpush.msra.mxu0 %v4847
    %4881 = vmatpush.msra.mxu0 %v4845
    %4882 = vmatpush.msra.mxu0 %v4843
    %4883 = vmatpush.msra.mxu0 %v4841
    %4884 = vmatpush.msra.mxu0 %v4839
    %4885 = vmatpush.msra.mxu0 %v4837
    %4886 = vmatpush.msra.mxu0 %v4835
    %4887 = vmatpush.msra.mxu0 %v4833
    %4888 = vmatpush.msra.mxu0 %v4831
    %4889 = vmatpush.msra.mxu0 %v4829
    %4890 = vmatpush.msra.mxu0 %v4827
    %4891 = vmatpush.msra.mxu0 %v4825
    %4892 = vmatpush.msra.mxu0 %v4823
    %4893 = vmatpush.msra.mxu0 %v4821
    %4894 = vmatmul.f32.gmra.mxu0 %v4856
    %v4895 = vpop.f32.mrf.mxu0
    %v4896 = vadd.f32 0.0, %v4895
    %4897 = vdwg.mxu0
    %v4898 = vadd.f32 %v4818, %v4876
    %v4899 = vadd.f32 %v4819, %v4896
    %4900 = vst [vmem:[#allocation5] sm:$0xf] %v4898
    %4901 = vst [vmem:[#allocation5 + $0x8] sm:$0xf] %v4899
    %v4902 = vld [vmem:[#allocation14] sm:$0x1]
    %v4903 = vld [vmem:[#allocation5] ss:$8 sm:$0x3]
    %v4904 = vld [vmem:[%s797] ss:$8 sm:$0x3]
    %v4905 = vmax.f32 %v4903, %v4904
    %v4907 = vrot.slane %v4905, 1
    %v4909 = vmax.f32 %v4905, %v4907
    %v4910 = vadd.f32 %v4909, %v4902
    %v4911 = vmax.f32 %v4910, 0.0
    %v4912 = vld [vmem:[%s7] sm:$0xff]
    %v4913 = vld [vmem:[%s7 + $0x8] sm:$0xff]
    %v4914 = vld [vmem:[%s7 + $0x10] sm:$0xff]
    %v4915 = vld [vmem:[%s7 + $0x18] sm:$0xff]
    %v4916 = vld [vmem:[%s7 + $0x20] sm:$0xff]
    %v4917 = vld [vmem:[%s7 + $0x28] sm:$0xff]
    %v4918 = vld [vmem:[%s7 + $0x30] sm:$0xff]
    %v4919 = vld [vmem:[%s7 + $0x38] sm:$0xff]
    %v4920 = vld [vmem:[%s7 + $0x40] sm:$0xff]
    %v4921 = vld [vmem:[%s7 + $0x48] sm:$0xff]
    %v4922 = vld [vmem:[%s7 + $0x50] sm:$0xff]
    %v4923 = vld [vmem:[%s7 + $0x58] sm:$0xff]
    %v4924 = vld [vmem:[%s7 + $0x60] sm:$0xff]
    %v4925 = vld [vmem:[%s7 + $0x68] sm:$0xff]
    %v4926 = vld [vmem:[%s7 + $0x70] sm:$0xff]
    %v4927 = vld [vmem:[%s7 + $0x78] sm:$0xff]
    %v4928 = vld [vmem:[#allocation16] sm:$0x1]
    %4929 = vmatpush.msra.mxu0 %v4927
    %4930 = vmatpush.msra.mxu0 %v4926
    %4931 = vmatpush.msra.mxu0 %v4925
    %4932 = vmatpush.msra.mxu0 %v4924
    %4933 = vmatpush.msra.mxu0 %v4923
    %4934 = vmatpush.msra.mxu0 %v4922
    %4935 = vmatpush.msra.mxu0 %v4921
    %4936 = vmatpush.msra.mxu0 %v4920
    %4937 = vmatpush.msra.mxu0 %v4919
    %4938 = vmatpush.msra.mxu0 %v4918
    %4939 = vmatpush.msra.mxu0 %v4917
    %4940 = vmatpush.msra.mxu0 %v4916
    %4941 = vmatpush.msra.mxu0 %v4915
    %4942 = vmatpush.msra.mxu0 %v4914
    %4943 = vmatpush.msra.mxu0 %v4913
    %4944 = vmatpush.msra.mxu0 %v4912
    %4945 = vmatmul.f32.gmra.mxu0 %v4911
    %v4946 = vpop.f32.mrf.mxu0
    %v4947 = vadd.f32 %v4928, %v4946
    %4948 = vdwg.mxu0
    %4949 = vst.msk [vmem:[%s9 + $0x2] sm:$0x1] %vm2548, %v4947
    %v4950 = vld [vmem:[%s815] ss:$8 sm:$0x3]
    %v4951 = vld [vmem:[%s817] ss:$8 sm:$0x3]
    %v4952 = vmax.f32 %v4950, %v4951
    %v4954 = vrot.slane %v4952, 1
    %v4956 = vmax.f32 %v4952, %v4954
    %v4957 = vadd.f32 %v4956, %v4902
    %v4958 = vmax.f32 %v4957, 0.0
    %v4959 = vld [vmem:[%s7] sm:$0xff]
    %v4960 = vld [vmem:[%s7 + $0x8] sm:$0xff]
    %v4961 = vld [vmem:[%s7 + $0x10] sm:$0xff]
    %v4962 = vld [vmem:[%s7 + $0x18] sm:$0xff]
    %v4963 = vld [vmem:[%s7 + $0x20] sm:$0xff]
    %v4964 = vld [vmem:[%s7 + $0x28] sm:$0xff]
    %v4965 = vld [vmem:[%s7 + $0x30] sm:$0xff]
    %v4966 = vld [vmem:[%s7 + $0x38] sm:$0xff]
    %v4967 = vld [vmem:[%s7 + $0x40] sm:$0xff]
    %v4968 = vld [vmem:[%s7 + $0x48] sm:$0xff]
    %v4969 = vld [vmem:[%s7 + $0x50] sm:$0xff]
    %v4970 = vld [vmem:[%s7 + $0x58] sm:$0xff]
    %v4971 = vld [vmem:[%s7 + $0x60] sm:$0xff]
    %v4972 = vld [vmem:[%s7 + $0x68] sm:$0xff]
    %v4973 = vld [vmem:[%s7 + $0x70] sm:$0xff]
    %v4974 = vld [vmem:[%s7 + $0x78] sm:$0xff]
    %v4975 = vld [vmem:[#allocation16] sm:$0x1]
    %4976 = vmatpush.msra.mxu0 %v4974
    %4977 = vmatpush.msra.mxu0 %v4973
    %4978 = vmatpush.msra.mxu0 %v4972
    %4979 = vmatpush.msra.mxu0 %v4971
    %4980 = vmatpush.msra.mxu0 %v4970
    %4981 = vmatpush.msra.mxu0 %v4969
    %4982 = vmatpush.msra.mxu0 %v4968
    %4983 = vmatpush.msra.mxu0 %v4967
    %4984 = vmatpush.msra.mxu0 %v4966
    %4985 = vmatpush.msra.mxu0 %v4965
    %4986 = vmatpush.msra.mxu0 %v4964
    %4987 = vmatpush.msra.mxu0 %v4963
    %4988 = vmatpush.msra.mxu0 %v4962
    %4989 = vmatpush.msra.mxu0 %v4961
    %4990 = vmatpush.msra.mxu0 %v4960
    %4991 = vmatpush.msra.mxu0 %v4959
    %4992 = vmatmul.f32.gmra.mxu0 %v4958
    %v4993 = vpop.f32.mrf.mxu0
    %v4994 = vadd.f32 %v4975, %v4993
    %4995 = vdwg.mxu0
    %4996 = vst.msk [vmem:[%s9 + $0x3] sm:$0x1] %vm2548, %v4994
    // Predicated region
    $region66: #{forward.1} parent=1 // pred_check
      _
    $region67: #{forward.1} parent=1 // pred_check_branch
      %4998 = sbr.rel (0) target = $region69
    $region68: #{forward.1} parent=1 // pred_region
      _
    $region69: #{forward.1} parent=1 // pred_fallthru
      _
    // Predicated region
    $region70: #{forward.1} parent=1 // pred_check
      _
    $region71: #{forward.1} parent=1 // pred_check_branch
      %5000 = sbr.rel (0) target = $region73
    $region72: #{forward.1} parent=1 // pred_region
      _
    $region73: #{forward.1} parent=1 // pred_fallthru
      _
    %5001 = vsyncpa [#allocation7], 1
    %5002 = vsyncpa [#allocation9], 1
    %5003 = vsyncpa [#allocation12], 1
    %5004 = vsyncpa [#allocation15], 1

</llo_original>
